<compile_context>
chip_gen: v6e
topology: v6e:2x2x1
jax: 0.10.0
libtpu: 0.0.40
codegen_flags: <defaults>
</compile_context>

<pallas_src>
import functools

import numpy as np

import jax
import jax.numpy as jnp
from jax import lax
from jax.experimental import pallas as pl
from jax.experimental.pallas import tpu as pltpu

LN_EPS = 1e-5

# module gather orders: module chunk m -> (kd, kh, kw) parity of the 2x2x2 window
_PM_PARITIES = {
    "v2": ((0, 0, 0), (1, 0, 0), (0, 1, 0), (0, 0, 1),
           (1, 0, 1), (1, 1, 0), (0, 1, 1), (1, 1, 1)),
    # legacy PatchMerging (v0.9.0): keeps its duplicate slices
    "v1": ((0, 0, 0), (1, 0, 0), (0, 1, 0), (0, 0, 1),
           (1, 0, 1), (0, 1, 0), (0, 0, 1), (1, 1, 1)),
}


# ---------------------------------------------------------------------------
# Small helpers
# ---------------------------------------------------------------------------
def _round_up(x, m):
    return (x + m - 1) // m * m


@functools.lru_cache(maxsize=None)
def _vmem_capacity():
    """Physical VMEM bytes of the local TPU (generation aware), with fallback."""
    try:
        cap = int(pltpu.get_tpu_info().vmem_capacity_bytes)
        if cap > 0:
            return cap
    except Exception:
        pass
    return 128 * 2**20          # v5e/v6e size; v7x reports 64 MiB via get_tpu_info


def _pick_tile(n, target):
    """Largest divisor of n <= target (if >= target/2), else target itself
    (the ragged tail is handled by the cdiv grid / masked block edges)."""
    n = int(n)
    target = int(max(1, min(target, n)))
    for t in range(target, 0, -1):
        if n % t == 0:
            if t >= max(1, target // 2):
                return t
            break
    return target


def _choose_blocks(bd2, h2, w2, target_rows):
    """Pick (db, hb): db slabs of (b*d2) and hb rows of h2 per grid step."""
    slab = h2 * w2
    if bd2 > 1 and slab < target_rows:
        hb = h2
        db = _pick_tile(bd2, max(1, target_rows // max(slab, 1)))
    else:
        db = 1
        hb = _pick_tile(h2, max(1, target_rows // max(w2, 1)))
    # keep >= 2 grid steps so both v7x TensorCores get work (no-op on v5e/v6e)
    if pl.cdiv(bd2, db) * pl.cdiv(h2, hb) < 2:
        if db > 1:
            db = _pick_tile(bd2, max(1, db // 2))
        elif hb > 1:
            hb = _pick_tile(h2, max(1, hb // 2))
    return db, hb


def _parity_index_map(i, j, *, kd, kh):
    # xr dims: (b*d2, kd, h2, kh, w2, 2C); kd/kh are squeezed size-1 dims.
    return (i, kd, j, kh, 0, 0)


# ---------------------------------------------------------------------------
# Fused kernel (gather + LayerNorm + folded reduction)
# ---------------------------------------------------------------------------
def _mixer_kernel(x00_ref, x01_ref, x10_ref, x11_ref, aux_ref, w_ref, b_ref,
                  o_ref, *, group_ln, weighted, inv_nf):
    """One (db, hb) tile.

    x??_ref : (db, hb, w2, 2C) raw activations for parity (kd, kh);
              lanes = [kw=0 channels, kw=1 channels]
    aux_ref : (4, 2C) f32  -- full-LN: per-lane statistic weights (dup counts)
                              group-LN: kw=1 lane mask (row 0)
    w_ref   : (4, 2C, CO)  -- LN-affine-folded reduction weights (bf16/f32)
    b_ref   : (1, CO) f32  -- folded bias
    o_ref   : (db, hb*w2, CO)
    """
    xs = (x00_ref, x01_ref, x10_ref, x11_ref)
    db, hb, w2, c2 = x00_ref.shape
    r = db * hb * w2

    def piece(q):
        # cast to f32 *before* the reshape so the leading-dim collapse is a
        # layout no-op (w2 % 8 == 0); re-reading per use keeps peak VMEM low.
        return xs[q][...].astype(jnp.float32).reshape(r, c2)

    aux = aux_ref[...].astype(jnp.float32)
    wdt = w_ref.dtype

    if not group_ln:
        # --- PatchMerging / PatchMergingV2: LayerNorm over the full 8C vector ---
        s = piece(0) * aux[0:1] if weighted else piece(0)
        for q in range(1, 4):
            p = piece(q)
            s = s + (p * aux[q:q + 1] if weighted else p)
        mu = jnp.sum(s, axis=-1, keepdims=True) * inv_nf              # (r, 1)

        ss = None
        for q in range(4):
            dq = piece(q) - mu
            t = dq * dq
            if weighted:
                t = t * aux[q:q + 1]
            ss = t if ss is None else ss + t
        var = jnp.sum(ss, axis=-1, keepdims=True) * inv_nf
        rstd = lax.rsqrt(var + LN_EPS)                                # (r, 1)

        acc = None
        for q in range(4):
            xn = ((piece(q) - mu) * rstd).astype(wdt)
            t = jnp.dot(xn, w_ref[q], preferred_element_type=jnp.float32)
            acc = t if acc is None else acc + t
    else:
        # --- downsample_conv: per-voxel LayerNorm(C); two C-groups per piece ---
        m_hi = aux[0:1]                                               # (1, 2C)
        m_lo = 1.0 - m_hi
        acc = None
        for q in range(4):
            p = piece(q)
            s_all = jnp.sum(p, axis=-1, keepdims=True)
            s_hi = jnp.sum(p * m_hi, axis=-1, keepdims=True)
            mu = ((s_all - s_hi) * m_lo + s_hi * m_hi) * inv_nf       # (r, 2C)
            dq = p - mu
            sq = dq * dq
            v_all = jnp.sum(sq, axis=-1, keepdims=True)
            v_hi = jnp.sum(sq * m_hi, axis=-1, keepdims=True)
            rstd = (lax.rsqrt((v_all - v_hi) * inv_nf + LN_EPS) * m_lo
                    + lax.rsqrt(v_hi * inv_nf + LN_EPS) * m_hi)
            xn = (dq * rstd).astype(wdt)
            t = jnp.dot(xn, w_ref[q], preferred_element_type=jnp.float32)
            acc = t if acc is None else acc + t

    y = acc + b_ref[...].astype(jnp.float32)                          # (r, CO)
    o_ref[...] = y.reshape(o_ref.shape).astype(o_ref.dtype)


# ---------------------------------------------------------------------------
# Parameter folding (tiny, one-time)
# ---------------------------------------------------------------------------
def _fold_patch_merging(gamma, beta, w_red, c, version):
    """Fold LN(8C) affine + the module's (possibly duplicated) slice order into
    per-(kd,kh)-piece weights.  Piece lane layout: [kw=0 channels, kw=1 channels]."""
    co = w_red.shape[-1]
    g = gamma.astype(jnp.float32)
    w_red = w_red.astype(jnp.float32)
    wf = jnp.zeros((8, c, co), jnp.float32)
    counts = np.zeros((2, 2, 2), np.float32)
    for m, (kd, kh, kw) in enumerate(_PM_PARITIES[version]):
        n = (kd * 2 + kh) * 2 + kw                 # natural (kd,kh,kw) chunk index
        counts[kd, kh, kw] += 1.0
        src = slice(m * c, (m + 1) * c)
        wf = wf.at[n].add(g[src][:, None] * w_red[src])
    wf = wf.reshape(2, 2, 2, c, co).reshape(4, 2 * c, co)
    bias = (beta.astype(jnp.float32) @ w_red).reshape(1, co)
    aux = jnp.asarray(np.repeat(counts.reshape(4, 2), c, axis=1))   # (4, 2C)
    return aux, wf, bias


def _fold_downsample_conv(gamma, beta, conv_w, conv_b, c):
    """Fold per-voxel LN(C) affine into the stride-2, k=2 Conv3d matmul."""
    co = conv_w.shape[0]
    g = gamma.astype(jnp.float32)
    bt = beta.astype(jnp.float32)
    # (CO, C, kd, kh, kw) -> (kd, kh, kw, C, CO)
    wnat = jnp.transpose(conv_w.astype(jnp.float32), (2, 3, 4, 1, 0))
    wf = (g[:, None] * wnat).reshape(4, 2 * c, co)
    bias = (jnp.sum(bt[:, None] * wnat, axis=(0, 1, 2, 3))
            + conv_b.astype(jnp.float32)).reshape(1, co)
    mask_hi = np.concatenate([np.zeros((c,), np.float32),
                              np.ones((c,), np.float32)])
    aux = jnp.asarray(np.tile(mask_hi, (4, 1)))                     # (4, 2C)
    return aux, wf, bias


# ---------------------------------------------------------------------------
# Shared launcher
# ---------------------------------------------------------------------------
def _mixer_forward(x, aux, wf, bias, *, group_ln, weighted, inv_nf, out_dtype,
                   mxu_dtype, block_rows, vmem_budget):
    """x: (B, 2*D2, 2*H2, 2*W2, C) with W2 % 8 == 0  ->  (B*D2, H2*W2, CO)."""
    b, d, h, w, c = x.shape
    d2, h2, w2 = d // 2, h // 2, w // 2
    co = wf.shape[-1]
    bd2 = b * d2
    xr = x.reshape(bd2, 2, h2, 2, w2, 2 * c)        # free reshape (bitcast view)

    in_item = jnp.dtype(x.dtype).itemsize
    out_item = jnp.dtype(out_dtype).itemsize

    # ---- generation-aware, layout-aware VMEM budgeting -----------------------
    cap = _vmem_capacity()
    limit_cap = max(24 * 2**20, min(cap - 16 * 2**20, 100 * 2**20))
    if vmem_budget is None:
        vmem_budget = min(cap // 2, 48 * 2**20)     # ~32 MiB on v7x, 48 on v5e/v6e
    vmem_budget = min(int(vmem_budget), (3 * limit_cap) // 4)

    lane_in = _round_up(2 * c, 128)                 # 2C pads to 128 lanes
    lane_out = _round_up(co, 128)
    in_pack = max(1, 4 // in_item)                  # bf16 sublane packing
    sub_fac = _round_up(w2, 8 * in_pack) / float(w2)
    per_row = (2.0 * 4 * lane_in * in_item * sub_fac    # 4 parity inputs, 2x buffered
               + 2.0 * lane_out * out_item              # output, 2x buffered
               + 8.0 * 128 * 4)                         # in-kernel f32/bf16 temporaries
    target_rows = max(8, int(vmem_budget / per_row))
    if block_rows is not None:
        target_rows = max(8, min(target_rows, int(block_rows)))

    db, hb = _choose_blocks(bd2, h2, w2, target_rows)
    grid = (pl.cdiv(bd2, db), pl.cdiv(h2, hb))

    cp = dict(dimension_semantics=("parallel", "parallel"))
    need = int(per_row * db * hb * w2) + (1 << 20)
    if need > 12 * 2**20:
        cp["vmem_limit_bytes"] = int(min(max(2 * need, 32 * 2**20), limit_cap))

    in_specs = []
    for kd in (0, 1):
        for kh in (0, 1):
            in_specs.append(pl.BlockSpec(
                (db, None, hb, None, w2, 2 * c),
                functools.partial(_parity_index_map, kd=kd, kh=kh)))
    in_specs += [
        pl.BlockSpec((4, 2 * c), lambda i, j: (0, 0)),
        pl.BlockSpec((4, 2 * c, co), lambda i, j: (0, 0, 0)),
        pl.BlockSpec((1, co), lambda i, j: (0, 0)),
    ]

    kernel = functools.partial(_mixer_kernel, group_ln=group_ln,
                               weighted=weighted, inv_nf=inv_nf)
    return pl.pallas_call(
        kernel,
        out_shape=jax.ShapeDtypeStruct((bd2, h2 * w2, co), out_dtype),
        grid_spec=pltpu.PrefetchScalarGridSpec(
            num_scalar_prefetch=0,
            grid=grid,
            in_specs=in_specs,
            out_specs=pl.BlockSpec((db, hb * w2, co), lambda i, j: (i, j, 0)),
        ),
        compiler_params=pltpu.CompilerParams(**cp),
    )(xr, xr, xr, xr, aux, wf.astype(mxu_dtype), bias)


# ---------------------------------------------------------------------------
# Public wrappers (forward passes of the modules)
# ---------------------------------------------------------------------------
@functools.partial(jax.jit, static_argnames=("version", "out_dtype", "mxu_dtype",
                                             "block_rows", "vmem_budget"))
def patch_merging_pallas(x, gamma, beta, w_red, *, version="v2", out_dtype=None,
                         mxu_dtype=jnp.bfloat16, block_rows=None,
                         vmem_budget=None):
    """PatchMergingV2 ('v2') / legacy PatchMerging ('v1') forward.
    x: (B, D, H, W, C) channels-last -> (B, ceil(D/2), ceil(H/2), ceil(W/2), 2C)."""
    b, d, h, w, c = x.shape
    d2o, h2o, w2o = (d + d % 2) // 2, (h + h % 2) // 2, (w + w % 2) // 2
    w2p = max(8, _round_up(w2o, 8))                 # lane/sublane-friendly half-width
    pads = ((0, 0), (0, 2 * d2o - d), (0, 2 * h2o - h), (0, 2 * w2p - w), (0, 0))
    if any(p[1] for p in pads):
        x = jnp.pad(x, pads)
    odt = jnp.dtype(out_dtype) if out_dtype is not None else x.dtype
    aux, wf, bias = _fold_patch_merging(gamma, beta, w_red, c, version)
    out = _mixer_forward(x, aux, wf, bias, group_ln=False,
                         weighted=(version != "v2"), inv_nf=1.0 / (8 * c),
                         out_dtype=odt, mxu_dtype=mxu_dtype,
                         block_rows=block_rows, vmem_budget=vmem_budget)
    co = wf.shape[-1]
    return out.reshape(b, d2o, h2o, w2p, co)[:, :, :, :w2o, :]


@functools.partial(jax.jit, static_argnames=("out_dtype", "mxu_dtype",
                                             "block_rows", "vmem_budget"))
def downsample_conv_pallas(x, gamma, beta, conv_w, conv_b, *, out_dtype=None,
                           mxu_dtype=jnp.bfloat16, block_rows=None,
                           vmem_budget=None):
    """downsample_conv forward: LayerNorm(C) then Conv3d(C->2C, k=2, s=2).
    x: (B, D, H, W, C) channels-last -> (B, D//2, H//2, W//2, 2C)."""
    b, d, h, w, c = x.shape
    d2, h2, w2 = d // 2, h // 2, w // 2
    x = x[:, : 2 * d2, : 2 * h2, : 2 * w2, :]
    w2p = max(8, _round_up(w2, 8))
    if w2p != w2:
        x = jnp.pad(x, ((0, 0), (0, 0), (0, 0), (0, 2 * (w2p - w2)), (0, 0)))
    odt = jnp.dtype(out_dtype) if out_dtype is not None else x.dtype
    aux, wf, bias = _fold_downsample_conv(gamma, beta, conv_w, conv_b, c)
    out = _mixer_forward(x, aux, wf, bias, group_ln=True, weighted=False,
                         inv_nf=1.0 / c, out_dtype=odt, mxu_dtype=mxu_dtype,
                         block_rows=block_rows, vmem_budget=vmem_budget)
    co = wf.shape[-1]
    return out.reshape(b, d2, h2, w2p, co)[:, :, :, :w2, :]


# ---------------------------------------------------------------------------
# Pure-JAX references (match the torch modules)
# ---------------------------------------------------------------------------
def _layernorm_ref(x, g, b):
    mu = jnp.mean(x, -1, keepdims=True)
    var = jnp.mean((x - mu) ** 2, -1, keepdims=True)
    return (x - mu) / jnp.sqrt(var + LN_EPS) * g + b


def _gather_pm(x, version):
    x0 = x[:, 0::2, 0::2, 0::2, :]
    x1 = x[:, 1::2, 0::2, 0::2, :]
    x2 = x[:, 0::2, 1::2, 0::2, :]
    x3 = x[:, 0::2, 0::2, 1::2, :]
    x4 = x[:, 1::2, 0::2, 1::2, :]
    if version == "v2":
        x5 = x[:, 1::2, 1::2, 0::2, :]
        x6 = x[:, 0::2, 1::2, 1::2, :]
    else:  # legacy duplicate slices
        x5 = x[:, 0::2, 1::2, 0::2, :]
        x6 = x[:, 0::2, 0::2, 1::2, :]
    x7 = x[:, 1::2, 1::2, 1::2, :]
    return jnp.concatenate([x0, x1, x2, x3, x4, x5, x6, x7], axis=-1)


def ref_patch_merging(x, gamma, beta, w_red, version="v2"):
    b, d, h, w, c = x.shape
    x = jnp.pad(x, ((0, 0), (0, d % 2), (0, h % 2), (0, w % 2), (0, 0)))
    xc = _gather_pm(x, version)
    return _layernorm_ref(xc, gamma, beta) @ w_red


def ref_downsample_conv(x, gamma, beta, conv_w, conv_b):
    b, d, h, w, c = x.shape
    xn = _layernorm_ref(x, gamma, beta)
    d2, h2, w2 = d // 2, h // 2, w // 2
    xn = xn[:, : 2 * d2, : 2 * h2, : 2 * w2, :]
    patches = xn.reshape(b, d2, 2, h2, 2, w2, 2, c).transpose(0, 1, 3, 5, 2, 4, 6, 7)
    cout = conv_w.shape[0]
    wmat = jnp.transpose(conv_w, (2, 3, 4, 1, 0)).reshape(8 * c, cout)
    return patches.reshape(b, d2, h2, w2, 8 * c) @ wmat + conv_b


# ---------------------------------------------------------------------------
# Main
# ---------------------------------------------------------------------------
if __name__ == "__main__":
    key = jax.random.PRNGKey(0)
    B, S, C = 2, 16, 24          # feature_size=24 (divisible by 12), spatial=16
    keys = jax.random.split(key, 9)
    x = jax.random.normal(keys[0], (B, S, S, S, C), jnp.float32)

    # PatchMerging(V2) params: LayerNorm(8C) affine + Linear(8C -> 2C, no bias)
    pm_gamma = 1.0 + 0.1 * jax.random.normal(keys[1], (8 * C,), jnp.float32)
    pm_beta = 0.05 * jax.random.normal(keys[2], (8 * C,), jnp.float32)
    pm_w = 0.02 * jax.random.normal(keys[3], (8 * C, 2 * C), jnp.float32)

    # downsample_conv params: LayerNorm(C) affine + Conv3d(C -> 2C, k=2, s=2)
    ds_gamma = 1.0 + 0.1 * jax.random.normal(keys[4], (C,), jnp.float32)
    ds_beta = 0.05 * jax.random.normal(keys[5], (C,), jnp.float32)
    ds_w = 0.02 * jax.random.normal(keys[6], (2 * C, C, 2, 2, 2), jnp.float32)
    ds_b = 0.01 * jax.random.normal(keys[7], (2 * C,), jnp.float32)

    def maxdiff(a, b):
        return float(jnp.max(jnp.abs(a.astype(jnp.float32) - b.astype(jnp.float32))))

    # PatchMergingV2
    out = jax.block_until_ready(
        patch_merging_pallas(x, pm_gamma, pm_beta, pm_w, version="v2"))
    ref = ref_patch_merging(x, pm_gamma, pm_beta, pm_w, "v2")
    assert out.shape == (B, S // 2, S // 2, S // 2, 2 * C)
    assert maxdiff(out, ref) < 2e-2, maxdiff(out, ref)

    # legacy PatchMerging (duplicate-slice ordering)
    out = jax.block_until_ready(
        patch_merging_pallas(x, pm_gamma, pm_beta, pm_w, version="v1"))
    ref = ref_patch_merging(x, pm_gamma, pm_beta, pm_w, "v1")
    assert maxdiff(out, ref) < 2e-2, maxdiff(out, ref)

    # downsample_conv (the default `downsample` of tokenmixers)
    out = jax.block_until_ready(
        downsample_conv_pallas(x, ds_gamma, ds_beta, ds_w, ds_b))
    ref = ref_downsample_conv(x, ds_gamma, ds_beta, ds_w, ds_b)
    assert out.shape == (B, S // 2, S // 2, S // 2, 2 * C)
    assert maxdiff(out, ref) < 2e-2, maxdiff(out, ref)

    # bf16 activations across HBM (LN math / accumulation stay f32 in-kernel)
    out = jax.block_until_ready(
        patch_merging_pallas(x.astype(jnp.bfloat16), pm_gamma, pm_beta, pm_w,
                             version="v2", out_dtype=jnp.bfloat16))
    ref = ref_patch_merging(x, pm_gamma, pm_beta, pm_w, "v2")
    assert out.dtype == jnp.dtype(jnp.bfloat16)
    assert maxdiff(out, ref) < 8e-2, maxdiff(out, ref)

    # unaligned half-width (w2=6 -> padded to 8 inside the fused path)
    x_odd = jax.random.normal(keys[8], (1, 12, 12, 12, C), jnp.float32)
    out = jax.block_until_ready(
        downsample_conv_pallas(x_odd, ds_gamma, ds_beta, ds_w, ds_b))
    ref = ref_downsample_conv(x_odd, ds_gamma, ds_beta, ds_w, ds_b)
    assert maxdiff(out, ref) < 2e-2, maxdiff(out, ref)

    # odd spatial dims for PatchMerging (parity pad + alignment pad)
    x_odd2 = x_odd[:, :11, :11, :11, :]
    out = jax.block_until_ready(
        patch_merging_pallas(x_odd2, pm_gamma, pm_beta, pm_w, version="v2"))
    ref = ref_patch_merging(x_odd2, pm_gamma, pm_beta, pm_w, "v2")
    assert out.shape == (1, 6, 6, 6, 2 * C)
    assert maxdiff(out, ref) < 2e-2, maxdiff(out, ref)

    print("KERNEL_OK")
</pallas_src>

<mosaic_0001>
module attributes {stable_mosaic.version = 11 : i64} {
  func.func @_mixer_kernel(%arg0: i32, %arg1: i32, %arg2: memref<8x1x8x1x8x48xf32, #tpu.memory_space<vmem>>, %arg3: memref<8x1x8x1x8x48xf32, #tpu.memory_space<vmem>>, %arg4: memref<8x1x8x1x8x48xf32, #tpu.memory_space<vmem>>, %arg5: memref<8x1x8x1x8x48xf32, #tpu.memory_space<vmem>>, %arg6: memref<4x48xf32, #tpu.memory_space<vmem>>, %arg7: memref<4x48x48xbf16, #tpu.memory_space<vmem>>, %arg8: memref<1x48xf32, #tpu.memory_space<vmem>>, %arg9: memref<8x64x48xf32, #tpu.memory_space<vmem>>) attributes {dimension_semantics = [#tpu.dimension_semantics<parallel>, #tpu.dimension_semantics<parallel>], iteration_bounds = array<i64: 2, 1>, scalar_prefetch = 0 : i64, scratch_operands = 0 : i64, tpu.core_type = #tpu.core_type<tc>, window_params = [{transform_indices = @transform_0, window_bounds = array<i64: 8, 1, 8, 1, 8, 48>}, {transform_indices = @transform_1, window_bounds = array<i64: 8, 1, 8, 1, 8, 48>}, {transform_indices = @transform_2, window_bounds = array<i64: 8, 1, 8, 1, 8, 48>}, {transform_indices = @transform_3, window_bounds = array<i64: 8, 1, 8, 1, 8, 48>}, {pipeline_mode = #tpu.pipeline_mode<synchronous>, transform_indices = @transform_4, window_bounds = array<i64: 4, 48>}, {pipeline_mode = #tpu.pipeline_mode<synchronous>, transform_indices = @transform_5, window_bounds = array<i64: 4, 48, 48>}, {pipeline_mode = #tpu.pipeline_mode<synchronous>, transform_indices = @transform_6, window_bounds = array<i64: 1, 48>}, {transform_indices = @transform_7, window_bounds = array<i64: 8, 64, 48>}]} {
    %c0 = arith.constant 0 : index
    %c0_0 = arith.constant 0 : index
    %c0_1 = arith.constant 0 : index
    %c0_2 = arith.constant 0 : index
    %c0_3 = arith.constant 0 : index
    %c0_4 = arith.constant 0 : index
    %0 = vector.load %arg2[%c0, %c0_0, %c0_1, %c0_2, %c0_3, %c0_4] : memref<8x1x8x1x8x48xf32, #tpu.memory_space<vmem>>, vector<8x1x8x1x8x48xf32>
    %1 = vector.shape_cast %0 : vector<8x1x8x1x8x48xf32> to vector<8x8x8x48xf32>
    %2 = vector.shape_cast %1 : vector<8x8x8x48xf32> to vector<512x48xf32>
    %c0_5 = arith.constant 0 : index
    %c0_6 = arith.constant 0 : index
    %c0_7 = arith.constant 0 : index
    %c0_8 = arith.constant 0 : index
    %c0_9 = arith.constant 0 : index
    %c0_10 = arith.constant 0 : index
    %3 = vector.load %arg3[%c0_5, %c0_6, %c0_7, %c0_8, %c0_9, %c0_10] : memref<8x1x8x1x8x48xf32, #tpu.memory_space<vmem>>, vector<8x1x8x1x8x48xf32>
    %4 = vector.shape_cast %3 : vector<8x1x8x1x8x48xf32> to vector<8x8x8x48xf32>
    %5 = vector.shape_cast %4 : vector<8x8x8x48xf32> to vector<512x48xf32>
    %6 = arith.addf %2, %5 : vector<512x48xf32>
    %c0_11 = arith.constant 0 : index
    %c0_12 = arith.constant 0 : index
    %c0_13 = arith.constant 0 : index
    %c0_14 = arith.constant 0 : index
    %c0_15 = arith.constant 0 : index
    %c0_16 = arith.constant 0 : index
    %7 = vector.load %arg4[%c0_11, %c0_12, %c0_13, %c0_14, %c0_15, %c0_16] : memref<8x1x8x1x8x48xf32, #tpu.memory_space<vmem>>, vector<8x1x8x1x8x48xf32>
    %8 = vector.shape_cast %7 : vector<8x1x8x1x8x48xf32> to vector<8x8x8x48xf32>
    %9 = vector.shape_cast %8 : vector<8x8x8x48xf32> to vector<512x48xf32>
    %10 = arith.addf %6, %9 : vector<512x48xf32>
    %c0_17 = arith.constant 0 : index
    %c0_18 = arith.constant 0 : index
    %c0_19 = arith.constant 0 : index
    %c0_20 = arith.constant 0 : index
    %c0_21 = arith.constant 0 : index
    %c0_22 = arith.constant 0 : index
    %11 = vector.load %arg5[%c0_17, %c0_18, %c0_19, %c0_20, %c0_21, %c0_22] : memref<8x1x8x1x8x48xf32, #tpu.memory_space<vmem>>, vector<8x1x8x1x8x48xf32>
    %12 = vector.shape_cast %11 : vector<8x1x8x1x8x48xf32> to vector<8x8x8x48xf32>
    %13 = vector.shape_cast %12 : vector<8x8x8x48xf32> to vector<512x48xf32>
    %14 = arith.addf %10, %13 : vector<512x48xf32>
    %cst = arith.constant dense<0.000000e+00> : vector<512xf32>
    %15 = vector.multi_reduction <add>, %14, %cst [1] : vector<512x48xf32> to vector<512xf32>
    %16 = vector.shape_cast %15 : vector<512xf32> to vector<512x1xf32>
    %cst_23 = arith.constant 0.00520833349 : f32
    %17 = vector.broadcast %cst_23 : f32 to vector<512x1xf32>
    %18 = arith.mulf %16, %17 : vector<512x1xf32>
    %c0_24 = arith.constant 0 : index
    %c0_25 = arith.constant 0 : index
    %c0_26 = arith.constant 0 : index
    %c0_27 = arith.constant 0 : index
    %c0_28 = arith.constant 0 : index
    %c0_29 = arith.constant 0 : index
    %19 = vector.load %arg2[%c0_24, %c0_25, %c0_26, %c0_27, %c0_28, %c0_29] : memref<8x1x8x1x8x48xf32, #tpu.memory_space<vmem>>, vector<8x1x8x1x8x48xf32>
    %20 = vector.shape_cast %19 : vector<8x1x8x1x8x48xf32> to vector<8x8x8x48xf32>
    %21 = vector.shape_cast %20 : vector<8x8x8x48xf32> to vector<512x48xf32>
    %22 = vector.broadcast %18 : vector<512x1xf32> to vector<512x48xf32>
    %23 = arith.subf %21, %22 : vector<512x48xf32>
    %24 = arith.mulf %23, %23 : vector<512x48xf32>
    %c0_30 = arith.constant 0 : index
    %c0_31 = arith.constant 0 : index
    %c0_32 = arith.constant 0 : index
    %c0_33 = arith.constant 0 : index
    %c0_34 = arith.constant 0 : index
    %c0_35 = arith.constant 0 : index
    %25 = vector.load %arg3[%c0_30, %c0_31, %c0_32, %c0_33, %c0_34, %c0_35] : memref<8x1x8x1x8x48xf32, #tpu.memory_space<vmem>>, vector<8x1x8x1x8x48xf32>
    %26 = vector.shape_cast %25 : vector<8x1x8x1x8x48xf32> to vector<8x8x8x48xf32>
    %27 = vector.shape_cast %26 : vector<8x8x8x48xf32> to vector<512x48xf32>
    %28 = vector.broadcast %18 : vector<512x1xf32> to vector<512x48xf32>
    %29 = arith.subf %27, %28 : vector<512x48xf32>
    %30 = arith.mulf %29, %29 : vector<512x48xf32>
    %31 = arith.addf %24, %30 : vector<512x48xf32>
    %c0_36 = arith.constant 0 : index
    %c0_37 = arith.constant 0 : index
    %c0_38 = arith.constant 0 : index
    %c0_39 = arith.constant 0 : index
    %c0_40 = arith.constant 0 : index
    %c0_41 = arith.constant 0 : index
    %32 = vector.load %arg4[%c0_36, %c0_37, %c0_38, %c0_39, %c0_40, %c0_41] : memref<8x1x8x1x8x48xf32, #tpu.memory_space<vmem>>, vector<8x1x8x1x8x48xf32>
    %33 = vector.shape_cast %32 : vector<8x1x8x1x8x48xf32> to vector<8x8x8x48xf32>
    %34 = vector.shape_cast %33 : vector<8x8x8x48xf32> to vector<512x48xf32>
    %35 = vector.broadcast %18 : vector<512x1xf32> to vector<512x48xf32>
    %36 = arith.subf %34, %35 : vector<512x48xf32>
    %37 = arith.mulf %36, %36 : vector<512x48xf32>
    %38 = arith.addf %31, %37 : vector<512x48xf32>
    %c0_42 = arith.constant 0 : index
    %c0_43 = arith.constant 0 : index
    %c0_44 = arith.constant 0 : index
    %c0_45 = arith.constant 0 : index
    %c0_46 = arith.constant 0 : index
    %c0_47 = arith.constant 0 : index
    %39 = vector.load %arg5[%c0_42, %c0_43, %c0_44, %c0_45, %c0_46, %c0_47] : memref<8x1x8x1x8x48xf32, #tpu.memory_space<vmem>>, vector<8x1x8x1x8x48xf32>
    %40 = vector.shape_cast %39 : vector<8x1x8x1x8x48xf32> to vector<8x8x8x48xf32>
    %41 = vector.shape_cast %40 : vector<8x8x8x48xf32> to vector<512x48xf32>
    %42 = vector.broadcast %18 : vector<512x1xf32> to vector<512x48xf32>
    %43 = arith.subf %41, %42 : vector<512x48xf32>
    %44 = arith.mulf %43, %43 : vector<512x48xf32>
    %45 = arith.addf %38, %44 : vector<512x48xf32>
    %cst_48 = arith.constant dense<0.000000e+00> : vector<512xf32>
    %46 = vector.multi_reduction <add>, %45, %cst_48 [1] : vector<512x48xf32> to vector<512xf32>
    %47 = vector.shape_cast %46 : vector<512xf32> to vector<512x1xf32>
    %cst_49 = arith.constant 0.00520833349 : f32
    %48 = vector.broadcast %cst_49 : f32 to vector<512x1xf32>
    %49 = arith.mulf %47, %48 : vector<512x1xf32>
    %cst_50 = arith.constant 9.99999974E-6 : f32
    %50 = vector.broadcast %cst_50 : f32 to vector<512x1xf32>
    %51 = arith.addf %49, %50 : vector<512x1xf32>
    %52 = math.rsqrt %51 : vector<512x1xf32>
    %c0_51 = arith.constant 0 : index
    %c0_52 = arith.constant 0 : index
    %c0_53 = arith.constant 0 : index
    %c0_54 = arith.constant 0 : index
    %c0_55 = arith.constant 0 : index
    %c0_56 = arith.constant 0 : index
    %53 = vector.load %arg2[%c0_51, %c0_52, %c0_53, %c0_54, %c0_55, %c0_56] : memref<8x1x8x1x8x48xf32, #tpu.memory_space<vmem>>, vector<8x1x8x1x8x48xf32>
    %54 = vector.shape_cast %53 : vector<8x1x8x1x8x48xf32> to vector<8x8x8x48xf32>
    %55 = vector.shape_cast %54 : vector<8x8x8x48xf32> to vector<512x48xf32>
    %56 = vector.broadcast %18 : vector<512x1xf32> to vector<512x48xf32>
    %57 = arith.subf %55, %56 : vector<512x48xf32>
    %58 = vector.broadcast %52 : vector<512x1xf32> to vector<512x48xf32>
    %59 = arith.mulf %57, %58 : vector<512x48xf32>
    %60 = arith.truncf %59 : vector<512x48xf32> to vector<512x48xbf16>
    %c0_57 = arith.constant 0 : index
    %c0_58 = arith.constant 0 : index
    %c0_59 = arith.constant 0 : index
    %61 = vector.load %arg7[%c0_57, %c0_58, %c0_59] : memref<4x48x48xbf16, #tpu.memory_space<vmem>>, vector<1x48x48xbf16>
    %62 = vector.shape_cast %61 : vector<1x48x48xbf16> to vector<48x48xbf16>
    %cst_60 = arith.constant dense<0.000000e+00> : vector<512x48xf32>
    %63 = tpu.matmul %60, %62, %cst_60 {dimension_numbers = #tpu.dot_dimension_numbers<[1], [0], [0], [1], [0, 0, 1, 1], [], []>} : vector<512x48xbf16>, vector<48x48xbf16>, vector<512x48xf32> -> vector<512x48xf32>
    %c0_61 = arith.constant 0 : index
    %c0_62 = arith.constant 0 : index
    %c0_63 = arith.constant 0 : index
    %c0_64 = arith.constant 0 : index
    %c0_65 = arith.constant 0 : index
    %c0_66 = arith.constant 0 : index
    %64 = vector.load %arg3[%c0_61, %c0_62, %c0_63, %c0_64, %c0_65, %c0_66] : memref<8x1x8x1x8x48xf32, #tpu.memory_space<vmem>>, vector<8x1x8x1x8x48xf32>
    %65 = vector.shape_cast %64 : vector<8x1x8x1x8x48xf32> to vector<8x8x8x48xf32>
    %66 = vector.shape_cast %65 : vector<8x8x8x48xf32> to vector<512x48xf32>
    %67 = vector.broadcast %18 : vector<512x1xf32> to vector<512x48xf32>
    %68 = arith.subf %66, %67 : vector<512x48xf32>
    %69 = vector.broadcast %52 : vector<512x1xf32> to vector<512x48xf32>
    %70 = arith.mulf %68, %69 : vector<512x48xf32>
    %71 = arith.truncf %70 : vector<512x48xf32> to vector<512x48xbf16>
    %c1 = arith.constant 1 : index
    %c0_67 = arith.constant 0 : index
    %c0_68 = arith.constant 0 : index
    %72 = vector.load %arg7[%c1, %c0_67, %c0_68] : memref<4x48x48xbf16, #tpu.memory_space<vmem>>, vector<1x48x48xbf16>
    %73 = vector.shape_cast %72 : vector<1x48x48xbf16> to vector<48x48xbf16>
    %cst_69 = arith.constant dense<0.000000e+00> : vector<512x48xf32>
    %74 = tpu.matmul %71, %73, %cst_69 {dimension_numbers = #tpu.dot_dimension_numbers<[1], [0], [0], [1], [0, 0, 1, 1], [], []>} : vector<512x48xbf16>, vector<48x48xbf16>, vector<512x48xf32> -> vector<512x48xf32>
    %75 = arith.addf %63, %74 : vector<512x48xf32>
    %c0_70 = arith.constant 0 : index
    %c0_71 = arith.constant 0 : index
    %c0_72 = arith.constant 0 : index
    %c0_73 = arith.constant 0 : index
    %c0_74 = arith.constant 0 : index
    %c0_75 = arith.constant 0 : index
    %76 = vector.load %arg4[%c0_70, %c0_71, %c0_72, %c0_73, %c0_74, %c0_75] : memref<8x1x8x1x8x48xf32, #tpu.memory_space<vmem>>, vector<8x1x8x1x8x48xf32>
    %77 = vector.shape_cast %76 : vector<8x1x8x1x8x48xf32> to vector<8x8x8x48xf32>
    %78 = vector.shape_cast %77 : vector<8x8x8x48xf32> to vector<512x48xf32>
    %79 = vector.broadcast %18 : vector<512x1xf32> to vector<512x48xf32>
    %80 = arith.subf %78, %79 : vector<512x48xf32>
    %81 = vector.broadcast %52 : vector<512x1xf32> to vector<512x48xf32>
    %82 = arith.mulf %80, %81 : vector<512x48xf32>
    %83 = arith.truncf %82 : vector<512x48xf32> to vector<512x48xbf16>
    %c2 = arith.constant 2 : index
    %c0_76 = arith.constant 0 : index
    %c0_77 = arith.constant 0 : index
    %84 = vector.load %arg7[%c2, %c0_76, %c0_77] : memref<4x48x48xbf16, #tpu.memory_space<vmem>>, vector<1x48x48xbf16>
    %85 = vector.shape_cast %84 : vector<1x48x48xbf16> to vector<48x48xbf16>
    %cst_78 = arith.constant dense<0.000000e+00> : vector<512x48xf32>
    %86 = tpu.matmul %83, %85, %cst_78 {dimension_numbers = #tpu.dot_dimension_numbers<[1], [0], [0], [1], [0, 0, 1, 1], [], []>} : vector<512x48xbf16>, vector<48x48xbf16>, vector<512x48xf32> -> vector<512x48xf32>
    %87 = arith.addf %75, %86 : vector<512x48xf32>
    %c0_79 = arith.constant 0 : index
    %c0_80 = arith.constant 0 : index
    %c0_81 = arith.constant 0 : index
    %c0_82 = arith.constant 0 : index
    %c0_83 = arith.constant 0 : index
    %c0_84 = arith.constant 0 : index
    %88 = vector.load %arg5[%c0_79, %c0_80, %c0_81, %c0_82, %c0_83, %c0_84] : memref<8x1x8x1x8x48xf32, #tpu.memory_space<vmem>>, vector<8x1x8x1x8x48xf32>
    %89 = vector.shape_cast %88 : vector<8x1x8x1x8x48xf32> to vector<8x8x8x48xf32>
    %90 = vector.shape_cast %89 : vector<8x8x8x48xf32> to vector<512x48xf32>
    %91 = vector.broadcast %18 : vector<512x1xf32> to vector<512x48xf32>
    %92 = arith.subf %90, %91 : vector<512x48xf32>
    %93 = vector.broadcast %52 : vector<512x1xf32> to vector<512x48xf32>
    %94 = arith.mulf %92, %93 : vector<512x48xf32>
    %95 = arith.truncf %94 : vector<512x48xf32> to vector<512x48xbf16>
    %c3 = arith.constant 3 : index
    %c0_85 = arith.constant 0 : index
    %c0_86 = arith.constant 0 : index
    %96 = vector.load %arg7[%c3, %c0_85, %c0_86] : memref<4x48x48xbf16, #tpu.memory_space<vmem>>, vector<1x48x48xbf16>
    %97 = vector.shape_cast %96 : vector<1x48x48xbf16> to vector<48x48xbf16>
    %cst_87 = arith.constant dense<0.000000e+00> : vector<512x48xf32>
    %98 = tpu.matmul %95, %97, %cst_87 {dimension_numbers = #tpu.dot_dimension_numbers<[1], [0], [0], [1], [0, 0, 1, 1], [], []>} : vector<512x48xbf16>, vector<48x48xbf16>, vector<512x48xf32> -> vector<512x48xf32>
    %99 = arith.addf %87, %98 : vector<512x48xf32>
    %c0_88 = arith.constant 0 : index
    %c0_89 = arith.constant 0 : index
    %100 = vector.load %arg8[%c0_88, %c0_89] : memref<1x48xf32, #tpu.memory_space<vmem>>, vector<1x48xf32>
    %101 = vector.broadcast %100 : vector<1x48xf32> to vector<512x48xf32>
    %102 = arith.addf %99, %101 : vector<512x48xf32>
    %103 = vector.shape_cast %102 : vector<512x48xf32> to vector<8x64x48xf32>
    %c0_90 = arith.constant 0 : index
    %c0_91 = arith.constant 0 : index
    %c0_92 = arith.constant 0 : index
    %104 = vector.load %arg9[%c0_90, %c0_91, %c0_92] : memref<8x64x48xf32, #tpu.memory_space<vmem>>, vector<8x64x48xf32>
    tpu.vector_store %arg9[%c0_90, %c0_91, %c0_92], %103 {strides = array<i32>} : memref<8x64x48xf32, #tpu.memory_space<vmem>>, vector<8x64x48xf32>,
    return
  }
  func.func @transform_0(%arg0: i32, %arg1: i32) -> (i32, i32, i32, i32, i32, i32) {
    %c0_i32 = arith.constant 0 : i32
    %c0_i32_0 = arith.constant 0 : i32
    %c0_i32_1 = arith.constant 0 : i32
    %c0_i32_2 = arith.constant 0 : i32
    %c0_i32_3 = arith.constant 0 : i32
    return %arg0, %c0_i32, %arg1, %c0_i32_0, %c0_i32_1, %c0_i32_2 : i32, i32, i32, i32, i32, i32
  }
  func.func @transform_1(%arg0: i32, %arg1: i32) -> (i32, i32, i32, i32, i32, i32) {
    %c0_i32 = arith.constant 0 : i32
    %c1_i32 = arith.constant 1 : i32
    %c0_i32_0 = arith.constant 0 : i32
    %c0_i32_1 = arith.constant 0 : i32
    %c0_i32_2 = arith.constant 0 : i32
    return %arg0, %c0_i32, %arg1, %c1_i32, %c0_i32_0, %c0_i32_1 : i32, i32, i32, i32, i32, i32
  }
  func.func @transform_2(%arg0: i32, %arg1: i32) -> (i32, i32, i32, i32, i32, i32) {
    %c1_i32 = arith.constant 1 : i32
    %c0_i32 = arith.constant 0 : i32
    %c0_i32_0 = arith.constant 0 : i32
    %c0_i32_1 = arith.constant 0 : i32
    %c0_i32_2 = arith.constant 0 : i32
    return %arg0, %c1_i32, %arg1, %c0_i32, %c0_i32_0, %c0_i32_1 : i32, i32, i32, i32, i32, i32
  }
  func.func @transform_3(%arg0: i32, %arg1: i32) -> (i32, i32, i32, i32, i32, i32) {
    %c1_i32 = arith.constant 1 : i32
    %c1_i32_0 = arith.constant 1 : i32
    %c0_i32 = arith.constant 0 : i32
    %c0_i32_1 = arith.constant 0 : i32
    %c0_i32_2 = arith.constant 0 : i32
    return %arg0, %c1_i32, %arg1, %c1_i32_0, %c0_i32, %c0_i32_1 : i32, i32, i32, i32, i32, i32
  }
  func.func @transform_4(%arg0: i32, %arg1: i32) -> (i32, i32) {
    %c0_i32 = arith.constant 0 : i32
    %c0_i32_0 = arith.constant 0 : i32
    %c0_i32_1 = arith.constant 0 : i32
    return %c0_i32, %c0_i32_0 : i32, i32
  }
  func.func @transform_5(%arg0: i32, %arg1: i32) -> (i32, i32, i32) {
    %c0_i32 = arith.constant 0 : i32
    %c0_i32_0 = arith.constant 0 : i32
    %c0_i32_1 = arith.constant 0 : i32
    %c0_i32_2 = arith.constant 0 : i32
    return %c0_i32, %c0_i32_0, %c0_i32_1 : i32, i32, i32
  }
  func.func @transform_6(%arg0: i32, %arg1: i32) -> (i32, i32) {
    %c0_i32 = arith.constant 0 : i32
    %c0_i32_0 = arith.constant 0 : i32
    %c0_i32_1 = arith.constant 0 : i32
    return %c0_i32, %c0_i32_0 : i32, i32
  }
  func.func @transform_7(%arg0: i32, %arg1: i32) -> (i32, i32, i32) {
    %c0_i32 = arith.constant 0 : i32
    %c0_i32_0 = arith.constant 0 : i32
    return %arg0, %arg1, %c0_i32 : i32, i32, i32
  }
}

</mosaic_0001>

<llo_original>
// kernel: patch_merging_pallas.1
$region0: #{patch_merging_pallas.1}
  #allocation0 [shape = 'u32[]', space=smem, size = 0x4, offset = 0x4, fixed_abs, tag = 'smem constant byte address 0x4 - core index']
  #allocation1 [shape = 'u32[144,128]{1,0:T(1,128)}', space=vmem, size = 0x12000, scoped, tag = 'internal scratch']
  %s0 = inlined_call_operand.vmem [shape: f32[16,2,8,2,8,48], index: 0, kind: input, shape index: {}, may-alias: {0,1,2,3}]
  %s1 = inlined_call_operand.vmem [shape: f32[16,2,8,2,8,48], index: 1, kind: input, shape index: {}, may-alias: {0,1,2,3}]
  %s2 = inlined_call_operand.vmem [shape: f32[16,2,8,2,8,48], index: 2, kind: input, shape index: {}, may-alias: {0,1,2,3}]
  %s3 = inlined_call_operand.vmem [shape: f32[16,2,8,2,8,48], index: 3, kind: input, shape index: {}, may-alias: {0,1,2,3}]
  %s4 = inlined_call_operand.vmem [shape: f32[4,48], index: 4, kind: input, shape index: {}]
  %s5 = inlined_call_operand.vmem [shape: bf16[4,48,48], index: 5, kind: input, shape index: {}]
  %s6 = inlined_call_operand.vmem [shape: f32[1,48], index: 6, kind: input, shape index: {}]
  %s7 = inlined_call_operand.hbm [shape: f32[16,64,48], index: 7, kind: output, shape index: {}]
  %s8 = sld [smem:[#allocation0]]
  $region213: #{patch_merging_pallas.1} parent=0
    _
  %s10 = ssub.s32 1, %s8
  %s11 = scalar_select 0, %s10, %s8
  $region1: #{patch_merging_pallas.1} parent=0
    #allocation2 [shape = 'u8[524288]{0}', space=vmem, size = 0x80000, scoped, tag = 'input window, operand 0']
    #allocation3 [shape = 'u8[524288]{0}', space=vmem, size = 0x80000, scoped, tag = 'input window, operand 1']
    #allocation4 [shape = 'u8[524288]{0}', space=vmem, size = 0x80000, scoped, tag = 'input window, operand 2']
    #allocation5 [shape = 'u8[524288]{0}', space=vmem, size = 0x80000, scoped, tag = 'input window, operand 3']
    #allocation6 [shape = 'u8[524288]{0}', space=vmem, size = 0x80000, scoped, tag = 'output window, operand 0']
    #allocation7 [shape = 's32[2]{0}', space=sflag, size = 0x8, scoped, tag = 'scoped memory for patch_merging_pallas.1']
    %12 = vsyncpa [#allocation7], 0
    %s13 = scalar_lea.sflag [#allocation7], 1
    %14 = vsyncpa %s13, 0
    loop: start=0, step=1, limit=4
    $region2: #{patch_merging_pallas.1} parent=1 // loop_pre_header
      _
    $region3: #{patch_merging_pallas.1} parent=1 // loop_header
      %s16 = sphi 0, %s20
      %p17 = scmp.ge.s32.totalorder %s16, 4
      %s23 = sphi 0, %s35
      %s24 = sphi 0, %s31
      %s25 = sphi 0, %s23
      %s26 = sphi 0, %s24
      %s27 = sphi 0, %s25
      %s28 = sphi 0, %s26
      %s40 = sphi 0, %s42
      %s43 = sphi 0, %s40
      %s44 = sphi 0, %s43
      %s60 = sphi 0, %s44
      %s68 = sphi 0, %s70
      %s71 = sphi 0, %s68
      %s72 = sphi 0, %s71
      %s88 = sphi 0, %s72
      %s96 = sphi 0, %s98
      %s99 = sphi 0, %s96
      %s100 = sphi 0, %s99
      %s116 = sphi 0, %s100
      %s124 = sphi 0, %s126
      %s127 = sphi 0, %s124
      %s128 = sphi 0, %s127
      %s144 = sphi 0, %s128
      %s148 = sphi 0, %s148
      %s150 = sphi 0, %s148
      %s151 = sphi 0, %s150
      %s165 = sphi 0, %s151
      %s169 = sphi 0, %s169
      %s171 = sphi 0, %s169
      %s172 = sphi 0, %s171
      %s186 = sphi 0, %s172
      %s190 = sphi 0, %s190
      %s192 = sphi 0, %s190
      %s193 = sphi 0, %s192
      %s207 = sphi 0, %s193
      %s215 = sphi 0, %s217
      %s218 = sphi 0, %s215
      %s219 = sphi 0, %s218
      %s235 = sphi 0, %s219
    $region4: #{patch_merging_pallas.1} parent=1 // loop_header_branch
      %19 = sbr.rel (%p17) target = $region8
    $region5: #{patch_merging_pallas.1} parent=1 // loop_body
      %s21 = ssub.s32 %s16, 1
      %s22 = ssub.s32 %s16, 2
      %s29 = sadd.s32 1, %s24
      %p30 = scmp.ge.s32.totalorder %s29, 1
      %s31 = scalar_select %p30, 0, %s29
      %s32 = sadd.s32 1, %s23
      %s33 = scalar_select %p30, %s32, %s23
      %p34 = scmp.ge.s32.totalorder %s33, 2
      %s35 = scalar_select %p34, 0, %s33
      %s36 = ssub.s32 %s23, %s35
      %s37 = ssub.s32 %s24, %s31
      %s38 = sor.u32 %s36, %s37
      %p39 = scmp.eq.s32.totalorder %s38, 0
      %s41 = sadd.s32 %s40, 1
      %s42 = scalar_select %p39, %s40, %s41
      %p45 = pneg %p39
      %p46 = scmp.eq.s32.totalorder %s16, 1
      %p47 = por %p45, %p46
      %p48 = scmp.ne.s32.totalorder %s40, %s43
      %p49 = scmp.eq.s32.totalorder %s16, 0
      %p50 = por %p48, %p49
      %p51 = scmp.ne.s32.totalorder %s40, %s43
      %p52 = scmp.eq.s32.totalorder %s21, 1
      %p53 = por %p51, %p52
      %p54 = scmp.ne.s32.totalorder %s43, %s44
      %p55 = scmp.eq.s32.totalorder %s21, 0
      %p56 = por %p54, %p55
      %p57 = scmp.ne.s32.totalorder %s43, %s44
      %p58 = scmp.eq.s32.totalorder %s22, 1
      %p59 = por %p57, %p58
      %p61 = scmp.ne.s32.totalorder %s44, %s60
      %p62 = scmp.eq.s32.totalorder %s22, 0
      %p63 = por %p61, %p62
      %s64 = ssub.s32 %s23, %s35
      %s65 = ssub.s32 %s24, %s31
      %s66 = sor.u32 %s64, %s65
      %p67 = scmp.eq.s32.totalorder %s66, 0
      %s69 = sadd.s32 %s68, 1
      %s70 = scalar_select %p67, %s68, %s69
      %p73 = pneg %p67
      %p74 = scmp.eq.s32.totalorder %s16, 1
      %p75 = por %p73, %p74
      %p76 = scmp.ne.s32.totalorder %s68, %s71
      %p77 = scmp.eq.s32.totalorder %s16, 0
      %p78 = por %p76, %p77
      %p79 = scmp.ne.s32.totalorder %s68, %s71
      %p80 = scmp.eq.s32.totalorder %s21, 1
      %p81 = por %p79, %p80
      %p82 = scmp.ne.s32.totalorder %s71, %s72
      %p83 = scmp.eq.s32.totalorder %s21, 0
      %p84 = por %p82, %p83
      %p85 = scmp.ne.s32.totalorder %s71, %s72
      %p86 = scmp.eq.s32.totalorder %s22, 1
      %p87 = por %p85, %p86
      %p89 = scmp.ne.s32.totalorder %s72, %s88
      %p90 = scmp.eq.s32.totalorder %s22, 0
      %p91 = por %p89, %p90
      %s92 = ssub.s32 %s23, %s35
      %s93 = ssub.s32 %s24, %s31
      %s94 = sor.u32 %s92, %s93
      %p95 = scmp.eq.s32.totalorder %s94, 0
      %s97 = sadd.s32 %s96, 1
      %s98 = scalar_select %p95, %s96, %s97
      %p101 = pneg %p95
      %p102 = scmp.eq.s32.totalorder %s16, 1
      %p103 = por %p101, %p102
      %p104 = scmp.ne.s32.totalorder %s96, %s99
      %p105 = scmp.eq.s32.totalorder %s16, 0
      %p106 = por %p104, %p105
      %p107 = scmp.ne.s32.totalorder %s96, %s99
      %p108 = scmp.eq.s32.totalorder %s21, 1
      %p109 = por %p107, %p108
      %p110 = scmp.ne.s32.totalorder %s99, %s100
      %p111 = scmp.eq.s32.totalorder %s21, 0
      %p112 = por %p110, %p111
      %p113 = scmp.ne.s32.totalorder %s99, %s100
      %p114 = scmp.eq.s32.totalorder %s22, 1
      %p115 = por %p113, %p114
      %p117 = scmp.ne.s32.totalorder %s100, %s116
      %p118 = scmp.eq.s32.totalorder %s22, 0
      %p119 = por %p117, %p118
      %s120 = ssub.s32 %s23, %s35
      %s121 = ssub.s32 %s24, %s31
      %s122 = sor.u32 %s120, %s121
      %p123 = scmp.eq.s32.totalorder %s122, 0
      %s125 = sadd.s32 %s124, 1
      %s126 = scalar_select %p123, %s124, %s125
      %p129 = pneg %p123
      %p130 = scmp.eq.s32.totalorder %s16, 1
      %p131 = por %p129, %p130
      %p132 = scmp.ne.s32.totalorder %s124, %s127
      %p133 = scmp.eq.s32.totalorder %s16, 0
      %p134 = por %p132, %p133
      %p135 = scmp.ne.s32.totalorder %s124, %s127
      %p136 = scmp.eq.s32.totalorder %s21, 1
      %p137 = por %p135, %p136
      %p138 = scmp.ne.s32.totalorder %s127, %s128
      %p139 = scmp.eq.s32.totalorder %s21, 0
      %p140 = por %p138, %p139
      %p141 = scmp.ne.s32.totalorder %s127, %s128
      %p142 = scmp.eq.s32.totalorder %s22, 1
      %p143 = por %p141, %p142
      %p145 = scmp.ne.s32.totalorder %s128, %s144
      %p146 = scmp.eq.s32.totalorder %s22, 0
      %p147 = por %p145, %p146
      %s149 = sadd.s32 %s148, 1
      %p152 = scmp.eq.s32.totalorder %s16, 1
      %p153 = scmp.ne.s32.totalorder %s148, %s150
      %p154 = scmp.eq.s32.totalorder %s16, 0
      %p155 = por %p153, %p154
      %p156 = scmp.ne.s32.totalorder %s148, %s150
      %p157 = scmp.eq.s32.totalorder %s21, 1
      %p158 = por %p156, %p157
      %p159 = scmp.ne.s32.totalorder %s150, %s151
      %p160 = scmp.eq.s32.totalorder %s21, 0
      %p161 = por %p159, %p160
      %p162 = scmp.ne.s32.totalorder %s150, %s151
      %p163 = scmp.eq.s32.totalorder %s22, 1
      %p164 = por %p162, %p163
      %p166 = scmp.ne.s32.totalorder %s151, %s165
      %p167 = scmp.eq.s32.totalorder %s22, 0
      %p168 = por %p166, %p167
      %s170 = sadd.s32 %s169, 1
      %p173 = scmp.eq.s32.totalorder %s16, 1
      %p174 = scmp.ne.s32.totalorder %s169, %s171
      %p175 = scmp.eq.s32.totalorder %s16, 0
      %p176 = por %p174, %p175
      %p177 = scmp.ne.s32.totalorder %s169, %s171
      %p178 = scmp.eq.s32.totalorder %s21, 1
      %p179 = por %p177, %p178
      %p180 = scmp.ne.s32.totalorder %s171, %s172
      %p181 = scmp.eq.s32.totalorder %s21, 0
      %p182 = por %p180, %p181
      %p183 = scmp.ne.s32.totalorder %s171, %s172
      %p184 = scmp.eq.s32.totalorder %s22, 1
      %p185 = por %p183, %p184
      %p187 = scmp.ne.s32.totalorder %s172, %s186
      %p188 = scmp.eq.s32.totalorder %s22, 0
      %p189 = por %p187, %p188
      %s191 = sadd.s32 %s190, 1
      %p194 = scmp.eq.s32.totalorder %s16, 1
      %p195 = scmp.ne.s32.totalorder %s190, %s192
      %p196 = scmp.eq.s32.totalorder %s16, 0
      %p197 = por %p195, %p196
      %p198 = scmp.ne.s32.totalorder %s190, %s192
      %p199 = scmp.eq.s32.totalorder %s21, 1
      %p200 = por %p198, %p199
      %p201 = scmp.ne.s32.totalorder %s192, %s193
      %p202 = scmp.eq.s32.totalorder %s21, 0
      %p203 = por %p201, %p202
      %p204 = scmp.ne.s32.totalorder %s192, %s193
      %p205 = scmp.eq.s32.totalorder %s22, 1
      %p206 = por %p204, %p205
      %p208 = scmp.ne.s32.totalorder %s193, %s207
      %p209 = scmp.eq.s32.totalorder %s22, 0
      %p210 = por %p208, %p209
      %s211 = ssub.s32 %s23, %s35
      %s212 = ssub.s32 %s24, %s31
      %s213 = sor.u32 %s211, %s212
      %p214 = scmp.eq.s32.totalorder %s213, 0
      %s216 = sadd.s32 %s215, 1
      %s217 = scalar_select %p214, %s215, %s216
      %p220 = pneg %p214
      %p221 = scmp.eq.s32.totalorder %s16, 1
      %p222 = por %p220, %p221
      %p223 = scmp.ne.s32.totalorder %s215, %s218
      %p224 = scmp.eq.s32.totalorder %s16, 0
      %p225 = por %p223, %p224
      %p226 = scmp.ne.s32.totalorder %s215, %s218
      %p227 = scmp.eq.s32.totalorder %s21, 1
      %p228 = por %p226, %p227
      %p229 = scmp.ne.s32.totalorder %s218, %s219
      %p230 = scmp.eq.s32.totalorder %s21, 0
      %p231 = por %p229, %p230
      %p232 = scmp.ne.s32.totalorder %s218, %s219
      %p233 = scmp.eq.s32.totalorder %s22, 1
      %p234 = por %p232, %p233
      %p236 = scmp.ne.s32.totalorder %s219, %s235
      %p237 = scmp.eq.s32.totalorder %s22, 0
      %p238 = por %p236, %p237
      %p239 = scmp.le.s32.totalorder 1, %s16
      %p240 = scmp.lt.s32.totalorder %s16, 3
      %p241 = pnand %p239, %p240
      %p242 = pneg %p241
      // Predicated region
      $region9: #{patch_merging_pallas.1} parent=5 // pred_check
        _
      $region10: #{patch_merging_pallas.1} parent=5 // pred_check_branch
        %244 = sbr.rel (%p241) target = $region12
      $region11: #{patch_merging_pallas.1} parent=5 // pred_region
        %s245 = ssub.s32 %s16, 1
        // Predicated region
        $region13: #{patch_merging_pallas.1} parent=11 // pred_check
          %p246 = pneg %p161
        $region14: #{patch_merging_pallas.1} parent=11 // pred_check_branch
          %248 = sbr.rel (%p246) target = $region16
        $region15: #{patch_merging_pallas.1} parent=11 // pred_region
          _
        $region16: #{patch_merging_pallas.1} parent=11 // pred_fallthru
          _
        // Predicated region
        $region17: #{patch_merging_pallas.1} parent=11 // pred_check
          %p249 = pneg %p182
        $region18: #{patch_merging_pallas.1} parent=11 // pred_check_branch
          %251 = sbr.rel (%p249) target = $region20
        $region19: #{patch_merging_pallas.1} parent=11 // pred_region
          _
        $region20: #{patch_merging_pallas.1} parent=11 // pred_fallthru
          _
        // Predicated region
        $region21: #{patch_merging_pallas.1} parent=11 // pred_check
          %p252 = pneg %p203
        $region22: #{patch_merging_pallas.1} parent=11 // pred_check_branch
          %254 = sbr.rel (%p252) target = $region24
        $region23: #{patch_merging_pallas.1} parent=11 // pred_region
          _
        $region24: #{patch_merging_pallas.1} parent=11 // pred_fallthru
          _
      $region12: #{patch_merging_pallas.1} parent=5 // pred_fallthru
        _
      %p255 = scmp.lt.s32.totalorder %s16, 2
      // Predicated region
      $region25: #{patch_merging_pallas.1} parent=5 // pred_check
        %p256 = pneg %p255
      $region26: #{patch_merging_pallas.1} parent=5 // pred_check_branch
        %258 = sbr.rel (%p256) target = $region28
      $region27: #{patch_merging_pallas.1} parent=5 // pred_region
        // Predicated region
        $region29: #{patch_merging_pallas.1} parent=27 // pred_check
          %p259 = pneg %p50
        $region30: #{patch_merging_pallas.1} parent=27 // pred_check_branch
          %261 = sbr.rel (%p259) target = $region32
        $region31: #{patch_merging_pallas.1} parent=27 // pred_region
          %s262 = sand.u32 %s40, 1
          %s263 = sand.u32 %s40, 1
          %s264 = smul.addr %s263, 512
          %s265 = scalar_lea.vmem [#allocation2], %s264
          %s266 = smul.u32 8, %s23
          %s267 = smul.u32 8, %s24
          %s268 = smul.addr %s267, 2
          %s269 = smul.addr %s266, 32
          %s270 = sadd.s32 %s268, %s269
          %s271 = smul.addr %s270, 8
          %s272 = scalar_lea.vmem %s0, %s271
          // Predicated region
          $region33: #{patch_merging_pallas.1} parent=31 // pred_check
            _
          $region34: #{patch_merging_pallas.1} parent=31 // pred_check_branch
            %274 = sbr.rel (0) target = $region36
          $region35: #{patch_merging_pallas.1} parent=31 // pred_region
            // Predicated region
            $region37: #{patch_merging_pallas.1} parent=35 // pred_check
              _
            $region38: #{patch_merging_pallas.1} parent=35 // pred_check_branch
              %276 = sbr.rel (0) target = $region40
            $region39: #{patch_merging_pallas.1} parent=35 // pred_region
              // Predicated region
              $region52: #{patch_merging_pallas.1} parent=39 // pred_check
                _
              $region53: #{patch_merging_pallas.1} parent=39 // pred_check_branch
                %418 = sbr.rel (0) target = $region55
              $region54: #{patch_merging_pallas.1} parent=39 // pred_region
                loop: start=0, step=1, limit=1
                $region56: #{patch_merging_pallas.1} parent=54 // loop_pre_header
                  _
                $region57: #{patch_merging_pallas.1} parent=54 // loop_header
                  %s420 = sphi 0, %s424
                  %p421 = scmp.ge.s32.totalorder %s420, 1
                  %s425 = sphi %s272, %s272
                  %s426 = sphi %s265, %s265
                $region58: #{patch_merging_pallas.1} parent=54 // loop_header_branch
                  %423 = sbr.rel (%p421) target = $region62
                $region59: #{patch_merging_pallas.1} parent=54 // loop_body
                  %v427 = vld [vmem:[%s425] sm:$0xff]
                  %428 = vst [vmem:[%s426] sm:$0xff] %v427
                  %v429 = vld [vmem:[%s425 + $0x10] sm:$0xff]
                  %430 = vst [vmem:[%s426 + $0x8] sm:$0xff] %v429
                  %v431 = vld [vmem:[%s425 + $0x20] sm:$0xff]
                  %432 = vst [vmem:[%s426 + $0x10] sm:$0xff] %v431
                  %v433 = vld [vmem:[%s425 + $0x30] sm:$0xff]
                  %434 = vst [vmem:[%s426 + $0x18] sm:$0xff] %v433
                  %v435 = vld [vmem:[%s425 + $0x40] sm:$0xff]
                  %436 = vst [vmem:[%s426 + $0x20] sm:$0xff] %v435
                  %v437 = vld [vmem:[%s425 + $0x50] sm:$0xff]
                  %438 = vst [vmem:[%s426 + $0x28] sm:$0xff] %v437
                  %v439 = vld [vmem:[%s425 + $0x60] sm:$0xff]
                  %440 = vst [vmem:[%s426 + $0x30] sm:$0xff] %v439
                  %v441 = vld [vmem:[%s425 + $0x70] sm:$0xff]
                  %442 = vst [vmem:[%s426 + $0x38] sm:$0xff] %v441
                  %v443 = vld [vmem:[%s425 + $0x100] sm:$0xff]
                  %444 = vst [vmem:[%s426 + $0x40] sm:$0xff] %v443
                  %v445 = vld [vmem:[%s425 + $0x110] sm:$0xff]
                  %446 = vst [vmem:[%s426 + $0x48] sm:$0xff] %v445
                  %v447 = vld [vmem:[%s425 + $0x120] sm:$0xff]
                  %448 = vst [vmem:[%s426 + $0x50] sm:$0xff] %v447
                  %v449 = vld [vmem:[%s425 + $0x130] sm:$0xff]
                  %450 = vst [vmem:[%s426 + $0x58] sm:$0xff] %v449
                  %v451 = vld [vmem:[%s425 + $0x140] sm:$0xff]
                  %452 = vst [vmem:[%s426 + $0x60] sm:$0xff] %v451
                  %v453 = vld [vmem:[%s425 + $0x150] sm:$0xff]
                  %454 = vst [vmem:[%s426 + $0x68] sm:$0xff] %v453
                  %v455 = vld [vmem:[%s425 + $0x160] sm:$0xff]
                  %456 = vst [vmem:[%s426 + $0x70] sm:$0xff] %v455
                  %v457 = vld [vmem:[%s425 + $0x170] sm:$0xff]
                  %458 = vst [vmem:[%s426 + $0x78] sm:$0xff] %v457
                  %v459 = vld [vmem:[%s425 + $0x200] sm:$0xff]
                  %460 = vst [vmem:[%s426 + $0x80] sm:$0xff] %v459
                  %v461 = vld [vmem:[%s425 + $0x210] sm:$0xff]
                  %462 = vst [vmem:[%s426 + $0x88] sm:$0xff] %v461
                  %v463 = vld [vmem:[%s425 + $0x220] sm:$0xff]
                  %464 = vst [vmem:[%s426 + $0x90] sm:$0xff] %v463
                  %v465 = vld [vmem:[%s425 + $0x230] sm:$0xff]
                  %466 = vst [vmem:[%s426 + $0x98] sm:$0xff] %v465
                  %v467 = vld [vmem:[%s425 + $0x240] sm:$0xff]
                  %468 = vst [vmem:[%s426 + $0xa0] sm:$0xff] %v467
                  %v469 = vld [vmem:[%s425 + $0x250] sm:$0xff]
                  %470 = vst [vmem:[%s426 + $0xa8] sm:$0xff] %v469
                  %v471 = vld [vmem:[%s425 + $0x260] sm:$0xff]
                  %472 = vst [vmem:[%s426 + $0xb0] sm:$0xff] %v471
                  %v473 = vld [vmem:[%s425 + $0x270] sm:$0xff]
                  %474 = vst [vmem:[%s426 + $0xb8] sm:$0xff] %v473
                  %v475 = vld [vmem:[%s425 + $0x300] sm:$0xff]
                  %476 = vst [vmem:[%s426 + $0xc0] sm:$0xff] %v475
                  %v477 = vld [vmem:[%s425 + $0x310] sm:$0xff]
                  %478 = vst [vmem:[%s426 + $0xc8] sm:$0xff] %v477
                  %v479 = vld [vmem:[%s425 + $0x320] sm:$0xff]
                  %480 = vst [vmem:[%s426 + $0xd0] sm:$0xff] %v479
                  %v481 = vld [vmem:[%s425 + $0x330] sm:$0xff]
                  %482 = vst [vmem:[%s426 + $0xd8] sm:$0xff] %v481
                  %v483 = vld [vmem:[%s425 + $0x340] sm:$0xff]
                  %484 = vst [vmem:[%s426 + $0xe0] sm:$0xff] %v483
                  %v485 = vld [vmem:[%s425 + $0x350] sm:$0xff]
                  %486 = vst [vmem:[%s426 + $0xe8] sm:$0xff] %v485
                  %v487 = vld [vmem:[%s425 + $0x360] sm:$0xff]
                  %488 = vst [vmem:[%s426 + $0xf0] sm:$0xff] %v487
                  %v489 = vld [vmem:[%s425 + $0x370] sm:$0xff]
                  %490 = vst [vmem:[%s426 + $0xf8] sm:$0xff] %v489
                  %v491 = vld [vmem:[%s425 + $0x400] sm:$0xff]
                  %492 = vst [vmem:[%s426 + $0x100] sm:$0xff] %v491
                  %v493 = vld [vmem:[%s425 + $0x410] sm:$0xff]
                  %494 = vst [vmem:[%s426 + $0x108] sm:$0xff] %v493
                  %v495 = vld [vmem:[%s425 + $0x420] sm:$0xff]
                  %496 = vst [vmem:[%s426 + $0x110] sm:$0xff] %v495
                  %v497 = vld [vmem:[%s425 + $0x430] sm:$0xff]
                  %498 = vst [vmem:[%s426 + $0x118] sm:$0xff] %v497
                  %v499 = vld [vmem:[%s425 + $0x440] sm:$0xff]
                  %500 = vst [vmem:[%s426 + $0x120] sm:$0xff] %v499
                  %v501 = vld [vmem:[%s425 + $0x450] sm:$0xff]
                  %502 = vst [vmem:[%s426 + $0x128] sm:$0xff] %v501
                  %v503 = vld [vmem:[%s425 + $0x460] sm:$0xff]
                  %504 = vst [vmem:[%s426 + $0x130] sm:$0xff] %v503
                  %v505 = vld [vmem:[%s425 + $0x470] sm:$0xff]
                  %506 = vst [vmem:[%s426 + $0x138] sm:$0xff] %v505
                  %v507 = vld [vmem:[%s425 + $0x500] sm:$0xff]
                  %508 = vst [vmem:[%s426 + $0x140] sm:$0xff] %v507
                  %v509 = vld [vmem:[%s425 + $0x510] sm:$0xff]
                  %510 = vst [vmem:[%s426 + $0x148] sm:$0xff] %v509
                  %v511 = vld [vmem:[%s425 + $0x520] sm:$0xff]
                  %512 = vst [vmem:[%s426 + $0x150] sm:$0xff] %v511
                  %v513 = vld [vmem:[%s425 + $0x530] sm:$0xff]
                  %514 = vst [vmem:[%s426 + $0x158] sm:$0xff] %v513
                  %v515 = vld [vmem:[%s425 + $0x540] sm:$0xff]
                  %516 = vst [vmem:[%s426 + $0x160] sm:$0xff] %v515
                  %v517 = vld [vmem:[%s425 + $0x550] sm:$0xff]
                  %518 = vst [vmem:[%s426 + $0x168] sm:$0xff] %v517
                  %v519 = vld [vmem:[%s425 + $0x560] sm:$0xff]
                  %520 = vst [vmem:[%s426 + $0x170] sm:$0xff] %v519
                  %v521 = vld [vmem:[%s425 + $0x570] sm:$0xff]
                  %522 = vst [vmem:[%s426 + $0x178] sm:$0xff] %v521
                  %v523 = vld [vmem:[%s425 + $0x600] sm:$0xff]
                  %524 = vst [vmem:[%s426 + $0x180] sm:$0xff] %v523
                  %v525 = vld [vmem:[%s425 + $0x610] sm:$0xff]
                  %526 = vst [vmem:[%s426 + $0x188] sm:$0xff] %v525
                  %v527 = vld [vmem:[%s425 + $0x620] sm:$0xff]
                  %528 = vst [vmem:[%s426 + $0x190] sm:$0xff] %v527
                  %v529 = vld [vmem:[%s425 + $0x630] sm:$0xff]
                  %530 = vst [vmem:[%s426 + $0x198] sm:$0xff] %v529
                  %v531 = vld [vmem:[%s425 + $0x640] sm:$0xff]
                  %532 = vst [vmem:[%s426 + $0x1a0] sm:$0xff] %v531
                  %v533 = vld [vmem:[%s425 + $0x650] sm:$0xff]
                  %534 = vst [vmem:[%s426 + $0x1a8] sm:$0xff] %v533
                  %v535 = vld [vmem:[%s425 + $0x660] sm:$0xff]
                  %536 = vst [vmem:[%s426 + $0x1b0] sm:$0xff] %v535
                  %v537 = vld [vmem:[%s425 + $0x670] sm:$0xff]
                  %538 = vst [vmem:[%s426 + $0x1b8] sm:$0xff] %v537
                  %v539 = vld [vmem:[%s425 + $0x700] sm:$0xff]
                  %540 = vst [vmem:[%s426 + $0x1c0] sm:$0xff] %v539
                  %v541 = vld [vmem:[%s425 + $0x710] sm:$0xff]
                  %542 = vst [vmem:[%s426 + $0x1c8] sm:$0xff] %v541
                  %v543 = vld [vmem:[%s425 + $0x720] sm:$0xff]
                  %544 = vst [vmem:[%s426 + $0x1d0] sm:$0xff] %v543
                  %v545 = vld [vmem:[%s425 + $0x730] sm:$0xff]
                  %546 = vst [vmem:[%s426 + $0x1d8] sm:$0xff] %v545
                  %v547 = vld [vmem:[%s425 + $0x740] sm:$0xff]
                  %548 = vst [vmem:[%s426 + $0x1e0] sm:$0xff] %v547
                  %v549 = vld [vmem:[%s425 + $0x750] sm:$0xff]
                  %550 = vst [vmem:[%s426 + $0x1e8] sm:$0xff] %v549
                  %v551 = vld [vmem:[%s425 + $0x760] sm:$0xff]
                  %552 = vst [vmem:[%s426 + $0x1f0] sm:$0xff] %v551
                  %v553 = vld [vmem:[%s425 + $0x770] sm:$0xff]
                  %554 = vst [vmem:[%s426 + $0x1f8] sm:$0xff] %v553
                $region60: #{patch_merging_pallas.1} parent=54 // loop_footer
                  %s424 = sadd.s32 1, %s420
                $region61: #{patch_merging_pallas.1} parent=54 // loop_footer_branch
                  %419 = sbr.rel target = $region57
                $region62: #{patch_merging_pallas.1} parent=54 // loop_exit
                  _
              $region55: #{patch_merging_pallas.1} parent=39 // pred_fallthru
                _
              // Predicated region
              $region63: #{patch_merging_pallas.1} parent=39 // pred_check
                _
              $region64: #{patch_merging_pallas.1} parent=39 // pred_check_branch
                %556 = sbr.rel target = $region66
              $region65: #{patch_merging_pallas.1} parent=39 // pred_region
                _
              $region66: #{patch_merging_pallas.1} parent=39 // pred_fallthru
                _
            $region40: #{patch_merging_pallas.1} parent=35 // pred_fallthru
              _
            // Predicated region
            $region41: #{patch_merging_pallas.1} parent=35 // pred_check
              _
            $region42: #{patch_merging_pallas.1} parent=35 // pred_check_branch
              %278 = sbr.rel target = $region44
            $region43: #{patch_merging_pallas.1} parent=35 // pred_region
              %s280 = ssub.s32 256, 1
              loop: start=0, step=1, limit=1
              $region45: #{patch_merging_pallas.1} parent=43 // loop_pre_header
                _
              $region46: #{patch_merging_pallas.1} parent=43 // loop_header
                %s282 = sphi 0, %s286
                %p283 = scmp.ge.s32.totalorder %s282, 1
                %s287 = sphi %s272, %s272
                %s288 = sphi %s265, %s265
              $region47: #{patch_merging_pallas.1} parent=43 // loop_header_branch
                %285 = sbr.rel (%p283) target = $region51
              $region48: #{patch_merging_pallas.1} parent=43 // loop_body
                %v289 = vld [vmem:[%s287] sm:%s280]
                %290 = vst [vmem:[%s288] sm:%s280] %v289
                %v291 = vld [vmem:[%s287 + $0x10] sm:%s280]
                %292 = vst [vmem:[%s288 + $0x8] sm:%s280] %v291
                %v293 = vld [vmem:[%s287 + $0x20] sm:%s280]
                %294 = vst [vmem:[%s288 + $0x10] sm:%s280] %v293
                %v295 = vld [vmem:[%s287 + $0x30] sm:%s280]
                %296 = vst [vmem:[%s288 + $0x18] sm:%s280] %v295
                %v297 = vld [vmem:[%s287 + $0x40] sm:%s280]
                %298 = vst [vmem:[%s288 + $0x20] sm:%s280] %v297
                %v299 = vld [vmem:[%s287 + $0x50] sm:%s280]
                %300 = vst [vmem:[%s288 + $0x28] sm:%s280] %v299
                %v301 = vld [vmem:[%s287 + $0x60] sm:%s280]
                %302 = vst [vmem:[%s288 + $0x30] sm:%s280] %v301
                %v303 = vld [vmem:[%s287 + $0x70] sm:%s280]
                %304 = vst [vmem:[%s288 + $0x38] sm:%s280] %v303
                %v305 = vld [vmem:[%s287 + $0x100] sm:%s280]
                %306 = vst [vmem:[%s288 + $0x40] sm:%s280] %v305
                %v307 = vld [vmem:[%s287 + $0x110] sm:%s280]
                %308 = vst [vmem:[%s288 + $0x48] sm:%s280] %v307
                %v309 = vld [vmem:[%s287 + $0x120] sm:%s280]
                %310 = vst [vmem:[%s288 + $0x50] sm:%s280] %v309
                %v311 = vld [vmem:[%s287 + $0x130] sm:%s280]
                %312 = vst [vmem:[%s288 + $0x58] sm:%s280] %v311
                %v313 = vld [vmem:[%s287 + $0x140] sm:%s280]
                %314 = vst [vmem:[%s288 + $0x60] sm:%s280] %v313
                %v315 = vld [vmem:[%s287 + $0x150] sm:%s280]
                %316 = vst [vmem:[%s288 + $0x68] sm:%s280] %v315
                %v317 = vld [vmem:[%s287 + $0x160] sm:%s280]
                %318 = vst [vmem:[%s288 + $0x70] sm:%s280] %v317
                %v319 = vld [vmem:[%s287 + $0x170] sm:%s280]
                %320 = vst [vmem:[%s288 + $0x78] sm:%s280] %v319
                %v321 = vld [vmem:[%s287 + $0x200] sm:%s280]
                %322 = vst [vmem:[%s288 + $0x80] sm:%s280] %v321
                %v323 = vld [vmem:[%s287 + $0x210] sm:%s280]
                %324 = vst [vmem:[%s288 + $0x88] sm:%s280] %v323
                %v325 = vld [vmem:[%s287 + $0x220] sm:%s280]
                %326 = vst [vmem:[%s288 + $0x90] sm:%s280] %v325
                %v327 = vld [vmem:[%s287 + $0x230] sm:%s280]
                %328 = vst [vmem:[%s288 + $0x98] sm:%s280] %v327
                %v329 = vld [vmem:[%s287 + $0x240] sm:%s280]
                %330 = vst [vmem:[%s288 + $0xa0] sm:%s280] %v329
                %v331 = vld [vmem:[%s287 + $0x250] sm:%s280]
                %332 = vst [vmem:[%s288 + $0xa8] sm:%s280] %v331
                %v333 = vld [vmem:[%s287 + $0x260] sm:%s280]
                %334 = vst [vmem:[%s288 + $0xb0] sm:%s280] %v333
                %v335 = vld [vmem:[%s287 + $0x270] sm:%s280]
                %336 = vst [vmem:[%s288 + $0xb8] sm:%s280] %v335
                %v337 = vld [vmem:[%s287 + $0x300] sm:%s280]
                %338 = vst [vmem:[%s288 + $0xc0] sm:%s280] %v337
                %v339 = vld [vmem:[%s287 + $0x310] sm:%s280]
                %340 = vst [vmem:[%s288 + $0xc8] sm:%s280] %v339
                %v341 = vld [vmem:[%s287 + $0x320] sm:%s280]
                %342 = vst [vmem:[%s288 + $0xd0] sm:%s280] %v341
                %v343 = vld [vmem:[%s287 + $0x330] sm:%s280]
                %344 = vst [vmem:[%s288 + $0xd8] sm:%s280] %v343
                %v345 = vld [vmem:[%s287 + $0x340] sm:%s280]
                %346 = vst [vmem:[%s288 + $0xe0] sm:%s280] %v345
                %v347 = vld [vmem:[%s287 + $0x350] sm:%s280]
                %348 = vst [vmem:[%s288 + $0xe8] sm:%s280] %v347
                %v349 = vld [vmem:[%s287 + $0x360] sm:%s280]
                %350 = vst [vmem:[%s288 + $0xf0] sm:%s280] %v349
                %v351 = vld [vmem:[%s287 + $0x370] sm:%s280]
                %352 = vst [vmem:[%s288 + $0xf8] sm:%s280] %v351
                %v353 = vld [vmem:[%s287 + $0x400] sm:%s280]
                %354 = vst [vmem:[%s288 + $0x100] sm:%s280] %v353
                %v355 = vld [vmem:[%s287 + $0x410] sm:%s280]
                %356 = vst [vmem:[%s288 + $0x108] sm:%s280] %v355
                %v357 = vld [vmem:[%s287 + $0x420] sm:%s280]
                %358 = vst [vmem:[%s288 + $0x110] sm:%s280] %v357
                %v359 = vld [vmem:[%s287 + $0x430] sm:%s280]
                %360 = vst [vmem:[%s288 + $0x118] sm:%s280] %v359
                %v361 = vld [vmem:[%s287 + $0x440] sm:%s280]
                %362 = vst [vmem:[%s288 + $0x120] sm:%s280] %v361
                %v363 = vld [vmem:[%s287 + $0x450] sm:%s280]
                %364 = vst [vmem:[%s288 + $0x128] sm:%s280] %v363
                %v365 = vld [vmem:[%s287 + $0x460] sm:%s280]
                %366 = vst [vmem:[%s288 + $0x130] sm:%s280] %v365
                %v367 = vld [vmem:[%s287 + $0x470] sm:%s280]
                %368 = vst [vmem:[%s288 + $0x138] sm:%s280] %v367
                %v369 = vld [vmem:[%s287 + $0x500] sm:%s280]
                %370 = vst [vmem:[%s288 + $0x140] sm:%s280] %v369
                %v371 = vld [vmem:[%s287 + $0x510] sm:%s280]
                %372 = vst [vmem:[%s288 + $0x148] sm:%s280] %v371
                %v373 = vld [vmem:[%s287 + $0x520] sm:%s280]
                %374 = vst [vmem:[%s288 + $0x150] sm:%s280] %v373
                %v375 = vld [vmem:[%s287 + $0x530] sm:%s280]
                %376 = vst [vmem:[%s288 + $0x158] sm:%s280] %v375
                %v377 = vld [vmem:[%s287 + $0x540] sm:%s280]
                %378 = vst [vmem:[%s288 + $0x160] sm:%s280] %v377
                %v379 = vld [vmem:[%s287 + $0x550] sm:%s280]
                %380 = vst [vmem:[%s288 + $0x168] sm:%s280] %v379
                %v381 = vld [vmem:[%s287 + $0x560] sm:%s280]
                %382 = vst [vmem:[%s288 + $0x170] sm:%s280] %v381
                %v383 = vld [vmem:[%s287 + $0x570] sm:%s280]
                %384 = vst [vmem:[%s288 + $0x178] sm:%s280] %v383
                %v385 = vld [vmem:[%s287 + $0x600] sm:%s280]
                %386 = vst [vmem:[%s288 + $0x180] sm:%s280] %v385
                %v387 = vld [vmem:[%s287 + $0x610] sm:%s280]
                %388 = vst [vmem:[%s288 + $0x188] sm:%s280] %v387
                %v389 = vld [vmem:[%s287 + $0x620] sm:%s280]
                %390 = vst [vmem:[%s288 + $0x190] sm:%s280] %v389
                %v391 = vld [vmem:[%s287 + $0x630] sm:%s280]
                %392 = vst [vmem:[%s288 + $0x198] sm:%s280] %v391
                %v393 = vld [vmem:[%s287 + $0x640] sm:%s280]
                %394 = vst [vmem:[%s288 + $0x1a0] sm:%s280] %v393
                %v395 = vld [vmem:[%s287 + $0x650] sm:%s280]
                %396 = vst [vmem:[%s288 + $0x1a8] sm:%s280] %v395
                %v397 = vld [vmem:[%s287 + $0x660] sm:%s280]
                %398 = vst [vmem:[%s288 + $0x1b0] sm:%s280] %v397
                %v399 = vld [vmem:[%s287 + $0x670] sm:%s280]
                %400 = vst [vmem:[%s288 + $0x1b8] sm:%s280] %v399
                %v401 = vld [vmem:[%s287 + $0x700] sm:%s280]
                %402 = vst [vmem:[%s288 + $0x1c0] sm:%s280] %v401
                %v403 = vld [vmem:[%s287 + $0x710] sm:%s280]
                %404 = vst [vmem:[%s288 + $0x1c8] sm:%s280] %v403
                %v405 = vld [vmem:[%s287 + $0x720] sm:%s280]
                %406 = vst [vmem:[%s288 + $0x1d0] sm:%s280] %v405
                %v407 = vld [vmem:[%s287 + $0x730] sm:%s280]
                %408 = vst [vmem:[%s288 + $0x1d8] sm:%s280] %v407
                %v409 = vld [vmem:[%s287 + $0x740] sm:%s280]
                %410 = vst [vmem:[%s288 + $0x1e0] sm:%s280] %v409
                %v411 = vld [vmem:[%s287 + $0x750] sm:%s280]
                %412 = vst [vmem:[%s288 + $0x1e8] sm:%s280] %v411
                %v413 = vld [vmem:[%s287 + $0x760] sm:%s280]
                %414 = vst [vmem:[%s288 + $0x1f0] sm:%s280] %v413
                %v415 = vld [vmem:[%s287 + $0x770] sm:%s280]
                %416 = vst [vmem:[%s288 + $0x1f8] sm:%s280] %v415
              $region49: #{patch_merging_pallas.1} parent=43 // loop_footer
                %s286 = sadd.s32 1, %s282
              $region50: #{patch_merging_pallas.1} parent=43 // loop_footer_branch
                %281 = sbr.rel target = $region46
              $region51: #{patch_merging_pallas.1} parent=43 // loop_exit
                _
            $region44: #{patch_merging_pallas.1} parent=35 // pred_fallthru
              _
          $region36: #{patch_merging_pallas.1} parent=31 // pred_fallthru
            _
          %557 = vnop
        $region32: #{patch_merging_pallas.1} parent=27 // pred_fallthru
          _
        // Predicated region
        $region67: #{patch_merging_pallas.1} parent=27 // pred_check
          %p558 = pneg %p78
        $region68: #{patch_merging_pallas.1} parent=27 // pred_check_branch
          %560 = sbr.rel (%p558) target = $region70
        $region69: #{patch_merging_pallas.1} parent=27 // pred_region
          %s561 = sand.u32 %s68, 1
          %s562 = sand.u32 %s68, 1
          %s563 = smul.addr %s562, 512
          %s564 = scalar_lea.vmem [#allocation3], %s563
          %s565 = smul.u32 8, %s23
          %s566 = smul.u32 8, %s24
          %s567 = smul.addr %s566, 2
          %s568 = sadd.s32 1, %s567
          %s569 = smul.addr %s565, 32
          %s570 = sadd.s32 %s568, %s569
          %s571 = smul.addr %s570, 8
          %s572 = scalar_lea.vmem %s1, %s571
          // Predicated region
          $region71: #{patch_merging_pallas.1} parent=69 // pred_check
            _
          $region72: #{patch_merging_pallas.1} parent=69 // pred_check_branch
            %574 = sbr.rel (0) target = $region74
          $region73: #{patch_merging_pallas.1} parent=69 // pred_region
            // Predicated region
            $region75: #{patch_merging_pallas.1} parent=73 // pred_check
              _
            $region76: #{patch_merging_pallas.1} parent=73 // pred_check_branch
              %576 = sbr.rel (0) target = $region78
            $region77: #{patch_merging_pallas.1} parent=73 // pred_region
              // Predicated region
              $region90: #{patch_merging_pallas.1} parent=77 // pred_check
                _
              $region91: #{patch_merging_pallas.1} parent=77 // pred_check_branch
                %718 = sbr.rel (0) target = $region93
              $region92: #{patch_merging_pallas.1} parent=77 // pred_region
                loop: start=0, step=1, limit=1
                $region94: #{patch_merging_pallas.1} parent=92 // loop_pre_header
                  _
                $region95: #{patch_merging_pallas.1} parent=92 // loop_header
                  %s720 = sphi 0, %s724
                  %p721 = scmp.ge.s32.totalorder %s720, 1
                  %s725 = sphi %s572, %s572
                  %s726 = sphi %s564, %s564
                $region96: #{patch_merging_pallas.1} parent=92 // loop_header_branch
                  %723 = sbr.rel (%p721) target = $region100
                $region97: #{patch_merging_pallas.1} parent=92 // loop_body
                  %v727 = vld [vmem:[%s725] sm:$0xff]
                  %728 = vst [vmem:[%s726] sm:$0xff] %v727
                  %v729 = vld [vmem:[%s725 + $0x10] sm:$0xff]
                  %730 = vst [vmem:[%s726 + $0x8] sm:$0xff] %v729
                  %v731 = vld [vmem:[%s725 + $0x20] sm:$0xff]
                  %732 = vst [vmem:[%s726 + $0x10] sm:$0xff] %v731
                  %v733 = vld [vmem:[%s725 + $0x30] sm:$0xff]
                  %734 = vst [vmem:[%s726 + $0x18] sm:$0xff] %v733
                  %v735 = vld [vmem:[%s725 + $0x40] sm:$0xff]
                  %736 = vst [vmem:[%s726 + $0x20] sm:$0xff] %v735
                  %v737 = vld [vmem:[%s725 + $0x50] sm:$0xff]
                  %738 = vst [vmem:[%s726 + $0x28] sm:$0xff] %v737
                  %v739 = vld [vmem:[%s725 + $0x60] sm:$0xff]
                  %740 = vst [vmem:[%s726 + $0x30] sm:$0xff] %v739
                  %v741 = vld [vmem:[%s725 + $0x70] sm:$0xff]
                  %742 = vst [vmem:[%s726 + $0x38] sm:$0xff] %v741
                  %v743 = vld [vmem:[%s725 + $0x100] sm:$0xff]
                  %744 = vst [vmem:[%s726 + $0x40] sm:$0xff] %v743
                  %v745 = vld [vmem:[%s725 + $0x110] sm:$0xff]
                  %746 = vst [vmem:[%s726 + $0x48] sm:$0xff] %v745
                  %v747 = vld [vmem:[%s725 + $0x120] sm:$0xff]
                  %748 = vst [vmem:[%s726 + $0x50] sm:$0xff] %v747
                  %v749 = vld [vmem:[%s725 + $0x130] sm:$0xff]
                  %750 = vst [vmem:[%s726 + $0x58] sm:$0xff] %v749
                  %v751 = vld [vmem:[%s725 + $0x140] sm:$0xff]
                  %752 = vst [vmem:[%s726 + $0x60] sm:$0xff] %v751
                  %v753 = vld [vmem:[%s725 + $0x150] sm:$0xff]
                  %754 = vst [vmem:[%s726 + $0x68] sm:$0xff] %v753
                  %v755 = vld [vmem:[%s725 + $0x160] sm:$0xff]
                  %756 = vst [vmem:[%s726 + $0x70] sm:$0xff] %v755
                  %v757 = vld [vmem:[%s725 + $0x170] sm:$0xff]
                  %758 = vst [vmem:[%s726 + $0x78] sm:$0xff] %v757
                  %v759 = vld [vmem:[%s725 + $0x200] sm:$0xff]
                  %760 = vst [vmem:[%s726 + $0x80] sm:$0xff] %v759
                  %v761 = vld [vmem:[%s725 + $0x210] sm:$0xff]
                  %762 = vst [vmem:[%s726 + $0x88] sm:$0xff] %v761
                  %v763 = vld [vmem:[%s725 + $0x220] sm:$0xff]
                  %764 = vst [vmem:[%s726 + $0x90] sm:$0xff] %v763
                  %v765 = vld [vmem:[%s725 + $0x230] sm:$0xff]
                  %766 = vst [vmem:[%s726 + $0x98] sm:$0xff] %v765
                  %v767 = vld [vmem:[%s725 + $0x240] sm:$0xff]
                  %768 = vst [vmem:[%s726 + $0xa0] sm:$0xff] %v767
                  %v769 = vld [vmem:[%s725 + $0x250] sm:$0xff]
                  %770 = vst [vmem:[%s726 + $0xa8] sm:$0xff] %v769
                  %v771 = vld [vmem:[%s725 + $0x260] sm:$0xff]
                  %772 = vst [vmem:[%s726 + $0xb0] sm:$0xff] %v771
                  %v773 = vld [vmem:[%s725 + $0x270] sm:$0xff]
                  %774 = vst [vmem:[%s726 + $0xb8] sm:$0xff] %v773
                  %v775 = vld [vmem:[%s725 + $0x300] sm:$0xff]
                  %776 = vst [vmem:[%s726 + $0xc0] sm:$0xff] %v775
                  %v777 = vld [vmem:[%s725 + $0x310] sm:$0xff]
                  %778 = vst [vmem:[%s726 + $0xc8] sm:$0xff] %v777
                  %v779 = vld [vmem:[%s725 + $0x320] sm:$0xff]
                  %780 = vst [vmem:[%s726 + $0xd0] sm:$0xff] %v779
                  %v781 = vld [vmem:[%s725 + $0x330] sm:$0xff]
                  %782 = vst [vmem:[%s726 + $0xd8] sm:$0xff] %v781
                  %v783 = vld [vmem:[%s725 + $0x340] sm:$0xff]
                  %784 = vst [vmem:[%s726 + $0xe0] sm:$0xff] %v783
                  %v785 = vld [vmem:[%s725 + $0x350] sm:$0xff]
                  %786 = vst [vmem:[%s726 + $0xe8] sm:$0xff] %v785
                  %v787 = vld [vmem:[%s725 + $0x360] sm:$0xff]
                  %788 = vst [vmem:[%s726 + $0xf0] sm:$0xff] %v787
                  %v789 = vld [vmem:[%s725 + $0x370] sm:$0xff]
                  %790 = vst [vmem:[%s726 + $0xf8] sm:$0xff] %v789
                  %v791 = vld [vmem:[%s725 + $0x400] sm:$0xff]
                  %792 = vst [vmem:[%s726 + $0x100] sm:$0xff] %v791
                  %v793 = vld [vmem:[%s725 + $0x410] sm:$0xff]
                  %794 = vst [vmem:[%s726 + $0x108] sm:$0xff] %v793
                  %v795 = vld [vmem:[%s725 + $0x420] sm:$0xff]
                  %796 = vst [vmem:[%s726 + $0x110] sm:$0xff] %v795
                  %v797 = vld [vmem:[%s725 + $0x430] sm:$0xff]
                  %798 = vst [vmem:[%s726 + $0x118] sm:$0xff] %v797
                  %v799 = vld [vmem:[%s725 + $0x440] sm:$0xff]
                  %800 = vst [vmem:[%s726 + $0x120] sm:$0xff] %v799
                  %v801 = vld [vmem:[%s725 + $0x450] sm:$0xff]
                  %802 = vst [vmem:[%s726 + $0x128] sm:$0xff] %v801
                  %v803 = vld [vmem:[%s725 + $0x460] sm:$0xff]
                  %804 = vst [vmem:[%s726 + $0x130] sm:$0xff] %v803
                  %v805 = vld [vmem:[%s725 + $0x470] sm:$0xff]
                  %806 = vst [vmem:[%s726 + $0x138] sm:$0xff] %v805
                  %v807 = vld [vmem:[%s725 + $0x500] sm:$0xff]
                  %808 = vst [vmem:[%s726 + $0x140] sm:$0xff] %v807
                  %v809 = vld [vmem:[%s725 + $0x510] sm:$0xff]
                  %810 = vst [vmem:[%s726 + $0x148] sm:$0xff] %v809
                  %v811 = vld [vmem:[%s725 + $0x520] sm:$0xff]
                  %812 = vst [vmem:[%s726 + $0x150] sm:$0xff] %v811
                  %v813 = vld [vmem:[%s725 + $0x530] sm:$0xff]
                  %814 = vst [vmem:[%s726 + $0x158] sm:$0xff] %v813
                  %v815 = vld [vmem:[%s725 + $0x540] sm:$0xff]
                  %816 = vst [vmem:[%s726 + $0x160] sm:$0xff] %v815
                  %v817 = vld [vmem:[%s725 + $0x550] sm:$0xff]
                  %818 = vst [vmem:[%s726 + $0x168] sm:$0xff] %v817
                  %v819 = vld [vmem:[%s725 + $0x560] sm:$0xff]
                  %820 = vst [vmem:[%s726 + $0x170] sm:$0xff] %v819
                  %v821 = vld [vmem:[%s725 + $0x570] sm:$0xff]
                  %822 = vst [vmem:[%s726 + $0x178] sm:$0xff] %v821
                  %v823 = vld [vmem:[%s725 + $0x600] sm:$0xff]
                  %824 = vst [vmem:[%s726 + $0x180] sm:$0xff] %v823
                  %v825 = vld [vmem:[%s725 + $0x610] sm:$0xff]
                  %826 = vst [vmem:[%s726 + $0x188] sm:$0xff] %v825
                  %v827 = vld [vmem:[%s725 + $0x620] sm:$0xff]
                  %828 = vst [vmem:[%s726 + $0x190] sm:$0xff] %v827
                  %v829 = vld [vmem:[%s725 + $0x630] sm:$0xff]
                  %830 = vst [vmem:[%s726 + $0x198] sm:$0xff] %v829
                  %v831 = vld [vmem:[%s725 + $0x640] sm:$0xff]
                  %832 = vst [vmem:[%s726 + $0x1a0] sm:$0xff] %v831
                  %v833 = vld [vmem:[%s725 + $0x650] sm:$0xff]
                  %834 = vst [vmem:[%s726 + $0x1a8] sm:$0xff] %v833
                  %v835 = vld [vmem:[%s725 + $0x660] sm:$0xff]
                  %836 = vst [vmem:[%s726 + $0x1b0] sm:$0xff] %v835
                  %v837 = vld [vmem:[%s725 + $0x670] sm:$0xff]
                  %838 = vst [vmem:[%s726 + $0x1b8] sm:$0xff] %v837
                  %v839 = vld [vmem:[%s725 + $0x700] sm:$0xff]
                  %840 = vst [vmem:[%s726 + $0x1c0] sm:$0xff] %v839
                  %v841 = vld [vmem:[%s725 + $0x710] sm:$0xff]
                  %842 = vst [vmem:[%s726 + $0x1c8] sm:$0xff] %v841
                  %v843 = vld [vmem:[%s725 + $0x720] sm:$0xff]
                  %844 = vst [vmem:[%s726 + $0x1d0] sm:$0xff] %v843
                  %v845 = vld [vmem:[%s725 + $0x730] sm:$0xff]
                  %846 = vst [vmem:[%s726 + $0x1d8] sm:$0xff] %v845
                  %v847 = vld [vmem:[%s725 + $0x740] sm:$0xff]
                  %848 = vst [vmem:[%s726 + $0x1e0] sm:$0xff] %v847
                  %v849 = vld [vmem:[%s725 + $0x750] sm:$0xff]
                  %850 = vst [vmem:[%s726 + $0x1e8] sm:$0xff] %v849
                  %v851 = vld [vmem:[%s725 + $0x760] sm:$0xff]
                  %852 = vst [vmem:[%s726 + $0x1f0] sm:$0xff] %v851
                  %v853 = vld [vmem:[%s725 + $0x770] sm:$0xff]
                  %854 = vst [vmem:[%s726 + $0x1f8] sm:$0xff] %v853
                $region98: #{patch_merging_pallas.1} parent=92 // loop_footer
                  %s724 = sadd.s32 1, %s720
                $region99: #{patch_merging_pallas.1} parent=92 // loop_footer_branch
                  %719 = sbr.rel target = $region95
                $region100: #{patch_merging_pallas.1} parent=92 // loop_exit
                  _
              $region93: #{patch_merging_pallas.1} parent=77 // pred_fallthru
                _
              // Predicated region
              $region101: #{patch_merging_pallas.1} parent=77 // pred_check
                _
              $region102: #{patch_merging_pallas.1} parent=77 // pred_check_branch
                %856 = sbr.rel target = $region104
              $region103: #{patch_merging_pallas.1} parent=77 // pred_region
                _
              $region104: #{patch_merging_pallas.1} parent=77 // pred_fallthru
                _
            $region78: #{patch_merging_pallas.1} parent=73 // pred_fallthru
              _
            // Predicated region
            $region79: #{patch_merging_pallas.1} parent=73 // pred_check
              _
            $region80: #{patch_merging_pallas.1} parent=73 // pred_check_branch
              %578 = sbr.rel target = $region82
            $region81: #{patch_merging_pallas.1} parent=73 // pred_region
              %s580 = ssub.s32 256, 1
              loop: start=0, step=1, limit=1
              $region83: #{patch_merging_pallas.1} parent=81 // loop_pre_header
                _
              $region84: #{patch_merging_pallas.1} parent=81 // loop_header
                %s582 = sphi 0, %s586
                %p583 = scmp.ge.s32.totalorder %s582, 1
                %s587 = sphi %s572, %s572
                %s588 = sphi %s564, %s564
              $region85: #{patch_merging_pallas.1} parent=81 // loop_header_branch
                %585 = sbr.rel (%p583) target = $region89
              $region86: #{patch_merging_pallas.1} parent=81 // loop_body
                %v589 = vld [vmem:[%s587] sm:%s580]
                %590 = vst [vmem:[%s588] sm:%s580] %v589
                %v591 = vld [vmem:[%s587 + $0x10] sm:%s580]
                %592 = vst [vmem:[%s588 + $0x8] sm:%s580] %v591
                %v593 = vld [vmem:[%s587 + $0x20] sm:%s580]
                %594 = vst [vmem:[%s588 + $0x10] sm:%s580] %v593
                %v595 = vld [vmem:[%s587 + $0x30] sm:%s580]
                %596 = vst [vmem:[%s588 + $0x18] sm:%s580] %v595
                %v597 = vld [vmem:[%s587 + $0x40] sm:%s580]
                %598 = vst [vmem:[%s588 + $0x20] sm:%s580] %v597
                %v599 = vld [vmem:[%s587 + $0x50] sm:%s580]
                %600 = vst [vmem:[%s588 + $0x28] sm:%s580] %v599
                %v601 = vld [vmem:[%s587 + $0x60] sm:%s580]
                %602 = vst [vmem:[%s588 + $0x30] sm:%s580] %v601
                %v603 = vld [vmem:[%s587 + $0x70] sm:%s580]
                %604 = vst [vmem:[%s588 + $0x38] sm:%s580] %v603
                %v605 = vld [vmem:[%s587 + $0x100] sm:%s580]
                %606 = vst [vmem:[%s588 + $0x40] sm:%s580] %v605
                %v607 = vld [vmem:[%s587 + $0x110] sm:%s580]
                %608 = vst [vmem:[%s588 + $0x48] sm:%s580] %v607
                %v609 = vld [vmem:[%s587 + $0x120] sm:%s580]
                %610 = vst [vmem:[%s588 + $0x50] sm:%s580] %v609
                %v611 = vld [vmem:[%s587 + $0x130] sm:%s580]
                %612 = vst [vmem:[%s588 + $0x58] sm:%s580] %v611
                %v613 = vld [vmem:[%s587 + $0x140] sm:%s580]
                %614 = vst [vmem:[%s588 + $0x60] sm:%s580] %v613
                %v615 = vld [vmem:[%s587 + $0x150] sm:%s580]
                %616 = vst [vmem:[%s588 + $0x68] sm:%s580] %v615
                %v617 = vld [vmem:[%s587 + $0x160] sm:%s580]
                %618 = vst [vmem:[%s588 + $0x70] sm:%s580] %v617
                %v619 = vld [vmem:[%s587 + $0x170] sm:%s580]
                %620 = vst [vmem:[%s588 + $0x78] sm:%s580] %v619
                %v621 = vld [vmem:[%s587 + $0x200] sm:%s580]
                %622 = vst [vmem:[%s588 + $0x80] sm:%s580] %v621
                %v623 = vld [vmem:[%s587 + $0x210] sm:%s580]
                %624 = vst [vmem:[%s588 + $0x88] sm:%s580] %v623
                %v625 = vld [vmem:[%s587 + $0x220] sm:%s580]
                %626 = vst [vmem:[%s588 + $0x90] sm:%s580] %v625
                %v627 = vld [vmem:[%s587 + $0x230] sm:%s580]
                %628 = vst [vmem:[%s588 + $0x98] sm:%s580] %v627
                %v629 = vld [vmem:[%s587 + $0x240] sm:%s580]
                %630 = vst [vmem:[%s588 + $0xa0] sm:%s580] %v629
                %v631 = vld [vmem:[%s587 + $0x250] sm:%s580]
                %632 = vst [vmem:[%s588 + $0xa8] sm:%s580] %v631
                %v633 = vld [vmem:[%s587 + $0x260] sm:%s580]
                %634 = vst [vmem:[%s588 + $0xb0] sm:%s580] %v633
                %v635 = vld [vmem:[%s587 + $0x270] sm:%s580]
                %636 = vst [vmem:[%s588 + $0xb8] sm:%s580] %v635
                %v637 = vld [vmem:[%s587 + $0x300] sm:%s580]
                %638 = vst [vmem:[%s588 + $0xc0] sm:%s580] %v637
                %v639 = vld [vmem:[%s587 + $0x310] sm:%s580]
                %640 = vst [vmem:[%s588 + $0xc8] sm:%s580] %v639
                %v641 = vld [vmem:[%s587 + $0x320] sm:%s580]
                %642 = vst [vmem:[%s588 + $0xd0] sm:%s580] %v641
                %v643 = vld [vmem:[%s587 + $0x330] sm:%s580]
                %644 = vst [vmem:[%s588 + $0xd8] sm:%s580] %v643
                %v645 = vld [vmem:[%s587 + $0x340] sm:%s580]
                %646 = vst [vmem:[%s588 + $0xe0] sm:%s580] %v645
                %v647 = vld [vmem:[%s587 + $0x350] sm:%s580]
                %648 = vst [vmem:[%s588 + $0xe8] sm:%s580] %v647
                %v649 = vld [vmem:[%s587 + $0x360] sm:%s580]
                %650 = vst [vmem:[%s588 + $0xf0] sm:%s580] %v649
                %v651 = vld [vmem:[%s587 + $0x370] sm:%s580]
                %652 = vst [vmem:[%s588 + $0xf8] sm:%s580] %v651
                %v653 = vld [vmem:[%s587 + $0x400] sm:%s580]
                %654 = vst [vmem:[%s588 + $0x100] sm:%s580] %v653
                %v655 = vld [vmem:[%s587 + $0x410] sm:%s580]
                %656 = vst [vmem:[%s588 + $0x108] sm:%s580] %v655
                %v657 = vld [vmem:[%s587 + $0x420] sm:%s580]
                %658 = vst [vmem:[%s588 + $0x110] sm:%s580] %v657
                %v659 = vld [vmem:[%s587 + $0x430] sm:%s580]
                %660 = vst [vmem:[%s588 + $0x118] sm:%s580] %v659
                %v661 = vld [vmem:[%s587 + $0x440] sm:%s580]
                %662 = vst [vmem:[%s588 + $0x120] sm:%s580] %v661
                %v663 = vld [vmem:[%s587 + $0x450] sm:%s580]
                %664 = vst [vmem:[%s588 + $0x128] sm:%s580] %v663
                %v665 = vld [vmem:[%s587 + $0x460] sm:%s580]
                %666 = vst [vmem:[%s588 + $0x130] sm:%s580] %v665
                %v667 = vld [vmem:[%s587 + $0x470] sm:%s580]
                %668 = vst [vmem:[%s588 + $0x138] sm:%s580] %v667
                %v669 = vld [vmem:[%s587 + $0x500] sm:%s580]
                %670 = vst [vmem:[%s588 + $0x140] sm:%s580] %v669
                %v671 = vld [vmem:[%s587 + $0x510] sm:%s580]
                %672 = vst [vmem:[%s588 + $0x148] sm:%s580] %v671
                %v673 = vld [vmem:[%s587 + $0x520] sm:%s580]
                %674 = vst [vmem:[%s588 + $0x150] sm:%s580] %v673
                %v675 = vld [vmem:[%s587 + $0x530] sm:%s580]
                %676 = vst [vmem:[%s588 + $0x158] sm:%s580] %v675
                %v677 = vld [vmem:[%s587 + $0x540] sm:%s580]
                %678 = vst [vmem:[%s588 + $0x160] sm:%s580] %v677
                %v679 = vld [vmem:[%s587 + $0x550] sm:%s580]
                %680 = vst [vmem:[%s588 + $0x168] sm:%s580] %v679
                %v681 = vld [vmem:[%s587 + $0x560] sm:%s580]
                %682 = vst [vmem:[%s588 + $0x170] sm:%s580] %v681
                %v683 = vld [vmem:[%s587 + $0x570] sm:%s580]
                %684 = vst [vmem:[%s588 + $0x178] sm:%s580] %v683
                %v685 = vld [vmem:[%s587 + $0x600] sm:%s580]
                %686 = vst [vmem:[%s588 + $0x180] sm:%s580] %v685
                %v687 = vld [vmem:[%s587 + $0x610] sm:%s580]
                %688 = vst [vmem:[%s588 + $0x188] sm:%s580] %v687
                %v689 = vld [vmem:[%s587 + $0x620] sm:%s580]
                %690 = vst [vmem:[%s588 + $0x190] sm:%s580] %v689
                %v691 = vld [vmem:[%s587 + $0x630] sm:%s580]
                %692 = vst [vmem:[%s588 + $0x198] sm:%s580] %v691
                %v693 = vld [vmem:[%s587 + $0x640] sm:%s580]
                %694 = vst [vmem:[%s588 + $0x1a0] sm:%s580] %v693
                %v695 = vld [vmem:[%s587 + $0x650] sm:%s580]
                %696 = vst [vmem:[%s588 + $0x1a8] sm:%s580] %v695
                %v697 = vld [vmem:[%s587 + $0x660] sm:%s580]
                %698 = vst [vmem:[%s588 + $0x1b0] sm:%s580] %v697
                %v699 = vld [vmem:[%s587 + $0x670] sm:%s580]
                %700 = vst [vmem:[%s588 + $0x1b8] sm:%s580] %v699
                %v701 = vld [vmem:[%s587 + $0x700] sm:%s580]
                %702 = vst [vmem:[%s588 + $0x1c0] sm:%s580] %v701
                %v703 = vld [vmem:[%s587 + $0x710] sm:%s580]
                %704 = vst [vmem:[%s588 + $0x1c8] sm:%s580] %v703
                %v705 = vld [vmem:[%s587 + $0x720] sm:%s580]
                %706 = vst [vmem:[%s588 + $0x1d0] sm:%s580] %v705
                %v707 = vld [vmem:[%s587 + $0x730] sm:%s580]
                %708 = vst [vmem:[%s588 + $0x1d8] sm:%s580] %v707
                %v709 = vld [vmem:[%s587 + $0x740] sm:%s580]
                %710 = vst [vmem:[%s588 + $0x1e0] sm:%s580] %v709
                %v711 = vld [vmem:[%s587 + $0x750] sm:%s580]
                %712 = vst [vmem:[%s588 + $0x1e8] sm:%s580] %v711
                %v713 = vld [vmem:[%s587 + $0x760] sm:%s580]
                %714 = vst [vmem:[%s588 + $0x1f0] sm:%s580] %v713
                %v715 = vld [vmem:[%s587 + $0x770] sm:%s580]
                %716 = vst [vmem:[%s588 + $0x1f8] sm:%s580] %v715
              $region87: #{patch_merging_pallas.1} parent=81 // loop_footer
                %s586 = sadd.s32 1, %s582
              $region88: #{patch_merging_pallas.1} parent=81 // loop_footer_branch
                %581 = sbr.rel target = $region84
              $region89: #{patch_merging_pallas.1} parent=81 // loop_exit
                _
            $region82: #{patch_merging_pallas.1} parent=73 // pred_fallthru
              _
          $region74: #{patch_merging_pallas.1} parent=69 // pred_fallthru
            _
          %857 = vnop
        $region70: #{patch_merging_pallas.1} parent=27 // pred_fallthru
          _
        // Predicated region
        $region105: #{patch_merging_pallas.1} parent=27 // pred_check
          %p858 = pneg %p106
        $region106: #{patch_merging_pallas.1} parent=27 // pred_check_branch
          %860 = sbr.rel (%p858) target = $region108
        $region107: #{patch_merging_pallas.1} parent=27 // pred_region
          %s861 = sand.u32 %s96, 1
          %s862 = sand.u32 %s96, 1
          %s863 = smul.addr %s862, 512
          %s864 = scalar_lea.vmem [#allocation4], %s863
          %s865 = smul.u32 8, %s23
          %s866 = smul.u32 8, %s24
          %s867 = smul.addr %s866, 2
          %s868 = sadd.s32 %s867, 16
          %s869 = smul.addr %s865, 32
          %s870 = sadd.s32 %s868, %s869
          %s871 = smul.addr %s870, 8
          %s872 = scalar_lea.vmem %s2, %s871
          // Predicated region
          $region109: #{patch_merging_pallas.1} parent=107 // pred_check
            _
          $region110: #{patch_merging_pallas.1} parent=107 // pred_check_branch
            %874 = sbr.rel (0) target = $region112
          $region111: #{patch_merging_pallas.1} parent=107 // pred_region
            // Predicated region
            $region113: #{patch_merging_pallas.1} parent=111 // pred_check
              _
            $region114: #{patch_merging_pallas.1} parent=111 // pred_check_branch
              %876 = sbr.rel (0) target = $region116
            $region115: #{patch_merging_pallas.1} parent=111 // pred_region
              // Predicated region
              $region128: #{patch_merging_pallas.1} parent=115 // pred_check
                _
              $region129: #{patch_merging_pallas.1} parent=115 // pred_check_branch
                %1018 = sbr.rel (0) target = $region131
              $region130: #{patch_merging_pallas.1} parent=115 // pred_region
                loop: start=0, step=1, limit=1
                $region132: #{patch_merging_pallas.1} parent=130 // loop_pre_header
                  _
                $region133: #{patch_merging_pallas.1} parent=130 // loop_header
                  %s1020 = sphi 0, %s1024
                  %p1021 = scmp.ge.s32.totalorder %s1020, 1
                  %s1025 = sphi %s872, %s872
                  %s1026 = sphi %s864, %s864
                $region134: #{patch_merging_pallas.1} parent=130 // loop_header_branch
                  %1023 = sbr.rel (%p1021) target = $region138
                $region135: #{patch_merging_pallas.1} parent=130 // loop_body
                  %v1027 = vld [vmem:[%s1025] sm:$0xff]
                  %1028 = vst [vmem:[%s1026] sm:$0xff] %v1027
                  %v1029 = vld [vmem:[%s1025 + $0x10] sm:$0xff]
                  %1030 = vst [vmem:[%s1026 + $0x8] sm:$0xff] %v1029
                  %v1031 = vld [vmem:[%s1025 + $0x20] sm:$0xff]
                  %1032 = vst [vmem:[%s1026 + $0x10] sm:$0xff] %v1031
                  %v1033 = vld [vmem:[%s1025 + $0x30] sm:$0xff]
                  %1034 = vst [vmem:[%s1026 + $0x18] sm:$0xff] %v1033
                  %v1035 = vld [vmem:[%s1025 + $0x40] sm:$0xff]
                  %1036 = vst [vmem:[%s1026 + $0x20] sm:$0xff] %v1035
                  %v1037 = vld [vmem:[%s1025 + $0x50] sm:$0xff]
                  %1038 = vst [vmem:[%s1026 + $0x28] sm:$0xff] %v1037
                  %v1039 = vld [vmem:[%s1025 + $0x60] sm:$0xff]
                  %1040 = vst [vmem:[%s1026 + $0x30] sm:$0xff] %v1039
                  %v1041 = vld [vmem:[%s1025 + $0x70] sm:$0xff]
                  %1042 = vst [vmem:[%s1026 + $0x38] sm:$0xff] %v1041
                  %v1043 = vld [vmem:[%s1025 + $0x100] sm:$0xff]
                  %1044 = vst [vmem:[%s1026 + $0x40] sm:$0xff] %v1043
                  %v1045 = vld [vmem:[%s1025 + $0x110] sm:$0xff]
                  %1046 = vst [vmem:[%s1026 + $0x48] sm:$0xff] %v1045
                  %v1047 = vld [vmem:[%s1025 + $0x120] sm:$0xff]
                  %1048 = vst [vmem:[%s1026 + $0x50] sm:$0xff] %v1047
                  %v1049 = vld [vmem:[%s1025 + $0x130] sm:$0xff]
                  %1050 = vst [vmem:[%s1026 + $0x58] sm:$0xff] %v1049
                  %v1051 = vld [vmem:[%s1025 + $0x140] sm:$0xff]
                  %1052 = vst [vmem:[%s1026 + $0x60] sm:$0xff] %v1051
                  %v1053 = vld [vmem:[%s1025 + $0x150] sm:$0xff]
                  %1054 = vst [vmem:[%s1026 + $0x68] sm:$0xff] %v1053
                  %v1055 = vld [vmem:[%s1025 + $0x160] sm:$0xff]
                  %1056 = vst [vmem:[%s1026 + $0x70] sm:$0xff] %v1055
                  %v1057 = vld [vmem:[%s1025 + $0x170] sm:$0xff]
                  %1058 = vst [vmem:[%s1026 + $0x78] sm:$0xff] %v1057
                  %v1059 = vld [vmem:[%s1025 + $0x200] sm:$0xff]
                  %1060 = vst [vmem:[%s1026 + $0x80] sm:$0xff] %v1059
                  %v1061 = vld [vmem:[%s1025 + $0x210] sm:$0xff]
                  %1062 = vst [vmem:[%s1026 + $0x88] sm:$0xff] %v1061
                  %v1063 = vld [vmem:[%s1025 + $0x220] sm:$0xff]
                  %1064 = vst [vmem:[%s1026 + $0x90] sm:$0xff] %v1063
                  %v1065 = vld [vmem:[%s1025 + $0x230] sm:$0xff]
                  %1066 = vst [vmem:[%s1026 + $0x98] sm:$0xff] %v1065
                  %v1067 = vld [vmem:[%s1025 + $0x240] sm:$0xff]
                  %1068 = vst [vmem:[%s1026 + $0xa0] sm:$0xff] %v1067
                  %v1069 = vld [vmem:[%s1025 + $0x250] sm:$0xff]
                  %1070 = vst [vmem:[%s1026 + $0xa8] sm:$0xff] %v1069
                  %v1071 = vld [vmem:[%s1025 + $0x260] sm:$0xff]
                  %1072 = vst [vmem:[%s1026 + $0xb0] sm:$0xff] %v1071
                  %v1073 = vld [vmem:[%s1025 + $0x270] sm:$0xff]
                  %1074 = vst [vmem:[%s1026 + $0xb8] sm:$0xff] %v1073
                  %v1075 = vld [vmem:[%s1025 + $0x300] sm:$0xff]
                  %1076 = vst [vmem:[%s1026 + $0xc0] sm:$0xff] %v1075
                  %v1077 = vld [vmem:[%s1025 + $0x310] sm:$0xff]
                  %1078 = vst [vmem:[%s1026 + $0xc8] sm:$0xff] %v1077
                  %v1079 = vld [vmem:[%s1025 + $0x320] sm:$0xff]
                  %1080 = vst [vmem:[%s1026 + $0xd0] sm:$0xff] %v1079
                  %v1081 = vld [vmem:[%s1025 + $0x330] sm:$0xff]
                  %1082 = vst [vmem:[%s1026 + $0xd8] sm:$0xff] %v1081
                  %v1083 = vld [vmem:[%s1025 + $0x340] sm:$0xff]
                  %1084 = vst [vmem:[%s1026 + $0xe0] sm:$0xff] %v1083
                  %v1085 = vld [vmem:[%s1025 + $0x350] sm:$0xff]
                  %1086 = vst [vmem:[%s1026 + $0xe8] sm:$0xff] %v1085
                  %v1087 = vld [vmem:[%s1025 + $0x360] sm:$0xff]
                  %1088 = vst [vmem:[%s1026 + $0xf0] sm:$0xff] %v1087
                  %v1089 = vld [vmem:[%s1025 + $0x370] sm:$0xff]
                  %1090 = vst [vmem:[%s1026 + $0xf8] sm:$0xff] %v1089
                  %v1091 = vld [vmem:[%s1025 + $0x400] sm:$0xff]
                  %1092 = vst [vmem:[%s1026 + $0x100] sm:$0xff] %v1091
                  %v1093 = vld [vmem:[%s1025 + $0x410] sm:$0xff]
                  %1094 = vst [vmem:[%s1026 + $0x108] sm:$0xff] %v1093
                  %v1095 = vld [vmem:[%s1025 + $0x420] sm:$0xff]
                  %1096 = vst [vmem:[%s1026 + $0x110] sm:$0xff] %v1095
                  %v1097 = vld [vmem:[%s1025 + $0x430] sm:$0xff]
                  %1098 = vst [vmem:[%s1026 + $0x118] sm:$0xff] %v1097
                  %v1099 = vld [vmem:[%s1025 + $0x440] sm:$0xff]
                  %1100 = vst [vmem:[%s1026 + $0x120] sm:$0xff] %v1099
                  %v1101 = vld [vmem:[%s1025 + $0x450] sm:$0xff]
                  %1102 = vst [vmem:[%s1026 + $0x128] sm:$0xff] %v1101
                  %v1103 = vld [vmem:[%s1025 + $0x460] sm:$0xff]
                  %1104 = vst [vmem:[%s1026 + $0x130] sm:$0xff] %v1103
                  %v1105 = vld [vmem:[%s1025 + $0x470] sm:$0xff]
                  %1106 = vst [vmem:[%s1026 + $0x138] sm:$0xff] %v1105
                  %v1107 = vld [vmem:[%s1025 + $0x500] sm:$0xff]
                  %1108 = vst [vmem:[%s1026 + $0x140] sm:$0xff] %v1107
                  %v1109 = vld [vmem:[%s1025 + $0x510] sm:$0xff]
                  %1110 = vst [vmem:[%s1026 + $0x148] sm:$0xff] %v1109
                  %v1111 = vld [vmem:[%s1025 + $0x520] sm:$0xff]
                  %1112 = vst [vmem:[%s1026 + $0x150] sm:$0xff] %v1111
                  %v1113 = vld [vmem:[%s1025 + $0x530] sm:$0xff]
                  %1114 = vst [vmem:[%s1026 + $0x158] sm:$0xff] %v1113
                  %v1115 = vld [vmem:[%s1025 + $0x540] sm:$0xff]
                  %1116 = vst [vmem:[%s1026 + $0x160] sm:$0xff] %v1115
                  %v1117 = vld [vmem:[%s1025 + $0x550] sm:$0xff]
                  %1118 = vst [vmem:[%s1026 + $0x168] sm:$0xff] %v1117
                  %v1119 = vld [vmem:[%s1025 + $0x560] sm:$0xff]
                  %1120 = vst [vmem:[%s1026 + $0x170] sm:$0xff] %v1119
                  %v1121 = vld [vmem:[%s1025 + $0x570] sm:$0xff]
                  %1122 = vst [vmem:[%s1026 + $0x178] sm:$0xff] %v1121
                  %v1123 = vld [vmem:[%s1025 + $0x600] sm:$0xff]
                  %1124 = vst [vmem:[%s1026 + $0x180] sm:$0xff] %v1123
                  %v1125 = vld [vmem:[%s1025 + $0x610] sm:$0xff]
                  %1126 = vst [vmem:[%s1026 + $0x188] sm:$0xff] %v1125
                  %v1127 = vld [vmem:[%s1025 + $0x620] sm:$0xff]
                  %1128 = vst [vmem:[%s1026 + $0x190] sm:$0xff] %v1127
                  %v1129 = vld [vmem:[%s1025 + $0x630] sm:$0xff]
                  %1130 = vst [vmem:[%s1026 + $0x198] sm:$0xff] %v1129
                  %v1131 = vld [vmem:[%s1025 + $0x640] sm:$0xff]
                  %1132 = vst [vmem:[%s1026 + $0x1a0] sm:$0xff] %v1131
                  %v1133 = vld [vmem:[%s1025 + $0x650] sm:$0xff]
                  %1134 = vst [vmem:[%s1026 + $0x1a8] sm:$0xff] %v1133
                  %v1135 = vld [vmem:[%s1025 + $0x660] sm:$0xff]
                  %1136 = vst [vmem:[%s1026 + $0x1b0] sm:$0xff] %v1135
                  %v1137 = vld [vmem:[%s1025 + $0x670] sm:$0xff]
                  %1138 = vst [vmem:[%s1026 + $0x1b8] sm:$0xff] %v1137
                  %v1139 = vld [vmem:[%s1025 + $0x700] sm:$0xff]
                  %1140 = vst [vmem:[%s1026 + $0x1c0] sm:$0xff] %v1139
                  %v1141 = vld [vmem:[%s1025 + $0x710] sm:$0xff]
                  %1142 = vst [vmem:[%s1026 + $0x1c8] sm:$0xff] %v1141
                  %v1143 = vld [vmem:[%s1025 + $0x720] sm:$0xff]
                  %1144 = vst [vmem:[%s1026 + $0x1d0] sm:$0xff] %v1143
                  %v1145 = vld [vmem:[%s1025 + $0x730] sm:$0xff]
                  %1146 = vst [vmem:[%s1026 + $0x1d8] sm:$0xff] %v1145
                  %v1147 = vld [vmem:[%s1025 + $0x740] sm:$0xff]
                  %1148 = vst [vmem:[%s1026 + $0x1e0] sm:$0xff] %v1147
                  %v1149 = vld [vmem:[%s1025 + $0x750] sm:$0xff]
                  %1150 = vst [vmem:[%s1026 + $0x1e8] sm:$0xff] %v1149
                  %v1151 = vld [vmem:[%s1025 + $0x760] sm:$0xff]
                  %1152 = vst [vmem:[%s1026 + $0x1f0] sm:$0xff] %v1151
                  %v1153 = vld [vmem:[%s1025 + $0x770] sm:$0xff]
                  %1154 = vst [vmem:[%s1026 + $0x1f8] sm:$0xff] %v1153
                $region136: #{patch_merging_pallas.1} parent=130 // loop_footer
                  %s1024 = sadd.s32 1, %s1020
                $region137: #{patch_merging_pallas.1} parent=130 // loop_footer_branch
                  %1019 = sbr.rel target = $region133
                $region138: #{patch_merging_pallas.1} parent=130 // loop_exit
                  _
              $region131: #{patch_merging_pallas.1} parent=115 // pred_fallthru
                _
              // Predicated region
              $region139: #{patch_merging_pallas.1} parent=115 // pred_check
                _
              $region140: #{patch_merging_pallas.1} parent=115 // pred_check_branch
                %1156 = sbr.rel target = $region142
              $region141: #{patch_merging_pallas.1} parent=115 // pred_region
                _
              $region142: #{patch_merging_pallas.1} parent=115 // pred_fallthru
                _
            $region116: #{patch_merging_pallas.1} parent=111 // pred_fallthru
              _
            // Predicated region
            $region117: #{patch_merging_pallas.1} parent=111 // pred_check
              _
            $region118: #{patch_merging_pallas.1} parent=111 // pred_check_branch
              %878 = sbr.rel target = $region120
            $region119: #{patch_merging_pallas.1} parent=111 // pred_region
              %s880 = ssub.s32 256, 1
              loop: start=0, step=1, limit=1
              $region121: #{patch_merging_pallas.1} parent=119 // loop_pre_header
                _
              $region122: #{patch_merging_pallas.1} parent=119 // loop_header
                %s882 = sphi 0, %s886
                %p883 = scmp.ge.s32.totalorder %s882, 1
                %s887 = sphi %s872, %s872
                %s888 = sphi %s864, %s864
              $region123: #{patch_merging_pallas.1} parent=119 // loop_header_branch
                %885 = sbr.rel (%p883) target = $region127
              $region124: #{patch_merging_pallas.1} parent=119 // loop_body
                %v889 = vld [vmem:[%s887] sm:%s880]
                %890 = vst [vmem:[%s888] sm:%s880] %v889
                %v891 = vld [vmem:[%s887 + $0x10] sm:%s880]
                %892 = vst [vmem:[%s888 + $0x8] sm:%s880] %v891
                %v893 = vld [vmem:[%s887 + $0x20] sm:%s880]
                %894 = vst [vmem:[%s888 + $0x10] sm:%s880] %v893
                %v895 = vld [vmem:[%s887 + $0x30] sm:%s880]
                %896 = vst [vmem:[%s888 + $0x18] sm:%s880] %v895
                %v897 = vld [vmem:[%s887 + $0x40] sm:%s880]
                %898 = vst [vmem:[%s888 + $0x20] sm:%s880] %v897
                %v899 = vld [vmem:[%s887 + $0x50] sm:%s880]
                %900 = vst [vmem:[%s888 + $0x28] sm:%s880] %v899
                %v901 = vld [vmem:[%s887 + $0x60] sm:%s880]
                %902 = vst [vmem:[%s888 + $0x30] sm:%s880] %v901
                %v903 = vld [vmem:[%s887 + $0x70] sm:%s880]
                %904 = vst [vmem:[%s888 + $0x38] sm:%s880] %v903
                %v905 = vld [vmem:[%s887 + $0x100] sm:%s880]
                %906 = vst [vmem:[%s888 + $0x40] sm:%s880] %v905
                %v907 = vld [vmem:[%s887 + $0x110] sm:%s880]
                %908 = vst [vmem:[%s888 + $0x48] sm:%s880] %v907
                %v909 = vld [vmem:[%s887 + $0x120] sm:%s880]
                %910 = vst [vmem:[%s888 + $0x50] sm:%s880] %v909
                %v911 = vld [vmem:[%s887 + $0x130] sm:%s880]
                %912 = vst [vmem:[%s888 + $0x58] sm:%s880] %v911
                %v913 = vld [vmem:[%s887 + $0x140] sm:%s880]
                %914 = vst [vmem:[%s888 + $0x60] sm:%s880] %v913
                %v915 = vld [vmem:[%s887 + $0x150] sm:%s880]
                %916 = vst [vmem:[%s888 + $0x68] sm:%s880] %v915
                %v917 = vld [vmem:[%s887 + $0x160] sm:%s880]
                %918 = vst [vmem:[%s888 + $0x70] sm:%s880] %v917
                %v919 = vld [vmem:[%s887 + $0x170] sm:%s880]
                %920 = vst [vmem:[%s888 + $0x78] sm:%s880] %v919
                %v921 = vld [vmem:[%s887 + $0x200] sm:%s880]
                %922 = vst [vmem:[%s888 + $0x80] sm:%s880] %v921
                %v923 = vld [vmem:[%s887 + $0x210] sm:%s880]
                %924 = vst [vmem:[%s888 + $0x88] sm:%s880] %v923
                %v925 = vld [vmem:[%s887 + $0x220] sm:%s880]
                %926 = vst [vmem:[%s888 + $0x90] sm:%s880] %v925
                %v927 = vld [vmem:[%s887 + $0x230] sm:%s880]
                %928 = vst [vmem:[%s888 + $0x98] sm:%s880] %v927
                %v929 = vld [vmem:[%s887 + $0x240] sm:%s880]
                %930 = vst [vmem:[%s888 + $0xa0] sm:%s880] %v929
                %v931 = vld [vmem:[%s887 + $0x250] sm:%s880]
                %932 = vst [vmem:[%s888 + $0xa8] sm:%s880] %v931
                %v933 = vld [vmem:[%s887 + $0x260] sm:%s880]
                %934 = vst [vmem:[%s888 + $0xb0] sm:%s880] %v933
                %v935 = vld [vmem:[%s887 + $0x270] sm:%s880]
                %936 = vst [vmem:[%s888 + $0xb8] sm:%s880] %v935
                %v937 = vld [vmem:[%s887 + $0x300] sm:%s880]
                %938 = vst [vmem:[%s888 + $0xc0] sm:%s880] %v937
                %v939 = vld [vmem:[%s887 + $0x310] sm:%s880]
                %940 = vst [vmem:[%s888 + $0xc8] sm:%s880] %v939
                %v941 = vld [vmem:[%s887 + $0x320] sm:%s880]
                %942 = vst [vmem:[%s888 + $0xd0] sm:%s880] %v941
                %v943 = vld [vmem:[%s887 + $0x330] sm:%s880]
                %944 = vst [vmem:[%s888 + $0xd8] sm:%s880] %v943
                %v945 = vld [vmem:[%s887 + $0x340] sm:%s880]
                %946 = vst [vmem:[%s888 + $0xe0] sm:%s880] %v945
                %v947 = vld [vmem:[%s887 + $0x350] sm:%s880]
                %948 = vst [vmem:[%s888 + $0xe8] sm:%s880] %v947
                %v949 = vld [vmem:[%s887 + $0x360] sm:%s880]
                %950 = vst [vmem:[%s888 + $0xf0] sm:%s880] %v949
                %v951 = vld [vmem:[%s887 + $0x370] sm:%s880]
                %952 = vst [vmem:[%s888 + $0xf8] sm:%s880] %v951
                %v953 = vld [vmem:[%s887 + $0x400] sm:%s880]
                %954 = vst [vmem:[%s888 + $0x100] sm:%s880] %v953
                %v955 = vld [vmem:[%s887 + $0x410] sm:%s880]
                %956 = vst [vmem:[%s888 + $0x108] sm:%s880] %v955
                %v957 = vld [vmem:[%s887 + $0x420] sm:%s880]
                %958 = vst [vmem:[%s888 + $0x110] sm:%s880] %v957
                %v959 = vld [vmem:[%s887 + $0x430] sm:%s880]
                %960 = vst [vmem:[%s888 + $0x118] sm:%s880] %v959
                %v961 = vld [vmem:[%s887 + $0x440] sm:%s880]
                %962 = vst [vmem:[%s888 + $0x120] sm:%s880] %v961
                %v963 = vld [vmem:[%s887 + $0x450] sm:%s880]
                %964 = vst [vmem:[%s888 + $0x128] sm:%s880] %v963
                %v965 = vld [vmem:[%s887 + $0x460] sm:%s880]
                %966 = vst [vmem:[%s888 + $0x130] sm:%s880] %v965
                %v967 = vld [vmem:[%s887 + $0x470] sm:%s880]
                %968 = vst [vmem:[%s888 + $0x138] sm:%s880] %v967
                %v969 = vld [vmem:[%s887 + $0x500] sm:%s880]
                %970 = vst [vmem:[%s888 + $0x140] sm:%s880] %v969
                %v971 = vld [vmem:[%s887 + $0x510] sm:%s880]
                %972 = vst [vmem:[%s888 + $0x148] sm:%s880] %v971
                %v973 = vld [vmem:[%s887 + $0x520] sm:%s880]
                %974 = vst [vmem:[%s888 + $0x150] sm:%s880] %v973
                %v975 = vld [vmem:[%s887 + $0x530] sm:%s880]
                %976 = vst [vmem:[%s888 + $0x158] sm:%s880] %v975
                %v977 = vld [vmem:[%s887 + $0x540] sm:%s880]
                %978 = vst [vmem:[%s888 + $0x160] sm:%s880] %v977
                %v979 = vld [vmem:[%s887 + $0x550] sm:%s880]
                %980 = vst [vmem:[%s888 + $0x168] sm:%s880] %v979
                %v981 = vld [vmem:[%s887 + $0x560] sm:%s880]
                %982 = vst [vmem:[%s888 + $0x170] sm:%s880] %v981
                %v983 = vld [vmem:[%s887 + $0x570] sm:%s880]
                %984 = vst [vmem:[%s888 + $0x178] sm:%s880] %v983
                %v985 = vld [vmem:[%s887 + $0x600] sm:%s880]
                %986 = vst [vmem:[%s888 + $0x180] sm:%s880] %v985
                %v987 = vld [vmem:[%s887 + $0x610] sm:%s880]
                %988 = vst [vmem:[%s888 + $0x188] sm:%s880] %v987
                %v989 = vld [vmem:[%s887 + $0x620] sm:%s880]
                %990 = vst [vmem:[%s888 + $0x190] sm:%s880] %v989
                %v991 = vld [vmem:[%s887 + $0x630] sm:%s880]
                %992 = vst [vmem:[%s888 + $0x198] sm:%s880] %v991
                %v993 = vld [vmem:[%s887 + $0x640] sm:%s880]
                %994 = vst [vmem:[%s888 + $0x1a0] sm:%s880] %v993
                %v995 = vld [vmem:[%s887 + $0x650] sm:%s880]
                %996 = vst [vmem:[%s888 + $0x1a8] sm:%s880] %v995
                %v997 = vld [vmem:[%s887 + $0x660] sm:%s880]
                %998 = vst [vmem:[%s888 + $0x1b0] sm:%s880] %v997
                %v999 = vld [vmem:[%s887 + $0x670] sm:%s880]
                %1000 = vst [vmem:[%s888 + $0x1b8] sm:%s880] %v999
                %v1001 = vld [vmem:[%s887 + $0x700] sm:%s880]
                %1002 = vst [vmem:[%s888 + $0x1c0] sm:%s880] %v1001
                %v1003 = vld [vmem:[%s887 + $0x710] sm:%s880]
                %1004 = vst [vmem:[%s888 + $0x1c8] sm:%s880] %v1003
                %v1005 = vld [vmem:[%s887 + $0x720] sm:%s880]
                %1006 = vst [vmem:[%s888 + $0x1d0] sm:%s880] %v1005
                %v1007 = vld [vmem:[%s887 + $0x730] sm:%s880]
                %1008 = vst [vmem:[%s888 + $0x1d8] sm:%s880] %v1007
                %v1009 = vld [vmem:[%s887 + $0x740] sm:%s880]
                %1010 = vst [vmem:[%s888 + $0x1e0] sm:%s880] %v1009
                %v1011 = vld [vmem:[%s887 + $0x750] sm:%s880]
                %1012 = vst [vmem:[%s888 + $0x1e8] sm:%s880] %v1011
                %v1013 = vld [vmem:[%s887 + $0x760] sm:%s880]
                %1014 = vst [vmem:[%s888 + $0x1f0] sm:%s880] %v1013
                %v1015 = vld [vmem:[%s887 + $0x770] sm:%s880]
                %1016 = vst [vmem:[%s888 + $0x1f8] sm:%s880] %v1015
              $region125: #{patch_merging_pallas.1} parent=119 // loop_footer
                %s886 = sadd.s32 1, %s882
              $region126: #{patch_merging_pallas.1} parent=119 // loop_footer_branch
                %881 = sbr.rel target = $region122
              $region127: #{patch_merging_pallas.1} parent=119 // loop_exit
                _
            $region120: #{patch_merging_pallas.1} parent=111 // pred_fallthru
              _
          $region112: #{patch_merging_pallas.1} parent=107 // pred_fallthru
            _
          %1157 = vnop
        $region108: #{patch_merging_pallas.1} parent=27 // pred_fallthru
          _
        // Predicated region
        $region143: #{patch_merging_pallas.1} parent=27 // pred_check
          %p1158 = pneg %p134
        $region144: #{patch_merging_pallas.1} parent=27 // pred_check_branch
          %1160 = sbr.rel (%p1158) target = $region146
        $region145: #{patch_merging_pallas.1} parent=27 // pred_region
          %s1161 = sand.u32 %s124, 1
          %s1162 = sand.u32 %s124, 1
          %s1163 = smul.addr %s1162, 512
          %s1164 = scalar_lea.vmem [#allocation5], %s1163
          %s1165 = smul.u32 8, %s23
          %s1166 = smul.u32 8, %s24
          %s1167 = smul.addr %s1166, 2
          %s1168 = sadd.s32 1, %s1167
          %s1169 = sadd.s32 %s1168, 16
          %s1170 = smul.addr %s1165, 32
          %s1171 = sadd.s32 %s1169, %s1170
          %s1172 = smul.addr %s1171, 8
          %s1173 = scalar_lea.vmem %s3, %s1172
          // Predicated region
          $region147: #{patch_merging_pallas.1} parent=145 // pred_check
            _
          $region148: #{patch_merging_pallas.1} parent=145 // pred_check_branch
            %1175 = sbr.rel (0) target = $region150
          $region149: #{patch_merging_pallas.1} parent=145 // pred_region
            // Predicated region
            $region151: #{patch_merging_pallas.1} parent=149 // pred_check
              _
            $region152: #{patch_merging_pallas.1} parent=149 // pred_check_branch
              %1177 = sbr.rel (0) target = $region154
            $region153: #{patch_merging_pallas.1} parent=149 // pred_region
              // Predicated region
              $region166: #{patch_merging_pallas.1} parent=153 // pred_check
                _
              $region167: #{patch_merging_pallas.1} parent=153 // pred_check_branch
                %1319 = sbr.rel (0) target = $region169
              $region168: #{patch_merging_pallas.1} parent=153 // pred_region
                loop: start=0, step=1, limit=1
                $region170: #{patch_merging_pallas.1} parent=168 // loop_pre_header
                  _
                $region171: #{patch_merging_pallas.1} parent=168 // loop_header
                  %s1321 = sphi 0, %s1325
                  %p1322 = scmp.ge.s32.totalorder %s1321, 1
                  %s1326 = sphi %s1173, %s1173
                  %s1327 = sphi %s1164, %s1164
                $region172: #{patch_merging_pallas.1} parent=168 // loop_header_branch
                  %1324 = sbr.rel (%p1322) target = $region176
                $region173: #{patch_merging_pallas.1} parent=168 // loop_body
                  %v1328 = vld [vmem:[%s1326] sm:$0xff]
                  %1329 = vst [vmem:[%s1327] sm:$0xff] %v1328
                  %v1330 = vld [vmem:[%s1326 + $0x10] sm:$0xff]
                  %1331 = vst [vmem:[%s1327 + $0x8] sm:$0xff] %v1330
                  %v1332 = vld [vmem:[%s1326 + $0x20] sm:$0xff]
                  %1333 = vst [vmem:[%s1327 + $0x10] sm:$0xff] %v1332
                  %v1334 = vld [vmem:[%s1326 + $0x30] sm:$0xff]
                  %1335 = vst [vmem:[%s1327 + $0x18] sm:$0xff] %v1334
                  %v1336 = vld [vmem:[%s1326 + $0x40] sm:$0xff]
                  %1337 = vst [vmem:[%s1327 + $0x20] sm:$0xff] %v1336
                  %v1338 = vld [vmem:[%s1326 + $0x50] sm:$0xff]
                  %1339 = vst [vmem:[%s1327 + $0x28] sm:$0xff] %v1338
                  %v1340 = vld [vmem:[%s1326 + $0x60] sm:$0xff]
                  %1341 = vst [vmem:[%s1327 + $0x30] sm:$0xff] %v1340
                  %v1342 = vld [vmem:[%s1326 + $0x70] sm:$0xff]
                  %1343 = vst [vmem:[%s1327 + $0x38] sm:$0xff] %v1342
                  %v1344 = vld [vmem:[%s1326 + $0x100] sm:$0xff]
                  %1345 = vst [vmem:[%s1327 + $0x40] sm:$0xff] %v1344
                  %v1346 = vld [vmem:[%s1326 + $0x110] sm:$0xff]
                  %1347 = vst [vmem:[%s1327 + $0x48] sm:$0xff] %v1346
                  %v1348 = vld [vmem:[%s1326 + $0x120] sm:$0xff]
                  %1349 = vst [vmem:[%s1327 + $0x50] sm:$0xff] %v1348
                  %v1350 = vld [vmem:[%s1326 + $0x130] sm:$0xff]
                  %1351 = vst [vmem:[%s1327 + $0x58] sm:$0xff] %v1350
                  %v1352 = vld [vmem:[%s1326 + $0x140] sm:$0xff]
                  %1353 = vst [vmem:[%s1327 + $0x60] sm:$0xff] %v1352
                  %v1354 = vld [vmem:[%s1326 + $0x150] sm:$0xff]
                  %1355 = vst [vmem:[%s1327 + $0x68] sm:$0xff] %v1354
                  %v1356 = vld [vmem:[%s1326 + $0x160] sm:$0xff]
                  %1357 = vst [vmem:[%s1327 + $0x70] sm:$0xff] %v1356
                  %v1358 = vld [vmem:[%s1326 + $0x170] sm:$0xff]
                  %1359 = vst [vmem:[%s1327 + $0x78] sm:$0xff] %v1358
                  %v1360 = vld [vmem:[%s1326 + $0x200] sm:$0xff]
                  %1361 = vst [vmem:[%s1327 + $0x80] sm:$0xff] %v1360
                  %v1362 = vld [vmem:[%s1326 + $0x210] sm:$0xff]
                  %1363 = vst [vmem:[%s1327 + $0x88] sm:$0xff] %v1362
                  %v1364 = vld [vmem:[%s1326 + $0x220] sm:$0xff]
                  %1365 = vst [vmem:[%s1327 + $0x90] sm:$0xff] %v1364
                  %v1366 = vld [vmem:[%s1326 + $0x230] sm:$0xff]
                  %1367 = vst [vmem:[%s1327 + $0x98] sm:$0xff] %v1366
                  %v1368 = vld [vmem:[%s1326 + $0x240] sm:$0xff]
                  %1369 = vst [vmem:[%s1327 + $0xa0] sm:$0xff] %v1368
                  %v1370 = vld [vmem:[%s1326 + $0x250] sm:$0xff]
                  %1371 = vst [vmem:[%s1327 + $0xa8] sm:$0xff] %v1370
                  %v1372 = vld [vmem:[%s1326 + $0x260] sm:$0xff]
                  %1373 = vst [vmem:[%s1327 + $0xb0] sm:$0xff] %v1372
                  %v1374 = vld [vmem:[%s1326 + $0x270] sm:$0xff]
                  %1375 = vst [vmem:[%s1327 + $0xb8] sm:$0xff] %v1374
                  %v1376 = vld [vmem:[%s1326 + $0x300] sm:$0xff]
                  %1377 = vst [vmem:[%s1327 + $0xc0] sm:$0xff] %v1376
                  %v1378 = vld [vmem:[%s1326 + $0x310] sm:$0xff]
                  %1379 = vst [vmem:[%s1327 + $0xc8] sm:$0xff] %v1378
                  %v1380 = vld [vmem:[%s1326 + $0x320] sm:$0xff]
                  %1381 = vst [vmem:[%s1327 + $0xd0] sm:$0xff] %v1380
                  %v1382 = vld [vmem:[%s1326 + $0x330] sm:$0xff]
                  %1383 = vst [vmem:[%s1327 + $0xd8] sm:$0xff] %v1382
                  %v1384 = vld [vmem:[%s1326 + $0x340] sm:$0xff]
                  %1385 = vst [vmem:[%s1327 + $0xe0] sm:$0xff] %v1384
                  %v1386 = vld [vmem:[%s1326 + $0x350] sm:$0xff]
                  %1387 = vst [vmem:[%s1327 + $0xe8] sm:$0xff] %v1386
                  %v1388 = vld [vmem:[%s1326 + $0x360] sm:$0xff]
                  %1389 = vst [vmem:[%s1327 + $0xf0] sm:$0xff] %v1388
                  %v1390 = vld [vmem:[%s1326 + $0x370] sm:$0xff]
                  %1391 = vst [vmem:[%s1327 + $0xf8] sm:$0xff] %v1390
                  %v1392 = vld [vmem:[%s1326 + $0x400] sm:$0xff]
                  %1393 = vst [vmem:[%s1327 + $0x100] sm:$0xff] %v1392
                  %v1394 = vld [vmem:[%s1326 + $0x410] sm:$0xff]
                  %1395 = vst [vmem:[%s1327 + $0x108] sm:$0xff] %v1394
                  %v1396 = vld [vmem:[%s1326 + $0x420] sm:$0xff]
                  %1397 = vst [vmem:[%s1327 + $0x110] sm:$0xff] %v1396
                  %v1398 = vld [vmem:[%s1326 + $0x430] sm:$0xff]
                  %1399 = vst [vmem:[%s1327 + $0x118] sm:$0xff] %v1398
                  %v1400 = vld [vmem:[%s1326 + $0x440] sm:$0xff]
                  %1401 = vst [vmem:[%s1327 + $0x120] sm:$0xff] %v1400
                  %v1402 = vld [vmem:[%s1326 + $0x450] sm:$0xff]
                  %1403 = vst [vmem:[%s1327 + $0x128] sm:$0xff] %v1402
                  %v1404 = vld [vmem:[%s1326 + $0x460] sm:$0xff]
                  %1405 = vst [vmem:[%s1327 + $0x130] sm:$0xff] %v1404
                  %v1406 = vld [vmem:[%s1326 + $0x470] sm:$0xff]
                  %1407 = vst [vmem:[%s1327 + $0x138] sm:$0xff] %v1406
                  %v1408 = vld [vmem:[%s1326 + $0x500] sm:$0xff]
                  %1409 = vst [vmem:[%s1327 + $0x140] sm:$0xff] %v1408
                  %v1410 = vld [vmem:[%s1326 + $0x510] sm:$0xff]
                  %1411 = vst [vmem:[%s1327 + $0x148] sm:$0xff] %v1410
                  %v1412 = vld [vmem:[%s1326 + $0x520] sm:$0xff]
                  %1413 = vst [vmem:[%s1327 + $0x150] sm:$0xff] %v1412
                  %v1414 = vld [vmem:[%s1326 + $0x530] sm:$0xff]
                  %1415 = vst [vmem:[%s1327 + $0x158] sm:$0xff] %v1414
                  %v1416 = vld [vmem:[%s1326 + $0x540] sm:$0xff]
                  %1417 = vst [vmem:[%s1327 + $0x160] sm:$0xff] %v1416
                  %v1418 = vld [vmem:[%s1326 + $0x550] sm:$0xff]
                  %1419 = vst [vmem:[%s1327 + $0x168] sm:$0xff] %v1418
                  %v1420 = vld [vmem:[%s1326 + $0x560] sm:$0xff]
                  %1421 = vst [vmem:[%s1327 + $0x170] sm:$0xff] %v1420
                  %v1422 = vld [vmem:[%s1326 + $0x570] sm:$0xff]
                  %1423 = vst [vmem:[%s1327 + $0x178] sm:$0xff] %v1422
                  %v1424 = vld [vmem:[%s1326 + $0x600] sm:$0xff]
                  %1425 = vst [vmem:[%s1327 + $0x180] sm:$0xff] %v1424
                  %v1426 = vld [vmem:[%s1326 + $0x610] sm:$0xff]
                  %1427 = vst [vmem:[%s1327 + $0x188] sm:$0xff] %v1426
                  %v1428 = vld [vmem:[%s1326 + $0x620] sm:$0xff]
                  %1429 = vst [vmem:[%s1327 + $0x190] sm:$0xff] %v1428
                  %v1430 = vld [vmem:[%s1326 + $0x630] sm:$0xff]
                  %1431 = vst [vmem:[%s1327 + $0x198] sm:$0xff] %v1430
                  %v1432 = vld [vmem:[%s1326 + $0x640] sm:$0xff]
                  %1433 = vst [vmem:[%s1327 + $0x1a0] sm:$0xff] %v1432
                  %v1434 = vld [vmem:[%s1326 + $0x650] sm:$0xff]
                  %1435 = vst [vmem:[%s1327 + $0x1a8] sm:$0xff] %v1434
                  %v1436 = vld [vmem:[%s1326 + $0x660] sm:$0xff]
                  %1437 = vst [vmem:[%s1327 + $0x1b0] sm:$0xff] %v1436
                  %v1438 = vld [vmem:[%s1326 + $0x670] sm:$0xff]
                  %1439 = vst [vmem:[%s1327 + $0x1b8] sm:$0xff] %v1438
                  %v1440 = vld [vmem:[%s1326 + $0x700] sm:$0xff]
                  %1441 = vst [vmem:[%s1327 + $0x1c0] sm:$0xff] %v1440
                  %v1442 = vld [vmem:[%s1326 + $0x710] sm:$0xff]
                  %1443 = vst [vmem:[%s1327 + $0x1c8] sm:$0xff] %v1442
                  %v1444 = vld [vmem:[%s1326 + $0x720] sm:$0xff]
                  %1445 = vst [vmem:[%s1327 + $0x1d0] sm:$0xff] %v1444
                  %v1446 = vld [vmem:[%s1326 + $0x730] sm:$0xff]
                  %1447 = vst [vmem:[%s1327 + $0x1d8] sm:$0xff] %v1446
                  %v1448 = vld [vmem:[%s1326 + $0x740] sm:$0xff]
                  %1449 = vst [vmem:[%s1327 + $0x1e0] sm:$0xff] %v1448
                  %v1450 = vld [vmem:[%s1326 + $0x750] sm:$0xff]
                  %1451 = vst [vmem:[%s1327 + $0x1e8] sm:$0xff] %v1450
                  %v1452 = vld [vmem:[%s1326 + $0x760] sm:$0xff]
                  %1453 = vst [vmem:[%s1327 + $0x1f0] sm:$0xff] %v1452
                  %v1454 = vld [vmem:[%s1326 + $0x770] sm:$0xff]
                  %1455 = vst [vmem:[%s1327 + $0x1f8] sm:$0xff] %v1454
                $region174: #{patch_merging_pallas.1} parent=168 // loop_footer
                  %s1325 = sadd.s32 1, %s1321
                $region175: #{patch_merging_pallas.1} parent=168 // loop_footer_branch
                  %1320 = sbr.rel target = $region171
                $region176: #{patch_merging_pallas.1} parent=168 // loop_exit
                  _
              $region169: #{patch_merging_pallas.1} parent=153 // pred_fallthru
                _
              // Predicated region
              $region177: #{patch_merging_pallas.1} parent=153 // pred_check
                _
              $region178: #{patch_merging_pallas.1} parent=153 // pred_check_branch
                %1457 = sbr.rel target = $region180
              $region179: #{patch_merging_pallas.1} parent=153 // pred_region
                _
              $region180: #{patch_merging_pallas.1} parent=153 // pred_fallthru
                _
            $region154: #{patch_merging_pallas.1} parent=149 // pred_fallthru
              _
            // Predicated region
            $region155: #{patch_merging_pallas.1} parent=149 // pred_check
              _
            $region156: #{patch_merging_pallas.1} parent=149 // pred_check_branch
              %1179 = sbr.rel target = $region158
            $region157: #{patch_merging_pallas.1} parent=149 // pred_region
              %s1181 = ssub.s32 256, 1
              loop: start=0, step=1, limit=1
              $region159: #{patch_merging_pallas.1} parent=157 // loop_pre_header
                _
              $region160: #{patch_merging_pallas.1} parent=157 // loop_header
                %s1183 = sphi 0, %s1187
                %p1184 = scmp.ge.s32.totalorder %s1183, 1
                %s1188 = sphi %s1173, %s1173
                %s1189 = sphi %s1164, %s1164
              $region161: #{patch_merging_pallas.1} parent=157 // loop_header_branch
                %1186 = sbr.rel (%p1184) target = $region165
              $region162: #{patch_merging_pallas.1} parent=157 // loop_body
                %v1190 = vld [vmem:[%s1188] sm:%s1181]
                %1191 = vst [vmem:[%s1189] sm:%s1181] %v1190
                %v1192 = vld [vmem:[%s1188 + $0x10] sm:%s1181]
                %1193 = vst [vmem:[%s1189 + $0x8] sm:%s1181] %v1192
                %v1194 = vld [vmem:[%s1188 + $0x20] sm:%s1181]
                %1195 = vst [vmem:[%s1189 + $0x10] sm:%s1181] %v1194
                %v1196 = vld [vmem:[%s1188 + $0x30] sm:%s1181]
                %1197 = vst [vmem:[%s1189 + $0x18] sm:%s1181] %v1196
                %v1198 = vld [vmem:[%s1188 + $0x40] sm:%s1181]
                %1199 = vst [vmem:[%s1189 + $0x20] sm:%s1181] %v1198
                %v1200 = vld [vmem:[%s1188 + $0x50] sm:%s1181]
                %1201 = vst [vmem:[%s1189 + $0x28] sm:%s1181] %v1200
                %v1202 = vld [vmem:[%s1188 + $0x60] sm:%s1181]
                %1203 = vst [vmem:[%s1189 + $0x30] sm:%s1181] %v1202
                %v1204 = vld [vmem:[%s1188 + $0x70] sm:%s1181]
                %1205 = vst [vmem:[%s1189 + $0x38] sm:%s1181] %v1204
                %v1206 = vld [vmem:[%s1188 + $0x100] sm:%s1181]
                %1207 = vst [vmem:[%s1189 + $0x40] sm:%s1181] %v1206
                %v1208 = vld [vmem:[%s1188 + $0x110] sm:%s1181]
                %1209 = vst [vmem:[%s1189 + $0x48] sm:%s1181] %v1208
                %v1210 = vld [vmem:[%s1188 + $0x120] sm:%s1181]
                %1211 = vst [vmem:[%s1189 + $0x50] sm:%s1181] %v1210
                %v1212 = vld [vmem:[%s1188 + $0x130] sm:%s1181]
                %1213 = vst [vmem:[%s1189 + $0x58] sm:%s1181] %v1212
                %v1214 = vld [vmem:[%s1188 + $0x140] sm:%s1181]
                %1215 = vst [vmem:[%s1189 + $0x60] sm:%s1181] %v1214
                %v1216 = vld [vmem:[%s1188 + $0x150] sm:%s1181]
                %1217 = vst [vmem:[%s1189 + $0x68] sm:%s1181] %v1216
                %v1218 = vld [vmem:[%s1188 + $0x160] sm:%s1181]
                %1219 = vst [vmem:[%s1189 + $0x70] sm:%s1181] %v1218
                %v1220 = vld [vmem:[%s1188 + $0x170] sm:%s1181]
                %1221 = vst [vmem:[%s1189 + $0x78] sm:%s1181] %v1220
                %v1222 = vld [vmem:[%s1188 + $0x200] sm:%s1181]
                %1223 = vst [vmem:[%s1189 + $0x80] sm:%s1181] %v1222
                %v1224 = vld [vmem:[%s1188 + $0x210] sm:%s1181]
                %1225 = vst [vmem:[%s1189 + $0x88] sm:%s1181] %v1224
                %v1226 = vld [vmem:[%s1188 + $0x220] sm:%s1181]
                %1227 = vst [vmem:[%s1189 + $0x90] sm:%s1181] %v1226
                %v1228 = vld [vmem:[%s1188 + $0x230] sm:%s1181]
                %1229 = vst [vmem:[%s1189 + $0x98] sm:%s1181] %v1228
                %v1230 = vld [vmem:[%s1188 + $0x240] sm:%s1181]
                %1231 = vst [vmem:[%s1189 + $0xa0] sm:%s1181] %v1230
                %v1232 = vld [vmem:[%s1188 + $0x250] sm:%s1181]
                %1233 = vst [vmem:[%s1189 + $0xa8] sm:%s1181] %v1232
                %v1234 = vld [vmem:[%s1188 + $0x260] sm:%s1181]
                %1235 = vst [vmem:[%s1189 + $0xb0] sm:%s1181] %v1234
                %v1236 = vld [vmem:[%s1188 + $0x270] sm:%s1181]
                %1237 = vst [vmem:[%s1189 + $0xb8] sm:%s1181] %v1236
                %v1238 = vld [vmem:[%s1188 + $0x300] sm:%s1181]
                %1239 = vst [vmem:[%s1189 + $0xc0] sm:%s1181] %v1238
                %v1240 = vld [vmem:[%s1188 + $0x310] sm:%s1181]
                %1241 = vst [vmem:[%s1189 + $0xc8] sm:%s1181] %v1240
                %v1242 = vld [vmem:[%s1188 + $0x320] sm:%s1181]
                %1243 = vst [vmem:[%s1189 + $0xd0] sm:%s1181] %v1242
                %v1244 = vld [vmem:[%s1188 + $0x330] sm:%s1181]
                %1245 = vst [vmem:[%s1189 + $0xd8] sm:%s1181] %v1244
                %v1246 = vld [vmem:[%s1188 + $0x340] sm:%s1181]
                %1247 = vst [vmem:[%s1189 + $0xe0] sm:%s1181] %v1246
                %v1248 = vld [vmem:[%s1188 + $0x350] sm:%s1181]
                %1249 = vst [vmem:[%s1189 + $0xe8] sm:%s1181] %v1248
                %v1250 = vld [vmem:[%s1188 + $0x360] sm:%s1181]
                %1251 = vst [vmem:[%s1189 + $0xf0] sm:%s1181] %v1250
                %v1252 = vld [vmem:[%s1188 + $0x370] sm:%s1181]
                %1253 = vst [vmem:[%s1189 + $0xf8] sm:%s1181] %v1252
                %v1254 = vld [vmem:[%s1188 + $0x400] sm:%s1181]
                %1255 = vst [vmem:[%s1189 + $0x100] sm:%s1181] %v1254
                %v1256 = vld [vmem:[%s1188 + $0x410] sm:%s1181]
                %1257 = vst [vmem:[%s1189 + $0x108] sm:%s1181] %v1256
                %v1258 = vld [vmem:[%s1188 + $0x420] sm:%s1181]
                %1259 = vst [vmem:[%s1189 + $0x110] sm:%s1181] %v1258
                %v1260 = vld [vmem:[%s1188 + $0x430] sm:%s1181]
                %1261 = vst [vmem:[%s1189 + $0x118] sm:%s1181] %v1260
                %v1262 = vld [vmem:[%s1188 + $0x440] sm:%s1181]
                %1263 = vst [vmem:[%s1189 + $0x120] sm:%s1181] %v1262
                %v1264 = vld [vmem:[%s1188 + $0x450] sm:%s1181]
                %1265 = vst [vmem:[%s1189 + $0x128] sm:%s1181] %v1264
                %v1266 = vld [vmem:[%s1188 + $0x460] sm:%s1181]
                %1267 = vst [vmem:[%s1189 + $0x130] sm:%s1181] %v1266
                %v1268 = vld [vmem:[%s1188 + $0x470] sm:%s1181]
                %1269 = vst [vmem:[%s1189 + $0x138] sm:%s1181] %v1268
                %v1270 = vld [vmem:[%s1188 + $0x500] sm:%s1181]
                %1271 = vst [vmem:[%s1189 + $0x140] sm:%s1181] %v1270
                %v1272 = vld [vmem:[%s1188 + $0x510] sm:%s1181]
                %1273 = vst [vmem:[%s1189 + $0x148] sm:%s1181] %v1272
                %v1274 = vld [vmem:[%s1188 + $0x520] sm:%s1181]
                %1275 = vst [vmem:[%s1189 + $0x150] sm:%s1181] %v1274
                %v1276 = vld [vmem:[%s1188 + $0x530] sm:%s1181]
                %1277 = vst [vmem:[%s1189 + $0x158] sm:%s1181] %v1276
                %v1278 = vld [vmem:[%s1188 + $0x540] sm:%s1181]
                %1279 = vst [vmem:[%s1189 + $0x160] sm:%s1181] %v1278
                %v1280 = vld [vmem:[%s1188 + $0x550] sm:%s1181]
                %1281 = vst [vmem:[%s1189 + $0x168] sm:%s1181] %v1280
                %v1282 = vld [vmem:[%s1188 + $0x560] sm:%s1181]
                %1283 = vst [vmem:[%s1189 + $0x170] sm:%s1181] %v1282
                %v1284 = vld [vmem:[%s1188 + $0x570] sm:%s1181]
                %1285 = vst [vmem:[%s1189 + $0x178] sm:%s1181] %v1284
                %v1286 = vld [vmem:[%s1188 + $0x600] sm:%s1181]
                %1287 = vst [vmem:[%s1189 + $0x180] sm:%s1181] %v1286
                %v1288 = vld [vmem:[%s1188 + $0x610] sm:%s1181]
                %1289 = vst [vmem:[%s1189 + $0x188] sm:%s1181] %v1288
                %v1290 = vld [vmem:[%s1188 + $0x620] sm:%s1181]
                %1291 = vst [vmem:[%s1189 + $0x190] sm:%s1181] %v1290
                %v1292 = vld [vmem:[%s1188 + $0x630] sm:%s1181]
                %1293 = vst [vmem:[%s1189 + $0x198] sm:%s1181] %v1292
                %v1294 = vld [vmem:[%s1188 + $0x640] sm:%s1181]
                %1295 = vst [vmem:[%s1189 + $0x1a0] sm:%s1181] %v1294
                %v1296 = vld [vmem:[%s1188 + $0x650] sm:%s1181]
                %1297 = vst [vmem:[%s1189 + $0x1a8] sm:%s1181] %v1296
                %v1298 = vld [vmem:[%s1188 + $0x660] sm:%s1181]
                %1299 = vst [vmem:[%s1189 + $0x1b0] sm:%s1181] %v1298
                %v1300 = vld [vmem:[%s1188 + $0x670] sm:%s1181]
                %1301 = vst [vmem:[%s1189 + $0x1b8] sm:%s1181] %v1300
                %v1302 = vld [vmem:[%s1188 + $0x700] sm:%s1181]
                %1303 = vst [vmem:[%s1189 + $0x1c0] sm:%s1181] %v1302
                %v1304 = vld [vmem:[%s1188 + $0x710] sm:%s1181]
                %1305 = vst [vmem:[%s1189 + $0x1c8] sm:%s1181] %v1304
                %v1306 = vld [vmem:[%s1188 + $0x720] sm:%s1181]
                %1307 = vst [vmem:[%s1189 + $0x1d0] sm:%s1181] %v1306
                %v1308 = vld [vmem:[%s1188 + $0x730] sm:%s1181]
                %1309 = vst [vmem:[%s1189 + $0x1d8] sm:%s1181] %v1308
                %v1310 = vld [vmem:[%s1188 + $0x740] sm:%s1181]
                %1311 = vst [vmem:[%s1189 + $0x1e0] sm:%s1181] %v1310
                %v1312 = vld [vmem:[%s1188 + $0x750] sm:%s1181]
                %1313 = vst [vmem:[%s1189 + $0x1e8] sm:%s1181] %v1312
                %v1314 = vld [vmem:[%s1188 + $0x760] sm:%s1181]
                %1315 = vst [vmem:[%s1189 + $0x1f0] sm:%s1181] %v1314
                %v1316 = vld [vmem:[%s1188 + $0x770] sm:%s1181]
                %1317 = vst [vmem:[%s1189 + $0x1f8] sm:%s1181] %v1316
              $region163: #{patch_merging_pallas.1} parent=157 // loop_footer
                %s1187 = sadd.s32 1, %s1183
              $region164: #{patch_merging_pallas.1} parent=157 // loop_footer_branch
                %1182 = sbr.rel target = $region160
              $region165: #{patch_merging_pallas.1} parent=157 // loop_exit
                _
            $region158: #{patch_merging_pallas.1} parent=149 // pred_fallthru
              _
          $region150: #{patch_merging_pallas.1} parent=145 // pred_fallthru
            _
          %1458 = vnop
        $region146: #{patch_merging_pallas.1} parent=27 // pred_fallthru
          _
      $region28: #{patch_merging_pallas.1} parent=5 // pred_fallthru
        _
      %p1459 = scmp.le.s32.totalorder 1, %s16
      %p1460 = scmp.lt.s32.totalorder %s16, 3
      %p1461 = pnand %p1459, %p1460
      %p1462 = pneg %p1461
      // Predicated region
      $region181: #{patch_merging_pallas.1} parent=5 // pred_check
        _
      $region182: #{patch_merging_pallas.1} parent=5 // pred_check_branch
        %1464 = sbr.rel (%p1461) target = $region184
      $region183: #{patch_merging_pallas.1} parent=5 // pred_region
        %s1465 = ssub.s32 %s16, 1
        %s1466 = sand.u32 %s43, 1
        %s1467 = sand.u32 %s43, 1
        %s1468 = smul.addr %s1467, 512
        %s1469 = scalar_lea.vmem [#allocation2], %s1468
        // Predicated region
        $region185: #{patch_merging_pallas.1} parent=183 // pred_check
          %p1470 = pneg %p56
        $region186: #{patch_merging_pallas.1} parent=183 // pred_check_branch
          %1472 = sbr.rel (%p1470) target = $region188
        $region187: #{patch_merging_pallas.1} parent=183 // pred_region
          _
        $region188: #{patch_merging_pallas.1} parent=183 // pred_fallthru
          _
        %s1473 = sand.u32 %s71, 1
        %s1474 = sand.u32 %s71, 1
        %s1475 = smul.addr %s1474, 512
        %s1476 = scalar_lea.vmem [#allocation3], %s1475
        // Predicated region
        $region189: #{patch_merging_pallas.1} parent=183 // pred_check
          %p1477 = pneg %p84
        $region190: #{patch_merging_pallas.1} parent=183 // pred_check_branch
          %1479 = sbr.rel (%p1477) target = $region192
        $region191: #{patch_merging_pallas.1} parent=183 // pred_region
          _
        $region192: #{patch_merging_pallas.1} parent=183 // pred_fallthru
          _
        %s1480 = sand.u32 %s99, 1
        %s1481 = sand.u32 %s99, 1
        %s1482 = smul.addr %s1481, 512
        %s1483 = scalar_lea.vmem [#allocation4], %s1482
        // Predicated region
        $region193: #{patch_merging_pallas.1} parent=183 // pred_check
          %p1484 = pneg %p112
        $region194: #{patch_merging_pallas.1} parent=183 // pred_check_branch
          %1486 = sbr.rel (%p1484) target = $region196
        $region195: #{patch_merging_pallas.1} parent=183 // pred_region
          _
        $region196: #{patch_merging_pallas.1} parent=183 // pred_fallthru
          _
        %s1487 = sand.u32 %s127, 1
        %s1488 = sand.u32 %s127, 1
        %s1489 = smul.addr %s1488, 512
        %s1490 = scalar_lea.vmem [#allocation5], %s1489
        // Predicated region
        $region197: #{patch_merging_pallas.1} parent=183 // pred_check
          %p1491 = pneg %p140
        $region198: #{patch_merging_pallas.1} parent=183 // pred_check_branch
          %1493 = sbr.rel (%p1491) target = $region200
        $region199: #{patch_merging_pallas.1} parent=183 // pred_region
          _
        $region200: #{patch_merging_pallas.1} parent=183 // pred_fallthru
          _
        %s1494 = sand.u32 %s43, 1
        %s1495 = sand.u32 %s43, 1
        %s1496 = smul.addr %s1495, 512
        %s1497 = scalar_lea.vmem [#allocation2], %s1496
        %p1498 = pneg %p56
        %p1499 = pneg %p53
        %s1500 = sand.u32 %s71, 1
        %s1501 = sand.u32 %s71, 1
        %s1502 = smul.addr %s1501, 512
        %s1503 = scalar_lea.vmem [#allocation3], %s1502
        %p1504 = pneg %p84
        %p1505 = pneg %p81
        %s1506 = sand.u32 %s99, 1
        %s1507 = sand.u32 %s99, 1
        %s1508 = smul.addr %s1507, 512
        %s1509 = scalar_lea.vmem [#allocation4], %s1508
        %p1510 = pneg %p112
        %p1511 = pneg %p109
        %s1512 = sand.u32 %s127, 1
        %s1513 = sand.u32 %s127, 1
        %s1514 = smul.addr %s1513, 512
        %s1515 = scalar_lea.vmem [#allocation5], %s1514
        %p1516 = pneg %p140
        %p1517 = pneg %p137
        %p1518 = pneg %p161
        %p1519 = pneg %p158
        %p1520 = pneg %p182
        %p1521 = pneg %p179
        %p1522 = pneg %p203
        %p1523 = pneg %p200
        %p1524 = pneg %p231
        %p1525 = pneg %p228
        %s1526 = sand.u32 %s218, 1
        %s1527 = scalar_lea.sflag [#allocation7], %s1526
        %s1528 = sand.u32 %s218, 1
        %s1529 = smul.addr %s1528, 512
        %s1530 = scalar_lea.vmem [#allocation6], %s1529
        %s1531 = smul.u32 8, %s25
        %s1532 = smul.u32 8, %s26
        %s1533 = smul.u32 8, %s25
        %s1534 = smul.u32 8, %s26
        %s1535 = smul.u32 8, %s25
        %s1536 = smul.u32 8, %s26
        %s1537 = smul.u32 8, %s25
        %s1538 = smul.u32 8, %s26
        %s1539 = smul.u32 8, %s25
        %s1540 = smul.u32 8, %s26
        %v1542 = vld [vmem:[%s1469] sm:$0xff]
        %v1543 = vld [vmem:[%s1469 + $0x8] sm:$0xff]
        %v1544 = vld [vmem:[%s1469 + $0x10] sm:$0xff]
        %v1545 = vld [vmem:[%s1469 + $0x18] sm:$0xff]
        %v1546 = vld [vmem:[%s1469 + $0x20] sm:$0xff]
        %v1547 = vld [vmem:[%s1469 + $0x28] sm:$0xff]
        %v1548 = vld [vmem:[%s1469 + $0x30] sm:$0xff]
        %v1549 = vld [vmem:[%s1469 + $0x38] sm:$0xff]
        %v1550 = vld [vmem:[%s1469 + $0x40] sm:$0xff]
        %v1551 = vld [vmem:[%s1469 + $0x48] sm:$0xff]
        %v1552 = vld [vmem:[%s1469 + $0x50] sm:$0xff]
        %v1553 = vld [vmem:[%s1469 + $0x58] sm:$0xff]
        %v1554 = vld [vmem:[%s1469 + $0x60] sm:$0xff]
        %v1555 = vld [vmem:[%s1469 + $0x68] sm:$0xff]
        %v1556 = vld [vmem:[%s1469 + $0x70] sm:$0xff]
        %v1557 = vld [vmem:[%s1469 + $0x78] sm:$0xff]
        %v1558 = vld [vmem:[%s1469 + $0x80] sm:$0xff]
        %v1559 = vld [vmem:[%s1469 + $0x88] sm:$0xff]
        %v1560 = vld [vmem:[%s1469 + $0x90] sm:$0xff]
        %v1561 = vld [vmem:[%s1469 + $0x98] sm:$0xff]
        %v1562 = vld [vmem:[%s1469 + $0xa0] sm:$0xff]
        %v1563 = vld [vmem:[%s1469 + $0xa8] sm:$0xff]
        %v1564 = vld [vmem:[%s1469 + $0xb0] sm:$0xff]
        %v1565 = vld [vmem:[%s1469 + $0xb8] sm:$0xff]
        %v1566 = vld [vmem:[%s1469 + $0xc0] sm:$0xff]
        %v1567 = vld [vmem:[%s1469 + $0xc8] sm:$0xff]
        %v1568 = vld [vmem:[%s1469 + $0xd0] sm:$0xff]
        %v1569 = vld [vmem:[%s1469 + $0xd8] sm:$0xff]
        %v1570 = vld [vmem:[%s1469 + $0xe0] sm:$0xff]
        %v1571 = vld [vmem:[%s1469 + $0xe8] sm:$0xff]
        %v1572 = vld [vmem:[%s1469 + $0xf0] sm:$0xff]
        %v1573 = vld [vmem:[%s1469 + $0xf8] sm:$0xff]
        %v1574 = vld [vmem:[%s1469 + $0x100] sm:$0xff]
        %v1575 = vld [vmem:[%s1469 + $0x108] sm:$0xff]
        %v1576 = vld [vmem:[%s1469 + $0x110] sm:$0xff]
        %v1577 = vld [vmem:[%s1469 + $0x118] sm:$0xff]
        %v1578 = vld [vmem:[%s1469 + $0x120] sm:$0xff]
        %v1579 = vld [vmem:[%s1469 + $0x128] sm:$0xff]
        %v1580 = vld [vmem:[%s1469 + $0x130] sm:$0xff]
        %v1581 = vld [vmem:[%s1469 + $0x138] sm:$0xff]
        %v1582 = vld [vmem:[%s1469 + $0x140] sm:$0xff]
        %v1583 = vld [vmem:[%s1469 + $0x148] sm:$0xff]
        %v1584 = vld [vmem:[%s1469 + $0x150] sm:$0xff]
        %v1585 = vld [vmem:[%s1469 + $0x158] sm:$0xff]
        %v1586 = vld [vmem:[%s1469 + $0x160] sm:$0xff]
        %v1587 = vld [vmem:[%s1469 + $0x168] sm:$0xff]
        %v1588 = vld [vmem:[%s1469 + $0x170] sm:$0xff]
        %v1589 = vld [vmem:[%s1469 + $0x178] sm:$0xff]
        %v1590 = vld [vmem:[%s1469 + $0x180] sm:$0xff]
        %v1591 = vld [vmem:[%s1469 + $0x188] sm:$0xff]
        %v1592 = vld [vmem:[%s1469 + $0x190] sm:$0xff]
        %v1593 = vld [vmem:[%s1469 + $0x198] sm:$0xff]
        %v1594 = vld [vmem:[%s1469 + $0x1a0] sm:$0xff]
        %v1595 = vld [vmem:[%s1469 + $0x1a8] sm:$0xff]
        %v1596 = vld [vmem:[%s1469 + $0x1b0] sm:$0xff]
        %v1597 = vld [vmem:[%s1469 + $0x1b8] sm:$0xff]
        %v1598 = vld [vmem:[%s1469 + $0x1c0] sm:$0xff]
        %v1599 = vld [vmem:[%s1469 + $0x1c8] sm:$0xff]
        %v1600 = vld [vmem:[%s1469 + $0x1d0] sm:$0xff]
        %v1601 = vld [vmem:[%s1469 + $0x1d8] sm:$0xff]
        %v1602 = vld [vmem:[%s1469 + $0x1e0] sm:$0xff]
        %v1603 = vld [vmem:[%s1469 + $0x1e8] sm:$0xff]
        %v1604 = vld [vmem:[%s1469 + $0x1f0] sm:$0xff]
        %v1605 = vld [vmem:[%s1469 + $0x1f8] sm:$0xff]
        %v1606 = vld [vmem:[%s1476] sm:$0xff]
        %v1607 = vld [vmem:[%s1476 + $0x8] sm:$0xff]
        %v1608 = vld [vmem:[%s1476 + $0x10] sm:$0xff]
        %v1609 = vld [vmem:[%s1476 + $0x18] sm:$0xff]
        %v1610 = vld [vmem:[%s1476 + $0x20] sm:$0xff]
        %v1611 = vld [vmem:[%s1476 + $0x28] sm:$0xff]
        %v1612 = vld [vmem:[%s1476 + $0x30] sm:$0xff]
        %v1613 = vld [vmem:[%s1476 + $0x38] sm:$0xff]
        %v1614 = vld [vmem:[%s1476 + $0x40] sm:$0xff]
        %v1615 = vld [vmem:[%s1476 + $0x48] sm:$0xff]
        %v1616 = vld [vmem:[%s1476 + $0x50] sm:$0xff]
        %v1617 = vld [vmem:[%s1476 + $0x58] sm:$0xff]
        %v1618 = vld [vmem:[%s1476 + $0x60] sm:$0xff]
        %v1619 = vld [vmem:[%s1476 + $0x68] sm:$0xff]
        %v1620 = vld [vmem:[%s1476 + $0x70] sm:$0xff]
        %v1621 = vld [vmem:[%s1476 + $0x78] sm:$0xff]
        %v1622 = vld [vmem:[%s1476 + $0x80] sm:$0xff]
        %v1623 = vld [vmem:[%s1476 + $0x88] sm:$0xff]
        %v1624 = vld [vmem:[%s1476 + $0x90] sm:$0xff]
        %v1625 = vld [vmem:[%s1476 + $0x98] sm:$0xff]
        %v1626 = vld [vmem:[%s1476 + $0xa0] sm:$0xff]
        %v1627 = vld [vmem:[%s1476 + $0xa8] sm:$0xff]
        %v1628 = vld [vmem:[%s1476 + $0xb0] sm:$0xff]
        %v1629 = vld [vmem:[%s1476 + $0xb8] sm:$0xff]
        %v1630 = vld [vmem:[%s1476 + $0xc0] sm:$0xff]
        %v1631 = vld [vmem:[%s1476 + $0xc8] sm:$0xff]
        %v1632 = vld [vmem:[%s1476 + $0xd0] sm:$0xff]
        %v1633 = vld [vmem:[%s1476 + $0xd8] sm:$0xff]
        %v1634 = vld [vmem:[%s1476 + $0xe0] sm:$0xff]
        %v1635 = vld [vmem:[%s1476 + $0xe8] sm:$0xff]
        %v1636 = vld [vmem:[%s1476 + $0xf0] sm:$0xff]
        %v1637 = vld [vmem:[%s1476 + $0xf8] sm:$0xff]
        %v1638 = vld [vmem:[%s1476 + $0x100] sm:$0xff]
        %v1639 = vld [vmem:[%s1476 + $0x108] sm:$0xff]
        %v1640 = vld [vmem:[%s1476 + $0x110] sm:$0xff]
        %v1641 = vld [vmem:[%s1476 + $0x118] sm:$0xff]
        %v1642 = vld [vmem:[%s1476 + $0x120] sm:$0xff]
        %v1643 = vld [vmem:[%s1476 + $0x128] sm:$0xff]
        %v1644 = vld [vmem:[%s1476 + $0x130] sm:$0xff]
        %v1645 = vld [vmem:[%s1476 + $0x138] sm:$0xff]
        %v1646 = vld [vmem:[%s1476 + $0x140] sm:$0xff]
        %v1647 = vld [vmem:[%s1476 + $0x148] sm:$0xff]
        %v1648 = vld [vmem:[%s1476 + $0x150] sm:$0xff]
        %v1649 = vld [vmem:[%s1476 + $0x158] sm:$0xff]
        %v1650 = vld [vmem:[%s1476 + $0x160] sm:$0xff]
        %v1651 = vld [vmem:[%s1476 + $0x168] sm:$0xff]
        %v1652 = vld [vmem:[%s1476 + $0x170] sm:$0xff]
        %v1653 = vld [vmem:[%s1476 + $0x178] sm:$0xff]
        %v1654 = vld [vmem:[%s1476 + $0x180] sm:$0xff]
        %v1655 = vld [vmem:[%s1476 + $0x188] sm:$0xff]
        %v1656 = vld [vmem:[%s1476 + $0x190] sm:$0xff]
        %v1657 = vld [vmem:[%s1476 + $0x198] sm:$0xff]
        %v1658 = vld [vmem:[%s1476 + $0x1a0] sm:$0xff]
        %v1659 = vld [vmem:[%s1476 + $0x1a8] sm:$0xff]
        %v1660 = vld [vmem:[%s1476 + $0x1b0] sm:$0xff]
        %v1661 = vld [vmem:[%s1476 + $0x1b8] sm:$0xff]
        %v1662 = vld [vmem:[%s1476 + $0x1c0] sm:$0xff]
        %v1663 = vld [vmem:[%s1476 + $0x1c8] sm:$0xff]
        %v1664 = vld [vmem:[%s1476 + $0x1d0] sm:$0xff]
        %v1665 = vld [vmem:[%s1476 + $0x1d8] sm:$0xff]
        %v1666 = vld [vmem:[%s1476 + $0x1e0] sm:$0xff]
        %v1667 = vld [vmem:[%s1476 + $0x1e8] sm:$0xff]
        %v1668 = vld [vmem:[%s1476 + $0x1f0] sm:$0xff]
        %v1669 = vld [vmem:[%s1476 + $0x1f8] sm:$0xff]
        %v1670 = vadd.f32 %v1542, %v1606
        %v1671 = vadd.f32 %v1543, %v1607
        %v1672 = vadd.f32 %v1544, %v1608
        %v1673 = vadd.f32 %v1545, %v1609
        %v1674 = vadd.f32 %v1546, %v1610
        %v1675 = vadd.f32 %v1547, %v1611
        %v1676 = vadd.f32 %v1548, %v1612
        %v1677 = vadd.f32 %v1549, %v1613
        %v1678 = vadd.f32 %v1550, %v1614
        %v1679 = vadd.f32 %v1551, %v1615
        %v1680 = vadd.f32 %v1552, %v1616
        %v1681 = vadd.f32 %v1553, %v1617
        %v1682 = vadd.f32 %v1554, %v1618
        %v1683 = vadd.f32 %v1555, %v1619
        %v1684 = vadd.f32 %v1556, %v1620
        %v1685 = vadd.f32 %v1557, %v1621
        %v1686 = vadd.f32 %v1558, %v1622
        %v1687 = vadd.f32 %v1559, %v1623
        %v1688 = vadd.f32 %v1560, %v1624
        %v1689 = vadd.f32 %v1561, %v1625
        %v1690 = vadd.f32 %v1562, %v1626
        %v1691 = vadd.f32 %v1563, %v1627
        %v1692 = vadd.f32 %v1564, %v1628
        %v1693 = vadd.f32 %v1565, %v1629
        %v1694 = vadd.f32 %v1566, %v1630
        %v1695 = vadd.f32 %v1567, %v1631
        %v1696 = vadd.f32 %v1568, %v1632
        %v1697 = vadd.f32 %v1569, %v1633
        %v1698 = vadd.f32 %v1570, %v1634
        %v1699 = vadd.f32 %v1571, %v1635
        %v1700 = vadd.f32 %v1572, %v1636
        %v1701 = vadd.f32 %v1573, %v1637
        %v1702 = vadd.f32 %v1574, %v1638
        %v1703 = vadd.f32 %v1575, %v1639
        %v1704 = vadd.f32 %v1576, %v1640
        %v1705 = vadd.f32 %v1577, %v1641
        %v1706 = vadd.f32 %v1578, %v1642
        %v1707 = vadd.f32 %v1579, %v1643
        %v1708 = vadd.f32 %v1580, %v1644
        %v1709 = vadd.f32 %v1581, %v1645
        %v1710 = vadd.f32 %v1582, %v1646
        %v1711 = vadd.f32 %v1583, %v1647
        %v1712 = vadd.f32 %v1584, %v1648
        %v1713 = vadd.f32 %v1585, %v1649
        %v1714 = vadd.f32 %v1586, %v1650
        %v1715 = vadd.f32 %v1587, %v1651
        %v1716 = vadd.f32 %v1588, %v1652
        %v1717 = vadd.f32 %v1589, %v1653
        %v1718 = vadd.f32 %v1590, %v1654
        %v1719 = vadd.f32 %v1591, %v1655
        %v1720 = vadd.f32 %v1592, %v1656
        %v1721 = vadd.f32 %v1593, %v1657
        %v1722 = vadd.f32 %v1594, %v1658
        %v1723 = vadd.f32 %v1595, %v1659
        %v1724 = vadd.f32 %v1596, %v1660
        %v1725 = vadd.f32 %v1597, %v1661
        %v1726 = vadd.f32 %v1598, %v1662
        %v1727 = vadd.f32 %v1599, %v1663
        %v1728 = vadd.f32 %v1600, %v1664
        %v1729 = vadd.f32 %v1601, %v1665
        %v1730 = vadd.f32 %v1602, %v1666
        %v1731 = vadd.f32 %v1603, %v1667
        %v1732 = vadd.f32 %v1604, %v1668
        %v1733 = vadd.f32 %v1605, %v1669
        %v1734 = vld [vmem:[%s1483] sm:$0xff]
        %v1735 = vld [vmem:[%s1483 + $0x8] sm:$0xff]
        %v1736 = vld [vmem:[%s1483 + $0x10] sm:$0xff]
        %v1737 = vld [vmem:[%s1483 + $0x18] sm:$0xff]
        %v1738 = vld [vmem:[%s1483 + $0x20] sm:$0xff]
        %v1739 = vld [vmem:[%s1483 + $0x28] sm:$0xff]
        %v1740 = vld [vmem:[%s1483 + $0x30] sm:$0xff]
        %v1741 = vld [vmem:[%s1483 + $0x38] sm:$0xff]
        %v1742 = vld [vmem:[%s1483 + $0x40] sm:$0xff]
        %v1743 = vld [vmem:[%s1483 + $0x48] sm:$0xff]
        %v1744 = vld [vmem:[%s1483 + $0x50] sm:$0xff]
        %v1745 = vld [vmem:[%s1483 + $0x58] sm:$0xff]
        %v1746 = vld [vmem:[%s1483 + $0x60] sm:$0xff]
        %v1747 = vld [vmem:[%s1483 + $0x68] sm:$0xff]
        %v1748 = vld [vmem:[%s1483 + $0x70] sm:$0xff]
        %v1749 = vld [vmem:[%s1483 + $0x78] sm:$0xff]
        %v1750 = vld [vmem:[%s1483 + $0x80] sm:$0xff]
        %v1751 = vld [vmem:[%s1483 + $0x88] sm:$0xff]
        %v1752 = vld [vmem:[%s1483 + $0x90] sm:$0xff]
        %v1753 = vld [vmem:[%s1483 + $0x98] sm:$0xff]
        %v1754 = vld [vmem:[%s1483 + $0xa0] sm:$0xff]
        %v1755 = vld [vmem:[%s1483 + $0xa8] sm:$0xff]
        %v1756 = vld [vmem:[%s1483 + $0xb0] sm:$0xff]
        %v1757 = vld [vmem:[%s1483 + $0xb8] sm:$0xff]
        %v1758 = vld [vmem:[%s1483 + $0xc0] sm:$0xff]
        %v1759 = vld [vmem:[%s1483 + $0xc8] sm:$0xff]
        %v1760 = vld [vmem:[%s1483 + $0xd0] sm:$0xff]
        %v1761 = vld [vmem:[%s1483 + $0xd8] sm:$0xff]
        %v1762 = vld [vmem:[%s1483 + $0xe0] sm:$0xff]
        %v1763 = vld [vmem:[%s1483 + $0xe8] sm:$0xff]
        %v1764 = vld [vmem:[%s1483 + $0xf0] sm:$0xff]
        %v1765 = vld [vmem:[%s1483 + $0xf8] sm:$0xff]
        %v1766 = vld [vmem:[%s1483 + $0x100] sm:$0xff]
        %v1767 = vld [vmem:[%s1483 + $0x108] sm:$0xff]
        %v1768 = vld [vmem:[%s1483 + $0x110] sm:$0xff]
        %v1769 = vld [vmem:[%s1483 + $0x118] sm:$0xff]
        %v1770 = vld [vmem:[%s1483 + $0x120] sm:$0xff]
        %v1771 = vld [vmem:[%s1483 + $0x128] sm:$0xff]
        %v1772 = vld [vmem:[%s1483 + $0x130] sm:$0xff]
        %v1773 = vld [vmem:[%s1483 + $0x138] sm:$0xff]
        %v1774 = vld [vmem:[%s1483 + $0x140] sm:$0xff]
        %v1775 = vld [vmem:[%s1483 + $0x148] sm:$0xff]
        %v1776 = vld [vmem:[%s1483 + $0x150] sm:$0xff]
        %v1777 = vld [vmem:[%s1483 + $0x158] sm:$0xff]
        %v1778 = vld [vmem:[%s1483 + $0x160] sm:$0xff]
        %v1779 = vld [vmem:[%s1483 + $0x168] sm:$0xff]
        %v1780 = vld [vmem:[%s1483 + $0x170] sm:$0xff]
        %v1781 = vld [vmem:[%s1483 + $0x178] sm:$0xff]
        %v1782 = vld [vmem:[%s1483 + $0x180] sm:$0xff]
        %v1783 = vld [vmem:[%s1483 + $0x188] sm:$0xff]
        %v1784 = vld [vmem:[%s1483 + $0x190] sm:$0xff]
        %v1785 = vld [vmem:[%s1483 + $0x198] sm:$0xff]
        %v1786 = vld [vmem:[%s1483 + $0x1a0] sm:$0xff]
        %v1787 = vld [vmem:[%s1483 + $0x1a8] sm:$0xff]
        %v1788 = vld [vmem:[%s1483 + $0x1b0] sm:$0xff]
        %v1789 = vld [vmem:[%s1483 + $0x1b8] sm:$0xff]
        %v1790 = vld [vmem:[%s1483 + $0x1c0] sm:$0xff]
        %v1791 = vld [vmem:[%s1483 + $0x1c8] sm:$0xff]
        %v1792 = vld [vmem:[%s1483 + $0x1d0] sm:$0xff]
        %v1793 = vld [vmem:[%s1483 + $0x1d8] sm:$0xff]
        %v1794 = vld [vmem:[%s1483 + $0x1e0] sm:$0xff]
        %v1795 = vld [vmem:[%s1483 + $0x1e8] sm:$0xff]
        %v1796 = vld [vmem:[%s1483 + $0x1f0] sm:$0xff]
        %v1797 = vld [vmem:[%s1483 + $0x1f8] sm:$0xff]
        %v1798 = vadd.f32 %v1670, %v1734
        %v1799 = vadd.f32 %v1671, %v1735
        %v1800 = vadd.f32 %v1672, %v1736
        %v1801 = vadd.f32 %v1673, %v1737
        %v1802 = vadd.f32 %v1674, %v1738
        %v1803 = vadd.f32 %v1675, %v1739
        %v1804 = vadd.f32 %v1676, %v1740
        %v1805 = vadd.f32 %v1677, %v1741
        %v1806 = vadd.f32 %v1678, %v1742
        %v1807 = vadd.f32 %v1679, %v1743
        %v1808 = vadd.f32 %v1680, %v1744
        %v1809 = vadd.f32 %v1681, %v1745
        %v1810 = vadd.f32 %v1682, %v1746
        %v1811 = vadd.f32 %v1683, %v1747
        %v1812 = vadd.f32 %v1684, %v1748
        %v1813 = vadd.f32 %v1685, %v1749
        %v1814 = vadd.f32 %v1686, %v1750
        %v1815 = vadd.f32 %v1687, %v1751
        %v1816 = vadd.f32 %v1688, %v1752
        %v1817 = vadd.f32 %v1689, %v1753
        %v1818 = vadd.f32 %v1690, %v1754
        %v1819 = vadd.f32 %v1691, %v1755
        %v1820 = vadd.f32 %v1692, %v1756
        %v1821 = vadd.f32 %v1693, %v1757
        %v1822 = vadd.f32 %v1694, %v1758
        %v1823 = vadd.f32 %v1695, %v1759
        %v1824 = vadd.f32 %v1696, %v1760
        %v1825 = vadd.f32 %v1697, %v1761
        %v1826 = vadd.f32 %v1698, %v1762
        %v1827 = vadd.f32 %v1699, %v1763
        %v1828 = vadd.f32 %v1700, %v1764
        %v1829 = vadd.f32 %v1701, %v1765
        %v1830 = vadd.f32 %v1702, %v1766
        %v1831 = vadd.f32 %v1703, %v1767
        %v1832 = vadd.f32 %v1704, %v1768
        %v1833 = vadd.f32 %v1705, %v1769
        %v1834 = vadd.f32 %v1706, %v1770
        %v1835 = vadd.f32 %v1707, %v1771
        %v1836 = vadd.f32 %v1708, %v1772
        %v1837 = vadd.f32 %v1709, %v1773
        %v1838 = vadd.f32 %v1710, %v1774
        %v1839 = vadd.f32 %v1711, %v1775
        %v1840 = vadd.f32 %v1712, %v1776
        %v1841 = vadd.f32 %v1713, %v1777
        %v1842 = vadd.f32 %v1714, %v1778
        %v1843 = vadd.f32 %v1715, %v1779
        %v1844 = vadd.f32 %v1716, %v1780
        %v1845 = vadd.f32 %v1717, %v1781
        %v1846 = vadd.f32 %v1718, %v1782
        %v1847 = vadd.f32 %v1719, %v1783
        %v1848 = vadd.f32 %v1720, %v1784
        %v1849 = vadd.f32 %v1721, %v1785
        %v1850 = vadd.f32 %v1722, %v1786
        %v1851 = vadd.f32 %v1723, %v1787
        %v1852 = vadd.f32 %v1724, %v1788
        %v1853 = vadd.f32 %v1725, %v1789
        %v1854 = vadd.f32 %v1726, %v1790
        %v1855 = vadd.f32 %v1727, %v1791
        %v1856 = vadd.f32 %v1728, %v1792
        %v1857 = vadd.f32 %v1729, %v1793
        %v1858 = vadd.f32 %v1730, %v1794
        %v1859 = vadd.f32 %v1731, %v1795
        %v1860 = vadd.f32 %v1732, %v1796
        %v1861 = vadd.f32 %v1733, %v1797
        %v1862 = vld [vmem:[%s1490] sm:$0xff]
        %v1863 = vld [vmem:[%s1490 + $0x8] sm:$0xff]
        %v1864 = vld [vmem:[%s1490 + $0x10] sm:$0xff]
        %v1865 = vld [vmem:[%s1490 + $0x18] sm:$0xff]
        %v1866 = vld [vmem:[%s1490 + $0x20] sm:$0xff]
        %v1867 = vld [vmem:[%s1490 + $0x28] sm:$0xff]
        %v1868 = vld [vmem:[%s1490 + $0x30] sm:$0xff]
        %v1869 = vld [vmem:[%s1490 + $0x38] sm:$0xff]
        %v1870 = vld [vmem:[%s1490 + $0x40] sm:$0xff]
        %v1871 = vld [vmem:[%s1490 + $0x48] sm:$0xff]
        %v1872 = vld [vmem:[%s1490 + $0x50] sm:$0xff]
        %v1873 = vld [vmem:[%s1490 + $0x58] sm:$0xff]
        %v1874 = vld [vmem:[%s1490 + $0x60] sm:$0xff]
        %v1875 = vld [vmem:[%s1490 + $0x68] sm:$0xff]
        %v1876 = vld [vmem:[%s1490 + $0x70] sm:$0xff]
        %v1877 = vld [vmem:[%s1490 + $0x78] sm:$0xff]
        %v1878 = vld [vmem:[%s1490 + $0x80] sm:$0xff]
        %v1879 = vld [vmem:[%s1490 + $0x88] sm:$0xff]
        %v1880 = vld [vmem:[%s1490 + $0x90] sm:$0xff]
        %v1881 = vld [vmem:[%s1490 + $0x98] sm:$0xff]
        %v1882 = vld [vmem:[%s1490 + $0xa0] sm:$0xff]
        %v1883 = vld [vmem:[%s1490 + $0xa8] sm:$0xff]
        %v1884 = vld [vmem:[%s1490 + $0xb0] sm:$0xff]
        %v1885 = vld [vmem:[%s1490 + $0xb8] sm:$0xff]
        %v1886 = vld [vmem:[%s1490 + $0xc0] sm:$0xff]
        %v1887 = vld [vmem:[%s1490 + $0xc8] sm:$0xff]
        %v1888 = vld [vmem:[%s1490 + $0xd0] sm:$0xff]
        %v1889 = vld [vmem:[%s1490 + $0xd8] sm:$0xff]
        %v1890 = vld [vmem:[%s1490 + $0xe0] sm:$0xff]
        %v1891 = vld [vmem:[%s1490 + $0xe8] sm:$0xff]
        %v1892 = vld [vmem:[%s1490 + $0xf0] sm:$0xff]
        %v1893 = vld [vmem:[%s1490 + $0xf8] sm:$0xff]
        %v1894 = vld [vmem:[%s1490 + $0x100] sm:$0xff]
        %v1895 = vld [vmem:[%s1490 + $0x108] sm:$0xff]
        %v1896 = vld [vmem:[%s1490 + $0x110] sm:$0xff]
        %v1897 = vld [vmem:[%s1490 + $0x118] sm:$0xff]
        %v1898 = vld [vmem:[%s1490 + $0x120] sm:$0xff]
        %v1899 = vld [vmem:[%s1490 + $0x128] sm:$0xff]
        %v1900 = vld [vmem:[%s1490 + $0x130] sm:$0xff]
        %v1901 = vld [vmem:[%s1490 + $0x138] sm:$0xff]
        %v1902 = vld [vmem:[%s1490 + $0x140] sm:$0xff]
        %v1903 = vld [vmem:[%s1490 + $0x148] sm:$0xff]
        %v1904 = vld [vmem:[%s1490 + $0x150] sm:$0xff]
        %v1905 = vld [vmem:[%s1490 + $0x158] sm:$0xff]
        %v1906 = vld [vmem:[%s1490 + $0x160] sm:$0xff]
        %v1907 = vld [vmem:[%s1490 + $0x168] sm:$0xff]
        %v1908 = vld [vmem:[%s1490 + $0x170] sm:$0xff]
        %v1909 = vld [vmem:[%s1490 + $0x178] sm:$0xff]
        %v1910 = vld [vmem:[%s1490 + $0x180] sm:$0xff]
        %v1911 = vld [vmem:[%s1490 + $0x188] sm:$0xff]
        %v1912 = vld [vmem:[%s1490 + $0x190] sm:$0xff]
        %v1913 = vld [vmem:[%s1490 + $0x198] sm:$0xff]
        %v1914 = vld [vmem:[%s1490 + $0x1a0] sm:$0xff]
        %v1915 = vld [vmem:[%s1490 + $0x1a8] sm:$0xff]
        %v1916 = vld [vmem:[%s1490 + $0x1b0] sm:$0xff]
        %v1917 = vld [vmem:[%s1490 + $0x1b8] sm:$0xff]
        %v1918 = vld [vmem:[%s1490 + $0x1c0] sm:$0xff]
        %v1919 = vld [vmem:[%s1490 + $0x1c8] sm:$0xff]
        %v1920 = vld [vmem:[%s1490 + $0x1d0] sm:$0xff]
        %v1921 = vld [vmem:[%s1490 + $0x1d8] sm:$0xff]
        %v1922 = vld [vmem:[%s1490 + $0x1e0] sm:$0xff]
        %v1923 = vld [vmem:[%s1490 + $0x1e8] sm:$0xff]
        %v1924 = vld [vmem:[%s1490 + $0x1f0] sm:$0xff]
        %v1925 = vld [vmem:[%s1490 + $0x1f8] sm:$0xff]
        %v1926 = vadd.f32 %v1798, %v1862
        %v1927 = vadd.f32 %v1799, %v1863
        %v1928 = vadd.f32 %v1800, %v1864
        %v1929 = vadd.f32 %v1801, %v1865
        %v1930 = vadd.f32 %v1802, %v1866
        %v1931 = vadd.f32 %v1803, %v1867
        %v1932 = vadd.f32 %v1804, %v1868
        %v1933 = vadd.f32 %v1805, %v1869
        %v1934 = vadd.f32 %v1806, %v1870
        %v1935 = vadd.f32 %v1807, %v1871
        %v1936 = vadd.f32 %v1808, %v1872
        %v1937 = vadd.f32 %v1809, %v1873
        %v1938 = vadd.f32 %v1810, %v1874
        %v1939 = vadd.f32 %v1811, %v1875
        %v1940 = vadd.f32 %v1812, %v1876
        %v1941 = vadd.f32 %v1813, %v1877
        %v1942 = vadd.f32 %v1814, %v1878
        %v1943 = vadd.f32 %v1815, %v1879
        %v1944 = vadd.f32 %v1816, %v1880
        %v1945 = vadd.f32 %v1817, %v1881
        %v1946 = vadd.f32 %v1818, %v1882
        %v1947 = vadd.f32 %v1819, %v1883
        %v1948 = vadd.f32 %v1820, %v1884
        %v1949 = vadd.f32 %v1821, %v1885
        %v1950 = vadd.f32 %v1822, %v1886
        %v1951 = vadd.f32 %v1823, %v1887
        %v1952 = vadd.f32 %v1824, %v1888
        %v1953 = vadd.f32 %v1825, %v1889
        %v1954 = vadd.f32 %v1826, %v1890
        %v1955 = vadd.f32 %v1827, %v1891
        %v1956 = vadd.f32 %v1828, %v1892
        %v1957 = vadd.f32 %v1829, %v1893
        %v1958 = vadd.f32 %v1830, %v1894
        %v1959 = vadd.f32 %v1831, %v1895
        %v1960 = vadd.f32 %v1832, %v1896
        %v1961 = vadd.f32 %v1833, %v1897
        %v1962 = vadd.f32 %v1834, %v1898
        %v1963 = vadd.f32 %v1835, %v1899
        %v1964 = vadd.f32 %v1836, %v1900
        %v1965 = vadd.f32 %v1837, %v1901
        %v1966 = vadd.f32 %v1838, %v1902
        %v1967 = vadd.f32 %v1839, %v1903
        %v1968 = vadd.f32 %v1840, %v1904
        %v1969 = vadd.f32 %v1841, %v1905
        %v1970 = vadd.f32 %v1842, %v1906
        %v1971 = vadd.f32 %v1843, %v1907
        %v1972 = vadd.f32 %v1844, %v1908
        %v1973 = vadd.f32 %v1845, %v1909
        %v1974 = vadd.f32 %v1846, %v1910
        %v1975 = vadd.f32 %v1847, %v1911
        %v1976 = vadd.f32 %v1848, %v1912
        %v1977 = vadd.f32 %v1849, %v1913
        %v1978 = vadd.f32 %v1850, %v1914
        %v1979 = vadd.f32 %v1851, %v1915
        %v1980 = vadd.f32 %v1852, %v1916
        %v1981 = vadd.f32 %v1853, %v1917
        %v1982 = vadd.f32 %v1854, %v1918
        %v1983 = vadd.f32 %v1855, %v1919
        %v1984 = vadd.f32 %v1856, %v1920
        %v1985 = vadd.f32 %v1857, %v1921
        %v1986 = vadd.f32 %v1858, %v1922
        %v1987 = vadd.f32 %v1859, %v1923
        %v1988 = vadd.f32 %v1860, %v1924
        %v1989 = vadd.f32 %v1861, %v1925
        %vm1990 = vcmask 392192
        %v1991 = vsel %vm1990, %v1926, 0.0
        %1992 = vadd.xlane.f32.xlu0 %v1991
        %v1993 = vpop.xlane.xlu0 %1992
        %v1994 = vsel %vm1990, %v1927, 0.0
        %1995 = vadd.xlane.f32.xlu0 %v1994
        %v1996 = vpop.xlane.xlu0 %1995
        %v1997 = vsel %vm1990, %v1928, 0.0
        %1998 = vadd.xlane.f32.xlu0 %v1997
        %v1999 = vpop.xlane.xlu0 %1998
        %v2000 = vsel %vm1990, %v1929, 0.0
        %2001 = vadd.xlane.f32.xlu0 %v2000
        %v2002 = vpop.xlane.xlu0 %2001
        %v2003 = vsel %vm1990, %v1930, 0.0
        %2004 = vadd.xlane.f32.xlu0 %v2003
        %v2005 = vpop.xlane.xlu0 %2004
        %v2006 = vsel %vm1990, %v1931, 0.0
        %2007 = vadd.xlane.f32.xlu0 %v2006
        %v2008 = vpop.xlane.xlu0 %2007
        %v2009 = vsel %vm1990, %v1932, 0.0
        %2010 = vadd.xlane.f32.xlu0 %v2009
        %v2011 = vpop.xlane.xlu0 %2010
        %v2012 = vsel %vm1990, %v1933, 0.0
        %2013 = vadd.xlane.f32.xlu0 %v2012
        %v2014 = vpop.xlane.xlu0 %2013
        %v2015 = vsel %vm1990, %v1934, 0.0
        %2016 = vadd.xlane.f32.xlu0 %v2015
        %v2017 = vpop.xlane.xlu0 %2016
        %v2018 = vsel %vm1990, %v1935, 0.0
        %2019 = vadd.xlane.f32.xlu0 %v2018
        %v2020 = vpop.xlane.xlu0 %2019
        %v2021 = vsel %vm1990, %v1936, 0.0
        %2022 = vadd.xlane.f32.xlu0 %v2021
        %v2023 = vpop.xlane.xlu0 %2022
        %v2024 = vsel %vm1990, %v1937, 0.0
        %2025 = vadd.xlane.f32.xlu0 %v2024
        %v2026 = vpop.xlane.xlu0 %2025
        %v2027 = vsel %vm1990, %v1938, 0.0
        %2028 = vadd.xlane.f32.xlu0 %v2027
        %v2029 = vpop.xlane.xlu0 %2028
        %v2030 = vsel %vm1990, %v1939, 0.0
        %2031 = vadd.xlane.f32.xlu0 %v2030
        %v2032 = vpop.xlane.xlu0 %2031
        %v2033 = vsel %vm1990, %v1940, 0.0
        %2034 = vadd.xlane.f32.xlu0 %v2033
        %v2035 = vpop.xlane.xlu0 %2034
        %v2036 = vsel %vm1990, %v1941, 0.0
        %2037 = vadd.xlane.f32.xlu0 %v2036
        %v2038 = vpop.xlane.xlu0 %2037
        %v2039 = vsel %vm1990, %v1942, 0.0
        %2040 = vadd.xlane.f32.xlu0 %v2039
        %v2041 = vpop.xlane.xlu0 %2040
        %v2042 = vsel %vm1990, %v1943, 0.0
        %2043 = vadd.xlane.f32.xlu0 %v2042
        %v2044 = vpop.xlane.xlu0 %2043
        %v2045 = vsel %vm1990, %v1944, 0.0
        %2046 = vadd.xlane.f32.xlu0 %v2045
        %v2047 = vpop.xlane.xlu0 %2046
        %v2048 = vsel %vm1990, %v1945, 0.0
        %2049 = vadd.xlane.f32.xlu0 %v2048
        %v2050 = vpop.xlane.xlu0 %2049
        %v2051 = vsel %vm1990, %v1946, 0.0
        %2052 = vadd.xlane.f32.xlu0 %v2051
        %v2053 = vpop.xlane.xlu0 %2052
        %v2054 = vsel %vm1990, %v1947, 0.0
        %2055 = vadd.xlane.f32.xlu0 %v2054
        %v2056 = vpop.xlane.xlu0 %2055
        %v2057 = vsel %vm1990, %v1948, 0.0
        %2058 = vadd.xlane.f32.xlu0 %v2057
        %v2059 = vpop.xlane.xlu0 %2058
        %v2060 = vsel %vm1990, %v1949, 0.0
        %2061 = vadd.xlane.f32.xlu0 %v2060
        %v2062 = vpop.xlane.xlu0 %2061
        %v2063 = vsel %vm1990, %v1950, 0.0
        %2064 = vadd.xlane.f32.xlu0 %v2063
        %v2065 = vpop.xlane.xlu0 %2064
        %v2066 = vsel %vm1990, %v1951, 0.0
        %2067 = vadd.xlane.f32.xlu0 %v2066
        %v2068 = vpop.xlane.xlu0 %2067
        %v2069 = vsel %vm1990, %v1952, 0.0
        %2070 = vadd.xlane.f32.xlu0 %v2069
        %v2071 = vpop.xlane.xlu0 %2070
        %v2072 = vsel %vm1990, %v1953, 0.0
        %2073 = vadd.xlane.f32.xlu0 %v2072
        %v2074 = vpop.xlane.xlu0 %2073
        %v2075 = vsel %vm1990, %v1954, 0.0
        %2076 = vadd.xlane.f32.xlu0 %v2075
        %v2077 = vpop.xlane.xlu0 %2076
        %v2078 = vsel %vm1990, %v1955, 0.0
        %2079 = vadd.xlane.f32.xlu0 %v2078
        %v2080 = vpop.xlane.xlu0 %2079
        %v2081 = vsel %vm1990, %v1956, 0.0
        %2082 = vadd.xlane.f32.xlu0 %v2081
        %v2083 = vpop.xlane.xlu0 %2082
        %v2084 = vsel %vm1990, %v1957, 0.0
        %2085 = vadd.xlane.f32.xlu0 %v2084
        %v2086 = vpop.xlane.xlu0 %2085
        %v2087 = vsel %vm1990, %v1958, 0.0
        %2088 = vadd.xlane.f32.xlu0 %v2087
        %v2089 = vpop.xlane.xlu0 %2088
        %v2090 = vsel %vm1990, %v1959, 0.0
        %2091 = vadd.xlane.f32.xlu0 %v2090
        %v2092 = vpop.xlane.xlu0 %2091
        %v2093 = vsel %vm1990, %v1960, 0.0
        %2094 = vadd.xlane.f32.xlu0 %v2093
        %v2095 = vpop.xlane.xlu0 %2094
        %v2096 = vsel %vm1990, %v1961, 0.0
        %2097 = vadd.xlane.f32.xlu0 %v2096
        %v2098 = vpop.xlane.xlu0 %2097
        %v2099 = vsel %vm1990, %v1962, 0.0
        %2100 = vadd.xlane.f32.xlu0 %v2099
        %v2101 = vpop.xlane.xlu0 %2100
        %v2102 = vsel %vm1990, %v1963, 0.0
        %2103 = vadd.xlane.f32.xlu0 %v2102
        %v2104 = vpop.xlane.xlu0 %2103
        %v2105 = vsel %vm1990, %v1964, 0.0
        %2106 = vadd.xlane.f32.xlu0 %v2105
        %v2107 = vpop.xlane.xlu0 %2106
        %v2108 = vsel %vm1990, %v1965, 0.0
        %2109 = vadd.xlane.f32.xlu0 %v2108
        %v2110 = vpop.xlane.xlu0 %2109
        %v2111 = vsel %vm1990, %v1966, 0.0
        %2112 = vadd.xlane.f32.xlu0 %v2111
        %v2113 = vpop.xlane.xlu0 %2112
        %v2114 = vsel %vm1990, %v1967, 0.0
        %2115 = vadd.xlane.f32.xlu0 %v2114
        %v2116 = vpop.xlane.xlu0 %2115
        %v2117 = vsel %vm1990, %v1968, 0.0
        %2118 = vadd.xlane.f32.xlu0 %v2117
        %v2119 = vpop.xlane.xlu0 %2118
        %v2120 = vsel %vm1990, %v1969, 0.0
        %2121 = vadd.xlane.f32.xlu0 %v2120
        %v2122 = vpop.xlane.xlu0 %2121
        %v2123 = vsel %vm1990, %v1970, 0.0
        %2124 = vadd.xlane.f32.xlu0 %v2123
        %v2125 = vpop.xlane.xlu0 %2124
        %v2126 = vsel %vm1990, %v1971, 0.0
        %2127 = vadd.xlane.f32.xlu0 %v2126
        %v2128 = vpop.xlane.xlu0 %2127
        %v2129 = vsel %vm1990, %v1972, 0.0
        %2130 = vadd.xlane.f32.xlu0 %v2129
        %v2131 = vpop.xlane.xlu0 %2130
        %v2132 = vsel %vm1990, %v1973, 0.0
        %2133 = vadd.xlane.f32.xlu0 %v2132
        %v2134 = vpop.xlane.xlu0 %2133
        %v2135 = vsel %vm1990, %v1974, 0.0
        %2136 = vadd.xlane.f32.xlu0 %v2135
        %v2137 = vpop.xlane.xlu0 %2136
        %v2138 = vsel %vm1990, %v1975, 0.0
        %2139 = vadd.xlane.f32.xlu0 %v2138
        %v2140 = vpop.xlane.xlu0 %2139
        %v2141 = vsel %vm1990, %v1976, 0.0
        %2142 = vadd.xlane.f32.xlu0 %v2141
        %v2143 = vpop.xlane.xlu0 %2142
        %v2144 = vsel %vm1990, %v1977, 0.0
        %2145 = vadd.xlane.f32.xlu0 %v2144
        %v2146 = vpop.xlane.xlu0 %2145
        %v2147 = vsel %vm1990, %v1978, 0.0
        %2148 = vadd.xlane.f32.xlu0 %v2147
        %v2149 = vpop.xlane.xlu0 %2148
        %v2150 = vsel %vm1990, %v1979, 0.0
        %2151 = vadd.xlane.f32.xlu0 %v2150
        %v2152 = vpop.xlane.xlu0 %2151
        %v2153 = vsel %vm1990, %v1980, 0.0
        %2154 = vadd.xlane.f32.xlu0 %v2153
        %v2155 = vpop.xlane.xlu0 %2154
        %v2156 = vsel %vm1990, %v1981, 0.0
        %2157 = vadd.xlane.f32.xlu0 %v2156
        %v2158 = vpop.xlane.xlu0 %2157
        %v2159 = vsel %vm1990, %v1982, 0.0
        %2160 = vadd.xlane.f32.xlu0 %v2159
        %v2161 = vpop.xlane.xlu0 %2160
        %v2162 = vsel %vm1990, %v1983, 0.0
        %2163 = vadd.xlane.f32.xlu0 %v2162
        %v2164 = vpop.xlane.xlu0 %2163
        %v2165 = vsel %vm1990, %v1984, 0.0
        %2166 = vadd.xlane.f32.xlu0 %v2165
        %v2167 = vpop.xlane.xlu0 %2166
        %v2168 = vsel %vm1990, %v1985, 0.0
        %2169 = vadd.xlane.f32.xlu0 %v2168
        %v2170 = vpop.xlane.xlu0 %2169
        %v2171 = vsel %vm1990, %v1986, 0.0
        %2172 = vadd.xlane.f32.xlu0 %v2171
        %v2173 = vpop.xlane.xlu0 %2172
        %v2174 = vsel %vm1990, %v1987, 0.0
        %2175 = vadd.xlane.f32.xlu0 %v2174
        %v2176 = vpop.xlane.xlu0 %2175
        %v2177 = vsel %vm1990, %v1988, 0.0
        %2178 = vadd.xlane.f32.xlu0 %v2177
        %v2179 = vpop.xlane.xlu0 %2178
        %v2180 = vsel %vm1990, %v1989, 0.0
        %2181 = vadd.xlane.f32.xlu0 %v2180
        %v2182 = vpop.xlane.xlu0 %2181
        %v2183 = vmul.f32 %v1993, 0.0052083335
        %v2184 = vmul.f32 %v1996, 0.0052083335
        %v2185 = vmul.f32 %v1999, 0.0052083335
        %v2186 = vmul.f32 %v2002, 0.0052083335
        %v2187 = vmul.f32 %v2005, 0.0052083335
        %v2188 = vmul.f32 %v2008, 0.0052083335
        %v2189 = vmul.f32 %v2011, 0.0052083335
        %v2190 = vmul.f32 %v2014, 0.0052083335
        %v2191 = vmul.f32 %v2017, 0.0052083335
        %v2192 = vmul.f32 %v2020, 0.0052083335
        %v2193 = vmul.f32 %v2023, 0.0052083335
        %v2194 = vmul.f32 %v2026, 0.0052083335
        %v2195 = vmul.f32 %v2029, 0.0052083335
        %v2196 = vmul.f32 %v2032, 0.0052083335
        %v2197 = vmul.f32 %v2035, 0.0052083335
        %v2198 = vmul.f32 %v2038, 0.0052083335
        %v2199 = vmul.f32 %v2041, 0.0052083335
        %v2200 = vmul.f32 %v2044, 0.0052083335
        %v2201 = vmul.f32 %v2047, 0.0052083335
        %v2202 = vmul.f32 %v2050, 0.0052083335
        %v2203 = vmul.f32 %v2053, 0.0052083335
        %v2204 = vmul.f32 %v2056, 0.0052083335
        %v2205 = vmul.f32 %v2059, 0.0052083335
        %v2206 = vmul.f32 %v2062, 0.0052083335
        %v2207 = vmul.f32 %v2065, 0.0052083335
        %v2208 = vmul.f32 %v2068, 0.0052083335
        %v2209 = vmul.f32 %v2071, 0.0052083335
        %v2210 = vmul.f32 %v2074, 0.0052083335
        %v2211 = vmul.f32 %v2077, 0.0052083335
        %v2212 = vmul.f32 %v2080, 0.0052083335
        %v2213 = vmul.f32 %v2083, 0.0052083335
        %v2214 = vmul.f32 %v2086, 0.0052083335
        %v2215 = vmul.f32 %v2089, 0.0052083335
        %v2216 = vmul.f32 %v2092, 0.0052083335
        %v2217 = vmul.f32 %v2095, 0.0052083335
        %v2218 = vmul.f32 %v2098, 0.0052083335
        %v2219 = vmul.f32 %v2101, 0.0052083335
        %v2220 = vmul.f32 %v2104, 0.0052083335
        %v2221 = vmul.f32 %v2107, 0.0052083335
        %v2222 = vmul.f32 %v2110, 0.0052083335
        %v2223 = vmul.f32 %v2113, 0.0052083335
        %v2224 = vmul.f32 %v2116, 0.0052083335
        %v2225 = vmul.f32 %v2119, 0.0052083335
        %v2226 = vmul.f32 %v2122, 0.0052083335
        %v2227 = vmul.f32 %v2125, 0.0052083335
        %v2228 = vmul.f32 %v2128, 0.0052083335
        %v2229 = vmul.f32 %v2131, 0.0052083335
        %v2230 = vmul.f32 %v2134, 0.0052083335
        %v2231 = vmul.f32 %v2137, 0.0052083335
        %v2232 = vmul.f32 %v2140, 0.0052083335
        %v2233 = vmul.f32 %v2143, 0.0052083335
        %v2234 = vmul.f32 %v2146, 0.0052083335
        %v2235 = vmul.f32 %v2149, 0.0052083335
        %v2236 = vmul.f32 %v2152, 0.0052083335
        %v2237 = vmul.f32 %v2155, 0.0052083335
        %v2238 = vmul.f32 %v2158, 0.0052083335
        %v2239 = vmul.f32 %v2161, 0.0052083335
        %v2240 = vmul.f32 %v2164, 0.0052083335
        %v2241 = vmul.f32 %v2167, 0.0052083335
        %v2242 = vmul.f32 %v2170, 0.0052083335
        %v2243 = vmul.f32 %v2173, 0.0052083335
        %v2244 = vmul.f32 %v2176, 0.0052083335
        %v2245 = vmul.f32 %v2179, 0.0052083335
        %v2246 = vmul.f32 %v2182, 0.0052083335
        %v2247 = vsub.f32 %v1542, %v2183
        %v2248 = vsub.f32 %v1543, %v2184
        %v2249 = vsub.f32 %v1544, %v2185
        %v2250 = vsub.f32 %v1545, %v2186
        %v2251 = vsub.f32 %v1546, %v2187
        %v2252 = vsub.f32 %v1547, %v2188
        %v2253 = vsub.f32 %v1548, %v2189
        %v2254 = vsub.f32 %v1549, %v2190
        %v2255 = vsub.f32 %v1550, %v2191
        %v2256 = vsub.f32 %v1551, %v2192
        %v2257 = vsub.f32 %v1552, %v2193
        %v2258 = vsub.f32 %v1553, %v2194
        %v2259 = vsub.f32 %v1554, %v2195
        %v2260 = vsub.f32 %v1555, %v2196
        %v2261 = vsub.f32 %v1556, %v2197
        %v2262 = vsub.f32 %v1557, %v2198
        %v2263 = vsub.f32 %v1558, %v2199
        %v2264 = vsub.f32 %v1559, %v2200
        %v2265 = vsub.f32 %v1560, %v2201
        %v2266 = vsub.f32 %v1561, %v2202
        %v2267 = vsub.f32 %v1562, %v2203
        %v2268 = vsub.f32 %v1563, %v2204
        %v2269 = vsub.f32 %v1564, %v2205
        %v2270 = vsub.f32 %v1565, %v2206
        %v2271 = vsub.f32 %v1566, %v2207
        %v2272 = vsub.f32 %v1567, %v2208
        %v2273 = vsub.f32 %v1568, %v2209
        %v2274 = vsub.f32 %v1569, %v2210
        %v2275 = vsub.f32 %v1570, %v2211
        %v2276 = vsub.f32 %v1571, %v2212
        %v2277 = vsub.f32 %v1572, %v2213
        %v2278 = vsub.f32 %v1573, %v2214
        %v2279 = vsub.f32 %v1574, %v2215
        %v2280 = vsub.f32 %v1575, %v2216
        %v2281 = vsub.f32 %v1576, %v2217
        %v2282 = vsub.f32 %v1577, %v2218
        %v2283 = vsub.f32 %v1578, %v2219
        %v2284 = vsub.f32 %v1579, %v2220
        %v2285 = vsub.f32 %v1580, %v2221
        %v2286 = vsub.f32 %v1581, %v2222
        %v2287 = vsub.f32 %v1582, %v2223
        %v2288 = vsub.f32 %v1583, %v2224
        %v2289 = vsub.f32 %v1584, %v2225
        %v2290 = vsub.f32 %v1585, %v2226
        %v2291 = vsub.f32 %v1586, %v2227
        %v2292 = vsub.f32 %v1587, %v2228
        %v2293 = vsub.f32 %v1588, %v2229
        %v2294 = vsub.f32 %v1589, %v2230
        %v2295 = vsub.f32 %v1590, %v2231
        %v2296 = vsub.f32 %v1591, %v2232
        %v2297 = vsub.f32 %v1592, %v2233
        %v2298 = vsub.f32 %v1593, %v2234
        %v2299 = vsub.f32 %v1594, %v2235
        %v2300 = vsub.f32 %v1595, %v2236
        %v2301 = vsub.f32 %v1596, %v2237
        %v2302 = vsub.f32 %v1597, %v2238
        %v2303 = vsub.f32 %v1598, %v2239
        %v2304 = vsub.f32 %v1599, %v2240
        %v2305 = vsub.f32 %v1600, %v2241
        %v2306 = vsub.f32 %v1601, %v2242
        %v2307 = vsub.f32 %v1602, %v2243
        %v2308 = vsub.f32 %v1603, %v2244
        %v2309 = vsub.f32 %v1604, %v2245
        %v2310 = vsub.f32 %v1605, %v2246
        %v2311 = vmul.f32 %v2247, %v2247
        %v2312 = vmul.f32 %v2248, %v2248
        %v2313 = vmul.f32 %v2249, %v2249
        %v2314 = vmul.f32 %v2250, %v2250
        %v2315 = vmul.f32 %v2251, %v2251
        %v2316 = vmul.f32 %v2252, %v2252
        %v2317 = vmul.f32 %v2253, %v2253
        %v2318 = vmul.f32 %v2254, %v2254
        %v2319 = vmul.f32 %v2255, %v2255
        %v2320 = vmul.f32 %v2256, %v2256
        %v2321 = vmul.f32 %v2257, %v2257
        %v2322 = vmul.f32 %v2258, %v2258
        %v2323 = vmul.f32 %v2259, %v2259
        %v2324 = vmul.f32 %v2260, %v2260
        %v2325 = vmul.f32 %v2261, %v2261
        %v2326 = vmul.f32 %v2262, %v2262
        %v2327 = vmul.f32 %v2263, %v2263
        %v2328 = vmul.f32 %v2264, %v2264
        %v2329 = vmul.f32 %v2265, %v2265
        %v2330 = vmul.f32 %v2266, %v2266
        %v2331 = vmul.f32 %v2267, %v2267
        %v2332 = vmul.f32 %v2268, %v2268
        %v2333 = vmul.f32 %v2269, %v2269
        %v2334 = vmul.f32 %v2270, %v2270
        %v2335 = vmul.f32 %v2271, %v2271
        %v2336 = vmul.f32 %v2272, %v2272
        %v2337 = vmul.f32 %v2273, %v2273
        %v2338 = vmul.f32 %v2274, %v2274
        %v2339 = vmul.f32 %v2275, %v2275
        %v2340 = vmul.f32 %v2276, %v2276
        %v2341 = vmul.f32 %v2277, %v2277
        %v2342 = vmul.f32 %v2278, %v2278
        %v2343 = vmul.f32 %v2279, %v2279
        %v2344 = vmul.f32 %v2280, %v2280
        %v2345 = vmul.f32 %v2281, %v2281
        %v2346 = vmul.f32 %v2282, %v2282
        %v2347 = vmul.f32 %v2283, %v2283
        %v2348 = vmul.f32 %v2284, %v2284
        %v2349 = vmul.f32 %v2285, %v2285
        %v2350 = vmul.f32 %v2286, %v2286
        %v2351 = vmul.f32 %v2287, %v2287
        %v2352 = vmul.f32 %v2288, %v2288
        %v2353 = vmul.f32 %v2289, %v2289
        %v2354 = vmul.f32 %v2290, %v2290
        %v2355 = vmul.f32 %v2291, %v2291
        %v2356 = vmul.f32 %v2292, %v2292
        %v2357 = vmul.f32 %v2293, %v2293
        %v2358 = vmul.f32 %v2294, %v2294
        %v2359 = vmul.f32 %v2295, %v2295
        %v2360 = vmul.f32 %v2296, %v2296
        %v2361 = vmul.f32 %v2297, %v2297
        %v2362 = vmul.f32 %v2298, %v2298
        %v2363 = vmul.f32 %v2299, %v2299
        %v2364 = vmul.f32 %v2300, %v2300
        %v2365 = vmul.f32 %v2301, %v2301
        %v2366 = vmul.f32 %v2302, %v2302
        %v2367 = vmul.f32 %v2303, %v2303
        %v2368 = vmul.f32 %v2304, %v2304
        %v2369 = vmul.f32 %v2305, %v2305
        %v2370 = vmul.f32 %v2306, %v2306
        %v2371 = vmul.f32 %v2307, %v2307
        %v2372 = vmul.f32 %v2308, %v2308
        %v2373 = vmul.f32 %v2309, %v2309
        %v2374 = vmul.f32 %v2310, %v2310
        %v2375 = vsub.f32 %v1606, %v2183
        %v2376 = vsub.f32 %v1607, %v2184
        %v2377 = vsub.f32 %v1608, %v2185
        %v2378 = vsub.f32 %v1609, %v2186
        %v2379 = vsub.f32 %v1610, %v2187
        %v2380 = vsub.f32 %v1611, %v2188
        %v2381 = vsub.f32 %v1612, %v2189
        %v2382 = vsub.f32 %v1613, %v2190
        %v2383 = vsub.f32 %v1614, %v2191
        %v2384 = vsub.f32 %v1615, %v2192
        %v2385 = vsub.f32 %v1616, %v2193
        %v2386 = vsub.f32 %v1617, %v2194
        %v2387 = vsub.f32 %v1618, %v2195
        %v2388 = vsub.f32 %v1619, %v2196
        %v2389 = vsub.f32 %v1620, %v2197
        %v2390 = vsub.f32 %v1621, %v2198
        %v2391 = vsub.f32 %v1622, %v2199
        %v2392 = vsub.f32 %v1623, %v2200
        %v2393 = vsub.f32 %v1624, %v2201
        %v2394 = vsub.f32 %v1625, %v2202
        %v2395 = vsub.f32 %v1626, %v2203
        %v2396 = vsub.f32 %v1627, %v2204
        %v2397 = vsub.f32 %v1628, %v2205
        %v2398 = vsub.f32 %v1629, %v2206
        %v2399 = vsub.f32 %v1630, %v2207
        %v2400 = vsub.f32 %v1631, %v2208
        %v2401 = vsub.f32 %v1632, %v2209
        %v2402 = vsub.f32 %v1633, %v2210
        %v2403 = vsub.f32 %v1634, %v2211
        %v2404 = vsub.f32 %v1635, %v2212
        %v2405 = vsub.f32 %v1636, %v2213
        %v2406 = vsub.f32 %v1637, %v2214
        %v2407 = vsub.f32 %v1638, %v2215
        %v2408 = vsub.f32 %v1639, %v2216
        %v2409 = vsub.f32 %v1640, %v2217
        %v2410 = vsub.f32 %v1641, %v2218
        %v2411 = vsub.f32 %v1642, %v2219
        %v2412 = vsub.f32 %v1643, %v2220
        %v2413 = vsub.f32 %v1644, %v2221
        %v2414 = vsub.f32 %v1645, %v2222
        %v2415 = vsub.f32 %v1646, %v2223
        %v2416 = vsub.f32 %v1647, %v2224
        %v2417 = vsub.f32 %v1648, %v2225
        %v2418 = vsub.f32 %v1649, %v2226
        %v2419 = vsub.f32 %v1650, %v2227
        %v2420 = vsub.f32 %v1651, %v2228
        %v2421 = vsub.f32 %v1652, %v2229
        %v2422 = vsub.f32 %v1653, %v2230
        %v2423 = vsub.f32 %v1654, %v2231
        %v2424 = vsub.f32 %v1655, %v2232
        %v2425 = vsub.f32 %v1656, %v2233
        %v2426 = vsub.f32 %v1657, %v2234
        %v2427 = vsub.f32 %v1658, %v2235
        %v2428 = vsub.f32 %v1659, %v2236
        %v2429 = vsub.f32 %v1660, %v2237
        %v2430 = vsub.f32 %v1661, %v2238
        %v2431 = vsub.f32 %v1662, %v2239
        %v2432 = vsub.f32 %v1663, %v2240
        %v2433 = vsub.f32 %v1664, %v2241
        %v2434 = vsub.f32 %v1665, %v2242
        %v2435 = vsub.f32 %v1666, %v2243
        %v2436 = vsub.f32 %v1667, %v2244
        %v2437 = vsub.f32 %v1668, %v2245
        %v2438 = vsub.f32 %v1669, %v2246
        %v2439 = vmul.f32 %v2375, %v2375
        %v2440 = vmul.f32 %v2376, %v2376
        %v2441 = vmul.f32 %v2377, %v2377
        %v2442 = vmul.f32 %v2378, %v2378
        %v2443 = vmul.f32 %v2379, %v2379
        %v2444 = vmul.f32 %v2380, %v2380
        %v2445 = vmul.f32 %v2381, %v2381
        %v2446 = vmul.f32 %v2382, %v2382
        %v2447 = vmul.f32 %v2383, %v2383
        %v2448 = vmul.f32 %v2384, %v2384
        %v2449 = vmul.f32 %v2385, %v2385
        %v2450 = vmul.f32 %v2386, %v2386
        %v2451 = vmul.f32 %v2387, %v2387
        %v2452 = vmul.f32 %v2388, %v2388
        %v2453 = vmul.f32 %v2389, %v2389
        %v2454 = vmul.f32 %v2390, %v2390
        %v2455 = vmul.f32 %v2391, %v2391
        %v2456 = vmul.f32 %v2392, %v2392
        %v2457 = vmul.f32 %v2393, %v2393
        %v2458 = vmul.f32 %v2394, %v2394
        %v2459 = vmul.f32 %v2395, %v2395
        %v2460 = vmul.f32 %v2396, %v2396
        %v2461 = vmul.f32 %v2397, %v2397
        %v2462 = vmul.f32 %v2398, %v2398
        %v2463 = vmul.f32 %v2399, %v2399
        %v2464 = vmul.f32 %v2400, %v2400
        %v2465 = vmul.f32 %v2401, %v2401
        %v2466 = vmul.f32 %v2402, %v2402
        %v2467 = vmul.f32 %v2403, %v2403
        %v2468 = vmul.f32 %v2404, %v2404
        %v2469 = vmul.f32 %v2405, %v2405
        %v2470 = vmul.f32 %v2406, %v2406
        %v2471 = vmul.f32 %v2407, %v2407
        %v2472 = vmul.f32 %v2408, %v2408
        %v2473 = vmul.f32 %v2409, %v2409
        %v2474 = vmul.f32 %v2410, %v2410
        %v2475 = vmul.f32 %v2411, %v2411
        %v2476 = vmul.f32 %v2412, %v2412
        %v2477 = vmul.f32 %v2413, %v2413
        %v2478 = vmul.f32 %v2414, %v2414
        %v2479 = vmul.f32 %v2415, %v2415
        %v2480 = vmul.f32 %v2416, %v2416
        %v2481 = vmul.f32 %v2417, %v2417
        %v2482 = vmul.f32 %v2418, %v2418
        %v2483 = vmul.f32 %v2419, %v2419
        %v2484 = vmul.f32 %v2420, %v2420
        %v2485 = vmul.f32 %v2421, %v2421
        %v2486 = vmul.f32 %v2422, %v2422
        %v2487 = vmul.f32 %v2423, %v2423
        %v2488 = vmul.f32 %v2424, %v2424
        %v2489 = vmul.f32 %v2425, %v2425
        %v2490 = vmul.f32 %v2426, %v2426
        %v2491 = vmul.f32 %v2427, %v2427
        %v2492 = vmul.f32 %v2428, %v2428
        %v2493 = vmul.f32 %v2429, %v2429
        %v2494 = vmul.f32 %v2430, %v2430
        %v2495 = vmul.f32 %v2431, %v2431
        %v2496 = vmul.f32 %v2432, %v2432
        %v2497 = vmul.f32 %v2433, %v2433
        %v2498 = vmul.f32 %v2434, %v2434
        %v2499 = vmul.f32 %v2435, %v2435
        %v2500 = vmul.f32 %v2436, %v2436
        %v2501 = vmul.f32 %v2437, %v2437
        %v2502 = vmul.f32 %v2438, %v2438
        %v2503 = vadd.f32 %v2311, %v2439
        %v2504 = vadd.f32 %v2312, %v2440
        %v2505 = vadd.f32 %v2313, %v2441
        %v2506 = vadd.f32 %v2314, %v2442
        %v2507 = vadd.f32 %v2315, %v2443
        %v2508 = vadd.f32 %v2316, %v2444
        %v2509 = vadd.f32 %v2317, %v2445
        %v2510 = vadd.f32 %v2318, %v2446
        %v2511 = vadd.f32 %v2319, %v2447
        %v2512 = vadd.f32 %v2320, %v2448
        %v2513 = vadd.f32 %v2321, %v2449
        %v2514 = vadd.f32 %v2322, %v2450
        %v2515 = vadd.f32 %v2323, %v2451
        %v2516 = vadd.f32 %v2324, %v2452
        %v2517 = vadd.f32 %v2325, %v2453
        %v2518 = vadd.f32 %v2326, %v2454
        %v2519 = vadd.f32 %v2327, %v2455
        %v2520 = vadd.f32 %v2328, %v2456
        %v2521 = vadd.f32 %v2329, %v2457
        %v2522 = vadd.f32 %v2330, %v2458
        %v2523 = vadd.f32 %v2331, %v2459
        %v2524 = vadd.f32 %v2332, %v2460
        %v2525 = vadd.f32 %v2333, %v2461
        %v2526 = vadd.f32 %v2334, %v2462
        %v2527 = vadd.f32 %v2335, %v2463
        %v2528 = vadd.f32 %v2336, %v2464
        %v2529 = vadd.f32 %v2337, %v2465
        %v2530 = vadd.f32 %v2338, %v2466
        %v2531 = vadd.f32 %v2339, %v2467
        %v2532 = vadd.f32 %v2340, %v2468
        %v2533 = vadd.f32 %v2341, %v2469
        %v2534 = vadd.f32 %v2342, %v2470
        %v2535 = vadd.f32 %v2343, %v2471
        %v2536 = vadd.f32 %v2344, %v2472
        %v2537 = vadd.f32 %v2345, %v2473
        %v2538 = vadd.f32 %v2346, %v2474
        %v2539 = vadd.f32 %v2347, %v2475
        %v2540 = vadd.f32 %v2348, %v2476
        %v2541 = vadd.f32 %v2349, %v2477
        %v2542 = vadd.f32 %v2350, %v2478
        %v2543 = vadd.f32 %v2351, %v2479
        %v2544 = vadd.f32 %v2352, %v2480
        %v2545 = vadd.f32 %v2353, %v2481
        %v2546 = vadd.f32 %v2354, %v2482
        %v2547 = vadd.f32 %v2355, %v2483
        %v2548 = vadd.f32 %v2356, %v2484
        %v2549 = vadd.f32 %v2357, %v2485
        %v2550 = vadd.f32 %v2358, %v2486
        %v2551 = vadd.f32 %v2359, %v2487
        %v2552 = vadd.f32 %v2360, %v2488
        %v2553 = vadd.f32 %v2361, %v2489
        %v2554 = vadd.f32 %v2362, %v2490
        %v2555 = vadd.f32 %v2363, %v2491
        %v2556 = vadd.f32 %v2364, %v2492
        %v2557 = vadd.f32 %v2365, %v2493
        %v2558 = vadd.f32 %v2366, %v2494
        %v2559 = vadd.f32 %v2367, %v2495
        %v2560 = vadd.f32 %v2368, %v2496
        %v2561 = vadd.f32 %v2369, %v2497
        %v2562 = vadd.f32 %v2370, %v2498
        %v2563 = vadd.f32 %v2371, %v2499
        %v2564 = vadd.f32 %v2372, %v2500
        %v2565 = vadd.f32 %v2373, %v2501
        %v2566 = vadd.f32 %v2374, %v2502
        %v2567 = vsub.f32 %v1734, %v2183
        %v2568 = vsub.f32 %v1735, %v2184
        %v2569 = vsub.f32 %v1736, %v2185
        %v2570 = vsub.f32 %v1737, %v2186
        %v2571 = vsub.f32 %v1738, %v2187
        %v2572 = vsub.f32 %v1739, %v2188
        %v2573 = vsub.f32 %v1740, %v2189
        %v2574 = vsub.f32 %v1741, %v2190
        %v2575 = vsub.f32 %v1742, %v2191
        %v2576 = vsub.f32 %v1743, %v2192
        %v2577 = vsub.f32 %v1744, %v2193
        %v2578 = vsub.f32 %v1745, %v2194
        %v2579 = vsub.f32 %v1746, %v2195
        %v2580 = vsub.f32 %v1747, %v2196
        %v2581 = vsub.f32 %v1748, %v2197
        %v2582 = vsub.f32 %v1749, %v2198
        %v2583 = vsub.f32 %v1750, %v2199
        %v2584 = vsub.f32 %v1751, %v2200
        %v2585 = vsub.f32 %v1752, %v2201
        %v2586 = vsub.f32 %v1753, %v2202
        %v2587 = vsub.f32 %v1754, %v2203
        %v2588 = vsub.f32 %v1755, %v2204
        %v2589 = vsub.f32 %v1756, %v2205
        %v2590 = vsub.f32 %v1757, %v2206
        %v2591 = vsub.f32 %v1758, %v2207
        %v2592 = vsub.f32 %v1759, %v2208
        %v2593 = vsub.f32 %v1760, %v2209
        %v2594 = vsub.f32 %v1761, %v2210
        %v2595 = vsub.f32 %v1762, %v2211
        %v2596 = vsub.f32 %v1763, %v2212
        %v2597 = vsub.f32 %v1764, %v2213
        %v2598 = vsub.f32 %v1765, %v2214
        %v2599 = vsub.f32 %v1766, %v2215
        %v2600 = vsub.f32 %v1767, %v2216
        %v2601 = vsub.f32 %v1768, %v2217
        %v2602 = vsub.f32 %v1769, %v2218
        %v2603 = vsub.f32 %v1770, %v2219
        %v2604 = vsub.f32 %v1771, %v2220
        %v2605 = vsub.f32 %v1772, %v2221
        %v2606 = vsub.f32 %v1773, %v2222
        %v2607 = vsub.f32 %v1774, %v2223
        %v2608 = vsub.f32 %v1775, %v2224
        %v2609 = vsub.f32 %v1776, %v2225
        %v2610 = vsub.f32 %v1777, %v2226
        %v2611 = vsub.f32 %v1778, %v2227
        %v2612 = vsub.f32 %v1779, %v2228
        %v2613 = vsub.f32 %v1780, %v2229
        %v2614 = vsub.f32 %v1781, %v2230
        %v2615 = vsub.f32 %v1782, %v2231
        %v2616 = vsub.f32 %v1783, %v2232
        %v2617 = vsub.f32 %v1784, %v2233
        %v2618 = vsub.f32 %v1785, %v2234
        %v2619 = vsub.f32 %v1786, %v2235
        %v2620 = vsub.f32 %v1787, %v2236
        %v2621 = vsub.f32 %v1788, %v2237
        %v2622 = vsub.f32 %v1789, %v2238
        %v2623 = vsub.f32 %v1790, %v2239
        %v2624 = vsub.f32 %v1791, %v2240
        %v2625 = vsub.f32 %v1792, %v2241
        %v2626 = vsub.f32 %v1793, %v2242
        %v2627 = vsub.f32 %v1794, %v2243
        %v2628 = vsub.f32 %v1795, %v2244
        %v2629 = vsub.f32 %v1796, %v2245
        %v2630 = vsub.f32 %v1797, %v2246
        %v2631 = vmul.f32 %v2567, %v2567
        %v2632 = vmul.f32 %v2568, %v2568
        %v2633 = vmul.f32 %v2569, %v2569
        %v2634 = vmul.f32 %v2570, %v2570
        %v2635 = vmul.f32 %v2571, %v2571
        %v2636 = vmul.f32 %v2572, %v2572
        %v2637 = vmul.f32 %v2573, %v2573
        %v2638 = vmul.f32 %v2574, %v2574
        %v2639 = vmul.f32 %v2575, %v2575
        %v2640 = vmul.f32 %v2576, %v2576
        %v2641 = vmul.f32 %v2577, %v2577
        %v2642 = vmul.f32 %v2578, %v2578
        %v2643 = vmul.f32 %v2579, %v2579
        %v2644 = vmul.f32 %v2580, %v2580
        %v2645 = vmul.f32 %v2581, %v2581
        %v2646 = vmul.f32 %v2582, %v2582
        %v2647 = vmul.f32 %v2583, %v2583
        %v2648 = vmul.f32 %v2584, %v2584
        %v2649 = vmul.f32 %v2585, %v2585
        %v2650 = vmul.f32 %v2586, %v2586
        %v2651 = vmul.f32 %v2587, %v2587
        %v2652 = vmul.f32 %v2588, %v2588
        %v2653 = vmul.f32 %v2589, %v2589
        %v2654 = vmul.f32 %v2590, %v2590
        %v2655 = vmul.f32 %v2591, %v2591
        %v2656 = vmul.f32 %v2592, %v2592
        %v2657 = vmul.f32 %v2593, %v2593
        %v2658 = vmul.f32 %v2594, %v2594
        %v2659 = vmul.f32 %v2595, %v2595
        %v2660 = vmul.f32 %v2596, %v2596
        %v2661 = vmul.f32 %v2597, %v2597
        %v2662 = vmul.f32 %v2598, %v2598
        %v2663 = vmul.f32 %v2599, %v2599
        %v2664 = vmul.f32 %v2600, %v2600
        %v2665 = vmul.f32 %v2601, %v2601
        %v2666 = vmul.f32 %v2602, %v2602
        %v2667 = vmul.f32 %v2603, %v2603
        %v2668 = vmul.f32 %v2604, %v2604
        %v2669 = vmul.f32 %v2605, %v2605
        %v2670 = vmul.f32 %v2606, %v2606
        %v2671 = vmul.f32 %v2607, %v2607
        %v2672 = vmul.f32 %v2608, %v2608
        %v2673 = vmul.f32 %v2609, %v2609
        %v2674 = vmul.f32 %v2610, %v2610
        %v2675 = vmul.f32 %v2611, %v2611
        %v2676 = vmul.f32 %v2612, %v2612
        %v2677 = vmul.f32 %v2613, %v2613
        %v2678 = vmul.f32 %v2614, %v2614
        %v2679 = vmul.f32 %v2615, %v2615
        %v2680 = vmul.f32 %v2616, %v2616
        %v2681 = vmul.f32 %v2617, %v2617
        %v2682 = vmul.f32 %v2618, %v2618
        %v2683 = vmul.f32 %v2619, %v2619
        %v2684 = vmul.f32 %v2620, %v2620
        %v2685 = vmul.f32 %v2621, %v2621
        %v2686 = vmul.f32 %v2622, %v2622
        %v2687 = vmul.f32 %v2623, %v2623
        %v2688 = vmul.f32 %v2624, %v2624
        %v2689 = vmul.f32 %v2625, %v2625
        %v2690 = vmul.f32 %v2626, %v2626
        %v2691 = vmul.f32 %v2627, %v2627
        %v2692 = vmul.f32 %v2628, %v2628
        %v2693 = vmul.f32 %v2629, %v2629
        %v2694 = vmul.f32 %v2630, %v2630
        %v2695 = vadd.f32 %v2503, %v2631
        %v2696 = vadd.f32 %v2504, %v2632
        %v2697 = vadd.f32 %v2505, %v2633
        %v2698 = vadd.f32 %v2506, %v2634
        %v2699 = vadd.f32 %v2507, %v2635
        %v2700 = vadd.f32 %v2508, %v2636
        %v2701 = vadd.f32 %v2509, %v2637
        %v2702 = vadd.f32 %v2510, %v2638
        %v2703 = vadd.f32 %v2511, %v2639
        %v2704 = vadd.f32 %v2512, %v2640
        %v2705 = vadd.f32 %v2513, %v2641
        %v2706 = vadd.f32 %v2514, %v2642
        %v2707 = vadd.f32 %v2515, %v2643
        %v2708 = vadd.f32 %v2516, %v2644
        %v2709 = vadd.f32 %v2517, %v2645
        %v2710 = vadd.f32 %v2518, %v2646
        %v2711 = vadd.f32 %v2519, %v2647
        %v2712 = vadd.f32 %v2520, %v2648
        %v2713 = vadd.f32 %v2521, %v2649
        %v2714 = vadd.f32 %v2522, %v2650
        %v2715 = vadd.f32 %v2523, %v2651
        %v2716 = vadd.f32 %v2524, %v2652
        %v2717 = vadd.f32 %v2525, %v2653
        %v2718 = vadd.f32 %v2526, %v2654
        %v2719 = vadd.f32 %v2527, %v2655
        %v2720 = vadd.f32 %v2528, %v2656
        %v2721 = vadd.f32 %v2529, %v2657
        %v2722 = vadd.f32 %v2530, %v2658
        %v2723 = vadd.f32 %v2531, %v2659
        %v2724 = vadd.f32 %v2532, %v2660
        %v2725 = vadd.f32 %v2533, %v2661
        %v2726 = vadd.f32 %v2534, %v2662
        %v2727 = vadd.f32 %v2535, %v2663
        %v2728 = vadd.f32 %v2536, %v2664
        %v2729 = vadd.f32 %v2537, %v2665
        %v2730 = vadd.f32 %v2538, %v2666
        %v2731 = vadd.f32 %v2539, %v2667
        %v2732 = vadd.f32 %v2540, %v2668
        %v2733 = vadd.f32 %v2541, %v2669
        %v2734 = vadd.f32 %v2542, %v2670
        %v2735 = vadd.f32 %v2543, %v2671
        %v2736 = vadd.f32 %v2544, %v2672
        %v2737 = vadd.f32 %v2545, %v2673
        %v2738 = vadd.f32 %v2546, %v2674
        %v2739 = vadd.f32 %v2547, %v2675
        %v2740 = vadd.f32 %v2548, %v2676
        %v2741 = vadd.f32 %v2549, %v2677
        %v2742 = vadd.f32 %v2550, %v2678
        %v2743 = vadd.f32 %v2551, %v2679
        %v2744 = vadd.f32 %v2552, %v2680
        %v2745 = vadd.f32 %v2553, %v2681
        %v2746 = vadd.f32 %v2554, %v2682
        %v2747 = vadd.f32 %v2555, %v2683
        %v2748 = vadd.f32 %v2556, %v2684
        %v2749 = vadd.f32 %v2557, %v2685
        %v2750 = vadd.f32 %v2558, %v2686
        %v2751 = vadd.f32 %v2559, %v2687
        %v2752 = vadd.f32 %v2560, %v2688
        %v2753 = vadd.f32 %v2561, %v2689
        %v2754 = vadd.f32 %v2562, %v2690
        %v2755 = vadd.f32 %v2563, %v2691
        %v2756 = vadd.f32 %v2564, %v2692
        %v2757 = vadd.f32 %v2565, %v2693
        %v2758 = vadd.f32 %v2566, %v2694
        %v2759 = vsub.f32 %v1862, %v2183
        %v2760 = vsub.f32 %v1863, %v2184
        %v2761 = vsub.f32 %v1864, %v2185
        %v2762 = vsub.f32 %v1865, %v2186
        %v2763 = vsub.f32 %v1866, %v2187
        %v2764 = vsub.f32 %v1867, %v2188
        %v2765 = vsub.f32 %v1868, %v2189
        %v2766 = vsub.f32 %v1869, %v2190
        %v2767 = vsub.f32 %v1870, %v2191
        %v2768 = vsub.f32 %v1871, %v2192
        %v2769 = vsub.f32 %v1872, %v2193
        %v2770 = vsub.f32 %v1873, %v2194
        %v2771 = vsub.f32 %v1874, %v2195
        %v2772 = vsub.f32 %v1875, %v2196
        %v2773 = vsub.f32 %v1876, %v2197
        %v2774 = vsub.f32 %v1877, %v2198
        %v2775 = vsub.f32 %v1878, %v2199
        %v2776 = vsub.f32 %v1879, %v2200
        %v2777 = vsub.f32 %v1880, %v2201
        %v2778 = vsub.f32 %v1881, %v2202
        %v2779 = vsub.f32 %v1882, %v2203
        %v2780 = vsub.f32 %v1883, %v2204
        %v2781 = vsub.f32 %v1884, %v2205
        %v2782 = vsub.f32 %v1885, %v2206
        %v2783 = vsub.f32 %v1886, %v2207
        %v2784 = vsub.f32 %v1887, %v2208
        %v2785 = vsub.f32 %v1888, %v2209
        %v2786 = vsub.f32 %v1889, %v2210
        %v2787 = vsub.f32 %v1890, %v2211
        %v2788 = vsub.f32 %v1891, %v2212
        %v2789 = vsub.f32 %v1892, %v2213
        %v2790 = vsub.f32 %v1893, %v2214
        %v2791 = vsub.f32 %v1894, %v2215
        %v2792 = vsub.f32 %v1895, %v2216
        %v2793 = vsub.f32 %v1896, %v2217
        %v2794 = vsub.f32 %v1897, %v2218
        %v2795 = vsub.f32 %v1898, %v2219
        %v2796 = vsub.f32 %v1899, %v2220
        %v2797 = vsub.f32 %v1900, %v2221
        %v2798 = vsub.f32 %v1901, %v2222
        %v2799 = vsub.f32 %v1902, %v2223
        %v2800 = vsub.f32 %v1903, %v2224
        %v2801 = vsub.f32 %v1904, %v2225
        %v2802 = vsub.f32 %v1905, %v2226
        %v2803 = vsub.f32 %v1906, %v2227
        %v2804 = vsub.f32 %v1907, %v2228
        %v2805 = vsub.f32 %v1908, %v2229
        %v2806 = vsub.f32 %v1909, %v2230
        %v2807 = vsub.f32 %v1910, %v2231
        %v2808 = vsub.f32 %v1911, %v2232
        %v2809 = vsub.f32 %v1912, %v2233
        %v2810 = vsub.f32 %v1913, %v2234
        %v2811 = vsub.f32 %v1914, %v2235
        %v2812 = vsub.f32 %v1915, %v2236
        %v2813 = vsub.f32 %v1916, %v2237
        %v2814 = vsub.f32 %v1917, %v2238
        %v2815 = vsub.f32 %v1918, %v2239
        %v2816 = vsub.f32 %v1919, %v2240
        %v2817 = vsub.f32 %v1920, %v2241
        %v2818 = vsub.f32 %v1921, %v2242
        %v2819 = vsub.f32 %v1922, %v2243
        %v2820 = vsub.f32 %v1923, %v2244
        %v2821 = vsub.f32 %v1924, %v2245
        %v2822 = vsub.f32 %v1925, %v2246
        %v2823 = vmul.f32 %v2759, %v2759
        %v2824 = vmul.f32 %v2760, %v2760
        %v2825 = vmul.f32 %v2761, %v2761
        %v2826 = vmul.f32 %v2762, %v2762
        %v2827 = vmul.f32 %v2763, %v2763
        %v2828 = vmul.f32 %v2764, %v2764
        %v2829 = vmul.f32 %v2765, %v2765
        %v2830 = vmul.f32 %v2766, %v2766
        %v2831 = vmul.f32 %v2767, %v2767
        %v2832 = vmul.f32 %v2768, %v2768
        %v2833 = vmul.f32 %v2769, %v2769
        %v2834 = vmul.f32 %v2770, %v2770
        %v2835 = vmul.f32 %v2771, %v2771
        %v2836 = vmul.f32 %v2772, %v2772
        %v2837 = vmul.f32 %v2773, %v2773
        %v2838 = vmul.f32 %v2774, %v2774
        %v2839 = vmul.f32 %v2775, %v2775
        %v2840 = vmul.f32 %v2776, %v2776
        %v2841 = vmul.f32 %v2777, %v2777
        %v2842 = vmul.f32 %v2778, %v2778
        %v2843 = vmul.f32 %v2779, %v2779
        %v2844 = vmul.f32 %v2780, %v2780
        %v2845 = vmul.f32 %v2781, %v2781
        %v2846 = vmul.f32 %v2782, %v2782
        %v2847 = vmul.f32 %v2783, %v2783
        %v2848 = vmul.f32 %v2784, %v2784
        %v2849 = vmul.f32 %v2785, %v2785
        %v2850 = vmul.f32 %v2786, %v2786
        %v2851 = vmul.f32 %v2787, %v2787
        %v2852 = vmul.f32 %v2788, %v2788
        %v2853 = vmul.f32 %v2789, %v2789
        %v2854 = vmul.f32 %v2790, %v2790
        %v2855 = vmul.f32 %v2791, %v2791
        %v2856 = vmul.f32 %v2792, %v2792
        %v2857 = vmul.f32 %v2793, %v2793
        %v2858 = vmul.f32 %v2794, %v2794
        %v2859 = vmul.f32 %v2795, %v2795
        %v2860 = vmul.f32 %v2796, %v2796
        %v2861 = vmul.f32 %v2797, %v2797
        %v2862 = vmul.f32 %v2798, %v2798
        %v2863 = vmul.f32 %v2799, %v2799
        %v2864 = vmul.f32 %v2800, %v2800
        %v2865 = vmul.f32 %v2801, %v2801
        %v2866 = vmul.f32 %v2802, %v2802
        %v2867 = vmul.f32 %v2803, %v2803
        %v2868 = vmul.f32 %v2804, %v2804
        %v2869 = vmul.f32 %v2805, %v2805
        %v2870 = vmul.f32 %v2806, %v2806
        %v2871 = vmul.f32 %v2807, %v2807
        %v2872 = vmul.f32 %v2808, %v2808
        %v2873 = vmul.f32 %v2809, %v2809
        %v2874 = vmul.f32 %v2810, %v2810
        %v2875 = vmul.f32 %v2811, %v2811
        %v2876 = vmul.f32 %v2812, %v2812
        %v2877 = vmul.f32 %v2813, %v2813
        %v2878 = vmul.f32 %v2814, %v2814
        %v2879 = vmul.f32 %v2815, %v2815
        %v2880 = vmul.f32 %v2816, %v2816
        %v2881 = vmul.f32 %v2817, %v2817
        %v2882 = vmul.f32 %v2818, %v2818
        %v2883 = vmul.f32 %v2819, %v2819
        %v2884 = vmul.f32 %v2820, %v2820
        %v2885 = vmul.f32 %v2821, %v2821
        %v2886 = vmul.f32 %v2822, %v2822
        %v2887 = vadd.f32 %v2695, %v2823
        %v2888 = vadd.f32 %v2696, %v2824
        %v2889 = vadd.f32 %v2697, %v2825
        %v2890 = vadd.f32 %v2698, %v2826
        %v2891 = vadd.f32 %v2699, %v2827
        %v2892 = vadd.f32 %v2700, %v2828
        %v2893 = vadd.f32 %v2701, %v2829
        %v2894 = vadd.f32 %v2702, %v2830
        %v2895 = vadd.f32 %v2703, %v2831
        %v2896 = vadd.f32 %v2704, %v2832
        %v2897 = vadd.f32 %v2705, %v2833
        %v2898 = vadd.f32 %v2706, %v2834
        %v2899 = vadd.f32 %v2707, %v2835
        %v2900 = vadd.f32 %v2708, %v2836
        %v2901 = vadd.f32 %v2709, %v2837
        %v2902 = vadd.f32 %v2710, %v2838
        %v2903 = vadd.f32 %v2711, %v2839
        %v2904 = vadd.f32 %v2712, %v2840
        %v2905 = vadd.f32 %v2713, %v2841
        %v2906 = vadd.f32 %v2714, %v2842
        %v2907 = vadd.f32 %v2715, %v2843
        %v2908 = vadd.f32 %v2716, %v2844
        %v2909 = vadd.f32 %v2717, %v2845
        %v2910 = vadd.f32 %v2718, %v2846
        %v2911 = vadd.f32 %v2719, %v2847
        %v2912 = vadd.f32 %v2720, %v2848
        %v2913 = vadd.f32 %v2721, %v2849
        %v2914 = vadd.f32 %v2722, %v2850
        %v2915 = vadd.f32 %v2723, %v2851
        %v2916 = vadd.f32 %v2724, %v2852
        %v2917 = vadd.f32 %v2725, %v2853
        %v2918 = vadd.f32 %v2726, %v2854
        %v2919 = vadd.f32 %v2727, %v2855
        %v2920 = vadd.f32 %v2728, %v2856
        %v2921 = vadd.f32 %v2729, %v2857
        %v2922 = vadd.f32 %v2730, %v2858
        %v2923 = vadd.f32 %v2731, %v2859
        %v2924 = vadd.f32 %v2732, %v2860
        %v2925 = vadd.f32 %v2733, %v2861
        %v2926 = vadd.f32 %v2734, %v2862
        %v2927 = vadd.f32 %v2735, %v2863
        %v2928 = vadd.f32 %v2736, %v2864
        %v2929 = vadd.f32 %v2737, %v2865
        %v2930 = vadd.f32 %v2738, %v2866
        %v2931 = vadd.f32 %v2739, %v2867
        %v2932 = vadd.f32 %v2740, %v2868
        %v2933 = vadd.f32 %v2741, %v2869
        %v2934 = vadd.f32 %v2742, %v2870
        %v2935 = vadd.f32 %v2743, %v2871
        %v2936 = vadd.f32 %v2744, %v2872
        %v2937 = vadd.f32 %v2745, %v2873
        %v2938 = vadd.f32 %v2746, %v2874
        %v2939 = vadd.f32 %v2747, %v2875
        %v2940 = vadd.f32 %v2748, %v2876
        %v2941 = vadd.f32 %v2749, %v2877
        %v2942 = vadd.f32 %v2750, %v2878
        %v2943 = vadd.f32 %v2751, %v2879
        %v2944 = vadd.f32 %v2752, %v2880
        %v2945 = vadd.f32 %v2753, %v2881
        %v2946 = vadd.f32 %v2754, %v2882
        %v2947 = vadd.f32 %v2755, %v2883
        %v2948 = vadd.f32 %v2756, %v2884
        %v2949 = vadd.f32 %v2757, %v2885
        %v2950 = vadd.f32 %v2758, %v2886
        %v2951 = vsel %vm1990, %v2887, 0.0
        %2952 = vadd.xlane.f32.xlu0 %v2951
        %v2953 = vpop.xlane.xlu0 %2952
        %v2954 = vsel %vm1990, %v2888, 0.0
        %2955 = vadd.xlane.f32.xlu0 %v2954
        %v2956 = vpop.xlane.xlu0 %2955
        %v2957 = vsel %vm1990, %v2889, 0.0
        %2958 = vadd.xlane.f32.xlu0 %v2957
        %v2959 = vpop.xlane.xlu0 %2958
        %v2960 = vsel %vm1990, %v2890, 0.0
        %2961 = vadd.xlane.f32.xlu0 %v2960
        %v2962 = vpop.xlane.xlu0 %2961
        %v2963 = vsel %vm1990, %v2891, 0.0
        %2964 = vadd.xlane.f32.xlu0 %v2963
        %v2965 = vpop.xlane.xlu0 %2964
        %v2966 = vsel %vm1990, %v2892, 0.0
        %2967 = vadd.xlane.f32.xlu0 %v2966
        %v2968 = vpop.xlane.xlu0 %2967
        %v2969 = vsel %vm1990, %v2893, 0.0
        %2970 = vadd.xlane.f32.xlu0 %v2969
        %v2971 = vpop.xlane.xlu0 %2970
        %v2972 = vsel %vm1990, %v2894, 0.0
        %2973 = vadd.xlane.f32.xlu0 %v2972
        %v2974 = vpop.xlane.xlu0 %2973
        %v2975 = vsel %vm1990, %v2895, 0.0
        %2976 = vadd.xlane.f32.xlu0 %v2975
        %v2977 = vpop.xlane.xlu0 %2976
        %v2978 = vsel %vm1990, %v2896, 0.0
        %2979 = vadd.xlane.f32.xlu0 %v2978
        %v2980 = vpop.xlane.xlu0 %2979
        %v2981 = vsel %vm1990, %v2897, 0.0
        %2982 = vadd.xlane.f32.xlu0 %v2981
        %v2983 = vpop.xlane.xlu0 %2982
        %v2984 = vsel %vm1990, %v2898, 0.0
        %2985 = vadd.xlane.f32.xlu0 %v2984
        %v2986 = vpop.xlane.xlu0 %2985
        %v2987 = vsel %vm1990, %v2899, 0.0
        %2988 = vadd.xlane.f32.xlu0 %v2987
        %v2989 = vpop.xlane.xlu0 %2988
        %v2990 = vsel %vm1990, %v2900, 0.0
        %2991 = vadd.xlane.f32.xlu0 %v2990
        %v2992 = vpop.xlane.xlu0 %2991
        %v2993 = vsel %vm1990, %v2901, 0.0
        %2994 = vadd.xlane.f32.xlu0 %v2993
        %v2995 = vpop.xlane.xlu0 %2994
        %v2996 = vsel %vm1990, %v2902, 0.0
        %2997 = vadd.xlane.f32.xlu0 %v2996
        %v2998 = vpop.xlane.xlu0 %2997
        %v2999 = vsel %vm1990, %v2903, 0.0
        %3000 = vadd.xlane.f32.xlu0 %v2999
        %v3001 = vpop.xlane.xlu0 %3000
        %v3002 = vsel %vm1990, %v2904, 0.0
        %3003 = vadd.xlane.f32.xlu0 %v3002
        %v3004 = vpop.xlane.xlu0 %3003
        %v3005 = vsel %vm1990, %v2905, 0.0
        %3006 = vadd.xlane.f32.xlu0 %v3005
        %v3007 = vpop.xlane.xlu0 %3006
        %v3008 = vsel %vm1990, %v2906, 0.0
        %3009 = vadd.xlane.f32.xlu0 %v3008
        %v3010 = vpop.xlane.xlu0 %3009
        %v3011 = vsel %vm1990, %v2907, 0.0
        %3012 = vadd.xlane.f32.xlu0 %v3011
        %v3013 = vpop.xlane.xlu0 %3012
        %v3014 = vsel %vm1990, %v2908, 0.0
        %3015 = vadd.xlane.f32.xlu0 %v3014
        %v3016 = vpop.xlane.xlu0 %3015
        %v3017 = vsel %vm1990, %v2909, 0.0
        %3018 = vadd.xlane.f32.xlu0 %v3017
        %v3019 = vpop.xlane.xlu0 %3018
        %v3020 = vsel %vm1990, %v2910, 0.0
        %3021 = vadd.xlane.f32.xlu0 %v3020
        %v3022 = vpop.xlane.xlu0 %3021
        %v3023 = vsel %vm1990, %v2911, 0.0
        %3024 = vadd.xlane.f32.xlu0 %v3023
        %v3025 = vpop.xlane.xlu0 %3024
        %v3026 = vsel %vm1990, %v2912, 0.0
        %3027 = vadd.xlane.f32.xlu0 %v3026
        %v3028 = vpop.xlane.xlu0 %3027
        %v3029 = vsel %vm1990, %v2913, 0.0
        %3030 = vadd.xlane.f32.xlu0 %v3029
        %v3031 = vpop.xlane.xlu0 %3030
        %v3032 = vsel %vm1990, %v2914, 0.0
        %3033 = vadd.xlane.f32.xlu0 %v3032
        %v3034 = vpop.xlane.xlu0 %3033
        %v3035 = vsel %vm1990, %v2915, 0.0
        %3036 = vadd.xlane.f32.xlu0 %v3035
        %v3037 = vpop.xlane.xlu0 %3036
        %v3038 = vsel %vm1990, %v2916, 0.0
        %3039 = vadd.xlane.f32.xlu0 %v3038
        %v3040 = vpop.xlane.xlu0 %3039
        %v3041 = vsel %vm1990, %v2917, 0.0
        %3042 = vadd.xlane.f32.xlu0 %v3041
        %v3043 = vpop.xlane.xlu0 %3042
        %v3044 = vsel %vm1990, %v2918, 0.0
        %3045 = vadd.xlane.f32.xlu0 %v3044
        %v3046 = vpop.xlane.xlu0 %3045
        %v3047 = vsel %vm1990, %v2919, 0.0
        %3048 = vadd.xlane.f32.xlu0 %v3047
        %v3049 = vpop.xlane.xlu0 %3048
        %v3050 = vsel %vm1990, %v2920, 0.0
        %3051 = vadd.xlane.f32.xlu0 %v3050
        %v3052 = vpop.xlane.xlu0 %3051
        %v3053 = vsel %vm1990, %v2921, 0.0
        %3054 = vadd.xlane.f32.xlu0 %v3053
        %v3055 = vpop.xlane.xlu0 %3054
        %v3056 = vsel %vm1990, %v2922, 0.0
        %3057 = vadd.xlane.f32.xlu0 %v3056
        %v3058 = vpop.xlane.xlu0 %3057
        %v3059 = vsel %vm1990, %v2923, 0.0
        %3060 = vadd.xlane.f32.xlu0 %v3059
        %v3061 = vpop.xlane.xlu0 %3060
        %v3062 = vsel %vm1990, %v2924, 0.0
        %3063 = vadd.xlane.f32.xlu0 %v3062
        %v3064 = vpop.xlane.xlu0 %3063
        %v3065 = vsel %vm1990, %v2925, 0.0
        %3066 = vadd.xlane.f32.xlu0 %v3065
        %v3067 = vpop.xlane.xlu0 %3066
        %v3068 = vsel %vm1990, %v2926, 0.0
        %3069 = vadd.xlane.f32.xlu0 %v3068
        %v3070 = vpop.xlane.xlu0 %3069
        %v3071 = vsel %vm1990, %v2927, 0.0
        %3072 = vadd.xlane.f32.xlu0 %v3071
        %v3073 = vpop.xlane.xlu0 %3072
        %v3074 = vsel %vm1990, %v2928, 0.0
        %3075 = vadd.xlane.f32.xlu0 %v3074
        %v3076 = vpop.xlane.xlu0 %3075
        %v3077 = vsel %vm1990, %v2929, 0.0
        %3078 = vadd.xlane.f32.xlu0 %v3077
        %v3079 = vpop.xlane.xlu0 %3078
        %v3080 = vsel %vm1990, %v2930, 0.0
        %3081 = vadd.xlane.f32.xlu0 %v3080
        %v3082 = vpop.xlane.xlu0 %3081
        %v3083 = vsel %vm1990, %v2931, 0.0
        %3084 = vadd.xlane.f32.xlu0 %v3083
        %v3085 = vpop.xlane.xlu0 %3084
        %v3086 = vsel %vm1990, %v2932, 0.0
        %3087 = vadd.xlane.f32.xlu0 %v3086
        %v3088 = vpop.xlane.xlu0 %3087
        %v3089 = vsel %vm1990, %v2933, 0.0
        %3090 = vadd.xlane.f32.xlu0 %v3089
        %v3091 = vpop.xlane.xlu0 %3090
        %v3092 = vsel %vm1990, %v2934, 0.0
        %3093 = vadd.xlane.f32.xlu0 %v3092
        %v3094 = vpop.xlane.xlu0 %3093
        %v3095 = vsel %vm1990, %v2935, 0.0
        %3096 = vadd.xlane.f32.xlu0 %v3095
        %v3097 = vpop.xlane.xlu0 %3096
        %v3098 = vsel %vm1990, %v2936, 0.0
        %3099 = vadd.xlane.f32.xlu0 %v3098
        %v3100 = vpop.xlane.xlu0 %3099
        %v3101 = vsel %vm1990, %v2937, 0.0
        %3102 = vadd.xlane.f32.xlu0 %v3101
        %v3103 = vpop.xlane.xlu0 %3102
        %v3104 = vsel %vm1990, %v2938, 0.0
        %3105 = vadd.xlane.f32.xlu0 %v3104
        %v3106 = vpop.xlane.xlu0 %3105
        %v3107 = vsel %vm1990, %v2939, 0.0
        %3108 = vadd.xlane.f32.xlu0 %v3107
        %v3109 = vpop.xlane.xlu0 %3108
        %v3110 = vsel %vm1990, %v2940, 0.0
        %3111 = vadd.xlane.f32.xlu0 %v3110
        %v3112 = vpop.xlane.xlu0 %3111
        %v3113 = vsel %vm1990, %v2941, 0.0
        %3114 = vadd.xlane.f32.xlu0 %v3113
        %v3115 = vpop.xlane.xlu0 %3114
        %v3116 = vsel %vm1990, %v2942, 0.0
        %3117 = vadd.xlane.f32.xlu0 %v3116
        %v3118 = vpop.xlane.xlu0 %3117
        %v3119 = vsel %vm1990, %v2943, 0.0
        %3120 = vadd.xlane.f32.xlu0 %v3119
        %v3121 = vpop.xlane.xlu0 %3120
        %v3122 = vsel %vm1990, %v2944, 0.0
        %3123 = vadd.xlane.f32.xlu0 %v3122
        %v3124 = vpop.xlane.xlu0 %3123
        %v3125 = vsel %vm1990, %v2945, 0.0
        %3126 = vadd.xlane.f32.xlu0 %v3125
        %v3127 = vpop.xlane.xlu0 %3126
        %v3128 = vsel %vm1990, %v2946, 0.0
        %3129 = vadd.xlane.f32.xlu0 %v3128
        %v3130 = vpop.xlane.xlu0 %3129
        %v3131 = vsel %vm1990, %v2947, 0.0
        %3132 = vadd.xlane.f32.xlu0 %v3131
        %v3133 = vpop.xlane.xlu0 %3132
        %v3134 = vsel %vm1990, %v2948, 0.0
        %3135 = vadd.xlane.f32.xlu0 %v3134
        %v3136 = vpop.xlane.xlu0 %3135
        %v3137 = vsel %vm1990, %v2949, 0.0
        %3138 = vadd.xlane.f32.xlu0 %v3137
        %v3139 = vpop.xlane.xlu0 %3138
        %v3140 = vsel %vm1990, %v2950, 0.0
        %3141 = vadd.xlane.f32.xlu0 %v3140
        %v3142 = vpop.xlane.xlu0 %3141
        %v3143 = vmul.f32 %v2953, 0.0052083335
        %v3144 = vmul.f32 %v2956, 0.0052083335
        %v3145 = vmul.f32 %v2959, 0.0052083335
        %v3146 = vmul.f32 %v2962, 0.0052083335
        %v3147 = vmul.f32 %v2965, 0.0052083335
        %v3148 = vmul.f32 %v2968, 0.0052083335
        %v3149 = vmul.f32 %v2971, 0.0052083335
        %v3150 = vmul.f32 %v2974, 0.0052083335
        %v3151 = vmul.f32 %v2977, 0.0052083335
        %v3152 = vmul.f32 %v2980, 0.0052083335
        %v3153 = vmul.f32 %v2983, 0.0052083335
        %v3154 = vmul.f32 %v2986, 0.0052083335
        %v3155 = vmul.f32 %v2989, 0.0052083335
        %v3156 = vmul.f32 %v2992, 0.0052083335
        %v3157 = vmul.f32 %v2995, 0.0052083335
        %v3158 = vmul.f32 %v2998, 0.0052083335
        %v3159 = vmul.f32 %v3001, 0.0052083335
        %v3160 = vmul.f32 %v3004, 0.0052083335
        %v3161 = vmul.f32 %v3007, 0.0052083335
        %v3162 = vmul.f32 %v3010, 0.0052083335
        %v3163 = vmul.f32 %v3013, 0.0052083335
        %v3164 = vmul.f32 %v3016, 0.0052083335
        %v3165 = vmul.f32 %v3019, 0.0052083335
        %v3166 = vmul.f32 %v3022, 0.0052083335
        %v3167 = vmul.f32 %v3025, 0.0052083335
        %v3168 = vmul.f32 %v3028, 0.0052083335
        %v3169 = vmul.f32 %v3031, 0.0052083335
        %v3170 = vmul.f32 %v3034, 0.0052083335
        %v3171 = vmul.f32 %v3037, 0.0052083335
        %v3172 = vmul.f32 %v3040, 0.0052083335
        %v3173 = vmul.f32 %v3043, 0.0052083335
        %v3174 = vmul.f32 %v3046, 0.0052083335
        %v3175 = vmul.f32 %v3049, 0.0052083335
        %v3176 = vmul.f32 %v3052, 0.0052083335
        %v3177 = vmul.f32 %v3055, 0.0052083335
        %v3178 = vmul.f32 %v3058, 0.0052083335
        %v3179 = vmul.f32 %v3061, 0.0052083335
        %v3180 = vmul.f32 %v3064, 0.0052083335
        %v3181 = vmul.f32 %v3067, 0.0052083335
        %v3182 = vmul.f32 %v3070, 0.0052083335
        %v3183 = vmul.f32 %v3073, 0.0052083335
        %v3184 = vmul.f32 %v3076, 0.0052083335
        %v3185 = vmul.f32 %v3079, 0.0052083335
        %v3186 = vmul.f32 %v3082, 0.0052083335
        %v3187 = vmul.f32 %v3085, 0.0052083335
        %v3188 = vmul.f32 %v3088, 0.0052083335
        %v3189 = vmul.f32 %v3091, 0.0052083335
        %v3190 = vmul.f32 %v3094, 0.0052083335
        %v3191 = vmul.f32 %v3097, 0.0052083335
        %v3192 = vmul.f32 %v3100, 0.0052083335
        %v3193 = vmul.f32 %v3103, 0.0052083335
        %v3194 = vmul.f32 %v3106, 0.0052083335
        %v3195 = vmul.f32 %v3109, 0.0052083335
        %v3196 = vmul.f32 %v3112, 0.0052083335
        %v3197 = vmul.f32 %v3115, 0.0052083335
        %v3198 = vmul.f32 %v3118, 0.0052083335
        %v3199 = vmul.f32 %v3121, 0.0052083335
        %v3200 = vmul.f32 %v3124, 0.0052083335
        %v3201 = vmul.f32 %v3127, 0.0052083335
        %v3202 = vmul.f32 %v3130, 0.0052083335
        %v3203 = vmul.f32 %v3133, 0.0052083335
        %v3204 = vmul.f32 %v3136, 0.0052083335
        %v3205 = vmul.f32 %v3139, 0.0052083335
        %v3206 = vmul.f32 %v3142, 0.0052083335
        %v3207 = vadd.f32 %v3143, 1e-05
        %v3208 = vadd.f32 %v3144, 1e-05
        %v3209 = vadd.f32 %v3145, 1e-05
        %v3210 = vadd.f32 %v3146, 1e-05
        %v3211 = vadd.f32 %v3147, 1e-05
        %v3212 = vadd.f32 %v3148, 1e-05
        %v3213 = vadd.f32 %v3149, 1e-05
        %v3214 = vadd.f32 %v3150, 1e-05
        %v3215 = vadd.f32 %v3151, 1e-05
        %v3216 = vadd.f32 %v3152, 1e-05
        %v3217 = vadd.f32 %v3153, 1e-05
        %v3218 = vadd.f32 %v3154, 1e-05
        %v3219 = vadd.f32 %v3155, 1e-05
        %v3220 = vadd.f32 %v3156, 1e-05
        %v3221 = vadd.f32 %v3157, 1e-05
        %v3222 = vadd.f32 %v3158, 1e-05
        %v3223 = vadd.f32 %v3159, 1e-05
        %v3224 = vadd.f32 %v3160, 1e-05
        %v3225 = vadd.f32 %v3161, 1e-05
        %v3226 = vadd.f32 %v3162, 1e-05
        %v3227 = vadd.f32 %v3163, 1e-05
        %v3228 = vadd.f32 %v3164, 1e-05
        %v3229 = vadd.f32 %v3165, 1e-05
        %v3230 = vadd.f32 %v3166, 1e-05
        %v3231 = vadd.f32 %v3167, 1e-05
        %v3232 = vadd.f32 %v3168, 1e-05
        %v3233 = vadd.f32 %v3169, 1e-05
        %v3234 = vadd.f32 %v3170, 1e-05
        %v3235 = vadd.f32 %v3171, 1e-05
        %v3236 = vadd.f32 %v3172, 1e-05
        %v3237 = vadd.f32 %v3173, 1e-05
        %v3238 = vadd.f32 %v3174, 1e-05
        %v3239 = vadd.f32 %v3175, 1e-05
        %v3240 = vadd.f32 %v3176, 1e-05
        %v3241 = vadd.f32 %v3177, 1e-05
        %v3242 = vadd.f32 %v3178, 1e-05
        %v3243 = vadd.f32 %v3179, 1e-05
        %v3244 = vadd.f32 %v3180, 1e-05
        %v3245 = vadd.f32 %v3181, 1e-05
        %v3246 = vadd.f32 %v3182, 1e-05
        %v3247 = vadd.f32 %v3183, 1e-05
        %v3248 = vadd.f32 %v3184, 1e-05
        %v3249 = vadd.f32 %v3185, 1e-05
        %v3250 = vadd.f32 %v3186, 1e-05
        %v3251 = vadd.f32 %v3187, 1e-05
        %v3252 = vadd.f32 %v3188, 1e-05
        %v3253 = vadd.f32 %v3189, 1e-05
        %v3254 = vadd.f32 %v3190, 1e-05
        %v3255 = vadd.f32 %v3191, 1e-05
        %v3256 = vadd.f32 %v3192, 1e-05
        %v3257 = vadd.f32 %v3193, 1e-05
        %v3258 = vadd.f32 %v3194, 1e-05
        %v3259 = vadd.f32 %v3195, 1e-05
        %v3260 = vadd.f32 %v3196, 1e-05
        %v3261 = vadd.f32 %v3197, 1e-05
        %v3262 = vadd.f32 %v3198, 1e-05
        %v3263 = vadd.f32 %v3199, 1e-05
        %v3264 = vadd.f32 %v3200, 1e-05
        %v3265 = vadd.f32 %v3201, 1e-05
        %v3266 = vadd.f32 %v3202, 1e-05
        %v3267 = vadd.f32 %v3203, 1e-05
        %v3268 = vadd.f32 %v3204, 1e-05
        %v3269 = vadd.f32 %v3205, 1e-05
        %v3270 = vadd.f32 %v3206, 1e-05
        %v3271 = vrsqrt.pop %v3207
        %v3272 = vrsqrt.pop %v3208
        %v3273 = vrsqrt.pop %v3209
        %v3274 = vrsqrt.pop %v3210
        %v3275 = vrsqrt.pop %v3211
        %v3276 = vrsqrt.pop %v3212
        %v3277 = vrsqrt.pop %v3213
        %v3278 = vrsqrt.pop %v3214
        %v3279 = vrsqrt.pop %v3215
        %v3280 = vrsqrt.pop %v3216
        %v3281 = vrsqrt.pop %v3217
        %v3282 = vrsqrt.pop %v3218
        %v3283 = vrsqrt.pop %v3219
        %v3284 = vrsqrt.pop %v3220
        %v3285 = vrsqrt.pop %v3221
        %v3286 = vrsqrt.pop %v3222
        %v3287 = vrsqrt.pop %v3223
        %v3288 = vrsqrt.pop %v3224
        %v3289 = vrsqrt.pop %v3225
        %v3290 = vrsqrt.pop %v3226
        %v3291 = vrsqrt.pop %v3227
        %v3292 = vrsqrt.pop %v3228
        %v3293 = vrsqrt.pop %v3229
        %v3294 = vrsqrt.pop %v3230
        %v3295 = vrsqrt.pop %v3231
        %v3296 = vrsqrt.pop %v3232
        %v3297 = vrsqrt.pop %v3233
        %v3298 = vrsqrt.pop %v3234
        %v3299 = vrsqrt.pop %v3235
        %v3300 = vrsqrt.pop %v3236
        %v3301 = vrsqrt.pop %v3237
        %v3302 = vrsqrt.pop %v3238
        %v3303 = vrsqrt.pop %v3239
        %v3304 = vrsqrt.pop %v3240
        %v3305 = vrsqrt.pop %v3241
        %v3306 = vrsqrt.pop %v3242
        %v3307 = vrsqrt.pop %v3243
        %v3308 = vrsqrt.pop %v3244
        %v3309 = vrsqrt.pop %v3245
        %v3310 = vrsqrt.pop %v3246
        %v3311 = vrsqrt.pop %v3247
        %v3312 = vrsqrt.pop %v3248
        %v3313 = vrsqrt.pop %v3249
        %v3314 = vrsqrt.pop %v3250
        %v3315 = vrsqrt.pop %v3251
        %v3316 = vrsqrt.pop %v3252
        %v3317 = vrsqrt.pop %v3253
        %v3318 = vrsqrt.pop %v3254
        %v3319 = vrsqrt.pop %v3255
        %v3320 = vrsqrt.pop %v3256
        %v3321 = vrsqrt.pop %v3257
        %v3322 = vrsqrt.pop %v3258
        %v3323 = vrsqrt.pop %v3259
        %v3324 = vrsqrt.pop %v3260
        %v3325 = vrsqrt.pop %v3261
        %v3326 = vrsqrt.pop %v3262
        %v3327 = vrsqrt.pop %v3263
        %v3328 = vrsqrt.pop %v3264
        %v3329 = vrsqrt.pop %v3265
        %v3330 = vrsqrt.pop %v3266
        %v3331 = vrsqrt.pop %v3267
        %v3332 = vrsqrt.pop %v3268
        %v3333 = vrsqrt.pop %v3269
        %v3334 = vrsqrt.pop %v3270
        %v3335 = vmul.f32 %v2247, %v3271
        %v3336 = vmul.f32 %v2248, %v3272
        %v3337 = vmul.f32 %v2249, %v3273
        %v3338 = vmul.f32 %v2250, %v3274
        %v3339 = vmul.f32 %v2251, %v3275
        %v3340 = vmul.f32 %v2252, %v3276
        %v3341 = vmul.f32 %v2253, %v3277
        %v3342 = vmul.f32 %v2254, %v3278
        %v3343 = vmul.f32 %v2255, %v3279
        %v3344 = vmul.f32 %v2256, %v3280
        %v3345 = vmul.f32 %v2257, %v3281
        %v3346 = vmul.f32 %v2258, %v3282
        %v3347 = vmul.f32 %v2259, %v3283
        %v3348 = vmul.f32 %v2260, %v3284
        %v3349 = vmul.f32 %v2261, %v3285
        %v3350 = vmul.f32 %v2262, %v3286
        %v3351 = vmul.f32 %v2263, %v3287
        %v3352 = vmul.f32 %v2264, %v3288
        %v3353 = vmul.f32 %v2265, %v3289
        %v3354 = vmul.f32 %v2266, %v3290
        %v3355 = vmul.f32 %v2267, %v3291
        %v3356 = vmul.f32 %v2268, %v3292
        %v3357 = vmul.f32 %v2269, %v3293
        %v3358 = vmul.f32 %v2270, %v3294
        %v3359 = vmul.f32 %v2271, %v3295
        %v3360 = vmul.f32 %v2272, %v3296
        %v3361 = vmul.f32 %v2273, %v3297
        %v3362 = vmul.f32 %v2274, %v3298
        %v3363 = vmul.f32 %v2275, %v3299
        %v3364 = vmul.f32 %v2276, %v3300
        %v3365 = vmul.f32 %v2277, %v3301
        %v3366 = vmul.f32 %v2278, %v3302
        %v3367 = vmul.f32 %v2279, %v3303
        %v3368 = vmul.f32 %v2280, %v3304
        %v3369 = vmul.f32 %v2281, %v3305
        %v3370 = vmul.f32 %v2282, %v3306
        %v3371 = vmul.f32 %v2283, %v3307
        %v3372 = vmul.f32 %v2284, %v3308
        %v3373 = vmul.f32 %v2285, %v3309
        %v3374 = vmul.f32 %v2286, %v3310
        %v3375 = vmul.f32 %v2287, %v3311
        %v3376 = vmul.f32 %v2288, %v3312
        %v3377 = vmul.f32 %v2289, %v3313
        %v3378 = vmul.f32 %v2290, %v3314
        %v3379 = vmul.f32 %v2291, %v3315
        %v3380 = vmul.f32 %v2292, %v3316
        %v3381 = vmul.f32 %v2293, %v3317
        %v3382 = vmul.f32 %v2294, %v3318
        %v3383 = vmul.f32 %v2295, %v3319
        %v3384 = vmul.f32 %v2296, %v3320
        %v3385 = vmul.f32 %v2297, %v3321
        %v3386 = vmul.f32 %v2298, %v3322
        %v3387 = vmul.f32 %v2299, %v3323
        %v3388 = vmul.f32 %v2300, %v3324
        %v3389 = vmul.f32 %v2301, %v3325
        %v3390 = vmul.f32 %v2302, %v3326
        %v3391 = vmul.f32 %v2303, %v3327
        %v3392 = vmul.f32 %v2304, %v3328
        %v3393 = vmul.f32 %v2305, %v3329
        %v3394 = vmul.f32 %v2306, %v3330
        %v3395 = vmul.f32 %v2307, %v3331
        %v3396 = vmul.f32 %v2308, %v3332
        %v3397 = vmul.f32 %v2309, %v3333
        %v3398 = vmul.f32 %v2310, %v3334
        %v3399 = vpack.c.bf16 %v3336, %v3335
        %v3400 = vpack.c.bf16 %v3338, %v3337
        %v3401 = vpack.c.bf16 %v3340, %v3339
        %v3402 = vpack.c.bf16 %v3342, %v3341
        %v3403 = vpack.c.bf16 %v3344, %v3343
        %v3404 = vpack.c.bf16 %v3346, %v3345
        %v3405 = vpack.c.bf16 %v3348, %v3347
        %v3406 = vpack.c.bf16 %v3350, %v3349
        %v3407 = vpack.c.bf16 %v3352, %v3351
        %v3408 = vpack.c.bf16 %v3354, %v3353
        %v3409 = vpack.c.bf16 %v3356, %v3355
        %v3410 = vpack.c.bf16 %v3358, %v3357
        %v3411 = vpack.c.bf16 %v3360, %v3359
        %v3412 = vpack.c.bf16 %v3362, %v3361
        %v3413 = vpack.c.bf16 %v3364, %v3363
        %v3414 = vpack.c.bf16 %v3366, %v3365
        %v3415 = vpack.c.bf16 %v3368, %v3367
        %v3416 = vpack.c.bf16 %v3370, %v3369
        %v3417 = vpack.c.bf16 %v3372, %v3371
        %v3418 = vpack.c.bf16 %v3374, %v3373
        %v3419 = vpack.c.bf16 %v3376, %v3375
        %v3420 = vpack.c.bf16 %v3378, %v3377
        %v3421 = vpack.c.bf16 %v3380, %v3379
        %v3422 = vpack.c.bf16 %v3382, %v3381
        %v3423 = vpack.c.bf16 %v3384, %v3383
        %v3424 = vpack.c.bf16 %v3386, %v3385
        %v3425 = vpack.c.bf16 %v3388, %v3387
        %v3426 = vpack.c.bf16 %v3390, %v3389
        %v3427 = vpack.c.bf16 %v3392, %v3391
        %v3428 = vpack.c.bf16 %v3394, %v3393
        %v3429 = vpack.c.bf16 %v3396, %v3395
        %v3430 = vpack.c.bf16 %v3398, %v3397
        %v3431 = vld [vmem:[%s5] sm:$0xf]
        %v3432 = vld [vmem:[%s5 + $0x4] sm:$0xf]
        %v3433 = vld [vmem:[%s5 + $0x8] sm:$0xf]
        %v3434 = vld [vmem:[%s5 + $0xc] sm:$0xf]
        %v3435 = vld [vmem:[%s5 + $0x10] sm:$0xf]
        %v3436 = vld [vmem:[%s5 + $0x14] sm:$0xf]
        %v3437 = vmul.f32 %v2375, %v3271
        %v3438 = vmul.f32 %v2376, %v3272
        %v3439 = vmul.f32 %v2377, %v3273
        %v3440 = vmul.f32 %v2378, %v3274
        %v3441 = vmul.f32 %v2379, %v3275
        %v3442 = vmul.f32 %v2380, %v3276
        %v3443 = vmul.f32 %v2381, %v3277
        %v3444 = vmul.f32 %v2382, %v3278
        %v3445 = vmul.f32 %v2383, %v3279
        %v3446 = vmul.f32 %v2384, %v3280
        %v3447 = vmul.f32 %v2385, %v3281
        %v3448 = vmul.f32 %v2386, %v3282
        %v3449 = vmul.f32 %v2387, %v3283
        %v3450 = vmul.f32 %v2388, %v3284
        %v3451 = vmul.f32 %v2389, %v3285
        %v3452 = vmul.f32 %v2390, %v3286
        %v3453 = vmul.f32 %v2391, %v3287
        %v3454 = vmul.f32 %v2392, %v3288
        %v3455 = vmul.f32 %v2393, %v3289
        %v3456 = vmul.f32 %v2394, %v3290
        %v3457 = vmul.f32 %v2395, %v3291
        %v3458 = vmul.f32 %v2396, %v3292
        %v3459 = vmul.f32 %v2397, %v3293
        %v3460 = vmul.f32 %v2398, %v3294
        %v3461 = vmul.f32 %v2399, %v3295
        %v3462 = vmul.f32 %v2400, %v3296
        %v3463 = vmul.f32 %v2401, %v3297
        %v3464 = vmul.f32 %v2402, %v3298
        %v3465 = vmul.f32 %v2403, %v3299
        %v3466 = vmul.f32 %v2404, %v3300
        %v3467 = vmul.f32 %v2405, %v3301
        %v3468 = vmul.f32 %v2406, %v3302
        %v3469 = vmul.f32 %v2407, %v3303
        %v3470 = vmul.f32 %v2408, %v3304
        %v3471 = vmul.f32 %v2409, %v3305
        %v3472 = vmul.f32 %v2410, %v3306
        %v3473 = vmul.f32 %v2411, %v3307
        %v3474 = vmul.f32 %v2412, %v3308
        %v3475 = vmul.f32 %v2413, %v3309
        %v3476 = vmul.f32 %v2414, %v3310
        %v3477 = vmul.f32 %v2415, %v3311
        %v3478 = vmul.f32 %v2416, %v3312
        %v3479 = vmul.f32 %v2417, %v3313
        %v3480 = vmul.f32 %v2418, %v3314
        %v3481 = vmul.f32 %v2419, %v3315
        %v3482 = vmul.f32 %v2420, %v3316
        %v3483 = vmul.f32 %v2421, %v3317
        %v3484 = vmul.f32 %v2422, %v3318
        %v3485 = vmul.f32 %v2423, %v3319
        %v3486 = vmul.f32 %v2424, %v3320
        %v3487 = vmul.f32 %v2425, %v3321
        %v3488 = vmul.f32 %v2426, %v3322
        %v3489 = vmul.f32 %v2427, %v3323
        %v3490 = vmul.f32 %v2428, %v3324
        %v3491 = vmul.f32 %v2429, %v3325
        %v3492 = vmul.f32 %v2430, %v3326
        %v3493 = vmul.f32 %v2431, %v3327
        %v3494 = vmul.f32 %v2432, %v3328
        %v3495 = vmul.f32 %v2433, %v3329
        %v3496 = vmul.f32 %v2434, %v3330
        %v3497 = vmul.f32 %v2435, %v3331
        %v3498 = vmul.f32 %v2436, %v3332
        %v3499 = vmul.f32 %v2437, %v3333
        %v3500 = vmul.f32 %v2438, %v3334
        %v3501 = vpack.c.bf16 %v3438, %v3437
        %v3502 = vpack.c.bf16 %v3440, %v3439
        %v3503 = vpack.c.bf16 %v3442, %v3441
        %v3504 = vpack.c.bf16 %v3444, %v3443
        %v3505 = vpack.c.bf16 %v3446, %v3445
        %v3506 = vpack.c.bf16 %v3448, %v3447
        %v3507 = vpack.c.bf16 %v3450, %v3449
        %v3508 = vpack.c.bf16 %v3452, %v3451
        %v3509 = vpack.c.bf16 %v3454, %v3453
        %v3510 = vpack.c.bf16 %v3456, %v3455
        %v3511 = vpack.c.bf16 %v3458, %v3457
        %v3512 = vpack.c.bf16 %v3460, %v3459
        %v3513 = vpack.c.bf16 %v3462, %v3461
        %v3514 = vpack.c.bf16 %v3464, %v3463
        %v3515 = vpack.c.bf16 %v3466, %v3465
        %v3516 = vpack.c.bf16 %v3468, %v3467
        %v3517 = vpack.c.bf16 %v3470, %v3469
        %v3518 = vpack.c.bf16 %v3472, %v3471
        %v3519 = vpack.c.bf16 %v3474, %v3473
        %v3520 = vpack.c.bf16 %v3476, %v3475
        %v3521 = vpack.c.bf16 %v3478, %v3477
        %v3522 = vpack.c.bf16 %v3480, %v3479
        %v3523 = vpack.c.bf16 %v3482, %v3481
        %v3524 = vpack.c.bf16 %v3484, %v3483
        %v3525 = vpack.c.bf16 %v3486, %v3485
        %v3526 = vpack.c.bf16 %v3488, %v3487
        %v3527 = vpack.c.bf16 %v3490, %v3489
        %v3528 = vpack.c.bf16 %v3492, %v3491
        %v3529 = vpack.c.bf16 %v3494, %v3493
        %v3530 = vpack.c.bf16 %v3496, %v3495
        %v3531 = vpack.c.bf16 %v3498, %v3497
        %v3532 = vpack.c.bf16 %v3500, %v3499
        %s3533 = scalar_lea.vmem %s5, 24
        %v3534 = vld [vmem:[%s3533] sm:$0xf]
        %v3535 = vld [vmem:[%s3533 + $0x4] sm:$0xf]
        %v3536 = vld [vmem:[%s3533 + $0x8] sm:$0xf]
        %v3537 = vld [vmem:[%s3533 + $0xc] sm:$0xf]
        %v3538 = vld [vmem:[%s3533 + $0x10] sm:$0xf]
        %v3539 = vld [vmem:[%s3533 + $0x14] sm:$0xf]
        %v3546 = vunpack.c.l.b16 %v3534
        %v3547 = vunpack.c.l.b16 %v3535
        %v3548 = vunpack.c.l.b16 %v3536
        %v3549 = vunpack.c.l.b16 %v3537
        %v3550 = vunpack.c.l.b16 %v3538
        %v3551 = vunpack.c.l.b16 %v3539
        %v3552 = vpack.c.b16 %v3547, %v3546
        %v3553 = vpack.c.b16 %v3549, %v3548
        %v3554 = vpack.c.b16 %v3551, %v3550
        %v3559 = vsel %vm1990, %v3501, 0
        %v3562 = vsel %vm1990, %v3502, 0
        %v3565 = vsel %vm1990, %v3503, 0
        %v3568 = vsel %vm1990, %v3504, 0
        %v3571 = vsel %vm1990, %v3505, 0
        %v3574 = vsel %vm1990, %v3506, 0
        %v3577 = vsel %vm1990, %v3507, 0
        %v3580 = vsel %vm1990, %v3508, 0
        %v3583 = vsel %vm1990, %v3509, 0
        %v3586 = vsel %vm1990, %v3510, 0
        %v3589 = vsel %vm1990, %v3511, 0
        %v3592 = vsel %vm1990, %v3512, 0
        %v3595 = vsel %vm1990, %v3513, 0
        %v3598 = vsel %vm1990, %v3514, 0
        %v3601 = vsel %vm1990, %v3515, 0
        %v3604 = vsel %vm1990, %v3516, 0
        %v3607 = vsel %vm1990, %v3517, 0
        %v3610 = vsel %vm1990, %v3518, 0
        %v3613 = vsel %vm1990, %v3519, 0
        %v3616 = vsel %vm1990, %v3520, 0
        %v3619 = vsel %vm1990, %v3521, 0
        %v3622 = vsel %vm1990, %v3522, 0
        %v3625 = vsel %vm1990, %v3523, 0
        %v3628 = vsel %vm1990, %v3524, 0
        %v3631 = vsel %vm1990, %v3525, 0
        %v3634 = vsel %vm1990, %v3526, 0
        %v3637 = vsel %vm1990, %v3527, 0
        %v3640 = vsel %vm1990, %v3528, 0
        %v3643 = vsel %vm1990, %v3529, 0
        %v3646 = vsel %vm1990, %v3530, 0
        %v3649 = vsel %vm1990, %v3531, 0
        %v3652 = vsel %vm1990, %v3532, 0
        %3654 = vmatprep.subr.bf16.mxu0 0
        %3655 = vmatpush1.bf16.msra.mxu0 0
        %3656 = vmatprep.subr.bf16.mxu0 0
        %3657 = vmatpush1.bf16.msra.mxu0 0
        %3658 = vmatprep.subr.bf16.mxu0 0
        %3659 = vmatpush1.bf16.msra.mxu0 0
        %3660 = vmatprep.subr.bf16.mxu0 0
        %3661 = vmatpush1.bf16.msra.mxu0 0
        %3662 = vmatprep.subr.bf16.mxu0 0
        %3663 = vmatpush1.bf16.msra.mxu0 0
        %3664 = vmatprep.subr.bf16.mxu0 0
        %3665 = vmatpush1.bf16.msra.mxu0 %v3554
        %3666 = vmatprep.subr.bf16.mxu0 0
        %3667 = vmatpush1.bf16.msra.mxu0 %v3553
        %3668 = vmatprep.subr.bf16.mxu0 0
        %3669 = vmatpush1.bf16.msra.mxu0 %v3552
        %3670 = vmatprep.subr.bf16.mxu0 0
        %3671 = vmatpush2.bf16.msra.mxu0 0
        %3672 = vmatprep.subr.bf16.mxu0 0
        %3673 = vmatpush2.bf16.msra.mxu0 0
        %3674 = vmatprep.subr.bf16.mxu0 0
        %3675 = vmatpush2.bf16.msra.mxu0 0
        %3676 = vmatprep.subr.bf16.mxu0 0
        %3677 = vmatpush2.bf16.msra.mxu0 0
        %3678 = vmatprep.subr.bf16.mxu0 0
        %3679 = vmatpush2.bf16.msra.mxu0 0
        %3680 = vmatprep.subr.bf16.mxu0 0
        %3681 = vmatpush2.bf16.msra.mxu0 0
        %3682 = vmatprep.subr.bf16.mxu0 0
        %3683 = vmatpush2.bf16.msra.mxu0 0
        %3684 = vmatprep.subr.bf16.mxu0 0
        %3685 = vmatpush2.bf16.msra.mxu0 0
        %3686 = vmatprep.mubr.bf16.mxu0 0
        %3687 = vmatmul.mubr.bf16.gmra.mxu0 %v3559
        %v3688 = vpop.f32.mrf.mxu0
        %v3689 = vadd.f32 0.0, %v3688
        %v3690 = vpop.f32.mrf.mxu0
        %v3691 = vpop.f32.mrf.mxu0
        %v3692 = vadd.f32 0.0, %v3691
        %v3693 = vpop.f32.mrf.mxu0
        %3694 = vmatprep.mubr.bf16.mxu0 0
        %3695 = vmatmul.mubr.bf16.gmra.mxu0 %v3562
        %v3696 = vpop.f32.mrf.mxu0
        %v3697 = vadd.f32 0.0, %v3696
        %v3698 = vpop.f32.mrf.mxu0
        %v3699 = vpop.f32.mrf.mxu0
        %v3700 = vadd.f32 0.0, %v3699
        %v3701 = vpop.f32.mrf.mxu0
        %3702 = vmatprep.mubr.bf16.mxu0 0
        %3703 = vmatmul.mubr.bf16.gmra.mxu0 %v3565
        %v3704 = vpop.f32.mrf.mxu0
        %v3705 = vadd.f32 0.0, %v3704
        %v3706 = vpop.f32.mrf.mxu0
        %v3707 = vpop.f32.mrf.mxu0
        %v3708 = vadd.f32 0.0, %v3707
        %v3709 = vpop.f32.mrf.mxu0
        %3710 = vmatprep.mubr.bf16.mxu0 0
        %3711 = vmatmul.mubr.bf16.gmra.mxu0 %v3568
        %v3712 = vpop.f32.mrf.mxu0
        %v3713 = vadd.f32 0.0, %v3712
        %v3714 = vpop.f32.mrf.mxu0
        %v3715 = vpop.f32.mrf.mxu0
        %v3716 = vadd.f32 0.0, %v3715
        %v3717 = vpop.f32.mrf.mxu0
        %3718 = vmatprep.mubr.bf16.mxu0 0
        %3719 = vmatmul.mubr.bf16.gmra.mxu0 %v3571
        %v3720 = vpop.f32.mrf.mxu0
        %v3721 = vadd.f32 0.0, %v3720
        %v3722 = vpop.f32.mrf.mxu0
        %v3723 = vpop.f32.mrf.mxu0
        %v3724 = vadd.f32 0.0, %v3723
        %v3725 = vpop.f32.mrf.mxu0
        %3726 = vmatprep.mubr.bf16.mxu0 0
        %3727 = vmatmul.mubr.bf16.gmra.mxu0 %v3574
        %v3728 = vpop.f32.mrf.mxu0
        %v3729 = vadd.f32 0.0, %v3728
        %v3730 = vpop.f32.mrf.mxu0
        %v3731 = vpop.f32.mrf.mxu0
        %v3732 = vadd.f32 0.0, %v3731
        %v3733 = vpop.f32.mrf.mxu0
        %3734 = vmatprep.mubr.bf16.mxu0 0
        %3735 = vmatmul.mubr.bf16.gmra.mxu0 %v3577
        %v3736 = vpop.f32.mrf.mxu0
        %v3737 = vadd.f32 0.0, %v3736
        %v3738 = vpop.f32.mrf.mxu0
        %v3739 = vpop.f32.mrf.mxu0
        %v3740 = vadd.f32 0.0, %v3739
        %v3741 = vpop.f32.mrf.mxu0
        %3742 = vmatprep.mubr.bf16.mxu0 0
        %3743 = vmatmul.mubr.bf16.gmra.mxu0 %v3580
        %v3744 = vpop.f32.mrf.mxu0
        %v3745 = vadd.f32 0.0, %v3744
        %v3746 = vpop.f32.mrf.mxu0
        %v3747 = vpop.f32.mrf.mxu0
        %v3748 = vadd.f32 0.0, %v3747
        %v3749 = vpop.f32.mrf.mxu0
        %3750 = vmatprep.mubr.bf16.mxu0 0
        %3751 = vmatmul.mubr.bf16.gmra.mxu0 %v3583
        %v3752 = vpop.f32.mrf.mxu0
        %v3753 = vadd.f32 0.0, %v3752
        %v3754 = vpop.f32.mrf.mxu0
        %v3755 = vpop.f32.mrf.mxu0
        %v3756 = vadd.f32 0.0, %v3755
        %v3757 = vpop.f32.mrf.mxu0
        %3758 = vmatprep.mubr.bf16.mxu0 0
        %3759 = vmatmul.mubr.bf16.gmra.mxu0 %v3586
        %v3760 = vpop.f32.mrf.mxu0
        %v3761 = vadd.f32 0.0, %v3760
        %v3762 = vpop.f32.mrf.mxu0
        %v3763 = vpop.f32.mrf.mxu0
        %v3764 = vadd.f32 0.0, %v3763
        %v3765 = vpop.f32.mrf.mxu0
        %3766 = vmatprep.mubr.bf16.mxu0 0
        %3767 = vmatmul.mubr.bf16.gmra.mxu0 %v3589
        %v3768 = vpop.f32.mrf.mxu0
        %v3769 = vadd.f32 0.0, %v3768
        %v3770 = vpop.f32.mrf.mxu0
        %v3771 = vpop.f32.mrf.mxu0
        %v3772 = vadd.f32 0.0, %v3771
        %v3773 = vpop.f32.mrf.mxu0
        %3774 = vmatprep.mubr.bf16.mxu0 0
        %3775 = vmatmul.mubr.bf16.gmra.mxu0 %v3592
        %v3776 = vpop.f32.mrf.mxu0
        %v3777 = vadd.f32 0.0, %v3776
        %v3778 = vpop.f32.mrf.mxu0
        %v3779 = vpop.f32.mrf.mxu0
        %v3780 = vadd.f32 0.0, %v3779
        %v3781 = vpop.f32.mrf.mxu0
        %3782 = vmatprep.mubr.bf16.mxu0 0
        %3783 = vmatmul.mubr.bf16.gmra.mxu0 %v3595
        %v3784 = vpop.f32.mrf.mxu0
        %v3785 = vadd.f32 0.0, %v3784
        %v3786 = vpop.f32.mrf.mxu0
        %v3787 = vpop.f32.mrf.mxu0
        %v3788 = vadd.f32 0.0, %v3787
        %v3789 = vpop.f32.mrf.mxu0
        %3790 = vmatprep.mubr.bf16.mxu0 0
        %3791 = vmatmul.mubr.bf16.gmra.mxu0 %v3598
        %v3792 = vpop.f32.mrf.mxu0
        %v3793 = vadd.f32 0.0, %v3792
        %v3794 = vpop.f32.mrf.mxu0
        %v3795 = vpop.f32.mrf.mxu0
        %v3796 = vadd.f32 0.0, %v3795
        %v3797 = vpop.f32.mrf.mxu0
        %3798 = vmatprep.mubr.bf16.mxu0 0
        %3799 = vmatmul.mubr.bf16.gmra.mxu0 %v3601
        %v3800 = vpop.f32.mrf.mxu0
        %v3801 = vadd.f32 0.0, %v3800
        %v3802 = vpop.f32.mrf.mxu0
        %v3803 = vpop.f32.mrf.mxu0
        %v3804 = vadd.f32 0.0, %v3803
        %v3805 = vpop.f32.mrf.mxu0
        %3806 = vmatprep.mubr.bf16.mxu0 0
        %3807 = vmatmul.mubr.bf16.gmra.mxu0 %v3604
        %v3808 = vpop.f32.mrf.mxu0
        %v3809 = vadd.f32 0.0, %v3808
        %v3810 = vpop.f32.mrf.mxu0
        %v3811 = vpop.f32.mrf.mxu0
        %v3812 = vadd.f32 0.0, %v3811
        %v3813 = vpop.f32.mrf.mxu0
        %3814 = vmatprep.mubr.bf16.mxu0 0
        %3815 = vmatmul.mubr.bf16.gmra.mxu0 %v3607
        %v3816 = vpop.f32.mrf.mxu0
        %v3817 = vadd.f32 0.0, %v3816
        %v3818 = vpop.f32.mrf.mxu0
        %v3819 = vpop.f32.mrf.mxu0
        %v3820 = vadd.f32 0.0, %v3819
        %v3821 = vpop.f32.mrf.mxu0
        %3822 = vmatprep.mubr.bf16.mxu0 0
        %3823 = vmatmul.mubr.bf16.gmra.mxu0 %v3610
        %v3824 = vpop.f32.mrf.mxu0
        %v3825 = vadd.f32 0.0, %v3824
        %v3826 = vpop.f32.mrf.mxu0
        %v3827 = vpop.f32.mrf.mxu0
        %v3828 = vadd.f32 0.0, %v3827
        %v3829 = vpop.f32.mrf.mxu0
        %3830 = vmatprep.mubr.bf16.mxu0 0
        %3831 = vmatmul.mubr.bf16.gmra.mxu0 %v3613
        %v3832 = vpop.f32.mrf.mxu0
        %v3833 = vadd.f32 0.0, %v3832
        %v3834 = vpop.f32.mrf.mxu0
        %v3835 = vpop.f32.mrf.mxu0
        %v3836 = vadd.f32 0.0, %v3835
        %v3837 = vpop.f32.mrf.mxu0
        %3838 = vmatprep.mubr.bf16.mxu0 0
        %3839 = vmatmul.mubr.bf16.gmra.mxu0 %v3616
        %v3840 = vpop.f32.mrf.mxu0
        %v3841 = vadd.f32 0.0, %v3840
        %v3842 = vpop.f32.mrf.mxu0
        %v3843 = vpop.f32.mrf.mxu0
        %v3844 = vadd.f32 0.0, %v3843
        %v3845 = vpop.f32.mrf.mxu0
        %3846 = vmatprep.mubr.bf16.mxu0 0
        %3847 = vmatmul.mubr.bf16.gmra.mxu0 %v3619
        %v3848 = vpop.f32.mrf.mxu0
        %v3849 = vadd.f32 0.0, %v3848
        %v3850 = vpop.f32.mrf.mxu0
        %v3851 = vpop.f32.mrf.mxu0
        %v3852 = vadd.f32 0.0, %v3851
        %v3853 = vpop.f32.mrf.mxu0
        %3854 = vmatprep.mubr.bf16.mxu0 0
        %3855 = vmatmul.mubr.bf16.gmra.mxu0 %v3622
        %v3856 = vpop.f32.mrf.mxu0
        %v3857 = vadd.f32 0.0, %v3856
        %v3858 = vpop.f32.mrf.mxu0
        %v3859 = vpop.f32.mrf.mxu0
        %v3860 = vadd.f32 0.0, %v3859
        %v3861 = vpop.f32.mrf.mxu0
        %3862 = vmatprep.mubr.bf16.mxu0 0
        %3863 = vmatmul.mubr.bf16.gmra.mxu0 %v3625
        %v3864 = vpop.f32.mrf.mxu0
        %v3865 = vadd.f32 0.0, %v3864
        %v3866 = vpop.f32.mrf.mxu0
        %v3867 = vpop.f32.mrf.mxu0
        %v3868 = vadd.f32 0.0, %v3867
        %v3869 = vpop.f32.mrf.mxu0
        %3870 = vmatprep.mubr.bf16.mxu0 0
        %3871 = vmatmul.mubr.bf16.gmra.mxu0 %v3628
        %v3872 = vpop.f32.mrf.mxu0
        %v3873 = vadd.f32 0.0, %v3872
        %v3874 = vpop.f32.mrf.mxu0
        %v3875 = vpop.f32.mrf.mxu0
        %v3876 = vadd.f32 0.0, %v3875
        %v3877 = vpop.f32.mrf.mxu0
        %3878 = vmatprep.mubr.bf16.mxu0 0
        %3879 = vmatmul.mubr.bf16.gmra.mxu0 %v3631
        %v3880 = vpop.f32.mrf.mxu0
        %v3881 = vadd.f32 0.0, %v3880
        %v3882 = vpop.f32.mrf.mxu0
        %v3883 = vpop.f32.mrf.mxu0
        %v3884 = vadd.f32 0.0, %v3883
        %v3885 = vpop.f32.mrf.mxu0
        %3886 = vmatprep.mubr.bf16.mxu0 0
        %3887 = vmatmul.mubr.bf16.gmra.mxu0 %v3634
        %v3888 = vpop.f32.mrf.mxu0
        %v3889 = vadd.f32 0.0, %v3888
        %v3890 = vpop.f32.mrf.mxu0
        %v3891 = vpop.f32.mrf.mxu0
        %v3892 = vadd.f32 0.0, %v3891
        %v3893 = vpop.f32.mrf.mxu0
        %3894 = vmatprep.mubr.bf16.mxu0 0
        %3895 = vmatmul.mubr.bf16.gmra.mxu0 %v3637
        %v3896 = vpop.f32.mrf.mxu0
        %v3897 = vadd.f32 0.0, %v3896
        %v3898 = vpop.f32.mrf.mxu0
        %v3899 = vpop.f32.mrf.mxu0
        %v3900 = vadd.f32 0.0, %v3899
        %v3901 = vpop.f32.mrf.mxu0
        %3902 = vmatprep.mubr.bf16.mxu0 0
        %3903 = vmatmul.mubr.bf16.gmra.mxu0 %v3640
        %v3904 = vpop.f32.mrf.mxu0
        %v3905 = vadd.f32 0.0, %v3904
        %v3906 = vpop.f32.mrf.mxu0
        %v3907 = vpop.f32.mrf.mxu0
        %v3908 = vadd.f32 0.0, %v3907
        %v3909 = vpop.f32.mrf.mxu0
        %3910 = vmatprep.mubr.bf16.mxu0 0
        %3911 = vmatmul.mubr.bf16.gmra.mxu0 %v3643
        %v3912 = vpop.f32.mrf.mxu0
        %v3913 = vadd.f32 0.0, %v3912
        %v3914 = vpop.f32.mrf.mxu0
        %v3915 = vpop.f32.mrf.mxu0
        %v3916 = vadd.f32 0.0, %v3915
        %v3917 = vpop.f32.mrf.mxu0
        %3918 = vmatprep.mubr.bf16.mxu0 0
        %3919 = vmatmul.mubr.bf16.gmra.mxu0 %v3646
        %v3920 = vpop.f32.mrf.mxu0
        %v3921 = vadd.f32 0.0, %v3920
        %v3922 = vpop.f32.mrf.mxu0
        %v3923 = vpop.f32.mrf.mxu0
        %v3924 = vadd.f32 0.0, %v3923
        %v3925 = vpop.f32.mrf.mxu0
        %3926 = vmatprep.mubr.bf16.mxu0 0
        %3927 = vmatmul.mubr.bf16.gmra.mxu0 %v3649
        %v3928 = vpop.f32.mrf.mxu0
        %v3929 = vadd.f32 0.0, %v3928
        %v3930 = vpop.f32.mrf.mxu0
        %v3931 = vpop.f32.mrf.mxu0
        %v3932 = vadd.f32 0.0, %v3931
        %v3933 = vpop.f32.mrf.mxu0
        %3934 = vmatprep.mubr.bf16.mxu0 0
        %3935 = vmatmul.mubr.bf16.gmra.mxu0 %v3652
        %v3936 = vpop.f32.mrf.mxu0
        %v3937 = vadd.f32 0.0, %v3936
        %v3938 = vpop.f32.mrf.mxu0
        %v3939 = vpop.f32.mrf.mxu0
        %v3940 = vadd.f32 0.0, %v3939
        %v3941 = vpop.f32.mrf.mxu0
        %3942 = vdwg.mxu0
        %v3949 = vunpack.c.l.b16 %v3431
        %v3950 = vunpack.c.l.b16 %v3432
        %v3951 = vunpack.c.l.b16 %v3433
        %v3952 = vunpack.c.l.b16 %v3434
        %v3953 = vunpack.c.l.b16 %v3435
        %v3954 = vunpack.c.l.b16 %v3436
        %v3955 = vpack.c.b16 %v3950, %v3949
        %v3956 = vpack.c.b16 %v3952, %v3951
        %v3957 = vpack.c.b16 %v3954, %v3953
        %v3962 = vsel %vm1990, %v3399, 0
        %v3965 = vsel %vm1990, %v3400, 0
        %v3968 = vsel %vm1990, %v3401, 0
        %v3971 = vsel %vm1990, %v3402, 0
        %v3974 = vsel %vm1990, %v3403, 0
        %v3977 = vsel %vm1990, %v3404, 0
        %v3980 = vsel %vm1990, %v3405, 0
        %v3983 = vsel %vm1990, %v3406, 0
        %v3986 = vsel %vm1990, %v3407, 0
        %v3989 = vsel %vm1990, %v3408, 0
        %v3992 = vsel %vm1990, %v3409, 0
        %v3995 = vsel %vm1990, %v3410, 0
        %v3998 = vsel %vm1990, %v3411, 0
        %v4001 = vsel %vm1990, %v3412, 0
        %v4004 = vsel %vm1990, %v3413, 0
        %v4007 = vsel %vm1990, %v3414, 0
        %v4010 = vsel %vm1990, %v3415, 0
        %v4013 = vsel %vm1990, %v3416, 0
        %v4016 = vsel %vm1990, %v3417, 0
        %v4019 = vsel %vm1990, %v3418, 0
        %v4022 = vsel %vm1990, %v3419, 0
        %v4025 = vsel %vm1990, %v3420, 0
        %v4028 = vsel %vm1990, %v3421, 0
        %v4031 = vsel %vm1990, %v3422, 0
        %v4034 = vsel %vm1990, %v3423, 0
        %v4037 = vsel %vm1990, %v3424, 0
        %v4040 = vsel %vm1990, %v3425, 0
        %v4043 = vsel %vm1990, %v3426, 0
        %v4046 = vsel %vm1990, %v3427, 0
        %v4049 = vsel %vm1990, %v3428, 0
        %v4052 = vsel %vm1990, %v3429, 0
        %v4055 = vsel %vm1990, %v3430, 0
        %4057 = vmatprep.subr.bf16.mxu0 0
        %4058 = vmatpush1.bf16.msra.mxu0 0
        %4059 = vmatprep.subr.bf16.mxu0 0
        %4060 = vmatpush1.bf16.msra.mxu0 0
        %4061 = vmatprep.subr.bf16.mxu0 0
        %4062 = vmatpush1.bf16.msra.mxu0 0
        %4063 = vmatprep.subr.bf16.mxu0 0
        %4064 = vmatpush1.bf16.msra.mxu0 0
        %4065 = vmatprep.subr.bf16.mxu0 0
        %4066 = vmatpush1.bf16.msra.mxu0 0
        %4067 = vmatprep.subr.bf16.mxu0 0
        %4068 = vmatpush1.bf16.msra.mxu0 %v3957
        %4069 = vmatprep.subr.bf16.mxu0 0
        %4070 = vmatpush1.bf16.msra.mxu0 %v3956
        %4071 = vmatprep.subr.bf16.mxu0 0
        %4072 = vmatpush1.bf16.msra.mxu0 %v3955
        %4073 = vmatprep.subr.bf16.mxu0 0
        %4074 = vmatpush2.bf16.msra.mxu0 0
        %4075 = vmatprep.subr.bf16.mxu0 0
        %4076 = vmatpush2.bf16.msra.mxu0 0
        %4077 = vmatprep.subr.bf16.mxu0 0
        %4078 = vmatpush2.bf16.msra.mxu0 0
        %4079 = vmatprep.subr.bf16.mxu0 0
        %4080 = vmatpush2.bf16.msra.mxu0 0
        %4081 = vmatprep.subr.bf16.mxu0 0
        %4082 = vmatpush2.bf16.msra.mxu0 0
        %4083 = vmatprep.subr.bf16.mxu0 0
        %4084 = vmatpush2.bf16.msra.mxu0 0
        %4085 = vmatprep.subr.bf16.mxu0 0
        %4086 = vmatpush2.bf16.msra.mxu0 0
        %4087 = vmatprep.subr.bf16.mxu0 0
        %4088 = vmatpush2.bf16.msra.mxu0 0
        %4089 = vmatprep.mubr.bf16.mxu0 0
        %4090 = vmatmul.mubr.bf16.gmra.mxu0 %v3962
        %v4091 = vpop.f32.mrf.mxu0
        %v4092 = vadd.f32 %v3689, %v4091
        %v4093 = vpop.f32.mrf.mxu0
        %v4094 = vpop.f32.mrf.mxu0
        %v4095 = vadd.f32 %v3692, %v4094
        %v4096 = vpop.f32.mrf.mxu0
        %4097 = vmatprep.mubr.bf16.mxu0 0
        %4098 = vmatmul.mubr.bf16.gmra.mxu0 %v3965
        %v4099 = vpop.f32.mrf.mxu0
        %v4100 = vadd.f32 %v3697, %v4099
        %v4101 = vpop.f32.mrf.mxu0
        %v4102 = vpop.f32.mrf.mxu0
        %v4103 = vadd.f32 %v3700, %v4102
        %v4104 = vpop.f32.mrf.mxu0
        %4105 = vmatprep.mubr.bf16.mxu0 0
        %4106 = vmatmul.mubr.bf16.gmra.mxu0 %v3968
        %v4107 = vpop.f32.mrf.mxu0
        %v4108 = vadd.f32 %v3705, %v4107
        %v4109 = vpop.f32.mrf.mxu0
        %v4110 = vpop.f32.mrf.mxu0
        %v4111 = vadd.f32 %v3708, %v4110
        %v4112 = vpop.f32.mrf.mxu0
        %4113 = vmatprep.mubr.bf16.mxu0 0
        %4114 = vmatmul.mubr.bf16.gmra.mxu0 %v3971
        %v4115 = vpop.f32.mrf.mxu0
        %v4116 = vadd.f32 %v3713, %v4115
        %v4117 = vpop.f32.mrf.mxu0
        %v4118 = vpop.f32.mrf.mxu0
        %v4119 = vadd.f32 %v3716, %v4118
        %v4120 = vpop.f32.mrf.mxu0
        %4121 = vmatprep.mubr.bf16.mxu0 0
        %4122 = vmatmul.mubr.bf16.gmra.mxu0 %v3974
        %v4123 = vpop.f32.mrf.mxu0
        %v4124 = vadd.f32 %v3721, %v4123
        %v4125 = vpop.f32.mrf.mxu0
        %v4126 = vpop.f32.mrf.mxu0
        %v4127 = vadd.f32 %v3724, %v4126
        %v4128 = vpop.f32.mrf.mxu0
        %4129 = vmatprep.mubr.bf16.mxu0 0
        %4130 = vmatmul.mubr.bf16.gmra.mxu0 %v3977
        %v4131 = vpop.f32.mrf.mxu0
        %v4132 = vadd.f32 %v3729, %v4131
        %v4133 = vpop.f32.mrf.mxu0
        %v4134 = vpop.f32.mrf.mxu0
        %v4135 = vadd.f32 %v3732, %v4134
        %v4136 = vpop.f32.mrf.mxu0
        %4137 = vmatprep.mubr.bf16.mxu0 0
        %4138 = vmatmul.mubr.bf16.gmra.mxu0 %v3980
        %v4139 = vpop.f32.mrf.mxu0
        %v4140 = vadd.f32 %v3737, %v4139
        %v4141 = vpop.f32.mrf.mxu0
        %v4142 = vpop.f32.mrf.mxu0
        %v4143 = vadd.f32 %v3740, %v4142
        %v4144 = vpop.f32.mrf.mxu0
        %4145 = vmatprep.mubr.bf16.mxu0 0
        %4146 = vmatmul.mubr.bf16.gmra.mxu0 %v3983
        %v4147 = vpop.f32.mrf.mxu0
        %v4148 = vadd.f32 %v3745, %v4147
        %v4149 = vpop.f32.mrf.mxu0
        %v4150 = vpop.f32.mrf.mxu0
        %v4151 = vadd.f32 %v3748, %v4150
        %v4152 = vpop.f32.mrf.mxu0
        %4153 = vmatprep.mubr.bf16.mxu0 0
        %4154 = vmatmul.mubr.bf16.gmra.mxu0 %v3986
        %v4155 = vpop.f32.mrf.mxu0
        %v4156 = vadd.f32 %v3753, %v4155
        %v4157 = vpop.f32.mrf.mxu0
        %v4158 = vpop.f32.mrf.mxu0
        %v4159 = vadd.f32 %v3756, %v4158
        %v4160 = vpop.f32.mrf.mxu0
        %4161 = vmatprep.mubr.bf16.mxu0 0
        %4162 = vmatmul.mubr.bf16.gmra.mxu0 %v3989
        %v4163 = vpop.f32.mrf.mxu0
        %v4164 = vadd.f32 %v3761, %v4163
        %v4165 = vpop.f32.mrf.mxu0
        %v4166 = vpop.f32.mrf.mxu0
        %v4167 = vadd.f32 %v3764, %v4166
        %v4168 = vpop.f32.mrf.mxu0
        %4169 = vmatprep.mubr.bf16.mxu0 0
        %4170 = vmatmul.mubr.bf16.gmra.mxu0 %v3992
        %v4171 = vpop.f32.mrf.mxu0
        %v4172 = vadd.f32 %v3769, %v4171
        %v4173 = vpop.f32.mrf.mxu0
        %v4174 = vpop.f32.mrf.mxu0
        %v4175 = vadd.f32 %v3772, %v4174
        %v4176 = vpop.f32.mrf.mxu0
        %4177 = vmatprep.mubr.bf16.mxu0 0
        %4178 = vmatmul.mubr.bf16.gmra.mxu0 %v3995
        %v4179 = vpop.f32.mrf.mxu0
        %v4180 = vadd.f32 %v3777, %v4179
        %v4181 = vpop.f32.mrf.mxu0
        %v4182 = vpop.f32.mrf.mxu0
        %v4183 = vadd.f32 %v3780, %v4182
        %v4184 = vpop.f32.mrf.mxu0
        %4185 = vmatprep.mubr.bf16.mxu0 0
        %4186 = vmatmul.mubr.bf16.gmra.mxu0 %v3998
        %v4187 = vpop.f32.mrf.mxu0
        %v4188 = vadd.f32 %v3785, %v4187
        %v4189 = vpop.f32.mrf.mxu0
        %v4190 = vpop.f32.mrf.mxu0
        %v4191 = vadd.f32 %v3788, %v4190
        %v4192 = vpop.f32.mrf.mxu0
        %4193 = vmatprep.mubr.bf16.mxu0 0
        %4194 = vmatmul.mubr.bf16.gmra.mxu0 %v4001
        %v4195 = vpop.f32.mrf.mxu0
        %v4196 = vadd.f32 %v3793, %v4195
        %v4197 = vpop.f32.mrf.mxu0
        %v4198 = vpop.f32.mrf.mxu0
        %v4199 = vadd.f32 %v3796, %v4198
        %v4200 = vpop.f32.mrf.mxu0
        %4201 = vmatprep.mubr.bf16.mxu0 0
        %4202 = vmatmul.mubr.bf16.gmra.mxu0 %v4004
        %v4203 = vpop.f32.mrf.mxu0
        %v4204 = vadd.f32 %v3801, %v4203
        %v4205 = vpop.f32.mrf.mxu0
        %v4206 = vpop.f32.mrf.mxu0
        %v4207 = vadd.f32 %v3804, %v4206
        %v4208 = vpop.f32.mrf.mxu0
        %4209 = vmatprep.mubr.bf16.mxu0 0
        %4210 = vmatmul.mubr.bf16.gmra.mxu0 %v4007
        %v4211 = vpop.f32.mrf.mxu0
        %v4212 = vadd.f32 %v3809, %v4211
        %v4213 = vpop.f32.mrf.mxu0
        %v4214 = vpop.f32.mrf.mxu0
        %v4215 = vadd.f32 %v3812, %v4214
        %v4216 = vpop.f32.mrf.mxu0
        %4217 = vmatprep.mubr.bf16.mxu0 0
        %4218 = vmatmul.mubr.bf16.gmra.mxu0 %v4010
        %v4219 = vpop.f32.mrf.mxu0
        %v4220 = vadd.f32 %v3817, %v4219
        %v4221 = vpop.f32.mrf.mxu0
        %v4222 = vpop.f32.mrf.mxu0
        %v4223 = vadd.f32 %v3820, %v4222
        %v4224 = vpop.f32.mrf.mxu0
        %4225 = vmatprep.mubr.bf16.mxu0 0
        %4226 = vmatmul.mubr.bf16.gmra.mxu0 %v4013
        %v4227 = vpop.f32.mrf.mxu0
        %v4228 = vadd.f32 %v3825, %v4227
        %v4229 = vpop.f32.mrf.mxu0
        %v4230 = vpop.f32.mrf.mxu0
        %v4231 = vadd.f32 %v3828, %v4230
        %v4232 = vpop.f32.mrf.mxu0
        %4233 = vmatprep.mubr.bf16.mxu0 0
        %4234 = vmatmul.mubr.bf16.gmra.mxu0 %v4016
        %v4235 = vpop.f32.mrf.mxu0
        %v4236 = vadd.f32 %v3833, %v4235
        %v4237 = vpop.f32.mrf.mxu0
        %v4238 = vpop.f32.mrf.mxu0
        %v4239 = vadd.f32 %v3836, %v4238
        %v4240 = vpop.f32.mrf.mxu0
        %4241 = vmatprep.mubr.bf16.mxu0 0
        %4242 = vmatmul.mubr.bf16.gmra.mxu0 %v4019
        %v4243 = vpop.f32.mrf.mxu0
        %v4244 = vadd.f32 %v3841, %v4243
        %v4245 = vpop.f32.mrf.mxu0
        %v4246 = vpop.f32.mrf.mxu0
        %v4247 = vadd.f32 %v3844, %v4246
        %v4248 = vpop.f32.mrf.mxu0
        %4249 = vmatprep.mubr.bf16.mxu0 0
        %4250 = vmatmul.mubr.bf16.gmra.mxu0 %v4022
        %v4251 = vpop.f32.mrf.mxu0
        %v4252 = vadd.f32 %v3849, %v4251
        %v4253 = vpop.f32.mrf.mxu0
        %v4254 = vpop.f32.mrf.mxu0
        %v4255 = vadd.f32 %v3852, %v4254
        %v4256 = vpop.f32.mrf.mxu0
        %4257 = vmatprep.mubr.bf16.mxu0 0
        %4258 = vmatmul.mubr.bf16.gmra.mxu0 %v4025
        %v4259 = vpop.f32.mrf.mxu0
        %v4260 = vadd.f32 %v3857, %v4259
        %v4261 = vpop.f32.mrf.mxu0
        %v4262 = vpop.f32.mrf.mxu0
        %v4263 = vadd.f32 %v3860, %v4262
        %v4264 = vpop.f32.mrf.mxu0
        %4265 = vmatprep.mubr.bf16.mxu0 0
        %4266 = vmatmul.mubr.bf16.gmra.mxu0 %v4028
        %v4267 = vpop.f32.mrf.mxu0
        %v4268 = vadd.f32 %v3865, %v4267
        %v4269 = vpop.f32.mrf.mxu0
        %v4270 = vpop.f32.mrf.mxu0
        %v4271 = vadd.f32 %v3868, %v4270
        %v4272 = vpop.f32.mrf.mxu0
        %4273 = vmatprep.mubr.bf16.mxu0 0
        %4274 = vmatmul.mubr.bf16.gmra.mxu0 %v4031
        %v4275 = vpop.f32.mrf.mxu0
        %v4276 = vadd.f32 %v3873, %v4275
        %v4277 = vpop.f32.mrf.mxu0
        %v4278 = vpop.f32.mrf.mxu0
        %v4279 = vadd.f32 %v3876, %v4278
        %v4280 = vpop.f32.mrf.mxu0
        %4281 = vmatprep.mubr.bf16.mxu0 0
        %4282 = vmatmul.mubr.bf16.gmra.mxu0 %v4034
        %v4283 = vpop.f32.mrf.mxu0
        %v4284 = vadd.f32 %v3881, %v4283
        %v4285 = vpop.f32.mrf.mxu0
        %v4286 = vpop.f32.mrf.mxu0
        %v4287 = vadd.f32 %v3884, %v4286
        %v4288 = vpop.f32.mrf.mxu0
        %4289 = vmatprep.mubr.bf16.mxu0 0
        %4290 = vmatmul.mubr.bf16.gmra.mxu0 %v4037
        %v4291 = vpop.f32.mrf.mxu0
        %v4292 = vadd.f32 %v3889, %v4291
        %v4293 = vpop.f32.mrf.mxu0
        %v4294 = vpop.f32.mrf.mxu0
        %v4295 = vadd.f32 %v3892, %v4294
        %v4296 = vpop.f32.mrf.mxu0
        %4297 = vmatprep.mubr.bf16.mxu0 0
        %4298 = vmatmul.mubr.bf16.gmra.mxu0 %v4040
        %v4299 = vpop.f32.mrf.mxu0
        %v4300 = vadd.f32 %v3897, %v4299
        %v4301 = vpop.f32.mrf.mxu0
        %v4302 = vpop.f32.mrf.mxu0
        %v4303 = vadd.f32 %v3900, %v4302
        %v4304 = vpop.f32.mrf.mxu0
        %4305 = vmatprep.mubr.bf16.mxu0 0
        %4306 = vmatmul.mubr.bf16.gmra.mxu0 %v4043
        %v4307 = vpop.f32.mrf.mxu0
        %v4308 = vadd.f32 %v3905, %v4307
        %v4309 = vpop.f32.mrf.mxu0
        %v4310 = vpop.f32.mrf.mxu0
        %v4311 = vadd.f32 %v3908, %v4310
        %v4312 = vpop.f32.mrf.mxu0
        %4313 = vmatprep.mubr.bf16.mxu0 0
        %4314 = vmatmul.mubr.bf16.gmra.mxu0 %v4046
        %v4315 = vpop.f32.mrf.mxu0
        %v4316 = vadd.f32 %v3913, %v4315
        %v4317 = vpop.f32.mrf.mxu0
        %v4318 = vpop.f32.mrf.mxu0
        %v4319 = vadd.f32 %v3916, %v4318
        %v4320 = vpop.f32.mrf.mxu0
        %4321 = vmatprep.mubr.bf16.mxu0 0
        %4322 = vmatmul.mubr.bf16.gmra.mxu0 %v4049
        %v4323 = vpop.f32.mrf.mxu0
        %v4324 = vadd.f32 %v3921, %v4323
        %v4325 = vpop.f32.mrf.mxu0
        %v4326 = vpop.f32.mrf.mxu0
        %v4327 = vadd.f32 %v3924, %v4326
        %v4328 = vpop.f32.mrf.mxu0
        %4329 = vmatprep.mubr.bf16.mxu0 0
        %4330 = vmatmul.mubr.bf16.gmra.mxu0 %v4052
        %v4331 = vpop.f32.mrf.mxu0
        %v4332 = vadd.f32 %v3929, %v4331
        %v4333 = vpop.f32.mrf.mxu0
        %v4334 = vpop.f32.mrf.mxu0
        %v4335 = vadd.f32 %v3932, %v4334
        %v4336 = vpop.f32.mrf.mxu0
        %4337 = vmatprep.mubr.bf16.mxu0 0
        %4338 = vmatmul.mubr.bf16.gmra.mxu0 %v4055
        %v4339 = vpop.f32.mrf.mxu0
        %v4340 = vadd.f32 %v3937, %v4339
        %v4341 = vpop.f32.mrf.mxu0
        %v4342 = vpop.f32.mrf.mxu0
        %v4343 = vadd.f32 %v3940, %v4342
        %v4344 = vpop.f32.mrf.mxu0
        %4345 = vdwg.mxu0
        %v4346 = vmul.f32 %v2567, %v3271
        %v4347 = vmul.f32 %v2568, %v3272
        %v4348 = vmul.f32 %v2569, %v3273
        %v4349 = vmul.f32 %v2570, %v3274
        %v4350 = vmul.f32 %v2571, %v3275
        %v4351 = vmul.f32 %v2572, %v3276
        %v4352 = vmul.f32 %v2573, %v3277
        %v4353 = vmul.f32 %v2574, %v3278
        %v4354 = vmul.f32 %v2575, %v3279
        %v4355 = vmul.f32 %v2576, %v3280
        %v4356 = vmul.f32 %v2577, %v3281
        %v4357 = vmul.f32 %v2578, %v3282
        %v4358 = vmul.f32 %v2579, %v3283
        %v4359 = vmul.f32 %v2580, %v3284
        %v4360 = vmul.f32 %v2581, %v3285
        %v4361 = vmul.f32 %v2582, %v3286
        %v4362 = vmul.f32 %v2583, %v3287
        %v4363 = vmul.f32 %v2584, %v3288
        %v4364 = vmul.f32 %v2585, %v3289
        %v4365 = vmul.f32 %v2586, %v3290
        %v4366 = vmul.f32 %v2587, %v3291
        %v4367 = vmul.f32 %v2588, %v3292
        %v4368 = vmul.f32 %v2589, %v3293
        %v4369 = vmul.f32 %v2590, %v3294
        %v4370 = vmul.f32 %v2591, %v3295
        %v4371 = vmul.f32 %v2592, %v3296
        %v4372 = vmul.f32 %v2593, %v3297
        %v4373 = vmul.f32 %v2594, %v3298
        %v4374 = vmul.f32 %v2595, %v3299
        %v4375 = vmul.f32 %v2596, %v3300
        %v4376 = vmul.f32 %v2597, %v3301
        %v4377 = vmul.f32 %v2598, %v3302
        %v4378 = vmul.f32 %v2599, %v3303
        %v4379 = vmul.f32 %v2600, %v3304
        %v4380 = vmul.f32 %v2601, %v3305
        %v4381 = vmul.f32 %v2602, %v3306
        %v4382 = vmul.f32 %v2603, %v3307
        %v4383 = vmul.f32 %v2604, %v3308
        %v4384 = vmul.f32 %v2605, %v3309
        %v4385 = vmul.f32 %v2606, %v3310
        %v4386 = vmul.f32 %v2607, %v3311
        %v4387 = vmul.f32 %v2608, %v3312
        %v4388 = vmul.f32 %v2609, %v3313
        %v4389 = vmul.f32 %v2610, %v3314
        %v4390 = vmul.f32 %v2611, %v3315
        %v4391 = vmul.f32 %v2612, %v3316
        %v4392 = vmul.f32 %v2613, %v3317
        %v4393 = vmul.f32 %v2614, %v3318
        %v4394 = vmul.f32 %v2615, %v3319
        %v4395 = vmul.f32 %v2616, %v3320
        %v4396 = vmul.f32 %v2617, %v3321
        %v4397 = vmul.f32 %v2618, %v3322
        %v4398 = vmul.f32 %v2619, %v3323
        %v4399 = vmul.f32 %v2620, %v3324
        %v4400 = vmul.f32 %v2621, %v3325
        %v4401 = vmul.f32 %v2622, %v3326
        %v4402 = vmul.f32 %v2623, %v3327
        %v4403 = vmul.f32 %v2624, %v3328
        %v4404 = vmul.f32 %v2625, %v3329
        %v4405 = vmul.f32 %v2626, %v3330
        %v4406 = vmul.f32 %v2627, %v3331
        %v4407 = vmul.f32 %v2628, %v3332
        %v4408 = vmul.f32 %v2629, %v3333
        %v4409 = vmul.f32 %v2630, %v3334
        %v4410 = vpack.c.bf16 %v4347, %v4346
        %v4411 = vpack.c.bf16 %v4349, %v4348
        %v4412 = vpack.c.bf16 %v4351, %v4350
        %v4413 = vpack.c.bf16 %v4353, %v4352
        %v4414 = vpack.c.bf16 %v4355, %v4354
        %v4415 = vpack.c.bf16 %v4357, %v4356
        %v4416 = vpack.c.bf16 %v4359, %v4358
        %v4417 = vpack.c.bf16 %v4361, %v4360
        %v4418 = vpack.c.bf16 %v4363, %v4362
        %v4419 = vpack.c.bf16 %v4365, %v4364
        %v4420 = vpack.c.bf16 %v4367, %v4366
        %v4421 = vpack.c.bf16 %v4369, %v4368
        %v4422 = vpack.c.bf16 %v4371, %v4370
        %v4423 = vpack.c.bf16 %v4373, %v4372
        %v4424 = vpack.c.bf16 %v4375, %v4374
        %v4425 = vpack.c.bf16 %v4377, %v4376
        %v4426 = vpack.c.bf16 %v4379, %v4378
        %v4427 = vpack.c.bf16 %v4381, %v4380
        %v4428 = vpack.c.bf16 %v4383, %v4382
        %v4429 = vpack.c.bf16 %v4385, %v4384
        %v4430 = vpack.c.bf16 %v4387, %v4386
        %v4431 = vpack.c.bf16 %v4389, %v4388
        %v4432 = vpack.c.bf16 %v4391, %v4390
        %v4433 = vpack.c.bf16 %v4393, %v4392
        %v4434 = vpack.c.bf16 %v4395, %v4394
        %v4435 = vpack.c.bf16 %v4397, %v4396
        %v4436 = vpack.c.bf16 %v4399, %v4398
        %v4437 = vpack.c.bf16 %v4401, %v4400
        %v4438 = vpack.c.bf16 %v4403, %v4402
        %v4439 = vpack.c.bf16 %v4405, %v4404
        %v4440 = vpack.c.bf16 %v4407, %v4406
        %v4441 = vpack.c.bf16 %v4409, %v4408
        %s4442 = scalar_lea.vmem %s5, 48
        %v4443 = vld [vmem:[%s4442] sm:$0xf]
        %v4444 = vld [vmem:[%s4442 + $0x4] sm:$0xf]
        %v4445 = vld [vmem:[%s4442 + $0x8] sm:$0xf]
        %v4446 = vld [vmem:[%s4442 + $0xc] sm:$0xf]
        %v4447 = vld [vmem:[%s4442 + $0x10] sm:$0xf]
        %v4448 = vld [vmem:[%s4442 + $0x14] sm:$0xf]
        %v4455 = vunpack.c.l.b16 %v4443
        %v4456 = vunpack.c.l.b16 %v4444
        %v4457 = vunpack.c.l.b16 %v4445
        %v4458 = vunpack.c.l.b16 %v4446
        %v4459 = vunpack.c.l.b16 %v4447
        %v4460 = vunpack.c.l.b16 %v4448
        %v4461 = vpack.c.b16 %v4456, %v4455
        %v4462 = vpack.c.b16 %v4458, %v4457
        %v4463 = vpack.c.b16 %v4460, %v4459
        %v4468 = vsel %vm1990, %v4410, 0
        %v4471 = vsel %vm1990, %v4411, 0
        %v4474 = vsel %vm1990, %v4412, 0
        %v4477 = vsel %vm1990, %v4413, 0
        %v4480 = vsel %vm1990, %v4414, 0
        %v4483 = vsel %vm1990, %v4415, 0
        %v4486 = vsel %vm1990, %v4416, 0
        %v4489 = vsel %vm1990, %v4417, 0
        %v4492 = vsel %vm1990, %v4418, 0
        %v4495 = vsel %vm1990, %v4419, 0
        %v4498 = vsel %vm1990, %v4420, 0
        %v4501 = vsel %vm1990, %v4421, 0
        %v4504 = vsel %vm1990, %v4422, 0
        %v4507 = vsel %vm1990, %v4423, 0
        %v4510 = vsel %vm1990, %v4424, 0
        %v4513 = vsel %vm1990, %v4425, 0
        %v4516 = vsel %vm1990, %v4426, 0
        %v4519 = vsel %vm1990, %v4427, 0
        %v4522 = vsel %vm1990, %v4428, 0
        %v4525 = vsel %vm1990, %v4429, 0
        %v4528 = vsel %vm1990, %v4430, 0
        %v4531 = vsel %vm1990, %v4431, 0
        %v4534 = vsel %vm1990, %v4432, 0
        %v4537 = vsel %vm1990, %v4433, 0
        %v4540 = vsel %vm1990, %v4434, 0
        %v4543 = vsel %vm1990, %v4435, 0
        %v4546 = vsel %vm1990, %v4436, 0
        %v4549 = vsel %vm1990, %v4437, 0
        %v4552 = vsel %vm1990, %v4438, 0
        %v4555 = vsel %vm1990, %v4439, 0
        %v4558 = vsel %vm1990, %v4440, 0
        %v4561 = vsel %vm1990, %v4441, 0
        %4563 = vmatprep.subr.bf16.mxu0 0
        %4564 = vmatpush1.bf16.msra.mxu0 0
        %4565 = vmatprep.subr.bf16.mxu0 0
        %4566 = vmatpush1.bf16.msra.mxu0 0
        %4567 = vmatprep.subr.bf16.mxu0 0
        %4568 = vmatpush1.bf16.msra.mxu0 0
        %4569 = vmatprep.subr.bf16.mxu0 0
        %4570 = vmatpush1.bf16.msra.mxu0 0
        %4571 = vmatprep.subr.bf16.mxu0 0
        %4572 = vmatpush1.bf16.msra.mxu0 0
        %4573 = vmatprep.subr.bf16.mxu0 0
        %4574 = vmatpush1.bf16.msra.mxu0 %v4463
        %4575 = vmatprep.subr.bf16.mxu0 0
        %4576 = vmatpush1.bf16.msra.mxu0 %v4462
        %4577 = vmatprep.subr.bf16.mxu0 0
        %4578 = vmatpush1.bf16.msra.mxu0 %v4461
        %4579 = vmatprep.subr.bf16.mxu0 0
        %4580 = vmatpush2.bf16.msra.mxu0 0
        %4581 = vmatprep.subr.bf16.mxu0 0
        %4582 = vmatpush2.bf16.msra.mxu0 0
        %4583 = vmatprep.subr.bf16.mxu0 0
        %4584 = vmatpush2.bf16.msra.mxu0 0
        %4585 = vmatprep.subr.bf16.mxu0 0
        %4586 = vmatpush2.bf16.msra.mxu0 0
        %4587 = vmatprep.subr.bf16.mxu0 0
        %4588 = vmatpush2.bf16.msra.mxu0 0
        %4589 = vmatprep.subr.bf16.mxu0 0
        %4590 = vmatpush2.bf16.msra.mxu0 0
        %4591 = vmatprep.subr.bf16.mxu0 0
        %4592 = vmatpush2.bf16.msra.mxu0 0
        %4593 = vmatprep.subr.bf16.mxu0 0
        %4594 = vmatpush2.bf16.msra.mxu0 0
        %4595 = vmatprep.mubr.bf16.mxu0 0
        %4596 = vmatmul.mubr.bf16.gmra.mxu0 %v4468
        %v4597 = vpop.f32.mrf.mxu0
        %v4598 = vadd.f32 0.0, %v4597
        %v4599 = vpop.f32.mrf.mxu0
        %v4600 = vpop.f32.mrf.mxu0
        %v4601 = vadd.f32 0.0, %v4600
        %v4602 = vpop.f32.mrf.mxu0
        %4603 = vmatprep.mubr.bf16.mxu0 0
        %4604 = vmatmul.mubr.bf16.gmra.mxu0 %v4471
        %v4605 = vpop.f32.mrf.mxu0
        %v4606 = vadd.f32 0.0, %v4605
        %v4607 = vpop.f32.mrf.mxu0
        %v4608 = vpop.f32.mrf.mxu0
        %v4609 = vadd.f32 0.0, %v4608
        %v4610 = vpop.f32.mrf.mxu0
        %4611 = vmatprep.mubr.bf16.mxu0 0
        %4612 = vmatmul.mubr.bf16.gmra.mxu0 %v4474
        %v4613 = vpop.f32.mrf.mxu0
        %v4614 = vadd.f32 0.0, %v4613
        %v4615 = vpop.f32.mrf.mxu0
        %v4616 = vpop.f32.mrf.mxu0
        %v4617 = vadd.f32 0.0, %v4616
        %v4618 = vpop.f32.mrf.mxu0
        %4619 = vmatprep.mubr.bf16.mxu0 0
        %4620 = vmatmul.mubr.bf16.gmra.mxu0 %v4477
        %v4621 = vpop.f32.mrf.mxu0
        %v4622 = vadd.f32 0.0, %v4621
        %v4623 = vpop.f32.mrf.mxu0
        %v4624 = vpop.f32.mrf.mxu0
        %v4625 = vadd.f32 0.0, %v4624
        %v4626 = vpop.f32.mrf.mxu0
        %4627 = vmatprep.mubr.bf16.mxu0 0
        %4628 = vmatmul.mubr.bf16.gmra.mxu0 %v4480
        %v4629 = vpop.f32.mrf.mxu0
        %v4630 = vadd.f32 0.0, %v4629
        %v4631 = vpop.f32.mrf.mxu0
        %v4632 = vpop.f32.mrf.mxu0
        %v4633 = vadd.f32 0.0, %v4632
        %v4634 = vpop.f32.mrf.mxu0
        %4635 = vmatprep.mubr.bf16.mxu0 0
        %4636 = vmatmul.mubr.bf16.gmra.mxu0 %v4483
        %v4637 = vpop.f32.mrf.mxu0
        %v4638 = vadd.f32 0.0, %v4637
        %v4639 = vpop.f32.mrf.mxu0
        %v4640 = vpop.f32.mrf.mxu0
        %v4641 = vadd.f32 0.0, %v4640
        %v4642 = vpop.f32.mrf.mxu0
        %4643 = vmatprep.mubr.bf16.mxu0 0
        %4644 = vmatmul.mubr.bf16.gmra.mxu0 %v4486
        %v4645 = vpop.f32.mrf.mxu0
        %v4646 = vadd.f32 0.0, %v4645
        %v4647 = vpop.f32.mrf.mxu0
        %v4648 = vpop.f32.mrf.mxu0
        %v4649 = vadd.f32 0.0, %v4648
        %v4650 = vpop.f32.mrf.mxu0
        %4651 = vmatprep.mubr.bf16.mxu0 0
        %4652 = vmatmul.mubr.bf16.gmra.mxu0 %v4489
        %v4653 = vpop.f32.mrf.mxu0
        %v4654 = vadd.f32 0.0, %v4653
        %v4655 = vpop.f32.mrf.mxu0
        %v4656 = vpop.f32.mrf.mxu0
        %v4657 = vadd.f32 0.0, %v4656
        %v4658 = vpop.f32.mrf.mxu0
        %4659 = vmatprep.mubr.bf16.mxu0 0
        %4660 = vmatmul.mubr.bf16.gmra.mxu0 %v4492
        %v4661 = vpop.f32.mrf.mxu0
        %v4662 = vadd.f32 0.0, %v4661
        %v4663 = vpop.f32.mrf.mxu0
        %v4664 = vpop.f32.mrf.mxu0
        %v4665 = vadd.f32 0.0, %v4664
        %v4666 = vpop.f32.mrf.mxu0
        %4667 = vmatprep.mubr.bf16.mxu0 0
        %4668 = vmatmul.mubr.bf16.gmra.mxu0 %v4495
        %v4669 = vpop.f32.mrf.mxu0
        %v4670 = vadd.f32 0.0, %v4669
        %v4671 = vpop.f32.mrf.mxu0
        %v4672 = vpop.f32.mrf.mxu0
        %v4673 = vadd.f32 0.0, %v4672
        %v4674 = vpop.f32.mrf.mxu0
        %4675 = vmatprep.mubr.bf16.mxu0 0
        %4676 = vmatmul.mubr.bf16.gmra.mxu0 %v4498
        %v4677 = vpop.f32.mrf.mxu0
        %v4678 = vadd.f32 0.0, %v4677
        %v4679 = vpop.f32.mrf.mxu0
        %v4680 = vpop.f32.mrf.mxu0
        %v4681 = vadd.f32 0.0, %v4680
        %v4682 = vpop.f32.mrf.mxu0
        %4683 = vmatprep.mubr.bf16.mxu0 0
        %4684 = vmatmul.mubr.bf16.gmra.mxu0 %v4501
        %v4685 = vpop.f32.mrf.mxu0
        %v4686 = vadd.f32 0.0, %v4685
        %v4687 = vpop.f32.mrf.mxu0
        %v4688 = vpop.f32.mrf.mxu0
        %v4689 = vadd.f32 0.0, %v4688
        %v4690 = vpop.f32.mrf.mxu0
        %4691 = vmatprep.mubr.bf16.mxu0 0
        %4692 = vmatmul.mubr.bf16.gmra.mxu0 %v4504
        %v4693 = vpop.f32.mrf.mxu0
        %v4694 = vadd.f32 0.0, %v4693
        %v4695 = vpop.f32.mrf.mxu0
        %v4696 = vpop.f32.mrf.mxu0
        %v4697 = vadd.f32 0.0, %v4696
        %v4698 = vpop.f32.mrf.mxu0
        %4699 = vmatprep.mubr.bf16.mxu0 0
        %4700 = vmatmul.mubr.bf16.gmra.mxu0 %v4507
        %v4701 = vpop.f32.mrf.mxu0
        %v4702 = vadd.f32 0.0, %v4701
        %v4703 = vpop.f32.mrf.mxu0
        %v4704 = vpop.f32.mrf.mxu0
        %v4705 = vadd.f32 0.0, %v4704
        %v4706 = vpop.f32.mrf.mxu0
        %4707 = vmatprep.mubr.bf16.mxu0 0
        %4708 = vmatmul.mubr.bf16.gmra.mxu0 %v4510
        %v4709 = vpop.f32.mrf.mxu0
        %v4710 = vadd.f32 0.0, %v4709
        %v4711 = vpop.f32.mrf.mxu0
        %v4712 = vpop.f32.mrf.mxu0
        %v4713 = vadd.f32 0.0, %v4712
        %v4714 = vpop.f32.mrf.mxu0
        %4715 = vmatprep.mubr.bf16.mxu0 0
        %4716 = vmatmul.mubr.bf16.gmra.mxu0 %v4513
        %v4717 = vpop.f32.mrf.mxu0
        %v4718 = vadd.f32 0.0, %v4717
        %v4719 = vpop.f32.mrf.mxu0
        %v4720 = vpop.f32.mrf.mxu0
        %v4721 = vadd.f32 0.0, %v4720
        %v4722 = vpop.f32.mrf.mxu0
        %4723 = vmatprep.mubr.bf16.mxu0 0
        %4724 = vmatmul.mubr.bf16.gmra.mxu0 %v4516
        %v4725 = vpop.f32.mrf.mxu0
        %v4726 = vadd.f32 0.0, %v4725
        %v4727 = vpop.f32.mrf.mxu0
        %v4728 = vpop.f32.mrf.mxu0
        %v4729 = vadd.f32 0.0, %v4728
        %v4730 = vpop.f32.mrf.mxu0
        %4731 = vmatprep.mubr.bf16.mxu0 0
        %4732 = vmatmul.mubr.bf16.gmra.mxu0 %v4519
        %v4733 = vpop.f32.mrf.mxu0
        %v4734 = vadd.f32 0.0, %v4733
        %v4735 = vpop.f32.mrf.mxu0
        %v4736 = vpop.f32.mrf.mxu0
        %v4737 = vadd.f32 0.0, %v4736
        %v4738 = vpop.f32.mrf.mxu0
        %4739 = vmatprep.mubr.bf16.mxu0 0
        %4740 = vmatmul.mubr.bf16.gmra.mxu0 %v4522
        %v4741 = vpop.f32.mrf.mxu0
        %v4742 = vadd.f32 0.0, %v4741
        %v4743 = vpop.f32.mrf.mxu0
        %v4744 = vpop.f32.mrf.mxu0
        %v4745 = vadd.f32 0.0, %v4744
        %v4746 = vpop.f32.mrf.mxu0
        %4747 = vmatprep.mubr.bf16.mxu0 0
        %4748 = vmatmul.mubr.bf16.gmra.mxu0 %v4525
        %v4749 = vpop.f32.mrf.mxu0
        %v4750 = vadd.f32 0.0, %v4749
        %v4751 = vpop.f32.mrf.mxu0
        %v4752 = vpop.f32.mrf.mxu0
        %v4753 = vadd.f32 0.0, %v4752
        %v4754 = vpop.f32.mrf.mxu0
        %4755 = vmatprep.mubr.bf16.mxu0 0
        %4756 = vmatmul.mubr.bf16.gmra.mxu0 %v4528
        %v4757 = vpop.f32.mrf.mxu0
        %v4758 = vadd.f32 0.0, %v4757
        %v4759 = vpop.f32.mrf.mxu0
        %v4760 = vpop.f32.mrf.mxu0
        %v4761 = vadd.f32 0.0, %v4760
        %v4762 = vpop.f32.mrf.mxu0
        %4763 = vmatprep.mubr.bf16.mxu0 0
        %4764 = vmatmul.mubr.bf16.gmra.mxu0 %v4531
        %v4765 = vpop.f32.mrf.mxu0
        %v4766 = vadd.f32 0.0, %v4765
        %v4767 = vpop.f32.mrf.mxu0
        %v4768 = vpop.f32.mrf.mxu0
        %v4769 = vadd.f32 0.0, %v4768
        %v4770 = vpop.f32.mrf.mxu0
        %4771 = vmatprep.mubr.bf16.mxu0 0
        %4772 = vmatmul.mubr.bf16.gmra.mxu0 %v4534
        %v4773 = vpop.f32.mrf.mxu0
        %v4774 = vadd.f32 0.0, %v4773
        %v4775 = vpop.f32.mrf.mxu0
        %v4776 = vpop.f32.mrf.mxu0
        %v4777 = vadd.f32 0.0, %v4776
        %v4778 = vpop.f32.mrf.mxu0
        %4779 = vmatprep.mubr.bf16.mxu0 0
        %4780 = vmatmul.mubr.bf16.gmra.mxu0 %v4537
        %v4781 = vpop.f32.mrf.mxu0
        %v4782 = vadd.f32 0.0, %v4781
        %v4783 = vpop.f32.mrf.mxu0
        %v4784 = vpop.f32.mrf.mxu0
        %v4785 = vadd.f32 0.0, %v4784
        %v4786 = vpop.f32.mrf.mxu0
        %4787 = vmatprep.mubr.bf16.mxu0 0
        %4788 = vmatmul.mubr.bf16.gmra.mxu0 %v4540
        %v4789 = vpop.f32.mrf.mxu0
        %v4790 = vadd.f32 0.0, %v4789
        %v4791 = vpop.f32.mrf.mxu0
        %v4792 = vpop.f32.mrf.mxu0
        %v4793 = vadd.f32 0.0, %v4792
        %v4794 = vpop.f32.mrf.mxu0
        %4795 = vmatprep.mubr.bf16.mxu0 0
        %4796 = vmatmul.mubr.bf16.gmra.mxu0 %v4543
        %v4797 = vpop.f32.mrf.mxu0
        %v4798 = vadd.f32 0.0, %v4797
        %v4799 = vpop.f32.mrf.mxu0
        %v4800 = vpop.f32.mrf.mxu0
        %v4801 = vadd.f32 0.0, %v4800
        %v4802 = vpop.f32.mrf.mxu0
        %4803 = vmatprep.mubr.bf16.mxu0 0
        %4804 = vmatmul.mubr.bf16.gmra.mxu0 %v4546
        %v4805 = vpop.f32.mrf.mxu0
        %v4806 = vadd.f32 0.0, %v4805
        %v4807 = vpop.f32.mrf.mxu0
        %v4808 = vpop.f32.mrf.mxu0
        %v4809 = vadd.f32 0.0, %v4808
        %v4810 = vpop.f32.mrf.mxu0
        %4811 = vmatprep.mubr.bf16.mxu0 0
        %4812 = vmatmul.mubr.bf16.gmra.mxu0 %v4549
        %v4813 = vpop.f32.mrf.mxu0
        %v4814 = vadd.f32 0.0, %v4813
        %v4815 = vpop.f32.mrf.mxu0
        %v4816 = vpop.f32.mrf.mxu0
        %v4817 = vadd.f32 0.0, %v4816
        %v4818 = vpop.f32.mrf.mxu0
        %4819 = vmatprep.mubr.bf16.mxu0 0
        %4820 = vmatmul.mubr.bf16.gmra.mxu0 %v4552
        %v4821 = vpop.f32.mrf.mxu0
        %v4822 = vadd.f32 0.0, %v4821
        %v4823 = vpop.f32.mrf.mxu0
        %v4824 = vpop.f32.mrf.mxu0
        %v4825 = vadd.f32 0.0, %v4824
        %v4826 = vpop.f32.mrf.mxu0
        %4827 = vmatprep.mubr.bf16.mxu0 0
        %4828 = vmatmul.mubr.bf16.gmra.mxu0 %v4555
        %v4829 = vpop.f32.mrf.mxu0
        %v4830 = vadd.f32 0.0, %v4829
        %v4831 = vpop.f32.mrf.mxu0
        %v4832 = vpop.f32.mrf.mxu0
        %v4833 = vadd.f32 0.0, %v4832
        %v4834 = vpop.f32.mrf.mxu0
        %4835 = vmatprep.mubr.bf16.mxu0 0
        %4836 = vmatmul.mubr.bf16.gmra.mxu0 %v4558
        %v4837 = vpop.f32.mrf.mxu0
        %v4838 = vadd.f32 0.0, %v4837
        %v4839 = vpop.f32.mrf.mxu0
        %v4840 = vpop.f32.mrf.mxu0
        %v4841 = vadd.f32 0.0, %v4840
        %v4842 = vpop.f32.mrf.mxu0
        %4843 = vmatprep.mubr.bf16.mxu0 0
        %4844 = vmatmul.mubr.bf16.gmra.mxu0 %v4561
        %v4845 = vpop.f32.mrf.mxu0
        %v4846 = vadd.f32 0.0, %v4845
        %v4847 = vpop.f32.mrf.mxu0
        %v4848 = vpop.f32.mrf.mxu0
        %v4849 = vadd.f32 0.0, %v4848
        %v4850 = vpop.f32.mrf.mxu0
        %4851 = vdwg.mxu0
        %v4852 = vadd.f32 %v4092, %v4598
        %v4853 = vadd.f32 %v4095, %v4601
        %v4854 = vadd.f32 %v4100, %v4606
        %v4855 = vadd.f32 %v4103, %v4609
        %v4856 = vadd.f32 %v4108, %v4614
        %v4857 = vadd.f32 %v4111, %v4617
        %v4858 = vadd.f32 %v4116, %v4622
        %v4859 = vadd.f32 %v4119, %v4625
        %v4860 = vadd.f32 %v4124, %v4630
        %v4861 = vadd.f32 %v4127, %v4633
        %v4862 = vadd.f32 %v4132, %v4638
        %v4863 = vadd.f32 %v4135, %v4641
        %v4864 = vadd.f32 %v4140, %v4646
        %v4865 = vadd.f32 %v4143, %v4649
        %v4866 = vadd.f32 %v4148, %v4654
        %v4867 = vadd.f32 %v4151, %v4657
        %v4868 = vadd.f32 %v4156, %v4662
        %v4869 = vadd.f32 %v4159, %v4665
        %v4870 = vadd.f32 %v4164, %v4670
        %v4871 = vadd.f32 %v4167, %v4673
        %v4872 = vadd.f32 %v4172, %v4678
        %v4873 = vadd.f32 %v4175, %v4681
        %v4874 = vadd.f32 %v4180, %v4686
        %v4875 = vadd.f32 %v4183, %v4689
        %v4876 = vadd.f32 %v4188, %v4694
        %v4877 = vadd.f32 %v4191, %v4697
        %v4878 = vadd.f32 %v4196, %v4702
        %v4879 = vadd.f32 %v4199, %v4705
        %v4880 = vadd.f32 %v4204, %v4710
        %v4881 = vadd.f32 %v4207, %v4713
        %v4882 = vadd.f32 %v4212, %v4718
        %v4883 = vadd.f32 %v4215, %v4721
        %v4884 = vadd.f32 %v4220, %v4726
        %v4885 = vadd.f32 %v4223, %v4729
        %v4886 = vadd.f32 %v4228, %v4734
        %v4887 = vadd.f32 %v4231, %v4737
        %v4888 = vadd.f32 %v4236, %v4742
        %v4889 = vadd.f32 %v4239, %v4745
        %v4890 = vadd.f32 %v4244, %v4750
        %v4891 = vadd.f32 %v4247, %v4753
        %v4892 = vadd.f32 %v4252, %v4758
        %v4893 = vadd.f32 %v4255, %v4761
        %v4894 = vadd.f32 %v4260, %v4766
        %v4895 = vadd.f32 %v4263, %v4769
        %v4896 = vadd.f32 %v4268, %v4774
        %v4897 = vadd.f32 %v4271, %v4777
        %v4898 = vadd.f32 %v4276, %v4782
        %v4899 = vadd.f32 %v4279, %v4785
        %v4900 = vadd.f32 %v4284, %v4790
        %v4901 = vadd.f32 %v4287, %v4793
        %v4902 = vadd.f32 %v4292, %v4798
        %v4903 = vadd.f32 %v4295, %v4801
        %v4904 = vadd.f32 %v4300, %v4806
        %v4905 = vadd.f32 %v4303, %v4809
        %v4906 = vadd.f32 %v4308, %v4814
        %v4907 = vadd.f32 %v4311, %v4817
        %v4908 = vadd.f32 %v4316, %v4822
        %v4909 = vadd.f32 %v4319, %v4825
        %v4910 = vadd.f32 %v4324, %v4830
        %v4911 = vadd.f32 %v4327, %v4833
        %v4912 = vadd.f32 %v4332, %v4838
        %v4913 = vadd.f32 %v4335, %v4841
        %v4914 = vadd.f32 %v4340, %v4846
        %v4915 = vadd.f32 %v4343, %v4849
        %v4916 = vmul.f32 %v2759, %v3271
        %v4917 = vmul.f32 %v2760, %v3272
        %v4918 = vmul.f32 %v2761, %v3273
        %v4919 = vmul.f32 %v2762, %v3274
        %v4920 = vmul.f32 %v2763, %v3275
        %v4921 = vmul.f32 %v2764, %v3276
        %v4922 = vmul.f32 %v2765, %v3277
        %v4923 = vmul.f32 %v2766, %v3278
        %v4924 = vmul.f32 %v2767, %v3279
        %v4925 = vmul.f32 %v2768, %v3280
        %v4926 = vmul.f32 %v2769, %v3281
        %v4927 = vmul.f32 %v2770, %v3282
        %v4928 = vmul.f32 %v2771, %v3283
        %v4929 = vmul.f32 %v2772, %v3284
        %v4930 = vmul.f32 %v2773, %v3285
        %v4931 = vmul.f32 %v2774, %v3286
        %v4932 = vmul.f32 %v2775, %v3287
        %v4933 = vmul.f32 %v2776, %v3288
        %v4934 = vmul.f32 %v2777, %v3289
        %v4935 = vmul.f32 %v2778, %v3290
        %v4936 = vmul.f32 %v2779, %v3291
        %v4937 = vmul.f32 %v2780, %v3292
        %v4938 = vmul.f32 %v2781, %v3293
        %v4939 = vmul.f32 %v2782, %v3294
        %v4940 = vmul.f32 %v2783, %v3295
        %v4941 = vmul.f32 %v2784, %v3296
        %v4942 = vmul.f32 %v2785, %v3297
        %v4943 = vmul.f32 %v2786, %v3298
        %v4944 = vmul.f32 %v2787, %v3299
        %v4945 = vmul.f32 %v2788, %v3300
        %v4946 = vmul.f32 %v2789, %v3301
        %v4947 = vmul.f32 %v2790, %v3302
        %v4948 = vmul.f32 %v2791, %v3303
        %v4949 = vmul.f32 %v2792, %v3304
        %v4950 = vmul.f32 %v2793, %v3305
        %v4951 = vmul.f32 %v2794, %v3306
        %v4952 = vmul.f32 %v2795, %v3307
        %v4953 = vmul.f32 %v2796, %v3308
        %v4954 = vmul.f32 %v2797, %v3309
        %v4955 = vmul.f32 %v2798, %v3310
        %v4956 = vmul.f32 %v2799, %v3311
        %v4957 = vmul.f32 %v2800, %v3312
        %v4958 = vmul.f32 %v2801, %v3313
        %v4959 = vmul.f32 %v2802, %v3314
        %v4960 = vmul.f32 %v2803, %v3315
        %v4961 = vmul.f32 %v2804, %v3316
        %v4962 = vmul.f32 %v2805, %v3317
        %v4963 = vmul.f32 %v2806, %v3318
        %v4964 = vmul.f32 %v2807, %v3319
        %v4965 = vmul.f32 %v2808, %v3320
        %v4966 = vmul.f32 %v2809, %v3321
        %v4967 = vmul.f32 %v2810, %v3322
        %v4968 = vmul.f32 %v2811, %v3323
        %v4969 = vmul.f32 %v2812, %v3324
        %v4970 = vmul.f32 %v2813, %v3325
        %v4971 = vmul.f32 %v2814, %v3326
        %v4972 = vmul.f32 %v2815, %v3327
        %v4973 = vmul.f32 %v2816, %v3328
        %v4974 = vmul.f32 %v2817, %v3329
        %v4975 = vmul.f32 %v2818, %v3330
        %v4976 = vmul.f32 %v2819, %v3331
        %v4977 = vmul.f32 %v2820, %v3332
        %v4978 = vmul.f32 %v2821, %v3333
        %v4979 = vmul.f32 %v2822, %v3334
        %v4980 = vpack.c.bf16 %v4917, %v4916
        %v4981 = vpack.c.bf16 %v4919, %v4918
        %v4982 = vpack.c.bf16 %v4921, %v4920
        %v4983 = vpack.c.bf16 %v4923, %v4922
        %v4984 = vpack.c.bf16 %v4925, %v4924
        %v4985 = vpack.c.bf16 %v4927, %v4926
        %v4986 = vpack.c.bf16 %v4929, %v4928
        %v4987 = vpack.c.bf16 %v4931, %v4930
        %v4988 = vpack.c.bf16 %v4933, %v4932
        %v4989 = vpack.c.bf16 %v4935, %v4934
        %v4990 = vpack.c.bf16 %v4937, %v4936
        %v4991 = vpack.c.bf16 %v4939, %v4938
        %v4992 = vpack.c.bf16 %v4941, %v4940
        %v4993 = vpack.c.bf16 %v4943, %v4942
        %v4994 = vpack.c.bf16 %v4945, %v4944
        %v4995 = vpack.c.bf16 %v4947, %v4946
        %v4996 = vpack.c.bf16 %v4949, %v4948
        %v4997 = vpack.c.bf16 %v4951, %v4950
        %v4998 = vpack.c.bf16 %v4953, %v4952
        %v4999 = vpack.c.bf16 %v4955, %v4954
        %v5000 = vpack.c.bf16 %v4957, %v4956
        %v5001 = vpack.c.bf16 %v4959, %v4958
        %v5002 = vpack.c.bf16 %v4961, %v4960
        %v5003 = vpack.c.bf16 %v4963, %v4962
        %v5004 = vpack.c.bf16 %v4965, %v4964
        %v5005 = vpack.c.bf16 %v4967, %v4966
        %v5006 = vpack.c.bf16 %v4969, %v4968
        %v5007 = vpack.c.bf16 %v4971, %v4970
        %v5008 = vpack.c.bf16 %v4973, %v4972
        %v5009 = vpack.c.bf16 %v4975, %v4974
        %v5010 = vpack.c.bf16 %v4977, %v4976
        %v5011 = vpack.c.bf16 %v4979, %v4978
        %s5012 = scalar_lea.vmem %s5, 72
        %v5013 = vld [vmem:[%s5012] sm:$0xf]
        %v5014 = vld [vmem:[%s5012 + $0x4] sm:$0xf]
        %v5015 = vld [vmem:[%s5012 + $0x8] sm:$0xf]
        %v5016 = vld [vmem:[%s5012 + $0xc] sm:$0xf]
        %v5017 = vld [vmem:[%s5012 + $0x10] sm:$0xf]
        %v5018 = vld [vmem:[%s5012 + $0x14] sm:$0xf]
        %v5025 = vunpack.c.l.b16 %v5013
        %v5026 = vunpack.c.l.b16 %v5014
        %v5027 = vunpack.c.l.b16 %v5015
        %v5028 = vunpack.c.l.b16 %v5016
        %v5029 = vunpack.c.l.b16 %v5017
        %v5030 = vunpack.c.l.b16 %v5018
        %v5031 = vpack.c.b16 %v5026, %v5025
        %v5032 = vpack.c.b16 %v5028, %v5027
        %v5033 = vpack.c.b16 %v5030, %v5029
        %v5038 = vsel %vm1990, %v4980, 0
        %v5041 = vsel %vm1990, %v4981, 0
        %v5044 = vsel %vm1990, %v4982, 0
        %v5047 = vsel %vm1990, %v4983, 0
        %v5050 = vsel %vm1990, %v4984, 0
        %v5053 = vsel %vm1990, %v4985, 0
        %v5056 = vsel %vm1990, %v4986, 0
        %v5059 = vsel %vm1990, %v4987, 0
        %v5062 = vsel %vm1990, %v4988, 0
        %v5065 = vsel %vm1990, %v4989, 0
        %v5068 = vsel %vm1990, %v4990, 0
        %v5071 = vsel %vm1990, %v4991, 0
        %v5074 = vsel %vm1990, %v4992, 0
        %v5077 = vsel %vm1990, %v4993, 0
        %v5080 = vsel %vm1990, %v4994, 0
        %v5083 = vsel %vm1990, %v4995, 0
        %v5086 = vsel %vm1990, %v4996, 0
        %v5089 = vsel %vm1990, %v4997, 0
        %v5092 = vsel %vm1990, %v4998, 0
        %v5095 = vsel %vm1990, %v4999, 0
        %v5098 = vsel %vm1990, %v5000, 0
        %v5101 = vsel %vm1990, %v5001, 0
        %v5104 = vsel %vm1990, %v5002, 0
        %v5107 = vsel %vm1990, %v5003, 0
        %v5110 = vsel %vm1990, %v5004, 0
        %v5113 = vsel %vm1990, %v5005, 0
        %v5116 = vsel %vm1990, %v5006, 0
        %v5119 = vsel %vm1990, %v5007, 0
        %v5122 = vsel %vm1990, %v5008, 0
        %v5125 = vsel %vm1990, %v5009, 0
        %v5128 = vsel %vm1990, %v5010, 0
        %v5131 = vsel %vm1990, %v5011, 0
        %5133 = vmatprep.subr.bf16.mxu0 0
        %5134 = vmatpush1.bf16.msra.mxu0 0
        %5135 = vmatprep.subr.bf16.mxu0 0
        %5136 = vmatpush1.bf16.msra.mxu0 0
        %5137 = vmatprep.subr.bf16.mxu0 0
        %5138 = vmatpush1.bf16.msra.mxu0 0
        %5139 = vmatprep.subr.bf16.mxu0 0
        %5140 = vmatpush1.bf16.msra.mxu0 0
        %5141 = vmatprep.subr.bf16.mxu0 0
        %5142 = vmatpush1.bf16.msra.mxu0 0
        %5143 = vmatprep.subr.bf16.mxu0 0
        %5144 = vmatpush1.bf16.msra.mxu0 %v5033
        %5145 = vmatprep.subr.bf16.mxu0 0
        %5146 = vmatpush1.bf16.msra.mxu0 %v5032
        %5147 = vmatprep.subr.bf16.mxu0 0
        %5148 = vmatpush1.bf16.msra.mxu0 %v5031
        %5149 = vmatprep.subr.bf16.mxu0 0
        %5150 = vmatpush2.bf16.msra.mxu0 0
        %5151 = vmatprep.subr.bf16.mxu0 0
        %5152 = vmatpush2.bf16.msra.mxu0 0
        %5153 = vmatprep.subr.bf16.mxu0 0
        %5154 = vmatpush2.bf16.msra.mxu0 0
        %5155 = vmatprep.subr.bf16.mxu0 0
        %5156 = vmatpush2.bf16.msra.mxu0 0
        %5157 = vmatprep.subr.bf16.mxu0 0
        %5158 = vmatpush2.bf16.msra.mxu0 0
        %5159 = vmatprep.subr.bf16.mxu0 0
        %5160 = vmatpush2.bf16.msra.mxu0 0
        %5161 = vmatprep.subr.bf16.mxu0 0
        %5162 = vmatpush2.bf16.msra.mxu0 0
        %5163 = vmatprep.subr.bf16.mxu0 0
        %5164 = vmatpush2.bf16.msra.mxu0 0
        %5165 = vmatprep.mubr.bf16.mxu0 0
        %5166 = vmatmul.mubr.bf16.gmra.mxu0 %v5038
        %v5167 = vpop.f32.mrf.mxu0
        %v5168 = vadd.f32 0.0, %v5167
        %v5169 = vpop.f32.mrf.mxu0
        %v5170 = vpop.f32.mrf.mxu0
        %v5171 = vadd.f32 0.0, %v5170
        %v5172 = vpop.f32.mrf.mxu0
        %5173 = vmatprep.mubr.bf16.mxu0 0
        %5174 = vmatmul.mubr.bf16.gmra.mxu0 %v5041
        %v5175 = vpop.f32.mrf.mxu0
        %v5176 = vadd.f32 0.0, %v5175
        %v5177 = vpop.f32.mrf.mxu0
        %v5178 = vpop.f32.mrf.mxu0
        %v5179 = vadd.f32 0.0, %v5178
        %v5180 = vpop.f32.mrf.mxu0
        %5181 = vmatprep.mubr.bf16.mxu0 0
        %5182 = vmatmul.mubr.bf16.gmra.mxu0 %v5044
        %v5183 = vpop.f32.mrf.mxu0
        %v5184 = vadd.f32 0.0, %v5183
        %v5185 = vpop.f32.mrf.mxu0
        %v5186 = vpop.f32.mrf.mxu0
        %v5187 = vadd.f32 0.0, %v5186
        %v5188 = vpop.f32.mrf.mxu0
        %5189 = vmatprep.mubr.bf16.mxu0 0
        %5190 = vmatmul.mubr.bf16.gmra.mxu0 %v5047
        %v5191 = vpop.f32.mrf.mxu0
        %v5192 = vadd.f32 0.0, %v5191
        %v5193 = vpop.f32.mrf.mxu0
        %v5194 = vpop.f32.mrf.mxu0
        %v5195 = vadd.f32 0.0, %v5194
        %v5196 = vpop.f32.mrf.mxu0
        %5197 = vmatprep.mubr.bf16.mxu0 0
        %5198 = vmatmul.mubr.bf16.gmra.mxu0 %v5050
        %v5199 = vpop.f32.mrf.mxu0
        %v5200 = vadd.f32 0.0, %v5199
        %v5201 = vpop.f32.mrf.mxu0
        %v5202 = vpop.f32.mrf.mxu0
        %v5203 = vadd.f32 0.0, %v5202
        %v5204 = vpop.f32.mrf.mxu0
        %5205 = vmatprep.mubr.bf16.mxu0 0
        %5206 = vmatmul.mubr.bf16.gmra.mxu0 %v5053
        %v5207 = vpop.f32.mrf.mxu0
        %v5208 = vadd.f32 0.0, %v5207
        %v5209 = vpop.f32.mrf.mxu0
        %v5210 = vpop.f32.mrf.mxu0
        %v5211 = vadd.f32 0.0, %v5210
        %v5212 = vpop.f32.mrf.mxu0
        %5213 = vmatprep.mubr.bf16.mxu0 0
        %5214 = vmatmul.mubr.bf16.gmra.mxu0 %v5056
        %v5215 = vpop.f32.mrf.mxu0
        %v5216 = vadd.f32 0.0, %v5215
        %v5217 = vpop.f32.mrf.mxu0
        %v5218 = vpop.f32.mrf.mxu0
        %v5219 = vadd.f32 0.0, %v5218
        %v5220 = vpop.f32.mrf.mxu0
        %5221 = vmatprep.mubr.bf16.mxu0 0
        %5222 = vmatmul.mubr.bf16.gmra.mxu0 %v5059
        %v5223 = vpop.f32.mrf.mxu0
        %v5224 = vadd.f32 0.0, %v5223
        %v5225 = vpop.f32.mrf.mxu0
        %v5226 = vpop.f32.mrf.mxu0
        %v5227 = vadd.f32 0.0, %v5226
        %v5228 = vpop.f32.mrf.mxu0
        %5229 = vmatprep.mubr.bf16.mxu0 0
        %5230 = vmatmul.mubr.bf16.gmra.mxu0 %v5062
        %v5231 = vpop.f32.mrf.mxu0
        %v5232 = vadd.f32 0.0, %v5231
        %v5233 = vpop.f32.mrf.mxu0
        %v5234 = vpop.f32.mrf.mxu0
        %v5235 = vadd.f32 0.0, %v5234
        %v5236 = vpop.f32.mrf.mxu0
        %5237 = vmatprep.mubr.bf16.mxu0 0
        %5238 = vmatmul.mubr.bf16.gmra.mxu0 %v5065
        %v5239 = vpop.f32.mrf.mxu0
        %v5240 = vadd.f32 0.0, %v5239
        %v5241 = vpop.f32.mrf.mxu0
        %v5242 = vpop.f32.mrf.mxu0
        %v5243 = vadd.f32 0.0, %v5242
        %v5244 = vpop.f32.mrf.mxu0
        %5245 = vmatprep.mubr.bf16.mxu0 0
        %5246 = vmatmul.mubr.bf16.gmra.mxu0 %v5068
        %v5247 = vpop.f32.mrf.mxu0
        %v5248 = vadd.f32 0.0, %v5247
        %v5249 = vpop.f32.mrf.mxu0
        %v5250 = vpop.f32.mrf.mxu0
        %v5251 = vadd.f32 0.0, %v5250
        %v5252 = vpop.f32.mrf.mxu0
        %5253 = vmatprep.mubr.bf16.mxu0 0
        %5254 = vmatmul.mubr.bf16.gmra.mxu0 %v5071
        %v5255 = vpop.f32.mrf.mxu0
        %v5256 = vadd.f32 0.0, %v5255
        %v5257 = vpop.f32.mrf.mxu0
        %v5258 = vpop.f32.mrf.mxu0
        %v5259 = vadd.f32 0.0, %v5258
        %v5260 = vpop.f32.mrf.mxu0
        %5261 = vmatprep.mubr.bf16.mxu0 0
        %5262 = vmatmul.mubr.bf16.gmra.mxu0 %v5074
        %v5263 = vpop.f32.mrf.mxu0
        %v5264 = vadd.f32 0.0, %v5263
        %v5265 = vpop.f32.mrf.mxu0
        %v5266 = vpop.f32.mrf.mxu0
        %v5267 = vadd.f32 0.0, %v5266
        %v5268 = vpop.f32.mrf.mxu0
        %5269 = vmatprep.mubr.bf16.mxu0 0
        %5270 = vmatmul.mubr.bf16.gmra.mxu0 %v5077
        %v5271 = vpop.f32.mrf.mxu0
        %v5272 = vadd.f32 0.0, %v5271
        %v5273 = vpop.f32.mrf.mxu0
        %v5274 = vpop.f32.mrf.mxu0
        %v5275 = vadd.f32 0.0, %v5274
        %v5276 = vpop.f32.mrf.mxu0
        %5277 = vmatprep.mubr.bf16.mxu0 0
        %5278 = vmatmul.mubr.bf16.gmra.mxu0 %v5080
        %v5279 = vpop.f32.mrf.mxu0
        %v5280 = vadd.f32 0.0, %v5279
        %v5281 = vpop.f32.mrf.mxu0
        %v5282 = vpop.f32.mrf.mxu0
        %v5283 = vadd.f32 0.0, %v5282
        %v5284 = vpop.f32.mrf.mxu0
        %5285 = vmatprep.mubr.bf16.mxu0 0
        %5286 = vmatmul.mubr.bf16.gmra.mxu0 %v5083
        %v5287 = vpop.f32.mrf.mxu0
        %v5288 = vadd.f32 0.0, %v5287
        %v5289 = vpop.f32.mrf.mxu0
        %v5290 = vpop.f32.mrf.mxu0
        %v5291 = vadd.f32 0.0, %v5290
        %v5292 = vpop.f32.mrf.mxu0
        %5293 = vmatprep.mubr.bf16.mxu0 0
        %5294 = vmatmul.mubr.bf16.gmra.mxu0 %v5086
        %v5295 = vpop.f32.mrf.mxu0
        %v5296 = vadd.f32 0.0, %v5295
        %v5297 = vpop.f32.mrf.mxu0
        %v5298 = vpop.f32.mrf.mxu0
        %v5299 = vadd.f32 0.0, %v5298
        %v5300 = vpop.f32.mrf.mxu0
        %5301 = vmatprep.mubr.bf16.mxu0 0
        %5302 = vmatmul.mubr.bf16.gmra.mxu0 %v5089
        %v5303 = vpop.f32.mrf.mxu0
        %v5304 = vadd.f32 0.0, %v5303
        %v5305 = vpop.f32.mrf.mxu0
        %v5306 = vpop.f32.mrf.mxu0
        %v5307 = vadd.f32 0.0, %v5306
        %v5308 = vpop.f32.mrf.mxu0
        %5309 = vmatprep.mubr.bf16.mxu0 0
        %5310 = vmatmul.mubr.bf16.gmra.mxu0 %v5092
        %v5311 = vpop.f32.mrf.mxu0
        %v5312 = vadd.f32 0.0, %v5311
        %v5313 = vpop.f32.mrf.mxu0
        %v5314 = vpop.f32.mrf.mxu0
        %v5315 = vadd.f32 0.0, %v5314
        %v5316 = vpop.f32.mrf.mxu0
        %5317 = vmatprep.mubr.bf16.mxu0 0
        %5318 = vmatmul.mubr.bf16.gmra.mxu0 %v5095
        %v5319 = vpop.f32.mrf.mxu0
        %v5320 = vadd.f32 0.0, %v5319
        %v5321 = vpop.f32.mrf.mxu0
        %v5322 = vpop.f32.mrf.mxu0
        %v5323 = vadd.f32 0.0, %v5322
        %v5324 = vpop.f32.mrf.mxu0
        %5325 = vmatprep.mubr.bf16.mxu0 0
        %5326 = vmatmul.mubr.bf16.gmra.mxu0 %v5098
        %v5327 = vpop.f32.mrf.mxu0
        %v5328 = vadd.f32 0.0, %v5327
        %v5329 = vpop.f32.mrf.mxu0
        %v5330 = vpop.f32.mrf.mxu0
        %v5331 = vadd.f32 0.0, %v5330
        %v5332 = vpop.f32.mrf.mxu0
        %5333 = vmatprep.mubr.bf16.mxu0 0
        %5334 = vmatmul.mubr.bf16.gmra.mxu0 %v5101
        %v5335 = vpop.f32.mrf.mxu0
        %v5336 = vadd.f32 0.0, %v5335
        %v5337 = vpop.f32.mrf.mxu0
        %v5338 = vpop.f32.mrf.mxu0
        %v5339 = vadd.f32 0.0, %v5338
        %v5340 = vpop.f32.mrf.mxu0
        %5341 = vmatprep.mubr.bf16.mxu0 0
        %5342 = vmatmul.mubr.bf16.gmra.mxu0 %v5104
        %v5343 = vpop.f32.mrf.mxu0
        %v5344 = vadd.f32 0.0, %v5343
        %v5345 = vpop.f32.mrf.mxu0
        %v5346 = vpop.f32.mrf.mxu0
        %v5347 = vadd.f32 0.0, %v5346
        %v5348 = vpop.f32.mrf.mxu0
        %5349 = vmatprep.mubr.bf16.mxu0 0
        %5350 = vmatmul.mubr.bf16.gmra.mxu0 %v5107
        %v5351 = vpop.f32.mrf.mxu0
        %v5352 = vadd.f32 0.0, %v5351
        %v5353 = vpop.f32.mrf.mxu0
        %v5354 = vpop.f32.mrf.mxu0
        %v5355 = vadd.f32 0.0, %v5354
        %v5356 = vpop.f32.mrf.mxu0
        %5357 = vmatprep.mubr.bf16.mxu0 0
        %5358 = vmatmul.mubr.bf16.gmra.mxu0 %v5110
        %v5359 = vpop.f32.mrf.mxu0
        %v5360 = vadd.f32 0.0, %v5359
        %v5361 = vpop.f32.mrf.mxu0
        %v5362 = vpop.f32.mrf.mxu0
        %v5363 = vadd.f32 0.0, %v5362
        %v5364 = vpop.f32.mrf.mxu0
        %5365 = vmatprep.mubr.bf16.mxu0 0
        %5366 = vmatmul.mubr.bf16.gmra.mxu0 %v5113
        %v5367 = vpop.f32.mrf.mxu0
        %v5368 = vadd.f32 0.0, %v5367
        %v5369 = vpop.f32.mrf.mxu0
        %v5370 = vpop.f32.mrf.mxu0
        %v5371 = vadd.f32 0.0, %v5370
        %v5372 = vpop.f32.mrf.mxu0
        %5373 = vmatprep.mubr.bf16.mxu0 0
        %5374 = vmatmul.mubr.bf16.gmra.mxu0 %v5116
        %v5375 = vpop.f32.mrf.mxu0
        %v5376 = vadd.f32 0.0, %v5375
        %v5377 = vpop.f32.mrf.mxu0
        %v5378 = vpop.f32.mrf.mxu0
        %v5379 = vadd.f32 0.0, %v5378
        %v5380 = vpop.f32.mrf.mxu0
        %5381 = vmatprep.mubr.bf16.mxu0 0
        %5382 = vmatmul.mubr.bf16.gmra.mxu0 %v5119
        %v5383 = vpop.f32.mrf.mxu0
        %v5384 = vadd.f32 0.0, %v5383
        %v5385 = vpop.f32.mrf.mxu0
        %v5386 = vpop.f32.mrf.mxu0
        %v5387 = vadd.f32 0.0, %v5386
        %v5388 = vpop.f32.mrf.mxu0
        %5389 = vmatprep.mubr.bf16.mxu0 0
        %5390 = vmatmul.mubr.bf16.gmra.mxu0 %v5122
        %v5391 = vpop.f32.mrf.mxu0
        %v5392 = vadd.f32 0.0, %v5391
        %v5393 = vpop.f32.mrf.mxu0
        %v5394 = vpop.f32.mrf.mxu0
        %v5395 = vadd.f32 0.0, %v5394
        %v5396 = vpop.f32.mrf.mxu0
        %5397 = vmatprep.mubr.bf16.mxu0 0
        %5398 = vmatmul.mubr.bf16.gmra.mxu0 %v5125
        %v5399 = vpop.f32.mrf.mxu0
        %v5400 = vadd.f32 0.0, %v5399
        %v5401 = vpop.f32.mrf.mxu0
        %v5402 = vpop.f32.mrf.mxu0
        %v5403 = vadd.f32 0.0, %v5402
        %v5404 = vpop.f32.mrf.mxu0
        %5405 = vmatprep.mubr.bf16.mxu0 0
        %5406 = vmatmul.mubr.bf16.gmra.mxu0 %v5128
        %v5407 = vpop.f32.mrf.mxu0
        %v5408 = vadd.f32 0.0, %v5407
        %v5409 = vpop.f32.mrf.mxu0
        %v5410 = vpop.f32.mrf.mxu0
        %v5411 = vadd.f32 0.0, %v5410
        %v5412 = vpop.f32.mrf.mxu0
        %5413 = vmatprep.mubr.bf16.mxu0 0
        %5414 = vmatmul.mubr.bf16.gmra.mxu0 %v5131
        %v5415 = vpop.f32.mrf.mxu0
        %v5416 = vadd.f32 0.0, %v5415
        %v5417 = vpop.f32.mrf.mxu0
        %v5418 = vpop.f32.mrf.mxu0
        %v5419 = vadd.f32 0.0, %v5418
        %v5420 = vpop.f32.mrf.mxu0
        %5421 = vdwg.mxu0
        %v5422 = vadd.f32 %v4852, %v5168
        %v5423 = vadd.f32 %v4853, %v5171
        %v5424 = vadd.f32 %v4854, %v5176
        %v5425 = vadd.f32 %v4855, %v5179
        %v5426 = vadd.f32 %v4856, %v5184
        %v5427 = vadd.f32 %v4857, %v5187
        %v5428 = vadd.f32 %v4858, %v5192
        %v5429 = vadd.f32 %v4859, %v5195
        %v5430 = vadd.f32 %v4860, %v5200
        %v5431 = vadd.f32 %v4861, %v5203
        %v5432 = vadd.f32 %v4862, %v5208
        %v5433 = vadd.f32 %v4863, %v5211
        %v5434 = vadd.f32 %v4864, %v5216
        %v5435 = vadd.f32 %v4865, %v5219
        %v5436 = vadd.f32 %v4866, %v5224
        %v5437 = vadd.f32 %v4867, %v5227
        %v5438 = vadd.f32 %v4868, %v5232
        %v5439 = vadd.f32 %v4869, %v5235
        %v5440 = vadd.f32 %v4870, %v5240
        %v5441 = vadd.f32 %v4871, %v5243
        %v5442 = vadd.f32 %v4872, %v5248
        %v5443 = vadd.f32 %v4873, %v5251
        %v5444 = vadd.f32 %v4874, %v5256
        %v5445 = vadd.f32 %v4875, %v5259
        %v5446 = vadd.f32 %v4876, %v5264
        %v5447 = vadd.f32 %v4877, %v5267
        %v5448 = vadd.f32 %v4878, %v5272
        %v5449 = vadd.f32 %v4879, %v5275
        %v5450 = vadd.f32 %v4880, %v5280
        %v5451 = vadd.f32 %v4881, %v5283
        %v5452 = vadd.f32 %v4882, %v5288
        %v5453 = vadd.f32 %v4883, %v5291
        %v5454 = vadd.f32 %v4884, %v5296
        %v5455 = vadd.f32 %v4885, %v5299
        %v5456 = vadd.f32 %v4886, %v5304
        %v5457 = vadd.f32 %v4887, %v5307
        %v5458 = vadd.f32 %v4888, %v5312
        %v5459 = vadd.f32 %v4889, %v5315
        %v5460 = vadd.f32 %v4890, %v5320
        %v5461 = vadd.f32 %v4891, %v5323
        %v5462 = vadd.f32 %v4892, %v5328
        %v5463 = vadd.f32 %v4893, %v5331
        %v5464 = vadd.f32 %v4894, %v5336
        %v5465 = vadd.f32 %v4895, %v5339
        %v5466 = vadd.f32 %v4896, %v5344
        %v5467 = vadd.f32 %v4897, %v5347
        %v5468 = vadd.f32 %v4898, %v5352
        %v5469 = vadd.f32 %v4899, %v5355
        %v5470 = vadd.f32 %v4900, %v5360
        %v5471 = vadd.f32 %v4901, %v5363
        %v5472 = vadd.f32 %v4902, %v5368
        %v5473 = vadd.f32 %v4903, %v5371
        %v5474 = vadd.f32 %v4904, %v5376
        %v5475 = vadd.f32 %v4905, %v5379
        %v5476 = vadd.f32 %v4906, %v5384
        %v5477 = vadd.f32 %v4907, %v5387
        %v5478 = vadd.f32 %v4908, %v5392
        %v5479 = vadd.f32 %v4909, %v5395
        %v5480 = vadd.f32 %v4910, %v5400
        %v5481 = vadd.f32 %v4911, %v5403
        %v5482 = vadd.f32 %v4912, %v5408
        %v5483 = vadd.f32 %v4913, %v5411
        %v5484 = vadd.f32 %v4914, %v5416
        %v5485 = vadd.f32 %v4915, %v5419
        %v5486 = vld [vmem:[%s6] sm:$0x1]
        %v5488 = vlaneseq
        %v5489 = vshrl.u32 %v5488, 7
        %v5490 = vsub.s32 0, %v5489
        %v5491 = vrot.slane %v5486, %v5490
        %v5493 = vadd.f32 %v5422, %v5491
        %v5494 = vadd.f32 %v5423, %v5491
        %v5495 = vadd.f32 %v5424, %v5491
        %v5496 = vadd.f32 %v5425, %v5491
        %v5497 = vadd.f32 %v5426, %v5491
        %v5498 = vadd.f32 %v5427, %v5491
        %v5499 = vadd.f32 %v5428, %v5491
        %v5500 = vadd.f32 %v5429, %v5491
        %v5501 = vadd.f32 %v5430, %v5491
        %v5502 = vadd.f32 %v5431, %v5491
        %v5503 = vadd.f32 %v5432, %v5491
        %v5504 = vadd.f32 %v5433, %v5491
        %v5505 = vadd.f32 %v5434, %v5491
        %v5506 = vadd.f32 %v5435, %v5491
        %v5507 = vadd.f32 %v5436, %v5491
        %v5508 = vadd.f32 %v5437, %v5491
        %v5509 = vadd.f32 %v5438, %v5491
        %v5510 = vadd.f32 %v5439, %v5491
        %v5511 = vadd.f32 %v5440, %v5491
        %v5512 = vadd.f32 %v5441, %v5491
        %v5513 = vadd.f32 %v5442, %v5491
        %v5514 = vadd.f32 %v5443, %v5491
        %v5515 = vadd.f32 %v5444, %v5491
        %v5516 = vadd.f32 %v5445, %v5491
        %v5517 = vadd.f32 %v5446, %v5491
        %v5518 = vadd.f32 %v5447, %v5491
        %v5519 = vadd.f32 %v5448, %v5491
        %v5520 = vadd.f32 %v5449, %v5491
        %v5521 = vadd.f32 %v5450, %v5491
        %v5522 = vadd.f32 %v5451, %v5491
        %v5523 = vadd.f32 %v5452, %v5491
        %v5524 = vadd.f32 %v5453, %v5491
        %v5525 = vadd.f32 %v5454, %v5491
        %v5526 = vadd.f32 %v5455, %v5491
        %v5527 = vadd.f32 %v5456, %v5491
        %v5528 = vadd.f32 %v5457, %v5491
        %v5529 = vadd.f32 %v5458, %v5491
        %v5530 = vadd.f32 %v5459, %v5491
        %v5531 = vadd.f32 %v5460, %v5491
        %v5532 = vadd.f32 %v5461, %v5491
        %v5533 = vadd.f32 %v5462, %v5491
        %v5534 = vadd.f32 %v5463, %v5491
        %v5535 = vadd.f32 %v5464, %v5491
        %v5536 = vadd.f32 %v5465, %v5491
        %v5537 = vadd.f32 %v5466, %v5491
        %v5538 = vadd.f32 %v5467, %v5491
        %v5539 = vadd.f32 %v5468, %v5491
        %v5540 = vadd.f32 %v5469, %v5491
        %v5541 = vadd.f32 %v5470, %v5491
        %v5542 = vadd.f32 %v5471, %v5491
        %v5543 = vadd.f32 %v5472, %v5491
        %v5544 = vadd.f32 %v5473, %v5491
        %v5545 = vadd.f32 %v5474, %v5491
        %v5546 = vadd.f32 %v5475, %v5491
        %v5547 = vadd.f32 %v5476, %v5491
        %v5548 = vadd.f32 %v5477, %v5491
        %v5549 = vadd.f32 %v5478, %v5491
        %v5550 = vadd.f32 %v5479, %v5491
        %v5551 = vadd.f32 %v5480, %v5491
        %v5552 = vadd.f32 %v5481, %v5491
        %v5553 = vadd.f32 %v5482, %v5491
        %v5554 = vadd.f32 %v5483, %v5491
        %v5555 = vadd.f32 %v5484, %v5491
        %v5556 = vadd.f32 %v5485, %v5491
        %5557 = vst.msk [vmem:[%s1530] sm:$0xff] %vm1990, %v5493
        %5558 = vst.msk [vmem:[%s1530 + $0x8] sm:$0xff] %vm1990, %v5494
        %5559 = vst.msk [vmem:[%s1530 + $0x10] sm:$0xff] %vm1990, %v5495
        %5560 = vst.msk [vmem:[%s1530 + $0x18] sm:$0xff] %vm1990, %v5496
        %5561 = vst.msk [vmem:[%s1530 + $0x20] sm:$0xff] %vm1990, %v5497
        %5562 = vst.msk [vmem:[%s1530 + $0x28] sm:$0xff] %vm1990, %v5498
        %5563 = vst.msk [vmem:[%s1530 + $0x30] sm:$0xff] %vm1990, %v5499
        %5564 = vst.msk [vmem:[%s1530 + $0x38] sm:$0xff] %vm1990, %v5500
        %5565 = vst.msk [vmem:[%s1530 + $0x40] sm:$0xff] %vm1990, %v5501
        %5566 = vst.msk [vmem:[%s1530 + $0x48] sm:$0xff] %vm1990, %v5502
        %5567 = vst.msk [vmem:[%s1530 + $0x50] sm:$0xff] %vm1990, %v5503
        %5568 = vst.msk [vmem:[%s1530 + $0x58] sm:$0xff] %vm1990, %v5504
        %5569 = vst.msk [vmem:[%s1530 + $0x60] sm:$0xff] %vm1990, %v5505
        %5570 = vst.msk [vmem:[%s1530 + $0x68] sm:$0xff] %vm1990, %v5506
        %5571 = vst.msk [vmem:[%s1530 + $0x70] sm:$0xff] %vm1990, %v5507
        %5572 = vst.msk [vmem:[%s1530 + $0x78] sm:$0xff] %vm1990, %v5508
        %5573 = vst.msk [vmem:[%s1530 + $0x80] sm:$0xff] %vm1990, %v5509
        %5574 = vst.msk [vmem:[%s1530 + $0x88] sm:$0xff] %vm1990, %v5510
        %5575 = vst.msk [vmem:[%s1530 + $0x90] sm:$0xff] %vm1990, %v5511
        %5576 = vst.msk [vmem:[%s1530 + $0x98] sm:$0xff] %vm1990, %v5512
        %5577 = vst.msk [vmem:[%s1530 + $0xa0] sm:$0xff] %vm1990, %v5513
        %5578 = vst.msk [vmem:[%s1530 + $0xa8] sm:$0xff] %vm1990, %v5514
        %5579 = vst.msk [vmem:[%s1530 + $0xb0] sm:$0xff] %vm1990, %v5515
        %5580 = vst.msk [vmem:[%s1530 + $0xb8] sm:$0xff] %vm1990, %v5516
        %5581 = vst.msk [vmem:[%s1530 + $0xc0] sm:$0xff] %vm1990, %v5517
        %5582 = vst.msk [vmem:[%s1530 + $0xc8] sm:$0xff] %vm1990, %v5518
        %5583 = vst.msk [vmem:[%s1530 + $0xd0] sm:$0xff] %vm1990, %v5519
        %5584 = vst.msk [vmem:[%s1530 + $0xd8] sm:$0xff] %vm1990, %v5520
        %5585 = vst.msk [vmem:[%s1530 + $0xe0] sm:$0xff] %vm1990, %v5521
        %5586 = vst.msk [vmem:[%s1530 + $0xe8] sm:$0xff] %vm1990, %v5522
        %5587 = vst.msk [vmem:[%s1530 + $0xf0] sm:$0xff] %vm1990, %v5523
        %5588 = vst.msk [vmem:[%s1530 + $0xf8] sm:$0xff] %vm1990, %v5524
        %5589 = vst.msk [vmem:[%s1530 + $0x100] sm:$0xff] %vm1990, %v5525
        %5590 = vst.msk [vmem:[%s1530 + $0x108] sm:$0xff] %vm1990, %v5526
        %5591 = vst.msk [vmem:[%s1530 + $0x110] sm:$0xff] %vm1990, %v5527
        %5592 = vst.msk [vmem:[%s1530 + $0x118] sm:$0xff] %vm1990, %v5528
        %5593 = vst.msk [vmem:[%s1530 + $0x120] sm:$0xff] %vm1990, %v5529
        %5594 = vst.msk [vmem:[%s1530 + $0x128] sm:$0xff] %vm1990, %v5530
        %5595 = vst.msk [vmem:[%s1530 + $0x130] sm:$0xff] %vm1990, %v5531
        %5596 = vst.msk [vmem:[%s1530 + $0x138] sm:$0xff] %vm1990, %v5532
        %5597 = vst.msk [vmem:[%s1530 + $0x140] sm:$0xff] %vm1990, %v5533
        %5598 = vst.msk [vmem:[%s1530 + $0x148] sm:$0xff] %vm1990, %v5534
        %5599 = vst.msk [vmem:[%s1530 + $0x150] sm:$0xff] %vm1990, %v5535
        %5600 = vst.msk [vmem:[%s1530 + $0x158] sm:$0xff] %vm1990, %v5536
        %5601 = vst.msk [vmem:[%s1530 + $0x160] sm:$0xff] %vm1990, %v5537
        %5602 = vst.msk [vmem:[%s1530 + $0x168] sm:$0xff] %vm1990, %v5538
        %5603 = vst.msk [vmem:[%s1530 + $0x170] sm:$0xff] %vm1990, %v5539
        %5604 = vst.msk [vmem:[%s1530 + $0x178] sm:$0xff] %vm1990, %v5540
        %5605 = vst.msk [vmem:[%s1530 + $0x180] sm:$0xff] %vm1990, %v5541
        %5606 = vst.msk [vmem:[%s1530 + $0x188] sm:$0xff] %vm1990, %v5542
        %5607 = vst.msk [vmem:[%s1530 + $0x190] sm:$0xff] %vm1990, %v5543
        %5608 = vst.msk [vmem:[%s1530 + $0x198] sm:$0xff] %vm1990, %v5544
        %5609 = vst.msk [vmem:[%s1530 + $0x1a0] sm:$0xff] %vm1990, %v5545
        %5610 = vst.msk [vmem:[%s1530 + $0x1a8] sm:$0xff] %vm1990, %v5546
        %5611 = vst.msk [vmem:[%s1530 + $0x1b0] sm:$0xff] %vm1990, %v5547
        %5612 = vst.msk [vmem:[%s1530 + $0x1b8] sm:$0xff] %vm1990, %v5548
        %5613 = vst.msk [vmem:[%s1530 + $0x1c0] sm:$0xff] %vm1990, %v5549
        %5614 = vst.msk [vmem:[%s1530 + $0x1c8] sm:$0xff] %vm1990, %v5550
        %5615 = vst.msk [vmem:[%s1530 + $0x1d0] sm:$0xff] %vm1990, %v5551
        %5616 = vst.msk [vmem:[%s1530 + $0x1d8] sm:$0xff] %vm1990, %v5552
        %5617 = vst.msk [vmem:[%s1530 + $0x1e0] sm:$0xff] %vm1990, %v5553
        %5618 = vst.msk [vmem:[%s1530 + $0x1e8] sm:$0xff] %vm1990, %v5554
        %5619 = vst.msk [vmem:[%s1530 + $0x1f0] sm:$0xff] %vm1990, %v5555
        %5620 = vst.msk [vmem:[%s1530 + $0x1f8] sm:$0xff] %vm1990, %v5556
        %s5621 = sand.u32 %s218, 1
        %s5622 = scalar_lea.sflag [#allocation7], %s5621
        %s5623 = sand.u32 %s218, 1
        %s5624 = smul.addr %s5623, 512
        %s5625 = scalar_lea.vmem [#allocation6], %s5624
        // Predicated region
        $region201: #{patch_merging_pallas.1} parent=183 // pred_check
          %p5626 = pneg %p228
        $region202: #{patch_merging_pallas.1} parent=183 // pred_check_branch
          %5628 = sbr.rel (%p5626) target = $region204
        $region203: #{patch_merging_pallas.1} parent=183 // pred_region
          %s5629 = smul.u32 8, %s25
          %s5630 = smul.u32 8, %s26
          %s5632 = ssub.s32 8192, 8192
          %5633 = vsyncadd %s5622, %s5632
          %s5634 = smul.addr %s5629, 8
          %s5635 = sadd.s32 %s5630, %s5634
          %s5636 = smul.addr %s5635, 128
          %s5637 = scalar_lea.hbm %s7, %s5636
          %s5638 = sshll.u32 %s5625, 4
          %s5639 = int_to_ptr.vmem [resolvable:$true] %s5638
          %5644 = dma.vmem_to_hbm [thread:$0]  %s5639, 8192, %s5637, %s5622, 128, 128, 8
        $region204: #{patch_merging_pallas.1} parent=183 // pred_fallthru
          _
      $region184: #{patch_merging_pallas.1} parent=5 // pred_fallthru
        _
      %p5645 = scmp.le.s32.totalorder 2, %s16
      // Predicated region
      $region205: #{patch_merging_pallas.1} parent=5 // pred_check
        %p5646 = pneg %p5645
      $region206: #{patch_merging_pallas.1} parent=5 // pred_check_branch
        %5648 = sbr.rel (%p5646) target = $region208
      $region207: #{patch_merging_pallas.1} parent=5 // pred_region
        %s5649 = ssub.s32 %s16, 2
        // Predicated region
        $region209: #{patch_merging_pallas.1} parent=207 // pred_check
          %p5650 = pneg %p234
        $region210: #{patch_merging_pallas.1} parent=207 // pred_check_branch
          %5652 = sbr.rel (%p5650) target = $region212
        $region211: #{patch_merging_pallas.1} parent=207 // pred_region
          %s5653 = sand.u32 %s219, 1
          %s5654 = scalar_lea.sflag [#allocation7], %s5653
          %s5655 = sand.u32 %s219, 1
          %s5656 = smul.addr %s5655, 512
          %s5657 = scalar_lea.vmem [#allocation6], %s5656
          %5658 = dma.done %s5654, 8192
        $region212: #{patch_merging_pallas.1} parent=207 // pred_fallthru
          _
      $region208: #{patch_merging_pallas.1} parent=5 // pred_fallthru
        _
    $region6: #{patch_merging_pallas.1} parent=1 // loop_footer
      %s20 = sadd.s32 1, %s16
    $region7: #{patch_merging_pallas.1} parent=1 // loop_footer_branch
      %15 = sbr.rel target = $region3
    $region8: #{patch_merging_pallas.1} parent=1 // loop_exit
      _
    %5659 = vsyncpa [#allocation7], 1
    %s5660 = scalar_lea.sflag [#allocation7], 1
    %5661 = vsyncpa %s5660, 1

</llo_original>
